<compile_context>
chip_gen: v6e
topology: v6e:2x2x1
jax: 0.10.0
libtpu: 0.0.40
codegen_flags: <defaults>
</compile_context>

<pallas_src>
import functools

import jax
import jax.numpy as jnp
from jax.experimental import pallas as pl
from jax.experimental.pallas import tpu as pltpu

EPS = 1e-5
LANES = 128
VMEM_LIMIT = 48 * 1024 * 1024   # safe on v7x (64 MiB/TC); plenty on v5e/v6e
VMEM_TILE_BUDGET = 40 * 1024 * 1024


def _round_up(n, m):
    return (n + m - 1) // m * m


# ---------------------------------------------------------------------------
# Kernel 1: [optional fused BN-affine + ReLU on the input] + conv3x3
#           (stride=1, padding=1) + per-step partial BatchNorm statistics.
#
#   x_ref:     (bt, H, W+2, Ci)  bf16, zero column halo already in HBM layout
#   scale_ref: (1, Ci) f32       folded BN scale for the *input* (conv2 only)
#   shift_ref: (1, Ci) f32       folded BN shift for the *input* (conv2 only)
#   w_ref:     (3, 3*Ci, Co) bf16  dy-major weights, dx packed into K
#   y_ref:     (bt, H, W, Co) bf16  raw conv output
#   stats_ref: (1, 2, Co) f32    row0 = sum(y), row1 = sum(y^2) over the block
#   xp_ref:    (H+2, W+2, Ci) bf16 scratch (vertical zero padding only)
# ---------------------------------------------------------------------------
def _conv3x3_bn_stats_kernel(x_ref, scale_ref, shift_ref, w_ref,
                             y_ref, stats_ref, xp_ref, *, apply_bn_relu):
    bt, H, W, Co = y_ref.shape
    Wp = W + 2
    Ci = x_ref.shape[3]
    f32 = jnp.float32

    # Zero only the two halo rows (the interior rows are fully overwritten per
    # image and the column halo is already zero in the HBM layout).
    zrow = jnp.zeros((1, Wp, Ci), xp_ref.dtype)
    xp_ref[0:1] = zrow
    xp_ref[H + 1:H + 2] = zrow

    if apply_bn_relu:
        # Column mask keeping the horizontal halo exactly zero after the
        # affine (zero halo is what implements the conv padding).
        col = jax.lax.broadcasted_iota(jnp.int32, (H, Wp, Ci), 1)
        interior = (col >= 1) & (col <= W)

    ssum = jnp.zeros((1, Co), f32)
    ssq = jnp.zeros((1, Co), f32)

    for b in range(bt):
        if apply_bn_relu:
            xin = x_ref[b].astype(f32)
            xin = jnp.maximum(xin * scale_ref[...] + shift_ref[...], 0.0)
            xin = jnp.where(interior, xin, 0.0).astype(xp_ref.dtype)
        else:
            xin = x_ref[b]                     # already bf16, halo already 0
        # Full-extent row store: no masked / unaligned scratch stores.
        xp_ref[1:H + 1, :, :] = xin

        # 3 MXU matmuls with the dx taps packed into K (K = 3*Ci), bf16
        # operands, f32 accumulation.
        acc = jnp.zeros((H * W, Co), f32)
        for dy in range(3):
            win = jnp.concatenate(
                [xp_ref[dy:dy + H, dx:dx + W, :] for dx in range(3)], axis=-1)
            acc = acc + jnp.dot(win.reshape(H * W, 3 * Ci), w_ref[dy],
                                preferred_element_type=f32)

        y_ref[b] = acc.reshape(H, W, Co).astype(y_ref.dtype)

        # Partial BatchNorm statistics in f32 (before the bf16 store).
        ssum = ssum + jnp.sum(acc, axis=0, keepdims=True)
        ssq = ssq + jnp.sum(acc * acc, axis=0, keepdims=True)

    stats_ref[0] = jnp.concatenate([ssum, ssq], axis=0)


# ---------------------------------------------------------------------------
# Kernel 2: bn2 (folded scale/shift) + identity residual + ReLU.
# The residual arrives in the width-padded bf16 input layout and is sliced /
# upcast in-register.
# ---------------------------------------------------------------------------
def _bn_add_relu_kernel(y_ref, scale_ref, shift_ref, res_ref, o_ref):
    W = y_ref.shape[2]
    y = y_ref[...].astype(jnp.float32)
    r = res_ref[:, :, 1:W + 1, :].astype(jnp.float32)
    o_ref[...] = jnp.maximum(y * scale_ref[...] + shift_ref[...] + r, 0.0)


# ---------------------------------------------------------------------------
# pallas_call wrappers
# ---------------------------------------------------------------------------
def _conv3x3_bn_stats(x, scale, shift, w, *, bt, apply_bn_relu):
    B, H, Wp, Ci = x.shape
    W = Wp - 2
    Co = w.shape[2]
    G = B // bt
    kernel = functools.partial(_conv3x3_bn_stats_kernel,
                               apply_bn_relu=apply_bn_relu)
    return pl.pallas_call(
        kernel,
        grid=(G,),
        in_specs=[
            pl.BlockSpec((bt, H, Wp, Ci), lambda g: (g, 0, 0, 0)),
            pl.BlockSpec((1, Ci), lambda g: (0, 0)),
            pl.BlockSpec((1, Ci), lambda g: (0, 0)),
            pl.BlockSpec((3, 3 * Ci, Co), lambda g: (0, 0, 0)),
        ],
        out_specs=(
            pl.BlockSpec((bt, H, W, Co), lambda g: (g, 0, 0, 0)),
            pl.BlockSpec((1, 2, Co), lambda g: (g, 0, 0)),
        ),
        out_shape=(
            jax.ShapeDtypeStruct((B, H, W, Co), jnp.bfloat16),
            jax.ShapeDtypeStruct((G, 2, Co), jnp.float32),
        ),
        scratch_shapes=[pltpu.VMEM((H + 2, Wp, Ci), jnp.bfloat16)],
        compiler_params=pltpu.CompilerParams(
            dimension_semantics=("parallel",),
            vmem_limit_bytes=VMEM_LIMIT),
    )(x, scale, shift, w)


def _bn_add_relu(y, scale, shift, res, *, bt):
    B, H, W, C = y.shape
    G = B // bt
    return pl.pallas_call(
        _bn_add_relu_kernel,
        grid=(G,),
        in_specs=[
            pl.BlockSpec((bt, H, W, C), lambda g: (g, 0, 0, 0)),
            pl.BlockSpec((1, C), lambda g: (0, 0)),
            pl.BlockSpec((1, C), lambda g: (0, 0)),
            pl.BlockSpec((bt, H, W + 2, C), lambda g: (g, 0, 0, 0)),
        ],
        out_specs=pl.BlockSpec((bt, H, W, C), lambda g: (g, 0, 0, 0)),
        out_shape=jax.ShapeDtypeStruct((B, H, W, C), jnp.float32),
        compiler_params=pltpu.CompilerParams(
            dimension_semantics=("parallel",),
            vmem_limit_bytes=VMEM_LIMIT),
    )(y, scale, shift, res)


# ---------------------------------------------------------------------------
# Plain-JAX glue: layout / weight packing / BN finalize / tiling choice
# ---------------------------------------------------------------------------
def _pick_bt(B, H, W, ci_p, co_p):
    """Largest per-step batch tile fitting the VMEM budget while keeping at
    least 2 grid steps so both TensorCores of a megacore chip get work."""
    def est(bt):
        io = 2 * bt * H * ((W + 2) * ci_p + W * co_p) * 2   # dbl-buffered bf16
        scratch = (H + 2) * (W + 2) * ci_p * 2
        wts = 2 * 9 * ci_p * co_p * 2
        live = H * W * (3 * ci_p * 2 + co_p * 4) + H * (W + 2) * ci_p * 4
        return io + scratch + wts + live

    best = 1
    for bt in range(1, B + 1):
        if B % bt:
            continue
        if B >= 2 and B // bt < 2:
            continue
        if est(bt) <= VMEM_TILE_BUDGET:
            best = bt
    return best


def _pack_weight(w_oihw, ci_p, co_p):
    """(Cout, Cin, 3, 3) OIHW -> (3, 3*Ci_pad, Co_pad) bf16, dy-major with the
    dx taps packed into the contraction dimension (matches the in-kernel
    window concat order)."""
    co, ci = w_oihw.shape[0], w_oihw.shape[1]
    w = jnp.transpose(w_oihw, (2, 3, 1, 0))                 # (dy, dx, ci, co)
    w = jnp.pad(w, ((0, 0), (0, 0), (0, ci_p - ci), (0, co_p - co)))
    w = w.reshape(3, 3 * ci_p, co_p)                        # K index = dx*Ci + i
    return w.astype(jnp.bfloat16)


def _bn_scale_shift(stats, gamma_p, beta_p, n):
    """Partial (sum, sumsq) per grid step -> folded global (scale, shift).
    Note: E[y^2]-E[y]^2 in f32; fine for conv outputs with near-zero mean."""
    s = jnp.sum(stats[:, 0, :], axis=0)
    sq = jnp.sum(stats[:, 1, :], axis=0)
    mean = s / n
    var = jnp.maximum(sq / n - mean * mean, 0.0)            # biased (training) var
    scale = gamma_p * jax.lax.rsqrt(var + EPS)
    shift = beta_p - mean * scale
    return scale[None, :], shift[None, :]


@jax.jit
def basic_block_forward(x_nchw, w1, g1, b1, w2, g2, b2):
    """BasicBlock forward: conv3x3-BN-ReLU-conv3x3-BN + identity, ReLU."""
    x = jnp.transpose(x_nchw, (0, 2, 3, 1)).astype(jnp.float32)   # NCHW -> NHWC
    B, H, W, Cin = x.shape
    Cout = w1.shape[0]
    assert Cin == Cout, "identity residual requires inplanes == planes"
    ci_p = _round_up(Cin, LANES)
    co_p = _round_up(Cout, LANES)
    n = B * H * W

    # Single HBM copy of the input: bf16, channel-padded to a lane multiple and
    # width-padded by one zero column per side (the conv's horizontal padding).
    # Reused as conv1 operand and as the residual.
    x_b = jnp.pad(x, ((0, 0), (0, 0), (1, 1), (0, ci_p - Cin))).astype(jnp.bfloat16)

    w1m = _pack_weight(w1, ci_p, co_p)
    w2m = _pack_weight(w2, co_p, co_p)
    g1p = jnp.pad(g1.astype(jnp.float32), (0, co_p - Cout))
    b1p = jnp.pad(b1.astype(jnp.float32), (0, co_p - Cout))
    g2p = jnp.pad(g2.astype(jnp.float32), (0, co_p - Cout))
    b2p = jnp.pad(b2.astype(jnp.float32), (0, co_p - Cout))
    zeros_ci = jnp.zeros((1, ci_p), jnp.float32)

    bt = _pick_bt(B, H, W, ci_p, co_p)

    # conv1 (+ partial BN1 stats); raw output stored bf16.
    y1, st1 = _conv3x3_bn_stats(x_b, zeros_ci, zeros_ci, w1m,
                                bt=bt, apply_bn_relu=False)
    scale1, shift1 = _bn_scale_shift(st1, g1p, b1p, n)

    # Width-pad y1 with zero columns (conv2's horizontal padding); bn1 + ReLU
    # are fused inside the conv2 kernel so the normalized activation never
    # round-trips HBM in f32.
    y1p = jnp.pad(y1, ((0, 0), (0, 0), (1, 1), (0, 0)))

    y2, st2 = _conv3x3_bn_stats(y1p, scale1, shift1, w2m,
                                bt=bt, apply_bn_relu=True)
    scale2, shift2 = _bn_scale_shift(st2, g2p, b2p, n)

    # bn2 + identity residual + ReLU.
    out = _bn_add_relu(y2, scale2, shift2, x_b, bt=bt)

    out = out[..., :Cout]                                    # drop channel pad
    return jnp.transpose(out, (0, 3, 1, 2))                  # NHWC -> NCHW


# ---------------------------------------------------------------------------
# Pure-JAX references for correctness checks
# ---------------------------------------------------------------------------
def _conv_ref(x, w):
    return jax.lax.conv_general_dilated(
        x, w, window_strides=(1, 1), padding=((1, 1), (1, 1)),
        dimension_numbers=("NCHW", "OIHW", "NCHW"),
        precision=jax.lax.Precision.HIGHEST)


def _bn_fold_ref(y, g, b):
    mean = jnp.mean(y, axis=(0, 2, 3), keepdims=True)
    var = jnp.mean((y - mean) ** 2, axis=(0, 2, 3), keepdims=True)
    scale = g.reshape(1, -1, 1, 1) * jax.lax.rsqrt(var + EPS)
    shift = b.reshape(1, -1, 1, 1) - mean * scale
    return scale, shift


def _ref_forward_matched(x, w1, g1, b1, w2, g2, b2):
    """Mirrors the kernel's bf16 rounding points (operands + stored intermediates)."""
    bf = lambda t: t.astype(jnp.bfloat16).astype(jnp.float32)
    xb = bf(x)
    y1 = _conv_ref(xb, bf(w1))
    s1, t1 = _bn_fold_ref(y1, g1, b1)
    a1 = bf(jnp.maximum(bf(y1) * s1 + t1, 0.0))
    y2 = _conv_ref(a1, bf(w2))
    s2, t2 = _bn_fold_ref(y2, g2, b2)
    return jnp.maximum(bf(y2) * s2 + t2 + xb, 0.0)


def _ref_forward_f32(x, w1, g1, b1, w2, g2, b2):
    """Full-f32 module-exact reference."""
    s1, t1 = None, None
    y1 = _conv_ref(x, w1)
    s1, t1 = _bn_fold_ref(y1, g1, b1)
    a1 = jnp.maximum(y1 * s1 + t1, 0.0)
    y2 = _conv_ref(a1, w2)
    s2, t2 = _bn_fold_ref(y2, g2, b2)
    return jnp.maximum(y2 * s2 + t2 + x, 0.0)


if __name__ == "__main__":
    key = jax.random.PRNGKey(0)
    kx, kw1, kw2, kg1, kb1, kg2, kb2 = jax.random.split(key, 7)

    B, C, H, W = 2, 8, 16, 16          # inplanes = planes = 8, stride = 1
    x = jax.random.normal(kx, (B, C, H, W), dtype=jnp.float32)

    # conv3x3 weights, PyTorch OIHW (planes, inplanes, 3, 3), bias=False
    w1 = jax.random.normal(kw1, (C, C, 3, 3), dtype=jnp.float32) * 0.1
    w2 = jax.random.normal(kw2, (C, C, 3, 3), dtype=jnp.float32) * 0.1
    # BatchNorm affine parameters
    g1 = 1.0 + 0.1 * jax.random.normal(kg1, (C,), dtype=jnp.float32)
    b1 = 0.1 * jax.random.normal(kb1, (C,), dtype=jnp.float32)
    g2 = 1.0 + 0.1 * jax.random.normal(kg2, (C,), dtype=jnp.float32)
    b2 = 0.1 * jax.random.normal(kb2, (C,), dtype=jnp.float32)

    out = jax.block_until_ready(basic_block_forward(x, w1, g1, b1, w2, g2, b2))
    assert out.shape == (B, C, H, W)

    # Strict check vs. a precision-matched reference (same bf16 rounding points).
    ref_m = jax.block_until_ready(_ref_forward_matched(x, w1, g1, b1, w2, g2, b2))
    err_m = float(jnp.max(jnp.abs(out - ref_m)))
    assert bool(jnp.allclose(out, ref_m, rtol=5e-3, atol=5e-3)), (
        f"mismatch vs precision-matched reference: max abs err {err_m}")

    # Loose check vs. the full-f32 reference (bounds total bf16 drift).
    ref_f = jax.block_until_ready(_ref_forward_f32(x, w1, g1, b1, w2, g2, b2))
    err_f = float(jnp.max(jnp.abs(out - ref_f)))
    assert bool(jnp.allclose(out, ref_f, rtol=8e-2, atol=8e-2)), (
        f"mismatch vs f32 reference: max abs err {err_f}")

    # Second config exercising the batch-tiled (bt=2) path.
    x4 = jax.random.normal(kx, (4, C, H, W), dtype=jnp.float32)
    out4 = jax.block_until_ready(basic_block_forward(x4, w1, g1, b1, w2, g2, b2))
    ref4 = jax.block_until_ready(_ref_forward_matched(x4, w1, g1, b1, w2, g2, b2))
    err4 = float(jnp.max(jnp.abs(out4 - ref4)))
    assert bool(jnp.allclose(out4, ref4, rtol=5e-3, atol=5e-3)), (
        f"mismatch (batch-tiled path) vs matched reference: max abs err {err4}")

    print("KERNEL_OK")
</pallas_src>

<mosaic_0001>
module attributes {stable_mosaic.version = 11 : i64} {
  func.func @_conv3x3_bn_stats_kernel(%arg0: i32, %arg1: memref<1x16x18x128xbf16, #tpu.memory_space<vmem>>, %arg2: memref<1x128xf32, #tpu.memory_space<vmem>>, %arg3: memref<1x128xf32, #tpu.memory_space<vmem>>, %arg4: memref<3x384x128xbf16, #tpu.memory_space<vmem>>, %arg5: memref<1x16x16x128xbf16, #tpu.memory_space<vmem>>, %arg6: memref<1x2x128xf32, #tpu.memory_space<vmem>>, %arg7: memref<18x18x128xbf16, #tpu.memory_space<vmem>>) attributes {dimension_semantics = [#tpu.dimension_semantics<parallel>], iteration_bounds = array<i64: 2>, scalar_prefetch = 0 : i64, scratch_operands = 1 : i64, tpu.core_type = #tpu.core_type<tc>, window_params = [{transform_indices = @transform_0, window_bounds = array<i64: 1, 16, 18, 128>}, {pipeline_mode = #tpu.pipeline_mode<synchronous>, transform_indices = @transform_1, window_bounds = array<i64: 1, 128>}, {pipeline_mode = #tpu.pipeline_mode<synchronous>, transform_indices = @transform_2, window_bounds = array<i64: 1, 128>}, {pipeline_mode = #tpu.pipeline_mode<synchronous>, transform_indices = @transform_3, window_bounds = array<i64: 3, 384, 128>}, {transform_indices = @transform_4, window_bounds = array<i64: 1, 16, 16, 128>}, {transform_indices = @transform_5, window_bounds = array<i64: 1, 2, 128>}]} {
    %cst = arith.constant 0.000000e+00 : bf16
    %0 = vector.broadcast %cst : bf16 to vector<1x18x128xbf16>
    %c0 = arith.constant 0 : index
    %c0_0 = arith.constant 0 : index
    %c0_1 = arith.constant 0 : index
    %1 = vector.load %arg7[%c0, %c0_0, %c0_1] : memref<18x18x128xbf16, #tpu.memory_space<vmem>>, vector<1x18x128xbf16>
    tpu.vector_store %arg7[%c0, %c0_0, %c0_1], %0 {strides = array<i32>} : memref<18x18x128xbf16, #tpu.memory_space<vmem>>, vector<1x18x128xbf16>,
    %c17 = arith.constant 17 : index
    %c0_2 = arith.constant 0 : index
    %c0_3 = arith.constant 0 : index
    %2 = vector.load %arg7[%c17, %c0_2, %c0_3] : memref<18x18x128xbf16, #tpu.memory_space<vmem>>, vector<1x18x128xbf16>
    tpu.vector_store %arg7[%c17, %c0_2, %c0_3], %0 {strides = array<i32>} : memref<18x18x128xbf16, #tpu.memory_space<vmem>>, vector<1x18x128xbf16>,
    %cst_4 = arith.constant 0.000000e+00 : f32
    %3 = vector.broadcast %cst_4 : f32 to vector<1x128xf32>
    %cst_5 = arith.constant 0.000000e+00 : f32
    %4 = vector.broadcast %cst_5 : f32 to vector<1x128xf32>
    %c0_6 = arith.constant 0 : index
    %c0_7 = arith.constant 0 : index
    %c0_8 = arith.constant 0 : index
    %c0_9 = arith.constant 0 : index
    %5 = vector.load %arg1[%c0_6, %c0_7, %c0_8, %c0_9] : memref<1x16x18x128xbf16, #tpu.memory_space<vmem>>, vector<1x16x18x128xbf16>
    %6 = vector.shape_cast %5 : vector<1x16x18x128xbf16> to vector<16x18x128xbf16>
    %c1 = arith.constant 1 : index
    %c0_10 = arith.constant 0 : index
    %c0_11 = arith.constant 0 : index
    %7 = vector.load %arg7[%c1, %c0_10, %c0_11] : memref<18x18x128xbf16, #tpu.memory_space<vmem>>, vector<16x18x128xbf16>
    tpu.vector_store %arg7[%c1, %c0_10, %c0_11], %6 {strides = array<i32>} : memref<18x18x128xbf16, #tpu.memory_space<vmem>>, vector<16x18x128xbf16>,
    %cst_12 = arith.constant 0.000000e+00 : f32
    %8 = vector.broadcast %cst_12 : f32 to vector<256x128xf32>
    %c0_13 = arith.constant 0 : index
    %c0_14 = arith.constant 0 : index
    %c0_15 = arith.constant 0 : index
    %9 = vector.load %arg7[%c0_13, %c0_14, %c0_15] : memref<18x18x128xbf16, #tpu.memory_space<vmem>>, vector<16x16x128xbf16>
    %c0_16 = arith.constant 0 : index
    %c1_17 = arith.constant 1 : index
    %c0_18 = arith.constant 0 : index
    %10 = vector.load %arg7[%c0_16, %c1_17, %c0_18] : memref<18x18x128xbf16, #tpu.memory_space<vmem>>, vector<16x16x128xbf16>
    %c0_19 = arith.constant 0 : index
    %c2 = arith.constant 2 : index
    %c0_20 = arith.constant 0 : index
    %11 = vector.load %arg7[%c0_19, %c2, %c0_20] : memref<18x18x128xbf16, #tpu.memory_space<vmem>>, vector<16x16x128xbf16>
    %12 = tpu.concatenate %9, %10, %11 in 2 : vector<16x16x128xbf16>, vector<16x16x128xbf16>, vector<16x16x128xbf16> -> vector<16x16x384xbf16>
    %13 = vector.shape_cast %12 : vector<16x16x384xbf16> to vector<256x384xbf16>
    %c0_21 = arith.constant 0 : index
    %c0_22 = arith.constant 0 : index
    %c0_23 = arith.constant 0 : index
    %14 = vector.load %arg4[%c0_21, %c0_22, %c0_23] : memref<3x384x128xbf16, #tpu.memory_space<vmem>>, vector<1x384x128xbf16>
    %15 = vector.shape_cast %14 : vector<1x384x128xbf16> to vector<384x128xbf16>
    %cst_24 = arith.constant dense<0.000000e+00> : vector<256x128xf32>
    %16 = tpu.matmul %13, %15, %cst_24 {dimension_numbers = #tpu.dot_dimension_numbers<[1], [0], [0], [1], [0, 0, 1, 1], [], []>} : vector<256x384xbf16>, vector<384x128xbf16>, vector<256x128xf32> -> vector<256x128xf32>
    %17 = arith.addf %8, %16 : vector<256x128xf32>
    %c1_25 = arith.constant 1 : index
    %c0_26 = arith.constant 0 : index
    %c0_27 = arith.constant 0 : index
    %18 = vector.load %arg7[%c1_25, %c0_26, %c0_27] : memref<18x18x128xbf16, #tpu.memory_space<vmem>>, vector<16x16x128xbf16>
    %c1_28 = arith.constant 1 : index
    %c1_29 = arith.constant 1 : index
    %c0_30 = arith.constant 0 : index
    %19 = vector.load %arg7[%c1_28, %c1_29, %c0_30] : memref<18x18x128xbf16, #tpu.memory_space<vmem>>, vector<16x16x128xbf16>
    %c1_31 = arith.constant 1 : index
    %c2_32 = arith.constant 2 : index
    %c0_33 = arith.constant 0 : index
    %20 = vector.load %arg7[%c1_31, %c2_32, %c0_33] : memref<18x18x128xbf16, #tpu.memory_space<vmem>>, vector<16x16x128xbf16>
    %21 = tpu.concatenate %18, %19, %20 in 2 : vector<16x16x128xbf16>, vector<16x16x128xbf16>, vector<16x16x128xbf16> -> vector<16x16x384xbf16>
    %22 = vector.shape_cast %21 : vector<16x16x384xbf16> to vector<256x384xbf16>
    %c1_34 = arith.constant 1 : index
    %c0_35 = arith.constant 0 : index
    %c0_36 = arith.constant 0 : index
    %23 = vector.load %arg4[%c1_34, %c0_35, %c0_36] : memref<3x384x128xbf16, #tpu.memory_space<vmem>>, vector<1x384x128xbf16>
    %24 = vector.shape_cast %23 : vector<1x384x128xbf16> to vector<384x128xbf16>
    %cst_37 = arith.constant dense<0.000000e+00> : vector<256x128xf32>
    %25 = tpu.matmul %22, %24, %cst_37 {dimension_numbers = #tpu.dot_dimension_numbers<[1], [0], [0], [1], [0, 0, 1, 1], [], []>} : vector<256x384xbf16>, vector<384x128xbf16>, vector<256x128xf32> -> vector<256x128xf32>
    %26 = arith.addf %17, %25 : vector<256x128xf32>
    %c2_38 = arith.constant 2 : index
    %c0_39 = arith.constant 0 : index
    %c0_40 = arith.constant 0 : index
    %27 = vector.load %arg7[%c2_38, %c0_39, %c0_40] : memref<18x18x128xbf16, #tpu.memory_space<vmem>>, vector<16x16x128xbf16>
    %c2_41 = arith.constant 2 : index
    %c1_42 = arith.constant 1 : index
    %c0_43 = arith.constant 0 : index
    %28 = vector.load %arg7[%c2_41, %c1_42, %c0_43] : memref<18x18x128xbf16, #tpu.memory_space<vmem>>, vector<16x16x128xbf16>
    %c2_44 = arith.constant 2 : index
    %c2_45 = arith.constant 2 : index
    %c0_46 = arith.constant 0 : index
    %29 = vector.load %arg7[%c2_44, %c2_45, %c0_46] : memref<18x18x128xbf16, #tpu.memory_space<vmem>>, vector<16x16x128xbf16>
    %30 = tpu.concatenate %27, %28, %29 in 2 : vector<16x16x128xbf16>, vector<16x16x128xbf16>, vector<16x16x128xbf16> -> vector<16x16x384xbf16>
    %31 = vector.shape_cast %30 : vector<16x16x384xbf16> to vector<256x384xbf16>
    %c2_47 = arith.constant 2 : index
    %c0_48 = arith.constant 0 : index
    %c0_49 = arith.constant 0 : index
    %32 = vector.load %arg4[%c2_47, %c0_48, %c0_49] : memref<3x384x128xbf16, #tpu.memory_space<vmem>>, vector<1x384x128xbf16>
    %33 = vector.shape_cast %32 : vector<1x384x128xbf16> to vector<384x128xbf16>
    %cst_50 = arith.constant dense<0.000000e+00> : vector<256x128xf32>
    %34 = tpu.matmul %31, %33, %cst_50 {dimension_numbers = #tpu.dot_dimension_numbers<[1], [0], [0], [1], [0, 0, 1, 1], [], []>} : vector<256x384xbf16>, vector<384x128xbf16>, vector<256x128xf32> -> vector<256x128xf32>
    %35 = arith.addf %26, %34 : vector<256x128xf32>
    %36 = vector.shape_cast %35 : vector<256x128xf32> to vector<16x16x128xf32>
    %37 = arith.truncf %36 : vector<16x16x128xf32> to vector<16x16x128xbf16>
    %c0_51 = arith.constant 0 : index
    %c0_52 = arith.constant 0 : index
    %c0_53 = arith.constant 0 : index
    %c0_54 = arith.constant 0 : index
    %38 = vector.load %arg5[%c0_51, %c0_52, %c0_53, %c0_54] : memref<1x16x16x128xbf16, #tpu.memory_space<vmem>>, vector<1x16x16x128xbf16>
    %39 = vector.shape_cast %38 : vector<1x16x16x128xbf16> to vector<16x16x128xbf16>
    %40 = vector.shape_cast %37 : vector<16x16x128xbf16> to vector<1x16x16x128xbf16>
    tpu.vector_store %arg5[%c0_51, %c0_52, %c0_53, %c0_54], %40 {strides = array<i32>} : memref<1x16x16x128xbf16, #tpu.memory_space<vmem>>, vector<1x16x16x128xbf16>,
    %cst_55 = arith.constant dense<0.000000e+00> : vector<128xf32>
    %41 = vector.multi_reduction <add>, %35, %cst_55 [0] : vector<256x128xf32> to vector<128xf32>
    %42 = vector.shape_cast %41 : vector<128xf32> to vector<1x128xf32>
    %43 = arith.addf %3, %42 : vector<1x128xf32>
    %44 = arith.mulf %35, %35 : vector<256x128xf32>
    %cst_56 = arith.constant dense<0.000000e+00> : vector<128xf32>
    %45 = vector.multi_reduction <add>, %44, %cst_56 [0] : vector<256x128xf32> to vector<128xf32>
    %46 = vector.shape_cast %45 : vector<128xf32> to vector<1x128xf32>
    %47 = arith.addf %4, %46 : vector<1x128xf32>
    %48 = tpu.concatenate %43, %47 in 0 : vector<1x128xf32>, vector<1x128xf32> -> vector<2x128xf32>
    %c0_57 = arith.constant 0 : index
    %c0_58 = arith.constant 0 : index
    %c0_59 = arith.constant 0 : index
    %49 = vector.load %arg6[%c0_57, %c0_58, %c0_59] : memref<1x2x128xf32, #tpu.memory_space<vmem>>, vector<1x2x128xf32>
    %50 = vector.shape_cast %49 : vector<1x2x128xf32> to vector<2x128xf32>
    %51 = vector.shape_cast %48 : vector<2x128xf32> to vector<1x2x128xf32>
    tpu.vector_store %arg6[%c0_57, %c0_58, %c0_59], %51 {strides = array<i32>} : memref<1x2x128xf32, #tpu.memory_space<vmem>>, vector<1x2x128xf32>,
    return
  }
  func.func @transform_0(%arg0: i32) -> (i32, i32, i32, i32) {
    %c0_i32 = arith.constant 0 : i32
    %c0_i32_0 = arith.constant 0 : i32
    %c0_i32_1 = arith.constant 0 : i32
    %c0_i32_2 = arith.constant 0 : i32
    return %arg0, %c0_i32, %c0_i32_0, %c0_i32_1 : i32, i32, i32, i32
  }
  func.func @transform_1(%arg0: i32) -> (i32, i32) {
    %c0_i32 = arith.constant 0 : i32
    %c0_i32_0 = arith.constant 0 : i32
    %c0_i32_1 = arith.constant 0 : i32
    return %c0_i32, %c0_i32_0 : i32, i32
  }
  func.func @transform_2(%arg0: i32) -> (i32, i32) {
    %c0_i32 = arith.constant 0 : i32
    %c0_i32_0 = arith.constant 0 : i32
    %c0_i32_1 = arith.constant 0 : i32
    return %c0_i32, %c0_i32_0 : i32, i32
  }
  func.func @transform_3(%arg0: i32) -> (i32, i32, i32) {
    %c0_i32 = arith.constant 0 : i32
    %c0_i32_0 = arith.constant 0 : i32
    %c0_i32_1 = arith.constant 0 : i32
    %c0_i32_2 = arith.constant 0 : i32
    return %c0_i32, %c0_i32_0, %c0_i32_1 : i32, i32, i32
  }
  func.func @transform_4(%arg0: i32) -> (i32, i32, i32, i32) {
    %c0_i32 = arith.constant 0 : i32
    %c0_i32_0 = arith.constant 0 : i32
    %c0_i32_1 = arith.constant 0 : i32
    %c0_i32_2 = arith.constant 0 : i32
    return %arg0, %c0_i32, %c0_i32_0, %c0_i32_1 : i32, i32, i32, i32
  }
  func.func @transform_5(%arg0: i32) -> (i32, i32, i32) {
    %c0_i32 = arith.constant 0 : i32
    %c0_i32_0 = arith.constant 0 : i32
    %c0_i32_1 = arith.constant 0 : i32
    return %arg0, %c0_i32, %c0_i32_0 : i32, i32, i32
  }
}

module attributes {stable_mosaic.version = 11 : i64} {
  func.func @_conv3x3_bn_stats_kernel(%arg0: i32, %arg1: memref<1x16x18x128xbf16, #tpu.memory_space<vmem>>, %arg2: memref<1x128xf32, #tpu.memory_space<vmem>>, %arg3: memref<1x128xf32, #tpu.memory_space<vmem>>, %arg4: memref<3x384x128xbf16, #tpu.memory_space<vmem>>, %arg5: memref<1x16x16x128xbf16, #tpu.memory_space<vmem>>, %arg6: memref<1x2x128xf32, #tpu.memory_space<vmem>>, %arg7: memref<18x18x128xbf16, #tpu.memory_space<vmem>>) attributes {dimension_semantics = [#tpu.dimension_semantics<parallel>], iteration_bounds = array<i64: 2>, scalar_prefetch = 0 : i64, scratch_operands = 1 : i64, tpu.core_type = #tpu.core_type<tc>, window_params = [{transform_indices = @transform_0, window_bounds = array<i64: 1, 16, 18, 128>}, {pipeline_mode = #tpu.pipeline_mode<synchronous>, transform_indices = @transform_1, window_bounds = array<i64: 1, 128>}, {pipeline_mode = #tpu.pipeline_mode<synchronous>, transform_indices = @transform_2, window_bounds = array<i64: 1, 128>}, {pipeline_mode = #tpu.pipeline_mode<synchronous>, transform_indices = @transform_3, window_bounds = array<i64: 3, 384, 128>}, {transform_indices = @transform_4, window_bounds = array<i64: 1, 16, 16, 128>}, {transform_indices = @transform_5, window_bounds = array<i64: 1, 2, 128>}]} {
    %cst = arith.constant 0.000000e+00 : bf16
    %0 = vector.broadcast %cst : bf16 to vector<1x18x128xbf16>
    %c0 = arith.constant 0 : index
    %c0_0 = arith.constant 0 : index
    %c0_1 = arith.constant 0 : index
    %1 = vector.load %arg7[%c0, %c0_0, %c0_1] : memref<18x18x128xbf16, #tpu.memory_space<vmem>>, vector<1x18x128xbf16>
    tpu.vector_store %arg7[%c0, %c0_0, %c0_1], %0 {strides = array<i32>} : memref<18x18x128xbf16, #tpu.memory_space<vmem>>, vector<1x18x128xbf16>,
    %c17 = arith.constant 17 : index
    %c0_2 = arith.constant 0 : index
    %c0_3 = arith.constant 0 : index
    %2 = vector.load %arg7[%c17, %c0_2, %c0_3] : memref<18x18x128xbf16, #tpu.memory_space<vmem>>, vector<1x18x128xbf16>
    tpu.vector_store %arg7[%c17, %c0_2, %c0_3], %0 {strides = array<i32>} : memref<18x18x128xbf16, #tpu.memory_space<vmem>>, vector<1x18x128xbf16>,
    %3 = tpu.iota {dimensions = array<i32: 1>} : vector<16x18x128xi32>
    %c1_i32 = arith.constant 1 : i32
    %4 = vector.broadcast %c1_i32 : i32 to vector<16x18x128xi32>
    %5 = arith.cmpi sge, %3, %4 : vector<16x18x128xi32>
    %c16_i32 = arith.constant 16 : i32
    %6 = vector.broadcast %c16_i32 : i32 to vector<16x18x128xi32>
    %7 = arith.cmpi sle, %3, %6 : vector<16x18x128xi32>
    %8 = arith.andi %5, %7 : vector<16x18x128xi1>
    %cst_4 = arith.constant 0.000000e+00 : f32
    %9 = vector.broadcast %cst_4 : f32 to vector<1x128xf32>
    %cst_5 = arith.constant 0.000000e+00 : f32
    %10 = vector.broadcast %cst_5 : f32 to vector<1x128xf32>
    %c0_6 = arith.constant 0 : index
    %c0_7 = arith.constant 0 : index
    %c0_8 = arith.constant 0 : index
    %c0_9 = arith.constant 0 : index
    %11 = vector.load %arg1[%c0_6, %c0_7, %c0_8, %c0_9] : memref<1x16x18x128xbf16, #tpu.memory_space<vmem>>, vector<1x16x18x128xbf16>
    %12 = vector.shape_cast %11 : vector<1x16x18x128xbf16> to vector<16x18x128xbf16>
    %13 = arith.extf %12 : vector<16x18x128xbf16> to vector<16x18x128xf32>
    %c0_10 = arith.constant 0 : index
    %c0_11 = arith.constant 0 : index
    %14 = vector.load %arg2[%c0_10, %c0_11] : memref<1x128xf32, #tpu.memory_space<vmem>>, vector<1x128xf32>
    %15 = vector.shape_cast %14 : vector<1x128xf32> to vector<1x1x128xf32>
    %16 = vector.broadcast %15 : vector<1x1x128xf32> to vector<16x18x128xf32>
    %17 = arith.mulf %13, %16 : vector<16x18x128xf32>
    %c0_12 = arith.constant 0 : index
    %c0_13 = arith.constant 0 : index
    %18 = vector.load %arg3[%c0_12, %c0_13] : memref<1x128xf32, #tpu.memory_space<vmem>>, vector<1x128xf32>
    %19 = vector.shape_cast %18 : vector<1x128xf32> to vector<1x1x128xf32>
    %20 = vector.broadcast %19 : vector<1x1x128xf32> to vector<16x18x128xf32>
    %21 = arith.addf %17, %20 : vector<16x18x128xf32>
    %cst_14 = arith.constant 0.000000e+00 : f32
    %22 = vector.broadcast %cst_14 : f32 to vector<16x18x128xf32>
    %23 = arith.maximumf %21, %22 : vector<16x18x128xf32>
    %cst_15 = arith.constant 0.000000e+00 : f32
    %24 = vector.broadcast %cst_15 : f32 to vector<16x18x128xf32>
    %25 = arith.select %8, %23, %24 : vector<16x18x128xi1>, vector<16x18x128xf32>
    %26 = arith.truncf %25 : vector<16x18x128xf32> to vector<16x18x128xbf16>
    %c1 = arith.constant 1 : index
    %c0_16 = arith.constant 0 : index
    %c0_17 = arith.constant 0 : index
    %27 = vector.load %arg7[%c1, %c0_16, %c0_17] : memref<18x18x128xbf16, #tpu.memory_space<vmem>>, vector<16x18x128xbf16>
    tpu.vector_store %arg7[%c1, %c0_16, %c0_17], %26 {strides = array<i32>} : memref<18x18x128xbf16, #tpu.memory_space<vmem>>, vector<16x18x128xbf16>,
    %cst_18 = arith.constant 0.000000e+00 : f32
    %28 = vector.broadcast %cst_18 : f32 to vector<256x128xf32>
    %c0_19 = arith.constant 0 : index
    %c0_20 = arith.constant 0 : index
    %c0_21 = arith.constant 0 : index
    %29 = vector.load %arg7[%c0_19, %c0_20, %c0_21] : memref<18x18x128xbf16, #tpu.memory_space<vmem>>, vector<16x16x128xbf16>
    %c0_22 = arith.constant 0 : index
    %c1_23 = arith.constant 1 : index
    %c0_24 = arith.constant 0 : index
    %30 = vector.load %arg7[%c0_22, %c1_23, %c0_24] : memref<18x18x128xbf16, #tpu.memory_space<vmem>>, vector<16x16x128xbf16>
    %c0_25 = arith.constant 0 : index
    %c2 = arith.constant 2 : index
    %c0_26 = arith.constant 0 : index
    %31 = vector.load %arg7[%c0_25, %c2, %c0_26] : memref<18x18x128xbf16, #tpu.memory_space<vmem>>, vector<16x16x128xbf16>
    %32 = tpu.concatenate %29, %30, %31 in 2 : vector<16x16x128xbf16>, vector<16x16x128xbf16>, vector<16x16x128xbf16> -> vector<16x16x384xbf16>
    %33 = vector.shape_cast %32 : vector<16x16x384xbf16> to vector<256x384xbf16>
    %c0_27 = arith.constant 0 : index
    %c0_28 = arith.constant 0 : index
    %c0_29 = arith.constant 0 : index
    %34 = vector.load %arg4[%c0_27, %c0_28, %c0_29] : memref<3x384x128xbf16, #tpu.memory_space<vmem>>, vector<1x384x128xbf16>
    %35 = vector.shape_cast %34 : vector<1x384x128xbf16> to vector<384x128xbf16>
    %cst_30 = arith.constant dense<0.000000e+00> : vector<256x128xf32>
    %36 = tpu.matmul %33, %35, %cst_30 {dimension_numbers = #tpu.dot_dimension_numbers<[1], [0], [0], [1], [0, 0, 1, 1], [], []>} : vector<256x384xbf16>, vector<384x128xbf16>, vector<256x128xf32> -> vector<256x128xf32>
    %37 = arith.addf %28, %36 : vector<256x128xf32>
    %c1_31 = arith.constant 1 : index
    %c0_32 = arith.constant 0 : index
    %c0_33 = arith.constant 0 : index
    %38 = vector.load %arg7[%c1_31, %c0_32, %c0_33] : memref<18x18x128xbf16, #tpu.memory_space<vmem>>, vector<16x16x128xbf16>
    %c1_34 = arith.constant 1 : index
    %c1_35 = arith.constant 1 : index
    %c0_36 = arith.constant 0 : index
    %39 = vector.load %arg7[%c1_34, %c1_35, %c0_36] : memref<18x18x128xbf16, #tpu.memory_space<vmem>>, vector<16x16x128xbf16>
    %c1_37 = arith.constant 1 : index
    %c2_38 = arith.constant 2 : index
    %c0_39 = arith.constant 0 : index
    %40 = vector.load %arg7[%c1_37, %c2_38, %c0_39] : memref<18x18x128xbf16, #tpu.memory_space<vmem>>, vector<16x16x128xbf16>
    %41 = tpu.concatenate %38, %39, %40 in 2 : vector<16x16x128xbf16>, vector<16x16x128xbf16>, vector<16x16x128xbf16> -> vector<16x16x384xbf16>
    %42 = vector.shape_cast %41 : vector<16x16x384xbf16> to vector<256x384xbf16>
    %c1_40 = arith.constant 1 : index
    %c0_41 = arith.constant 0 : index
    %c0_42 = arith.constant 0 : index
    %43 = vector.load %arg4[%c1_40, %c0_41, %c0_42] : memref<3x384x128xbf16, #tpu.memory_space<vmem>>, vector<1x384x128xbf16>
    %44 = vector.shape_cast %43 : vector<1x384x128xbf16> to vector<384x128xbf16>
    %cst_43 = arith.constant dense<0.000000e+00> : vector<256x128xf32>
    %45 = tpu.matmul %42, %44, %cst_43 {dimension_numbers = #tpu.dot_dimension_numbers<[1], [0], [0], [1], [0, 0, 1, 1], [], []>} : vector<256x384xbf16>, vector<384x128xbf16>, vector<256x128xf32> -> vector<256x128xf32>
    %46 = arith.addf %37, %45 : vector<256x128xf32>
    %c2_44 = arith.constant 2 : index
    %c0_45 = arith.constant 0 : index
    %c0_46 = arith.constant 0 : index
    %47 = vector.load %arg7[%c2_44, %c0_45, %c0_46] : memref<18x18x128xbf16, #tpu.memory_space<vmem>>, vector<16x16x128xbf16>
    %c2_47 = arith.constant 2 : index
    %c1_48 = arith.constant 1 : index
    %c0_49 = arith.constant 0 : index
    %48 = vector.load %arg7[%c2_47, %c1_48, %c0_49] : memref<18x18x128xbf16, #tpu.memory_space<vmem>>, vector<16x16x128xbf16>
    %c2_50 = arith.constant 2 : index
    %c2_51 = arith.constant 2 : index
    %c0_52 = arith.constant 0 : index
    %49 = vector.load %arg7[%c2_50, %c2_51, %c0_52] : memref<18x18x128xbf16, #tpu.memory_space<vmem>>, vector<16x16x128xbf16>
    %50 = tpu.concatenate %47, %48, %49 in 2 : vector<16x16x128xbf16>, vector<16x16x128xbf16>, vector<16x16x128xbf16> -> vector<16x16x384xbf16>
    %51 = vector.shape_cast %50 : vector<16x16x384xbf16> to vector<256x384xbf16>
    %c2_53 = arith.constant 2 : index
    %c0_54 = arith.constant 0 : index
    %c0_55 = arith.constant 0 : index
    %52 = vector.load %arg4[%c2_53, %c0_54, %c0_55] : memref<3x384x128xbf16, #tpu.memory_space<vmem>>, vector<1x384x128xbf16>
    %53 = vector.shape_cast %52 : vector<1x384x128xbf16> to vector<384x128xbf16>
    %cst_56 = arith.constant dense<0.000000e+00> : vector<256x128xf32>
    %54 = tpu.matmul %51, %53, %cst_56 {dimension_numbers = #tpu.dot_dimension_numbers<[1], [0], [0], [1], [0, 0, 1, 1], [], []>} : vector<256x384xbf16>, vector<384x128xbf16>, vector<256x128xf32> -> vector<256x128xf32>
    %55 = arith.addf %46, %54 : vector<256x128xf32>
    %56 = vector.shape_cast %55 : vector<256x128xf32> to vector<16x16x128xf32>
    %57 = arith.truncf %56 : vector<16x16x128xf32> to vector<16x16x128xbf16>
    %c0_57 = arith.constant 0 : index
    %c0_58 = arith.constant 0 : index
    %c0_59 = arith.constant 0 : index
    %c0_60 = arith.constant 0 : index
    %58 = vector.load %arg5[%c0_57, %c0_58, %c0_59, %c0_60] : memref<1x16x16x128xbf16, #tpu.memory_space<vmem>>, vector<1x16x16x128xbf16>
    %59 = vector.shape_cast %58 : vector<1x16x16x128xbf16> to vector<16x16x128xbf16>
    %60 = vector.shape_cast %57 : vector<16x16x128xbf16> to vector<1x16x16x128xbf16>
    tpu.vector_store %arg5[%c0_57, %c0_58, %c0_59, %c0_60], %60 {strides = array<i32>} : memref<1x16x16x128xbf16, #tpu.memory_space<vmem>>, vector<1x16x16x128xbf16>,
    %cst_61 = arith.constant dense<0.000000e+00> : vector<128xf32>
    %61 = vector.multi_reduction <add>, %55, %cst_61 [0] : vector<256x128xf32> to vector<128xf32>
    %62 = vector.shape_cast %61 : vector<128xf32> to vector<1x128xf32>
    %63 = arith.addf %9, %62 : vector<1x128xf32>
    %64 = arith.mulf %55, %55 : vector<256x128xf32>
    %cst_62 = arith.constant dense<0.000000e+00> : vector<128xf32>
    %65 = vector.multi_reduction <add>, %64, %cst_62 [0] : vector<256x128xf32> to vector<128xf32>
    %66 = vector.shape_cast %65 : vector<128xf32> to vector<1x128xf32>
    %67 = arith.addf %10, %66 : vector<1x128xf32>
    %68 = tpu.concatenate %63, %67 in 0 : vector<1x128xf32>, vector<1x128xf32> -> vector<2x128xf32>
    %c0_63 = arith.constant 0 : index
    %c0_64 = arith.constant 0 : index
    %c0_65 = arith.constant 0 : index
    %69 = vector.load %arg6[%c0_63, %c0_64, %c0_65] : memref<1x2x128xf32, #tpu.memory_space<vmem>>, vector<1x2x128xf32>
    %70 = vector.shape_cast %69 : vector<1x2x128xf32> to vector<2x128xf32>
    %71 = vector.shape_cast %68 : vector<2x128xf32> to vector<1x2x128xf32>
    tpu.vector_store %arg6[%c0_63, %c0_64, %c0_65], %71 {strides = array<i32>} : memref<1x2x128xf32, #tpu.memory_space<vmem>>, vector<1x2x128xf32>,
    return
  }
  func.func @transform_0(%arg0: i32) -> (i32, i32, i32, i32) {
    %c0_i32 = arith.constant 0 : i32
    %c0_i32_0 = arith.constant 0 : i32
    %c0_i32_1 = arith.constant 0 : i32
    %c0_i32_2 = arith.constant 0 : i32
    return %arg0, %c0_i32, %c0_i32_0, %c0_i32_1 : i32, i32, i32, i32
  }
  func.func @transform_1(%arg0: i32) -> (i32, i32) {
    %c0_i32 = arith.constant 0 : i32
    %c0_i32_0 = arith.constant 0 : i32
    %c0_i32_1 = arith.constant 0 : i32
    return %c0_i32, %c0_i32_0 : i32, i32
  }
  func.func @transform_2(%arg0: i32) -> (i32, i32) {
    %c0_i32 = arith.constant 0 : i32
    %c0_i32_0 = arith.constant 0 : i32
    %c0_i32_1 = arith.constant 0 : i32
    return %c0_i32, %c0_i32_0 : i32, i32
  }
  func.func @transform_3(%arg0: i32) -> (i32, i32, i32) {
    %c0_i32 = arith.constant 0 : i32
    %c0_i32_0 = arith.constant 0 : i32
    %c0_i32_1 = arith.constant 0 : i32
    %c0_i32_2 = arith.constant 0 : i32
    return %c0_i32, %c0_i32_0, %c0_i32_1 : i32, i32, i32
  }
  func.func @transform_4(%arg0: i32) -> (i32, i32, i32, i32) {
    %c0_i32 = arith.constant 0 : i32
    %c0_i32_0 = arith.constant 0 : i32
    %c0_i32_1 = arith.constant 0 : i32
    %c0_i32_2 = arith.constant 0 : i32
    return %arg0, %c0_i32, %c0_i32_0, %c0_i32_1 : i32, i32, i32, i32
  }
  func.func @transform_5(%arg0: i32) -> (i32, i32, i32) {
    %c0_i32 = arith.constant 0 : i32
    %c0_i32_0 = arith.constant 0 : i32
    %c0_i32_1 = arith.constant 0 : i32
    return %arg0, %c0_i32, %c0_i32_0 : i32, i32, i32
  }
}

module attributes {stable_mosaic.version = 11 : i64} {
  func.func @_bn_add_relu_kernel(%arg0: i32, %arg1: memref<1x16x16x128xbf16, #tpu.memory_space<vmem>>, %arg2: memref<1x128xf32, #tpu.memory_space<vmem>>, %arg3: memref<1x128xf32, #tpu.memory_space<vmem>>, %arg4: memref<1x16x18x128xbf16, #tpu.memory_space<vmem>>, %arg5: memref<1x16x16x128xf32, #tpu.memory_space<vmem>>) attributes {dimension_semantics = [#tpu.dimension_semantics<parallel>], iteration_bounds = array<i64: 2>, scalar_prefetch = 0 : i64, scratch_operands = 0 : i64, tpu.core_type = #tpu.core_type<tc>, window_params = [{transform_indices = @transform_0, window_bounds = array<i64: 1, 16, 16, 128>}, {pipeline_mode = #tpu.pipeline_mode<synchronous>, transform_indices = @transform_1, window_bounds = array<i64: 1, 128>}, {pipeline_mode = #tpu.pipeline_mode<synchronous>, transform_indices = @transform_2, window_bounds = array<i64: 1, 128>}, {transform_indices = @transform_3, window_bounds = array<i64: 1, 16, 18, 128>}, {transform_indices = @transform_4, window_bounds = array<i64: 1, 16, 16, 128>}]} {
    %c0 = arith.constant 0 : index
    %c0_0 = arith.constant 0 : index
    %c0_1 = arith.constant 0 : index
    %c0_2 = arith.constant 0 : index
    %0 = vector.load %arg1[%c0, %c0_0, %c0_1, %c0_2] : memref<1x16x16x128xbf16, #tpu.memory_space<vmem>>, vector<1x16x16x128xbf16>
    %1 = arith.extf %0 : vector<1x16x16x128xbf16> to vector<1x16x16x128xf32>
    %c0_3 = arith.constant 0 : index
    %c0_4 = arith.constant 0 : index
    %c1 = arith.constant 1 : index
    %c0_5 = arith.constant 0 : index
    %2 = vector.load %arg4[%c0_3, %c0_4, %c1, %c0_5] : memref<1x16x18x128xbf16, #tpu.memory_space<vmem>>, vector<1x16x16x128xbf16>
    %3 = arith.extf %2 : vector<1x16x16x128xbf16> to vector<1x16x16x128xf32>
    %c0_6 = arith.constant 0 : index
    %c0_7 = arith.constant 0 : index
    %4 = vector.load %arg2[%c0_6, %c0_7] : memref<1x128xf32, #tpu.memory_space<vmem>>, vector<1x128xf32>
    %5 = vector.shape_cast %4 : vector<1x128xf32> to vector<1x1x1x128xf32>
    %6 = vector.broadcast %5 : vector<1x1x1x128xf32> to vector<1x16x16x128xf32>
    %7 = arith.mulf %1, %6 : vector<1x16x16x128xf32>
    %c0_8 = arith.constant 0 : index
    %c0_9 = arith.constant 0 : index
    %8 = vector.load %arg3[%c0_8, %c0_9] : memref<1x128xf32, #tpu.memory_space<vmem>>, vector<1x128xf32>
    %9 = vector.shape_cast %8 : vector<1x128xf32> to vector<1x1x1x128xf32>
    %10 = vector.broadcast %9 : vector<1x1x1x128xf32> to vector<1x16x16x128xf32>
    %11 = arith.addf %7, %10 : vector<1x16x16x128xf32>
    %12 = arith.addf %11, %3 : vector<1x16x16x128xf32>
    %cst = arith.constant 0.000000e+00 : f32
    %13 = vector.broadcast %cst : f32 to vector<1x16x16x128xf32>
    %14 = arith.maximumf %12, %13 : vector<1x16x16x128xf32>
    %c0_10 = arith.constant 0 : index
    %c0_11 = arith.constant 0 : index
    %c0_12 = arith.constant 0 : index
    %c0_13 = arith.constant 0 : index
    %15 = vector.load %arg5[%c0_10, %c0_11, %c0_12, %c0_13] : memref<1x16x16x128xf32, #tpu.memory_space<vmem>>, vector<1x16x16x128xf32>
    tpu.vector_store %arg5[%c0_10, %c0_11, %c0_12, %c0_13], %14 {strides = array<i32>} : memref<1x16x16x128xf32, #tpu.memory_space<vmem>>, vector<1x16x16x128xf32>,
    return
  }
  func.func @transform_0(%arg0: i32) -> (i32, i32, i32, i32) {
    %c0_i32 = arith.constant 0 : i32
    %c0_i32_0 = arith.constant 0 : i32
    %c0_i32_1 = arith.constant 0 : i32
    %c0_i32_2 = arith.constant 0 : i32
    return %arg0, %c0_i32, %c0_i32_0, %c0_i32_1 : i32, i32, i32, i32
  }
  func.func @transform_1(%arg0: i32) -> (i32, i32) {
    %c0_i32 = arith.constant 0 : i32
    %c0_i32_0 = arith.constant 0 : i32
    %c0_i32_1 = arith.constant 0 : i32
    return %c0_i32, %c0_i32_0 : i32, i32
  }
  func.func @transform_2(%arg0: i32) -> (i32, i32) {
    %c0_i32 = arith.constant 0 : i32
    %c0_i32_0 = arith.constant 0 : i32
    %c0_i32_1 = arith.constant 0 : i32
    return %c0_i32, %c0_i32_0 : i32, i32
  }
  func.func @transform_3(%arg0: i32) -> (i32, i32, i32, i32) {
    %c0_i32 = arith.constant 0 : i32
    %c0_i32_0 = arith.constant 0 : i32
    %c0_i32_1 = arith.constant 0 : i32
    %c0_i32_2 = arith.constant 0 : i32
    return %arg0, %c0_i32, %c0_i32_0, %c0_i32_1 : i32, i32, i32, i32
  }
  func.func @transform_4(%arg0: i32) -> (i32, i32, i32, i32) {
    %c0_i32 = arith.constant 0 : i32
    %c0_i32_0 = arith.constant 0 : i32
    %c0_i32_1 = arith.constant 0 : i32
    %c0_i32_2 = arith.constant 0 : i32
    return %arg0, %c0_i32, %c0_i32_0, %c0_i32_1 : i32, i32, i32, i32
  }
}

</mosaic_0001>

<llo_original>
// kernel: basic_block_forward.5
$region0: #{basic_block_forward.5}
  #allocation0 [shape = 'u32[]', space=smem, size = 0x4, offset = 0x4, fixed_abs, tag = 'smem constant byte address 0x4 - core index']
  #allocation1 [shape = 'u32[144,128]{1,0:T(1,128)}', space=vmem, size = 0x12000, scoped, tag = 'internal scratch']
  %s0 = inlined_call_operand.vmem [shape: bf16[2,16,16,128], index: 0, kind: input, shape index: {}]
  %s1 = inlined_call_operand.vmem [shape: f32[1,128], index: 1, kind: input, shape index: {}]
  %s2 = inlined_call_operand.vmem [shape: f32[1,128], index: 2, kind: input, shape index: {}]
  %s3 = inlined_call_operand.vmem [shape: bf16[2,16,18,128], index: 3, kind: input, shape index: {}]
  %s4 = inlined_call_operand.vmem [shape: f32[2,16,16,128], index: 4, kind: output, shape index: {}]
  %s5 = sld [smem:[#allocation0]]
  $region49: #{basic_block_forward.5} parent=0
    _
  %s7 = ssub.s32 1, %s5
  %s8 = scalar_select 0, %s7, %s5
  loop: start=0, step=1, limit=4
  $region2: #{basic_block_forward.5} parent=0 // loop_pre_header
    _
  $region3: #{basic_block_forward.5} parent=0 // loop_header
    %s10 = sphi 0, %s14
    %p11 = scmp.ge.s32.totalorder %s10, 4
    %s20 = sphi 0, %s22
    %s23 = sphi 0, %s20
    %s24 = sphi 0, %s23
    %s40 = sphi 0, %s24
    %s44 = sphi 0, %s44
    %s46 = sphi 0, %s44
    %s47 = sphi 0, %s46
    %s61 = sphi 0, %s47
    %s65 = sphi 0, %s65
    %s67 = sphi 0, %s65
    %s68 = sphi 0, %s67
    %s82 = sphi 0, %s68
    %s88 = sphi 0, %s90
    %s91 = sphi 0, %s88
    %s92 = sphi 0, %s91
    %s108 = sphi 0, %s92
    %s114 = sphi 0, %s116
    %s117 = sphi 0, %s114
    %s118 = sphi 0, %s117
    %s134 = sphi 0, %s118
  $region4: #{basic_block_forward.5} parent=0 // loop_header_branch
    %13 = sbr.rel (%p11) target = $region8
  $region5: #{basic_block_forward.5} parent=0 // loop_body
    %s15 = ssub.s32 %s10, 1
    %s16 = ssub.s32 %s10, 2
    %s17 = sadd.s32 %s10, 1
    %s18 = ssub.s32 %s10, %s17
    %p19 = scmp.eq.s32.totalorder %s18, 0
    %s21 = sadd.s32 %s20, 1
    %s22 = scalar_select %p19, %s20, %s21
    %p25 = pneg %p19
    %p26 = scmp.eq.s32.totalorder %s10, 1
    %p27 = por %p25, %p26
    %p28 = scmp.ne.s32.totalorder %s20, %s23
    %p29 = scmp.eq.s32.totalorder %s10, 0
    %p30 = por %p28, %p29
    %p31 = scmp.ne.s32.totalorder %s20, %s23
    %p32 = scmp.eq.s32.totalorder %s15, 1
    %p33 = por %p31, %p32
    %p34 = scmp.ne.s32.totalorder %s23, %s24
    %p35 = scmp.eq.s32.totalorder %s15, 0
    %p36 = por %p34, %p35
    %p37 = scmp.ne.s32.totalorder %s23, %s24
    %p38 = scmp.eq.s32.totalorder %s16, 1
    %p39 = por %p37, %p38
    %p41 = scmp.ne.s32.totalorder %s24, %s40
    %p42 = scmp.eq.s32.totalorder %s16, 0
    %p43 = por %p41, %p42
    %s45 = sadd.s32 %s44, 1
    %p48 = scmp.eq.s32.totalorder %s10, 1
    %p49 = scmp.ne.s32.totalorder %s44, %s46
    %p50 = scmp.eq.s32.totalorder %s10, 0
    %p51 = por %p49, %p50
    %p52 = scmp.ne.s32.totalorder %s44, %s46
    %p53 = scmp.eq.s32.totalorder %s15, 1
    %p54 = por %p52, %p53
    %p55 = scmp.ne.s32.totalorder %s46, %s47
    %p56 = scmp.eq.s32.totalorder %s15, 0
    %p57 = por %p55, %p56
    %p58 = scmp.ne.s32.totalorder %s46, %s47
    %p59 = scmp.eq.s32.totalorder %s16, 1
    %p60 = por %p58, %p59
    %p62 = scmp.ne.s32.totalorder %s47, %s61
    %p63 = scmp.eq.s32.totalorder %s16, 0
    %p64 = por %p62, %p63
    %s66 = sadd.s32 %s65, 1
    %p69 = scmp.eq.s32.totalorder %s10, 1
    %p70 = scmp.ne.s32.totalorder %s65, %s67
    %p71 = scmp.eq.s32.totalorder %s10, 0
    %p72 = por %p70, %p71
    %p73 = scmp.ne.s32.totalorder %s65, %s67
    %p74 = scmp.eq.s32.totalorder %s15, 1
    %p75 = por %p73, %p74
    %p76 = scmp.ne.s32.totalorder %s67, %s68
    %p77 = scmp.eq.s32.totalorder %s15, 0
    %p78 = por %p76, %p77
    %p79 = scmp.ne.s32.totalorder %s67, %s68
    %p80 = scmp.eq.s32.totalorder %s16, 1
    %p81 = por %p79, %p80
    %p83 = scmp.ne.s32.totalorder %s68, %s82
    %p84 = scmp.eq.s32.totalorder %s16, 0
    %p85 = por %p83, %p84
    %s86 = ssub.s32 %s10, %s17
    %p87 = scmp.eq.s32.totalorder %s86, 0
    %s89 = sadd.s32 %s88, 1
    %s90 = scalar_select %p87, %s88, %s89
    %p93 = pneg %p87
    %p94 = scmp.eq.s32.totalorder %s10, 1
    %p95 = por %p93, %p94
    %p96 = scmp.ne.s32.totalorder %s88, %s91
    %p97 = scmp.eq.s32.totalorder %s10, 0
    %p98 = por %p96, %p97
    %p99 = scmp.ne.s32.totalorder %s88, %s91
    %p100 = scmp.eq.s32.totalorder %s15, 1
    %p101 = por %p99, %p100
    %p102 = scmp.ne.s32.totalorder %s91, %s92
    %p103 = scmp.eq.s32.totalorder %s15, 0
    %p104 = por %p102, %p103
    %p105 = scmp.ne.s32.totalorder %s91, %s92
    %p106 = scmp.eq.s32.totalorder %s16, 1
    %p107 = por %p105, %p106
    %p109 = scmp.ne.s32.totalorder %s92, %s108
    %p110 = scmp.eq.s32.totalorder %s16, 0
    %p111 = por %p109, %p110
    %s112 = ssub.s32 %s10, %s17
    %p113 = scmp.eq.s32.totalorder %s112, 0
    %s115 = sadd.s32 %s114, 1
    %s116 = scalar_select %p113, %s114, %s115
    %p119 = pneg %p113
    %p120 = scmp.eq.s32.totalorder %s10, 1
    %p121 = por %p119, %p120
    %p122 = scmp.ne.s32.totalorder %s114, %s117
    %p123 = scmp.eq.s32.totalorder %s10, 0
    %p124 = por %p122, %p123
    %p125 = scmp.ne.s32.totalorder %s114, %s117
    %p126 = scmp.eq.s32.totalorder %s15, 1
    %p127 = por %p125, %p126
    %p128 = scmp.ne.s32.totalorder %s117, %s118
    %p129 = scmp.eq.s32.totalorder %s15, 0
    %p130 = por %p128, %p129
    %p131 = scmp.ne.s32.totalorder %s117, %s118
    %p132 = scmp.eq.s32.totalorder %s16, 1
    %p133 = por %p131, %p132
    %p135 = scmp.ne.s32.totalorder %s118, %s134
    %p136 = scmp.eq.s32.totalorder %s16, 0
    %p137 = por %p135, %p136
    %p138 = scmp.le.s32.totalorder 1, %s10
    %p139 = scmp.lt.s32.totalorder %s10, 3
    %p140 = pnand %p138, %p139
    %p141 = pneg %p140
    // Predicated region
    $region9: #{basic_block_forward.5} parent=5 // pred_check
      _
    $region10: #{basic_block_forward.5} parent=5 // pred_check_branch
      %143 = sbr.rel (%p140) target = $region12
    $region11: #{basic_block_forward.5} parent=5 // pred_region
      %s144 = ssub.s32 %s10, 1
      // Predicated region
      $region13: #{basic_block_forward.5} parent=11 // pred_check
        %p145 = pneg %p57
      $region14: #{basic_block_forward.5} parent=11 // pred_check_branch
        %147 = sbr.rel (%p145) target = $region16
      $region15: #{basic_block_forward.5} parent=11 // pred_region
        _
      $region16: #{basic_block_forward.5} parent=11 // pred_fallthru
        _
      // Predicated region
      $region17: #{basic_block_forward.5} parent=11 // pred_check
        %p148 = pneg %p78
      $region18: #{basic_block_forward.5} parent=11 // pred_check_branch
        %150 = sbr.rel (%p148) target = $region20
      $region19: #{basic_block_forward.5} parent=11 // pred_region
        _
      $region20: #{basic_block_forward.5} parent=11 // pred_fallthru
        _
    $region12: #{basic_block_forward.5} parent=5 // pred_fallthru
      _
    %p151 = scmp.lt.s32.totalorder %s10, 2
    // Predicated region
    $region21: #{basic_block_forward.5} parent=5 // pred_check
      %p152 = pneg %p151
    $region22: #{basic_block_forward.5} parent=5 // pred_check_branch
      %154 = sbr.rel (%p152) target = $region24
    $region23: #{basic_block_forward.5} parent=5 // pred_region
      // Predicated region
      $region25: #{basic_block_forward.5} parent=23 // pred_check
        %p155 = pneg %p30
      $region26: #{basic_block_forward.5} parent=23 // pred_check_branch
        %157 = sbr.rel (%p155) target = $region28
      $region27: #{basic_block_forward.5} parent=23 // pred_region
        %p158 = scmp.lt.s32.totalorder %s10, 1
        %s159 = scalar_select %p158, %s10, 1
        %s160 = smul.addr %s159, 32
        %s161 = smul.addr %s160, 4
        %s162 = scalar_lea.vmem %s0, %s161
      $region28: #{basic_block_forward.5} parent=23 // pred_fallthru
        _
      // Predicated region
      $region29: #{basic_block_forward.5} parent=23 // pred_check
        %p163 = pneg %p98
      $region30: #{basic_block_forward.5} parent=23 // pred_check_branch
        %165 = sbr.rel (%p163) target = $region32
      $region31: #{basic_block_forward.5} parent=23 // pred_region
        %p166 = scmp.lt.s32.totalorder %s10, 1
        %s167 = scalar_select %p166, %s10, 1
        %s168 = smul.addr %s167, 48
        %s169 = smul.addr %s168, 4
        %s170 = scalar_lea.vmem %s3, %s169
      $region32: #{basic_block_forward.5} parent=23 // pred_fallthru
        _
    $region24: #{basic_block_forward.5} parent=5 // pred_fallthru
      _
    %p171 = scmp.le.s32.totalorder 1, %s10
    %p172 = scmp.lt.s32.totalorder %s10, 3
    %p173 = pnand %p171, %p172
    %p174 = pneg %p173
    // Predicated region
    $region33: #{basic_block_forward.5} parent=5 // pred_check
      _
    $region34: #{basic_block_forward.5} parent=5 // pred_check_branch
      %176 = sbr.rel (%p173) target = $region36
    $region35: #{basic_block_forward.5} parent=5 // pred_region
      %s177 = ssub.s32 %s10, 1
      %p178 = scmp.lt.s32.totalorder %s15, 1
      %s179 = scalar_select %p178, %s15, 1
      %s180 = smul.addr %s179, 32
      %s181 = smul.addr %s180, 4
      %s182 = scalar_lea.vmem %s0, %s181
      %p183 = pneg %p36
      %p184 = pneg %p33
      %p185 = pneg %p57
      %p186 = pneg %p54
      %p187 = pneg %p78
      %p188 = pneg %p75
      %p189 = scmp.lt.s32.totalorder %s15, 1
      %s190 = scalar_select %p189, %s15, 1
      %s191 = smul.addr %s190, 48
      %s192 = smul.addr %s191, 4
      %s193 = scalar_lea.vmem %s3, %s192
      %p194 = pneg %p104
      %p195 = pneg %p101
      %p196 = pneg %p130
      %p197 = pneg %p127
      %p198 = scmp.lt.s32.totalorder %s15, 1
      %s199 = scalar_select %p198, %s15, 1
      %s200 = smul.addr %s199, 32
      %s201 = smul.addr %s200, 8
      %s202 = scalar_lea.vmem %s4, %s201
      %p203 = scmp.lt.s32.totalorder %s15, 1
      %s204 = scalar_select %p203, %s15, 1
      %s205 = smul.addr %s204, 32
      %s206 = smul.addr %s205, 4
      %s207 = scalar_lea.vmem %s0, %s206
      %p208 = scmp.lt.s32.totalorder %s15, 1
      %s209 = scalar_select %p208, %s15, 1
      %s210 = smul.addr %s209, 48
      %s211 = smul.addr %s210, 4
      %s212 = scalar_lea.vmem %s3, %s211
      %p213 = scmp.lt.s32.totalorder %s15, 1
      %s214 = scalar_select %p213, %s15, 1
      %s215 = smul.addr %s214, 32
      %s216 = smul.addr %s215, 8
      %s217 = scalar_lea.vmem %s4, %s216
      %v218 = vld [vmem:[%s207] sm:$0xf]
      %v219 = vld [vmem:[%s207 + $0x4] sm:$0xf]
      %v220 = vld [vmem:[%s207 + $0x8] sm:$0xf]
      %v221 = vld [vmem:[%s207 + $0xc] sm:$0xf]
      %v222 = vld [vmem:[%s207 + $0x10] sm:$0xf]
      %v223 = vld [vmem:[%s207 + $0x14] sm:$0xf]
      %v224 = vld [vmem:[%s207 + $0x18] sm:$0xf]
      %v225 = vld [vmem:[%s207 + $0x1c] sm:$0xf]
      %v226 = vld [vmem:[%s207 + $0x20] sm:$0xf]
      %v227 = vld [vmem:[%s207 + $0x24] sm:$0xf]
      %v228 = vld [vmem:[%s207 + $0x28] sm:$0xf]
      %v229 = vld [vmem:[%s207 + $0x2c] sm:$0xf]
      %v230 = vld [vmem:[%s207 + $0x30] sm:$0xf]
      %v231 = vld [vmem:[%s207 + $0x34] sm:$0xf]
      %v232 = vld [vmem:[%s207 + $0x38] sm:$0xf]
      %v233 = vld [vmem:[%s207 + $0x3c] sm:$0xf]
      %v234 = vld [vmem:[%s207 + $0x40] sm:$0xf]
      %v235 = vld [vmem:[%s207 + $0x44] sm:$0xf]
      %v236 = vld [vmem:[%s207 + $0x48] sm:$0xf]
      %v237 = vld [vmem:[%s207 + $0x4c] sm:$0xf]
      %v238 = vld [vmem:[%s207 + $0x50] sm:$0xf]
      %v239 = vld [vmem:[%s207 + $0x54] sm:$0xf]
      %v240 = vld [vmem:[%s207 + $0x58] sm:$0xf]
      %v241 = vld [vmem:[%s207 + $0x5c] sm:$0xf]
      %v242 = vld [vmem:[%s207 + $0x60] sm:$0xf]
      %v243 = vld [vmem:[%s207 + $0x64] sm:$0xf]
      %v244 = vld [vmem:[%s207 + $0x68] sm:$0xf]
      %v245 = vld [vmem:[%s207 + $0x6c] sm:$0xf]
      %v246 = vld [vmem:[%s207 + $0x70] sm:$0xf]
      %v247 = vld [vmem:[%s207 + $0x74] sm:$0xf]
      %v248 = vld [vmem:[%s207 + $0x78] sm:$0xf]
      %v249 = vld [vmem:[%s207 + $0x7c] sm:$0xf]
      %v250 = vunpack.c.l.bf16 %v218
      %v251 = vunpack.c.l.bf16 %v219
      %v252 = vunpack.c.l.bf16 %v220
      %v253 = vunpack.c.l.bf16 %v221
      %v254 = vunpack.c.l.bf16 %v222
      %v255 = vunpack.c.l.bf16 %v223
      %v256 = vunpack.c.l.bf16 %v224
      %v257 = vunpack.c.l.bf16 %v225
      %v258 = vunpack.c.l.bf16 %v226
      %v259 = vunpack.c.l.bf16 %v227
      %v260 = vunpack.c.l.bf16 %v228
      %v261 = vunpack.c.l.bf16 %v229
      %v262 = vunpack.c.l.bf16 %v230
      %v263 = vunpack.c.l.bf16 %v231
      %v264 = vunpack.c.l.bf16 %v232
      %v265 = vunpack.c.l.bf16 %v233
      %v266 = vunpack.c.l.bf16 %v234
      %v267 = vunpack.c.l.bf16 %v235
      %v268 = vunpack.c.l.bf16 %v236
      %v269 = vunpack.c.l.bf16 %v237
      %v270 = vunpack.c.l.bf16 %v238
      %v271 = vunpack.c.l.bf16 %v239
      %v272 = vunpack.c.l.bf16 %v240
      %v273 = vunpack.c.l.bf16 %v241
      %v274 = vunpack.c.l.bf16 %v242
      %v275 = vunpack.c.l.bf16 %v243
      %v276 = vunpack.c.l.bf16 %v244
      %v277 = vunpack.c.l.bf16 %v245
      %v278 = vunpack.c.l.bf16 %v246
      %v279 = vunpack.c.l.bf16 %v247
      %v280 = vunpack.c.l.bf16 %v248
      %v281 = vunpack.c.l.bf16 %v249
      %v282 = vld [vmem:[%s212] sm:$0xf]
      %v283 = vld [vmem:[%s212 + $0x4] sm:$0xf]
      %v284 = vld [vmem:[%s212 + $0x8] sm:$0x1]
      %v285 = vld [vmem:[%s212 + $0xc] sm:$0xf]
      %v286 = vld [vmem:[%s212 + $0x10] sm:$0xf]
      %v287 = vld [vmem:[%s212 + $0x14] sm:$0x1]
      %v288 = vld [vmem:[%s212 + $0x18] sm:$0xf]
      %v289 = vld [vmem:[%s212 + $0x1c] sm:$0xf]
      %v290 = vld [vmem:[%s212 + $0x20] sm:$0x1]
      %v291 = vld [vmem:[%s212 + $0x24] sm:$0xf]
      %v292 = vld [vmem:[%s212 + $0x28] sm:$0xf]
      %v293 = vld [vmem:[%s212 + $0x2c] sm:$0x1]
      %v294 = vld [vmem:[%s212 + $0x30] sm:$0xf]
      %v295 = vld [vmem:[%s212 + $0x34] sm:$0xf]
      %v296 = vld [vmem:[%s212 + $0x38] sm:$0x1]
      %v297 = vld [vmem:[%s212 + $0x3c] sm:$0xf]
      %v298 = vld [vmem:[%s212 + $0x40] sm:$0xf]
      %v299 = vld [vmem:[%s212 + $0x44] sm:$0x1]
      %v300 = vld [vmem:[%s212 + $0x48] sm:$0xf]
      %v301 = vld [vmem:[%s212 + $0x4c] sm:$0xf]
      %v302 = vld [vmem:[%s212 + $0x50] sm:$0x1]
      %v303 = vld [vmem:[%s212 + $0x54] sm:$0xf]
      %v304 = vld [vmem:[%s212 + $0x58] sm:$0xf]
      %v305 = vld [vmem:[%s212 + $0x5c] sm:$0x1]
      %v306 = vld [vmem:[%s212 + $0x60] sm:$0xf]
      %v307 = vld [vmem:[%s212 + $0x64] sm:$0xf]
      %v308 = vld [vmem:[%s212 + $0x68] sm:$0x1]
      %v309 = vld [vmem:[%s212 + $0x6c] sm:$0xf]
      %v310 = vld [vmem:[%s212 + $0x70] sm:$0xf]
      %v311 = vld [vmem:[%s212 + $0x74] sm:$0x1]
      %v312 = vld [vmem:[%s212 + $0x78] sm:$0xf]
      %v313 = vld [vmem:[%s212 + $0x7c] sm:$0xf]
      %v314 = vld [vmem:[%s212 + $0x80] sm:$0x1]
      %v315 = vld [vmem:[%s212 + $0x84] sm:$0xf]
      %v316 = vld [vmem:[%s212 + $0x88] sm:$0xf]
      %v317 = vld [vmem:[%s212 + $0x8c] sm:$0x1]
      %v318 = vld [vmem:[%s212 + $0x90] sm:$0xf]
      %v319 = vld [vmem:[%s212 + $0x94] sm:$0xf]
      %v320 = vld [vmem:[%s212 + $0x98] sm:$0x1]
      %v321 = vld [vmem:[%s212 + $0x9c] sm:$0xf]
      %v322 = vld [vmem:[%s212 + $0xa0] sm:$0xf]
      %v323 = vld [vmem:[%s212 + $0xa4] sm:$0x1]
      %v324 = vld [vmem:[%s212 + $0xa8] sm:$0xf]
      %v325 = vld [vmem:[%s212 + $0xac] sm:$0xf]
      %v326 = vld [vmem:[%s212 + $0xb0] sm:$0x1]
      %v327 = vld [vmem:[%s212 + $0xb4] sm:$0xf]
      %v328 = vld [vmem:[%s212 + $0xb8] sm:$0xf]
      %v329 = vld [vmem:[%s212 + $0xbc] sm:$0x1]
      %v330 = vunpack.c.l.bf16 %v282
      %v331 = vunpack.c.l.bf16 %v283
      %v332 = vunpack.c.l.bf16 %v284
      %v333 = vunpack.c.l.bf16 %v285
      %v334 = vunpack.c.l.bf16 %v286
      %v335 = vunpack.c.l.bf16 %v287
      %v336 = vunpack.c.l.bf16 %v288
      %v337 = vunpack.c.l.bf16 %v289
      %v338 = vunpack.c.l.bf16 %v290
      %v339 = vunpack.c.l.bf16 %v291
      %v340 = vunpack.c.l.bf16 %v292
      %v341 = vunpack.c.l.bf16 %v293
      %v342 = vunpack.c.l.bf16 %v294
      %v343 = vunpack.c.l.bf16 %v295
      %v344 = vunpack.c.l.bf16 %v296
      %v345 = vunpack.c.l.bf16 %v297
      %v346 = vunpack.c.l.bf16 %v298
      %v347 = vunpack.c.l.bf16 %v299
      %v348 = vunpack.c.l.bf16 %v300
      %v349 = vunpack.c.l.bf16 %v301
      %v350 = vunpack.c.l.bf16 %v302
      %v351 = vunpack.c.l.bf16 %v303
      %v352 = vunpack.c.l.bf16 %v304
      %v353 = vunpack.c.l.bf16 %v305
      %v354 = vunpack.c.l.bf16 %v306
      %v355 = vunpack.c.l.bf16 %v307
      %v356 = vunpack.c.l.bf16 %v308
      %v357 = vunpack.c.l.bf16 %v309
      %v358 = vunpack.c.l.bf16 %v310
      %v359 = vunpack.c.l.bf16 %v311
      %v360 = vunpack.c.l.bf16 %v312
      %v361 = vunpack.c.l.bf16 %v313
      %v362 = vunpack.c.l.bf16 %v314
      %v363 = vunpack.c.l.bf16 %v315
      %v364 = vunpack.c.l.bf16 %v316
      %v365 = vunpack.c.l.bf16 %v317
      %v366 = vunpack.c.l.bf16 %v318
      %v367 = vunpack.c.l.bf16 %v319
      %v368 = vunpack.c.l.bf16 %v320
      %v369 = vunpack.c.l.bf16 %v321
      %v370 = vunpack.c.l.bf16 %v322
      %v371 = vunpack.c.l.bf16 %v323
      %v372 = vunpack.c.l.bf16 %v324
      %v373 = vunpack.c.l.bf16 %v325
      %v374 = vunpack.c.l.bf16 %v326
      %v375 = vunpack.c.l.bf16 %v327
      %v376 = vunpack.c.l.bf16 %v328
      %v377 = vunpack.c.l.bf16 %v329
      %v378 = vld [vmem:[%s1] sm:$0x1]
      %v380 = vlaneseq
      %v381 = vshrl.u32 %v380, 7
      %v382 = vsub.s32 0, %v381
      %v383 = vrot.slane %v378, %v382
      %v385 = vmul.f32 %v250, %v383
      %v386 = vmul.f32 %v251, %v383
      %v387 = vmul.f32 %v252, %v383
      %v388 = vmul.f32 %v253, %v383
      %v389 = vmul.f32 %v254, %v383
      %v390 = vmul.f32 %v255, %v383
      %v391 = vmul.f32 %v256, %v383
      %v392 = vmul.f32 %v257, %v383
      %v393 = vmul.f32 %v258, %v383
      %v394 = vmul.f32 %v259, %v383
      %v395 = vmul.f32 %v260, %v383
      %v396 = vmul.f32 %v261, %v383
      %v397 = vmul.f32 %v262, %v383
      %v398 = vmul.f32 %v263, %v383
      %v399 = vmul.f32 %v264, %v383
      %v400 = vmul.f32 %v265, %v383
      %v401 = vmul.f32 %v266, %v383
      %v402 = vmul.f32 %v267, %v383
      %v403 = vmul.f32 %v268, %v383
      %v404 = vmul.f32 %v269, %v383
      %v405 = vmul.f32 %v270, %v383
      %v406 = vmul.f32 %v271, %v383
      %v407 = vmul.f32 %v272, %v383
      %v408 = vmul.f32 %v273, %v383
      %v409 = vmul.f32 %v274, %v383
      %v410 = vmul.f32 %v275, %v383
      %v411 = vmul.f32 %v276, %v383
      %v412 = vmul.f32 %v277, %v383
      %v413 = vmul.f32 %v278, %v383
      %v414 = vmul.f32 %v279, %v383
      %v415 = vmul.f32 %v280, %v383
      %v416 = vmul.f32 %v281, %v383
      %v417 = vld [vmem:[%s2] sm:$0x1]
      %v419 = vlaneseq
      %v420 = vshrl.u32 %v419, 7
      %v421 = vsub.s32 0, %v420
      %v422 = vrot.slane %v417, %v421
      %v424 = vadd.f32 %v385, %v422
      %v425 = vadd.f32 %v386, %v422
      %v426 = vadd.f32 %v387, %v422
      %v427 = vadd.f32 %v388, %v422
      %v428 = vadd.f32 %v389, %v422
      %v429 = vadd.f32 %v390, %v422
      %v430 = vadd.f32 %v391, %v422
      %v431 = vadd.f32 %v392, %v422
      %v432 = vadd.f32 %v393, %v422
      %v433 = vadd.f32 %v394, %v422
      %v434 = vadd.f32 %v395, %v422
      %v435 = vadd.f32 %v396, %v422
      %v436 = vadd.f32 %v397, %v422
      %v437 = vadd.f32 %v398, %v422
      %v438 = vadd.f32 %v399, %v422
      %v439 = vadd.f32 %v400, %v422
      %v440 = vadd.f32 %v401, %v422
      %v441 = vadd.f32 %v402, %v422
      %v442 = vadd.f32 %v403, %v422
      %v443 = vadd.f32 %v404, %v422
      %v444 = vadd.f32 %v405, %v422
      %v445 = vadd.f32 %v406, %v422
      %v446 = vadd.f32 %v407, %v422
      %v447 = vadd.f32 %v408, %v422
      %v448 = vadd.f32 %v409, %v422
      %v449 = vadd.f32 %v410, %v422
      %v450 = vadd.f32 %v411, %v422
      %v451 = vadd.f32 %v412, %v422
      %v452 = vadd.f32 %v413, %v422
      %v453 = vadd.f32 %v414, %v422
      %v454 = vadd.f32 %v415, %v422
      %v455 = vadd.f32 %v416, %v422
      %vm504 = vcmask 1046528
      %v505 = vrot.slane %v330, 1
      %v506 = vrot.slane %v331, 1
      %v507 = vsel %vm504, %v505, %v506
      %v508 = vrot.slane %v332, 1
      %v509 = vsel %vm504, %v506, %v508
      %v510 = vrot.slane %v333, 1
      %v511 = vrot.slane %v334, 1
      %v512 = vsel %vm504, %v510, %v511
      %v513 = vrot.slane %v335, 1
      %v514 = vsel %vm504, %v511, %v513
      %v515 = vrot.slane %v336, 1
      %v516 = vrot.slane %v337, 1
      %v517 = vsel %vm504, %v515, %v516
      %v518 = vrot.slane %v338, 1
      %v519 = vsel %vm504, %v516, %v518
      %v520 = vrot.slane %v339, 1
      %v521 = vrot.slane %v340, 1
      %v522 = vsel %vm504, %v520, %v521
      %v523 = vrot.slane %v341, 1
      %v524 = vsel %vm504, %v521, %v523
      %v525 = vrot.slane %v342, 1
      %v526 = vrot.slane %v343, 1
      %v527 = vsel %vm504, %v525, %v526
      %v528 = vrot.slane %v344, 1
      %v529 = vsel %vm504, %v526, %v528
      %v530 = vrot.slane %v345, 1
      %v531 = vrot.slane %v346, 1
      %v532 = vsel %vm504, %v530, %v531
      %v533 = vrot.slane %v347, 1
      %v534 = vsel %vm504, %v531, %v533
      %v535 = vrot.slane %v348, 1
      %v536 = vrot.slane %v349, 1
      %v537 = vsel %vm504, %v535, %v536
      %v538 = vrot.slane %v350, 1
      %v539 = vsel %vm504, %v536, %v538
      %v540 = vrot.slane %v351, 1
      %v541 = vrot.slane %v352, 1
      %v542 = vsel %vm504, %v540, %v541
      %v543 = vrot.slane %v353, 1
      %v544 = vsel %vm504, %v541, %v543
      %v545 = vrot.slane %v354, 1
      %v546 = vrot.slane %v355, 1
      %v547 = vsel %vm504, %v545, %v546
      %v548 = vrot.slane %v356, 1
      %v549 = vsel %vm504, %v546, %v548
      %v550 = vrot.slane %v357, 1
      %v551 = vrot.slane %v358, 1
      %v552 = vsel %vm504, %v550, %v551
      %v553 = vrot.slane %v359, 1
      %v554 = vsel %vm504, %v551, %v553
      %v555 = vrot.slane %v360, 1
      %v556 = vrot.slane %v361, 1
      %v557 = vsel %vm504, %v555, %v556
      %v558 = vrot.slane %v362, 1
      %v559 = vsel %vm504, %v556, %v558
      %v560 = vrot.slane %v363, 1
      %v561 = vrot.slane %v364, 1
      %v562 = vsel %vm504, %v560, %v561
      %v563 = vrot.slane %v365, 1
      %v564 = vsel %vm504, %v561, %v563
      %v565 = vrot.slane %v366, 1
      %v566 = vrot.slane %v367, 1
      %v567 = vsel %vm504, %v565, %v566
      %v568 = vrot.slane %v368, 1
      %v569 = vsel %vm504, %v566, %v568
      %v570 = vrot.slane %v369, 1
      %v571 = vrot.slane %v370, 1
      %v572 = vsel %vm504, %v570, %v571
      %v573 = vrot.slane %v371, 1
      %v574 = vsel %vm504, %v571, %v573
      %v575 = vrot.slane %v372, 1
      %v576 = vrot.slane %v373, 1
      %v577 = vsel %vm504, %v575, %v576
      %v578 = vrot.slane %v374, 1
      %v579 = vsel %vm504, %v576, %v578
      %v580 = vrot.slane %v375, 1
      %v581 = vrot.slane %v376, 1
      %v582 = vsel %vm504, %v580, %v581
      %v583 = vrot.slane %v377, 1
      %v584 = vsel %vm504, %v581, %v583
      %v617 = vadd.f32 %v424, %v507
      %v618 = vadd.f32 %v425, %v509
      %v619 = vadd.f32 %v426, %v512
      %v620 = vadd.f32 %v427, %v514
      %v621 = vadd.f32 %v428, %v517
      %v622 = vadd.f32 %v429, %v519
      %v623 = vadd.f32 %v430, %v522
      %v624 = vadd.f32 %v431, %v524
      %v625 = vadd.f32 %v432, %v527
      %v626 = vadd.f32 %v433, %v529
      %v627 = vadd.f32 %v434, %v532
      %v628 = vadd.f32 %v435, %v534
      %v629 = vadd.f32 %v436, %v537
      %v630 = vadd.f32 %v437, %v539
      %v631 = vadd.f32 %v438, %v542
      %v632 = vadd.f32 %v439, %v544
      %v633 = vadd.f32 %v440, %v547
      %v634 = vadd.f32 %v441, %v549
      %v635 = vadd.f32 %v442, %v552
      %v636 = vadd.f32 %v443, %v554
      %v637 = vadd.f32 %v444, %v557
      %v638 = vadd.f32 %v445, %v559
      %v639 = vadd.f32 %v446, %v562
      %v640 = vadd.f32 %v447, %v564
      %v641 = vadd.f32 %v448, %v567
      %v642 = vadd.f32 %v449, %v569
      %v643 = vadd.f32 %v450, %v572
      %v644 = vadd.f32 %v451, %v574
      %v645 = vadd.f32 %v452, %v577
      %v646 = vadd.f32 %v453, %v579
      %v647 = vadd.f32 %v454, %v582
      %v648 = vadd.f32 %v455, %v584
      %v649 = vmax.f32 %v617, 0.0
      %v650 = vmax.f32 %v618, 0.0
      %v651 = vmax.f32 %v619, 0.0
      %v652 = vmax.f32 %v620, 0.0
      %v653 = vmax.f32 %v621, 0.0
      %v654 = vmax.f32 %v622, 0.0
      %v655 = vmax.f32 %v623, 0.0
      %v656 = vmax.f32 %v624, 0.0
      %v657 = vmax.f32 %v625, 0.0
      %v658 = vmax.f32 %v626, 0.0
      %v659 = vmax.f32 %v627, 0.0
      %v660 = vmax.f32 %v628, 0.0
      %v661 = vmax.f32 %v629, 0.0
      %v662 = vmax.f32 %v630, 0.0
      %v663 = vmax.f32 %v631, 0.0
      %v664 = vmax.f32 %v632, 0.0
      %v665 = vmax.f32 %v633, 0.0
      %v666 = vmax.f32 %v634, 0.0
      %v667 = vmax.f32 %v635, 0.0
      %v668 = vmax.f32 %v636, 0.0
      %v669 = vmax.f32 %v637, 0.0
      %v670 = vmax.f32 %v638, 0.0
      %v671 = vmax.f32 %v639, 0.0
      %v672 = vmax.f32 %v640, 0.0
      %v673 = vmax.f32 %v641, 0.0
      %v674 = vmax.f32 %v642, 0.0
      %v675 = vmax.f32 %v643, 0.0
      %v676 = vmax.f32 %v644, 0.0
      %v677 = vmax.f32 %v645, 0.0
      %v678 = vmax.f32 %v646, 0.0
      %v679 = vmax.f32 %v647, 0.0
      %v680 = vmax.f32 %v648, 0.0
      %681 = vst [vmem:[%s217] sm:$0xff] %v649
      %682 = vst [vmem:[%s217 + $0x8] sm:$0xff] %v650
      %683 = vst [vmem:[%s217 + $0x10] sm:$0xff] %v651
      %684 = vst [vmem:[%s217 + $0x18] sm:$0xff] %v652
      %685 = vst [vmem:[%s217 + $0x20] sm:$0xff] %v653
      %686 = vst [vmem:[%s217 + $0x28] sm:$0xff] %v654
      %687 = vst [vmem:[%s217 + $0x30] sm:$0xff] %v655
      %688 = vst [vmem:[%s217 + $0x38] sm:$0xff] %v656
      %689 = vst [vmem:[%s217 + $0x40] sm:$0xff] %v657
      %690 = vst [vmem:[%s217 + $0x48] sm:$0xff] %v658
      %691 = vst [vmem:[%s217 + $0x50] sm:$0xff] %v659
      %692 = vst [vmem:[%s217 + $0x58] sm:$0xff] %v660
      %693 = vst [vmem:[%s217 + $0x60] sm:$0xff] %v661
      %694 = vst [vmem:[%s217 + $0x68] sm:$0xff] %v662
      %695 = vst [vmem:[%s217 + $0x70] sm:$0xff] %v663
      %696 = vst [vmem:[%s217 + $0x78] sm:$0xff] %v664
      %697 = vst [vmem:[%s217 + $0x80] sm:$0xff] %v665
      %698 = vst [vmem:[%s217 + $0x88] sm:$0xff] %v666
      %699 = vst [vmem:[%s217 + $0x90] sm:$0xff] %v667
      %700 = vst [vmem:[%s217 + $0x98] sm:$0xff] %v668
      %701 = vst [vmem:[%s217 + $0xa0] sm:$0xff] %v669
      %702 = vst [vmem:[%s217 + $0xa8] sm:$0xff] %v670
      %703 = vst [vmem:[%s217 + $0xb0] sm:$0xff] %v671
      %704 = vst [vmem:[%s217 + $0xb8] sm:$0xff] %v672
      %705 = vst [vmem:[%s217 + $0xc0] sm:$0xff] %v673
      %706 = vst [vmem:[%s217 + $0xc8] sm:$0xff] %v674
      %707 = vst [vmem:[%s217 + $0xd0] sm:$0xff] %v675
      %708 = vst [vmem:[%s217 + $0xd8] sm:$0xff] %v676
      %709 = vst [vmem:[%s217 + $0xe0] sm:$0xff] %v677
      %710 = vst [vmem:[%s217 + $0xe8] sm:$0xff] %v678
      %711 = vst [vmem:[%s217 + $0xf0] sm:$0xff] %v679
      %712 = vst [vmem:[%s217 + $0xf8] sm:$0xff] %v680
      %p713 = scmp.lt.s32.totalorder %s15, 1
      %s714 = scalar_select %p713, %s15, 1
      %s715 = smul.addr %s714, 32
      %s716 = smul.addr %s715, 8
      %s717 = scalar_lea.vmem %s4, %s716
      // Predicated region
      $region37: #{basic_block_forward.5} parent=35 // pred_check
        %p718 = pneg %p127
      $region38: #{basic_block_forward.5} parent=35 // pred_check_branch
        %720 = sbr.rel (%p718) target = $region40
      $region39: #{basic_block_forward.5} parent=35 // pred_region
        _
      $region40: #{basic_block_forward.5} parent=35 // pred_fallthru
        _
    $region36: #{basic_block_forward.5} parent=5 // pred_fallthru
      _
    %p721 = scmp.le.s32.totalorder 2, %s10
    // Predicated region
    $region41: #{basic_block_forward.5} parent=5 // pred_check
      %p722 = pneg %p721
    $region42: #{basic_block_forward.5} parent=5 // pred_check_branch
      %724 = sbr.rel (%p722) target = $region44
    $region43: #{basic_block_forward.5} parent=5 // pred_region
      %s725 = ssub.s32 %s10, 2
      // Predicated region
      $region45: #{basic_block_forward.5} parent=43 // pred_check
        %p726 = pneg %p133
      $region46: #{basic_block_forward.5} parent=43 // pred_check_branch
        %728 = sbr.rel (%p726) target = $region48
      $region47: #{basic_block_forward.5} parent=43 // pred_region
        %p729 = scmp.lt.s32.totalorder %s16, 1
        %s730 = scalar_select %p729, %s16, 1
        %s731 = smul.addr %s730, 32
        %s732 = smul.addr %s731, 8
        %s733 = scalar_lea.vmem %s4, %s732
      $region48: #{basic_block_forward.5} parent=43 // pred_fallthru
        _
    $region44: #{basic_block_forward.5} parent=5 // pred_fallthru
      _
  $region6: #{basic_block_forward.5} parent=0 // loop_footer
    %s14 = sadd.s32 1, %s10
  $region7: #{basic_block_forward.5} parent=0 // loop_footer_branch
    %9 = sbr.rel target = $region3
  $region8: #{basic_block_forward.5} parent=0 // loop_exit
    _

// kernel: basic_block_forward.3
$region0: #{basic_block_forward.3}
  #allocation0 [shape = 'u32[]', space=smem, size = 0x4, offset = 0x4, fixed_abs, tag = 'smem constant byte address 0x4 - core index']
  #allocation1 [shape = 'u32[144,128]{1,0:T(1,128)}', space=vmem, size = 0x12000, scoped, tag = 'internal scratch']
  #allocation2 [shape = 'bf16[18,18,128]{2,1,0:T(8,128)(2,1)}', space=vmem, size = 0x1b000, scoped, tag = 'scratch operand']
  %s0 = inlined_call_operand.vmem [shape: bf16[2,16,18,128], index: 0, kind: input, shape index: {}]
  %s1 = inlined_call_operand.vmem [shape: f32[1,128], index: 1, kind: input, shape index: {}, may-alias: {1,2}]
  %s2 = inlined_call_operand.vmem [shape: f32[1,128], index: 2, kind: input, shape index: {}, may-alias: {1,2}]
  %s3 = inlined_call_operand.vmem [shape: bf16[3,384,128], index: 3, kind: input, shape index: {}]
  %s4 = inlined_call_operand.vmem [shape: bf16[2,16,16,128], index: 4, kind: output, shape index: {0}]
  %s5 = inlined_call_operand.vmem [shape: f32[2,2,128], index: 5, kind: output, shape index: {1}]
  %6 = xla_tuple %s4, %s5
  %s7 = sld [smem:[#allocation0]]
  $region57: #{basic_block_forward.3} parent=0
    _
  %s9 = ssub.s32 1, %s7
  %s10 = scalar_select 0, %s9, %s7
  loop: start=0, step=1, limit=4
  $region2: #{basic_block_forward.3} parent=0 // loop_pre_header
    _
  $region3: #{basic_block_forward.3} parent=0 // loop_header
    %s12 = sphi 0, %s16
    %p13 = scmp.ge.s32.totalorder %s12, 4
    %s22 = sphi 0, %s24
    %s25 = sphi 0, %s22
    %s26 = sphi 0, %s25
    %s42 = sphi 0, %s26
    %s46 = sphi 0, %s46
    %s48 = sphi 0, %s46
    %s49 = sphi 0, %s48
    %s63 = sphi 0, %s49
    %s67 = sphi 0, %s67
    %s69 = sphi 0, %s67
    %s70 = sphi 0, %s69
    %s84 = sphi 0, %s70
    %s88 = sphi 0, %s88
    %s90 = sphi 0, %s88
    %s91 = sphi 0, %s90
    %s105 = sphi 0, %s91
    %s111 = sphi 0, %s113
    %s114 = sphi 0, %s111
    %s115 = sphi 0, %s114
    %s131 = sphi 0, %s115
    %s137 = sphi 0, %s139
    %s140 = sphi 0, %s137
    %s141 = sphi 0, %s140
    %s157 = sphi 0, %s141
  $region4: #{basic_block_forward.3} parent=0 // loop_header_branch
    %15 = sbr.rel (%p13) target = $region8
  $region5: #{basic_block_forward.3} parent=0 // loop_body
    %s17 = ssub.s32 %s12, 1
    %s18 = ssub.s32 %s12, 2
    %s19 = sadd.s32 %s12, 1
    %s20 = ssub.s32 %s12, %s19
    %p21 = scmp.eq.s32.totalorder %s20, 0
    %s23 = sadd.s32 %s22, 1
    %s24 = scalar_select %p21, %s22, %s23
    %p27 = pneg %p21
    %p28 = scmp.eq.s32.totalorder %s12, 1
    %p29 = por %p27, %p28
    %p30 = scmp.ne.s32.totalorder %s22, %s25
    %p31 = scmp.eq.s32.totalorder %s12, 0
    %p32 = por %p30, %p31
    %p33 = scmp.ne.s32.totalorder %s22, %s25
    %p34 = scmp.eq.s32.totalorder %s17, 1
    %p35 = por %p33, %p34
    %p36 = scmp.ne.s32.totalorder %s25, %s26
    %p37 = scmp.eq.s32.totalorder %s17, 0
    %p38 = por %p36, %p37
    %p39 = scmp.ne.s32.totalorder %s25, %s26
    %p40 = scmp.eq.s32.totalorder %s18, 1
    %p41 = por %p39, %p40
    %p43 = scmp.ne.s32.totalorder %s26, %s42
    %p44 = scmp.eq.s32.totalorder %s18, 0
    %p45 = por %p43, %p44
    %s47 = sadd.s32 %s46, 1
    %p50 = scmp.eq.s32.totalorder %s12, 1
    %p51 = scmp.ne.s32.totalorder %s46, %s48
    %p52 = scmp.eq.s32.totalorder %s12, 0
    %p53 = por %p51, %p52
    %p54 = scmp.ne.s32.totalorder %s46, %s48
    %p55 = scmp.eq.s32.totalorder %s17, 1
    %p56 = por %p54, %p55
    %p57 = scmp.ne.s32.totalorder %s48, %s49
    %p58 = scmp.eq.s32.totalorder %s17, 0
    %p59 = por %p57, %p58
    %p60 = scmp.ne.s32.totalorder %s48, %s49
    %p61 = scmp.eq.s32.totalorder %s18, 1
    %p62 = por %p60, %p61
    %p64 = scmp.ne.s32.totalorder %s49, %s63
    %p65 = scmp.eq.s32.totalorder %s18, 0
    %p66 = por %p64, %p65
    %s68 = sadd.s32 %s67, 1
    %p71 = scmp.eq.s32.totalorder %s12, 1
    %p72 = scmp.ne.s32.totalorder %s67, %s69
    %p73 = scmp.eq.s32.totalorder %s12, 0
    %p74 = por %p72, %p73
    %p75 = scmp.ne.s32.totalorder %s67, %s69
    %p76 = scmp.eq.s32.totalorder %s17, 1
    %p77 = por %p75, %p76
    %p78 = scmp.ne.s32.totalorder %s69, %s70
    %p79 = scmp.eq.s32.totalorder %s17, 0
    %p80 = por %p78, %p79
    %p81 = scmp.ne.s32.totalorder %s69, %s70
    %p82 = scmp.eq.s32.totalorder %s18, 1
    %p83 = por %p81, %p82
    %p85 = scmp.ne.s32.totalorder %s70, %s84
    %p86 = scmp.eq.s32.totalorder %s18, 0
    %p87 = por %p85, %p86
    %s89 = sadd.s32 %s88, 1
    %p92 = scmp.eq.s32.totalorder %s12, 1
    %p93 = scmp.ne.s32.totalorder %s88, %s90
    %p94 = scmp.eq.s32.totalorder %s12, 0
    %p95 = por %p93, %p94
    %p96 = scmp.ne.s32.totalorder %s88, %s90
    %p97 = scmp.eq.s32.totalorder %s17, 1
    %p98 = por %p96, %p97
    %p99 = scmp.ne.s32.totalorder %s90, %s91
    %p100 = scmp.eq.s32.totalorder %s17, 0
    %p101 = por %p99, %p100
    %p102 = scmp.ne.s32.totalorder %s90, %s91
    %p103 = scmp.eq.s32.totalorder %s18, 1
    %p104 = por %p102, %p103
    %p106 = scmp.ne.s32.totalorder %s91, %s105
    %p107 = scmp.eq.s32.totalorder %s18, 0
    %p108 = por %p106, %p107
    %s109 = ssub.s32 %s12, %s19
    %p110 = scmp.eq.s32.totalorder %s109, 0
    %s112 = sadd.s32 %s111, 1
    %s113 = scalar_select %p110, %s111, %s112
    %p116 = pneg %p110
    %p117 = scmp.eq.s32.totalorder %s12, 1
    %p118 = por %p116, %p117
    %p119 = scmp.ne.s32.totalorder %s111, %s114
    %p120 = scmp.eq.s32.totalorder %s12, 0
    %p121 = por %p119, %p120
    %p122 = scmp.ne.s32.totalorder %s111, %s114
    %p123 = scmp.eq.s32.totalorder %s17, 1
    %p124 = por %p122, %p123
    %p125 = scmp.ne.s32.totalorder %s114, %s115
    %p126 = scmp.eq.s32.totalorder %s17, 0
    %p127 = por %p125, %p126
    %p128 = scmp.ne.s32.totalorder %s114, %s115
    %p129 = scmp.eq.s32.totalorder %s18, 1
    %p130 = por %p128, %p129
    %p132 = scmp.ne.s32.totalorder %s115, %s131
    %p133 = scmp.eq.s32.totalorder %s18, 0
    %p134 = por %p132, %p133
    %s135 = ssub.s32 %s12, %s19
    %p136 = scmp.eq.s32.totalorder %s135, 0
    %s138 = sadd.s32 %s137, 1
    %s139 = scalar_select %p136, %s137, %s138
    %p142 = pneg %p136
    %p143 = scmp.eq.s32.totalorder %s12, 1
    %p144 = por %p142, %p143
    %p145 = scmp.ne.s32.totalorder %s137, %s140
    %p146 = scmp.eq.s32.totalorder %s12, 0
    %p147 = por %p145, %p146
    %p148 = scmp.ne.s32.totalorder %s137, %s140
    %p149 = scmp.eq.s32.totalorder %s17, 1
    %p150 = por %p148, %p149
    %p151 = scmp.ne.s32.totalorder %s140, %s141
    %p152 = scmp.eq.s32.totalorder %s17, 0
    %p153 = por %p151, %p152
    %p154 = scmp.ne.s32.totalorder %s140, %s141
    %p155 = scmp.eq.s32.totalorder %s18, 1
    %p156 = por %p154, %p155
    %p158 = scmp.ne.s32.totalorder %s141, %s157
    %p159 = scmp.eq.s32.totalorder %s18, 0
    %p160 = por %p158, %p159
    %p161 = scmp.le.s32.totalorder 1, %s12
    %p162 = scmp.lt.s32.totalorder %s12, 3
    %p163 = pnand %p161, %p162
    %p164 = pneg %p163
    // Predicated region
    $region9: #{basic_block_forward.3} parent=5 // pred_check
      _
    $region10: #{basic_block_forward.3} parent=5 // pred_check_branch
      %166 = sbr.rel (%p163) target = $region12
    $region11: #{basic_block_forward.3} parent=5 // pred_region
      %s167 = ssub.s32 %s12, 1
      // Predicated region
      $region13: #{basic_block_forward.3} parent=11 // pred_check
        %p168 = pneg %p59
      $region14: #{basic_block_forward.3} parent=11 // pred_check_branch
        %170 = sbr.rel (%p168) target = $region16
      $region15: #{basic_block_forward.3} parent=11 // pred_region
        _
      $region16: #{basic_block_forward.3} parent=11 // pred_fallthru
        _
      // Predicated region
      $region17: #{basic_block_forward.3} parent=11 // pred_check
        %p171 = pneg %p80
      $region18: #{basic_block_forward.3} parent=11 // pred_check_branch
        %173 = sbr.rel (%p171) target = $region20
      $region19: #{basic_block_forward.3} parent=11 // pred_region
        _
      $region20: #{basic_block_forward.3} parent=11 // pred_fallthru
        _
      // Predicated region
      $region21: #{basic_block_forward.3} parent=11 // pred_check
        %p174 = pneg %p101
      $region22: #{basic_block_forward.3} parent=11 // pred_check_branch
        %176 = sbr.rel (%p174) target = $region24
      $region23: #{basic_block_forward.3} parent=11 // pred_region
        _
      $region24: #{basic_block_forward.3} parent=11 // pred_fallthru
        _
    $region12: #{basic_block_forward.3} parent=5 // pred_fallthru
      _
    %p177 = scmp.lt.s32.totalorder %s12, 2
    // Predicated region
    $region25: #{basic_block_forward.3} parent=5 // pred_check
      %p178 = pneg %p177
    $region26: #{basic_block_forward.3} parent=5 // pred_check_branch
      %180 = sbr.rel (%p178) target = $region28
    $region27: #{basic_block_forward.3} parent=5 // pred_region
      // Predicated region
      $region29: #{basic_block_forward.3} parent=27 // pred_check
        %p181 = pneg %p32
      $region30: #{basic_block_forward.3} parent=27 // pred_check_branch
        %183 = sbr.rel (%p181) target = $region32
      $region31: #{basic_block_forward.3} parent=27 // pred_region
        %p184 = scmp.lt.s32.totalorder %s12, 1
        %s185 = scalar_select %p184, %s12, 1
        %s186 = smul.addr %s185, 48
        %s187 = smul.addr %s186, 4
        %s188 = scalar_lea.vmem %s0, %s187
      $region32: #{basic_block_forward.3} parent=27 // pred_fallthru
        _
    $region28: #{basic_block_forward.3} parent=5 // pred_fallthru
      _
    %p189 = scmp.le.s32.totalorder 1, %s12
    %p190 = scmp.lt.s32.totalorder %s12, 3
    %p191 = pnand %p189, %p190
    %p192 = pneg %p191
    // Predicated region
    $region33: #{basic_block_forward.3} parent=5 // pred_check
      _
    $region34: #{basic_block_forward.3} parent=5 // pred_check_branch
      %194 = sbr.rel (%p191) target = $region36
    $region35: #{basic_block_forward.3} parent=5 // pred_region
      %s195 = ssub.s32 %s12, 1
      %p196 = scmp.lt.s32.totalorder %s17, 1
      %s197 = scalar_select %p196, %s17, 1
      %s198 = smul.addr %s197, 48
      %s199 = smul.addr %s198, 4
      %s200 = scalar_lea.vmem %s0, %s199
      %p201 = pneg %p38
      %p202 = pneg %p35
      %p203 = pneg %p59
      %p204 = pneg %p56
      %p205 = pneg %p80
      %p206 = pneg %p77
      %p207 = pneg %p101
      %p208 = pneg %p98
      %p209 = pneg %p127
      %p210 = pneg %p124
      %p211 = scmp.lt.s32.totalorder %s17, 1
      %s212 = scalar_select %p211, %s17, 1
      %s213 = smul.addr %s212, 32
      %s214 = smul.addr %s213, 4
      %s215 = scalar_lea.vmem %s4, %s214
      %p216 = pneg %p153
      %p217 = pneg %p150
      %p218 = scmp.lt.s32.totalorder %s17, 1
      %s219 = scalar_select %p218, %s17, 1
      %s220 = smul.addr %s219, 2
      %s221 = scalar_lea.vmem %s5, %s220
      %p222 = scmp.lt.s32.totalorder %s17, 1
      %s223 = scalar_select %p222, %s17, 1
      %s224 = smul.addr %s223, 48
      %s225 = smul.addr %s224, 4
      %s226 = scalar_lea.vmem %s0, %s225
      %p227 = scmp.lt.s32.totalorder %s17, 1
      %s228 = scalar_select %p227, %s17, 1
      %s229 = smul.addr %s228, 32
      %s230 = smul.addr %s229, 4
      %s231 = scalar_lea.vmem %s4, %s230
      %p232 = scmp.lt.s32.totalorder %s17, 1
      %s233 = scalar_select %p232, %s17, 1
      %s234 = smul.addr %s233, 2
      %s235 = scalar_lea.vmem %s5, %s234
      %237 = vst [vmem:[#allocation2] sm:$0xf] 0
      %238 = vst [vmem:[#allocation2 + $0x4] sm:$0xf] 0
      %239 = vst [vmem:[#allocation2 + $0x8] sm:$0x1] 0
      %s240 = scalar_lea.vmem [#allocation2], 204
      %241 = vst [vmem:[%s240] sm:$0xf] 0
      %242 = vst [vmem:[%s240 + $0x4] sm:$0xf] 0
      %243 = vst [vmem:[%s240 + $0x8] sm:$0x1] 0
      %v244 = vld [vmem:[%s226] sm:$0xf]
      %v245 = vld [vmem:[%s226 + $0x4] sm:$0xf]
      %v246 = vld [vmem:[%s226 + $0x8] sm:$0x1]
      %v247 = vld [vmem:[%s226 + $0xc] sm:$0xf]
      %v248 = vld [vmem:[%s226 + $0x10] sm:$0xf]
      %v249 = vld [vmem:[%s226 + $0x14] sm:$0x1]
      %v250 = vld [vmem:[%s226 + $0x18] sm:$0xf]
      %v251 = vld [vmem:[%s226 + $0x1c] sm:$0xf]
      %v252 = vld [vmem:[%s226 + $0x20] sm:$0x1]
      %v253 = vld [vmem:[%s226 + $0x24] sm:$0xf]
      %v254 = vld [vmem:[%s226 + $0x28] sm:$0xf]
      %v255 = vld [vmem:[%s226 + $0x2c] sm:$0x1]
      %v256 = vld [vmem:[%s226 + $0x30] sm:$0xf]
      %v257 = vld [vmem:[%s226 + $0x34] sm:$0xf]
      %v258 = vld [vmem:[%s226 + $0x38] sm:$0x1]
      %v259 = vld [vmem:[%s226 + $0x3c] sm:$0xf]
      %v260 = vld [vmem:[%s226 + $0x40] sm:$0xf]
      %v261 = vld [vmem:[%s226 + $0x44] sm:$0x1]
      %v262 = vld [vmem:[%s226 + $0x48] sm:$0xf]
      %v263 = vld [vmem:[%s226 + $0x4c] sm:$0xf]
      %v264 = vld [vmem:[%s226 + $0x50] sm:$0x1]
      %v265 = vld [vmem:[%s226 + $0x54] sm:$0xf]
      %v266 = vld [vmem:[%s226 + $0x58] sm:$0xf]
      %v267 = vld [vmem:[%s226 + $0x5c] sm:$0x1]
      %v268 = vld [vmem:[%s226 + $0x60] sm:$0xf]
      %v269 = vld [vmem:[%s226 + $0x64] sm:$0xf]
      %v270 = vld [vmem:[%s226 + $0x68] sm:$0x1]
      %v271 = vld [vmem:[%s226 + $0x6c] sm:$0xf]
      %v272 = vld [vmem:[%s226 + $0x70] sm:$0xf]
      %v273 = vld [vmem:[%s226 + $0x74] sm:$0x1]
      %v274 = vld [vmem:[%s226 + $0x78] sm:$0xf]
      %v275 = vld [vmem:[%s226 + $0x7c] sm:$0xf]
      %v276 = vld [vmem:[%s226 + $0x80] sm:$0x1]
      %v277 = vld [vmem:[%s226 + $0x84] sm:$0xf]
      %v278 = vld [vmem:[%s226 + $0x88] sm:$0xf]
      %v279 = vld [vmem:[%s226 + $0x8c] sm:$0x1]
      %v280 = vld [vmem:[%s226 + $0x90] sm:$0xf]
      %v281 = vld [vmem:[%s226 + $0x94] sm:$0xf]
      %v282 = vld [vmem:[%s226 + $0x98] sm:$0x1]
      %v283 = vld [vmem:[%s226 + $0x9c] sm:$0xf]
      %v284 = vld [vmem:[%s226 + $0xa0] sm:$0xf]
      %v285 = vld [vmem:[%s226 + $0xa4] sm:$0x1]
      %v286 = vld [vmem:[%s226 + $0xa8] sm:$0xf]
      %v287 = vld [vmem:[%s226 + $0xac] sm:$0xf]
      %v288 = vld [vmem:[%s226 + $0xb0] sm:$0x1]
      %v289 = vld [vmem:[%s226 + $0xb4] sm:$0xf]
      %v290 = vld [vmem:[%s226 + $0xb8] sm:$0xf]
      %v291 = vld [vmem:[%s226 + $0xbc] sm:$0x1]
      %s292 = scalar_lea.vmem [#allocation2], 12
      %293 = vst [vmem:[%s292] sm:$0xf] %v244
      %294 = vst [vmem:[%s292 + $0x4] sm:$0xf] %v245
      %295 = vst [vmem:[%s292 + $0x8] sm:$0x1] %v246
      %296 = vst [vmem:[%s292 + $0xc] sm:$0xf] %v247
      %297 = vst [vmem:[%s292 + $0x10] sm:$0xf] %v248
      %298 = vst [vmem:[%s292 + $0x14] sm:$0x1] %v249
      %299 = vst [vmem:[%s292 + $0x18] sm:$0xf] %v250
      %300 = vst [vmem:[%s292 + $0x1c] sm:$0xf] %v251
      %301 = vst [vmem:[%s292 + $0x20] sm:$0x1] %v252
      %302 = vst [vmem:[%s292 + $0x24] sm:$0xf] %v253
      %303 = vst [vmem:[%s292 + $0x28] sm:$0xf] %v254
      %304 = vst [vmem:[%s292 + $0x2c] sm:$0x1] %v255
      %305 = vst [vmem:[%s292 + $0x30] sm:$0xf] %v256
      %306 = vst [vmem:[%s292 + $0x34] sm:$0xf] %v257
      %307 = vst [vmem:[%s292 + $0x38] sm:$0x1] %v258
      %308 = vst [vmem:[%s292 + $0x3c] sm:$0xf] %v259
      %309 = vst [vmem:[%s292 + $0x40] sm:$0xf] %v260
      %310 = vst [vmem:[%s292 + $0x44] sm:$0x1] %v261
      %311 = vst [vmem:[%s292 + $0x48] sm:$0xf] %v262
      %312 = vst [vmem:[%s292 + $0x4c] sm:$0xf] %v263
      %313 = vst [vmem:[%s292 + $0x50] sm:$0x1] %v264
      %314 = vst [vmem:[%s292 + $0x54] sm:$0xf] %v265
      %315 = vst [vmem:[%s292 + $0x58] sm:$0xf] %v266
      %316 = vst [vmem:[%s292 + $0x5c] sm:$0x1] %v267
      %317 = vst [vmem:[%s292 + $0x60] sm:$0xf] %v268
      %318 = vst [vmem:[%s292 + $0x64] sm:$0xf] %v269
      %319 = vst [vmem:[%s292 + $0x68] sm:$0x1] %v270
      %320 = vst [vmem:[%s292 + $0x6c] sm:$0xf] %v271
      %321 = vst [vmem:[%s292 + $0x70] sm:$0xf] %v272
      %322 = vst [vmem:[%s292 + $0x74] sm:$0x1] %v273
      %323 = vst [vmem:[%s292 + $0x78] sm:$0xf] %v274
      %324 = vst [vmem:[%s292 + $0x7c] sm:$0xf] %v275
      %325 = vst [vmem:[%s292 + $0x80] sm:$0x1] %v276
      %326 = vst [vmem:[%s292 + $0x84] sm:$0xf] %v277
      %327 = vst [vmem:[%s292 + $0x88] sm:$0xf] %v278
      %328 = vst [vmem:[%s292 + $0x8c] sm:$0x1] %v279
      %329 = vst [vmem:[%s292 + $0x90] sm:$0xf] %v280
      %330 = vst [vmem:[%s292 + $0x94] sm:$0xf] %v281
      %331 = vst [vmem:[%s292 + $0x98] sm:$0x1] %v282
      %332 = vst [vmem:[%s292 + $0x9c] sm:$0xf] %v283
      %333 = vst [vmem:[%s292 + $0xa0] sm:$0xf] %v284
      %334 = vst [vmem:[%s292 + $0xa4] sm:$0x1] %v285
      %335 = vst [vmem:[%s292 + $0xa8] sm:$0xf] %v286
      %336 = vst [vmem:[%s292 + $0xac] sm:$0xf] %v287
      %337 = vst [vmem:[%s292 + $0xb0] sm:$0x1] %v288
      %338 = vst [vmem:[%s292 + $0xb4] sm:$0xf] %v289
      %339 = vst [vmem:[%s292 + $0xb8] sm:$0xf] %v290
      %340 = vst [vmem:[%s292 + $0xbc] sm:$0x1] %v291
      %v341 = vld [vmem:[#allocation2] sm:$0xf]
      %v342 = vld [vmem:[#allocation2 + $0x4] sm:$0xf]
      %v343 = vld [vmem:[#allocation2 + $0xc] sm:$0xf]
      %v344 = vld [vmem:[#allocation2 + $0x10] sm:$0xf]
      %v345 = vld [vmem:[#allocation2 + $0x18] sm:$0xf]
      %v346 = vld [vmem:[#allocation2 + $0x1c] sm:$0xf]
      %v347 = vld [vmem:[#allocation2 + $0x24] sm:$0xf]
      %v348 = vld [vmem:[#allocation2 + $0x28] sm:$0xf]
      %v349 = vld [vmem:[#allocation2 + $0x30] sm:$0xf]
      %v350 = vld [vmem:[#allocation2 + $0x34] sm:$0xf]
      %v351 = vld [vmem:[#allocation2 + $0x3c] sm:$0xf]
      %v352 = vld [vmem:[#allocation2 + $0x40] sm:$0xf]
      %v353 = vld [vmem:[#allocation2 + $0x48] sm:$0xf]
      %v354 = vld [vmem:[#allocation2 + $0x4c] sm:$0xf]
      %v355 = vld [vmem:[#allocation2 + $0x54] sm:$0xf]
      %v356 = vld [vmem:[#allocation2 + $0x58] sm:$0xf]
      %v357 = vld [vmem:[#allocation2 + $0x60] sm:$0xf]
      %v358 = vld [vmem:[#allocation2 + $0x64] sm:$0xf]
      %v359 = vld [vmem:[#allocation2 + $0x6c] sm:$0xf]
      %v360 = vld [vmem:[#allocation2 + $0x70] sm:$0xf]
      %v361 = vld [vmem:[#allocation2 + $0x78] sm:$0xf]
      %v362 = vld [vmem:[#allocation2 + $0x7c] sm:$0xf]
      %v363 = vld [vmem:[#allocation2 + $0x84] sm:$0xf]
      %v364 = vld [vmem:[#allocation2 + $0x88] sm:$0xf]
      %v365 = vld [vmem:[#allocation2 + $0x90] sm:$0xf]
      %v366 = vld [vmem:[#allocation2 + $0x94] sm:$0xf]
      %v367 = vld [vmem:[#allocation2 + $0x9c] sm:$0xf]
      %v368 = vld [vmem:[#allocation2 + $0xa0] sm:$0xf]
      %v369 = vld [vmem:[#allocation2 + $0xa8] sm:$0xf]
      %v370 = vld [vmem:[#allocation2 + $0xac] sm:$0xf]
      %v371 = vld [vmem:[#allocation2 + $0xb4] sm:$0xf]
      %v372 = vld [vmem:[#allocation2 + $0xb8] sm:$0xf]
      %v373 = vld [vmem:[#allocation2 + $0x8] sm:$0x1]
      %v374 = vld [vmem:[#allocation2 + $0x14] sm:$0x1]
      %v375 = vld [vmem:[#allocation2 + $0x20] sm:$0x1]
      %v376 = vld [vmem:[#allocation2 + $0x2c] sm:$0x1]
      %v377 = vld [vmem:[#allocation2 + $0x38] sm:$0x1]
      %v378 = vld [vmem:[#allocation2 + $0x44] sm:$0x1]
      %v379 = vld [vmem:[#allocation2 + $0x50] sm:$0x1]
      %v380 = vld [vmem:[#allocation2 + $0x5c] sm:$0x1]
      %v381 = vld [vmem:[#allocation2 + $0x68] sm:$0x1]
      %v382 = vld [vmem:[#allocation2 + $0x74] sm:$0x1]
      %v383 = vld [vmem:[#allocation2 + $0x80] sm:$0x1]
      %v384 = vld [vmem:[#allocation2 + $0x8c] sm:$0x1]
      %v385 = vld [vmem:[#allocation2 + $0x98] sm:$0x1]
      %v386 = vld [vmem:[#allocation2 + $0xa4] sm:$0x1]
      %v387 = vld [vmem:[#allocation2 + $0xb0] sm:$0x1]
      %v388 = vld [vmem:[#allocation2 + $0xbc] sm:$0x1]
      %v389 = vld [vmem:[#allocation2] sm:$0xe]
      %v390 = vld [vmem:[#allocation2 + $0xc] sm:$0xe]
      %v391 = vld [vmem:[#allocation2 + $0x18] sm:$0xe]
      %v392 = vld [vmem:[#allocation2 + $0x24] sm:$0xe]
      %v393 = vld [vmem:[#allocation2 + $0x30] sm:$0xe]
      %v394 = vld [vmem:[#allocation2 + $0x3c] sm:$0xe]
      %v395 = vld [vmem:[#allocation2 + $0x48] sm:$0xe]
      %v396 = vld [vmem:[#allocation2 + $0x54] sm:$0xe]
      %v397 = vld [vmem:[#allocation2 + $0x60] sm:$0xe]
      %v398 = vld [vmem:[#allocation2 + $0x6c] sm:$0xe]
      %v399 = vld [vmem:[#allocation2 + $0x78] sm:$0xe]
      %v400 = vld [vmem:[#allocation2 + $0x84] sm:$0xe]
      %v401 = vld [vmem:[#allocation2 + $0x90] sm:$0xe]
      %v402 = vld [vmem:[#allocation2 + $0x9c] sm:$0xe]
      %v403 = vld [vmem:[#allocation2 + $0xa8] sm:$0xe]
      %v404 = vld [vmem:[#allocation2 + $0xb4] sm:$0xe]
      %v437 = vunpack.c.l.b16 %v341
      %v438 = vunpack.c.l.b16 %v342
      %v439 = vunpack.c.l.b16 %v343
      %v440 = vunpack.c.l.b16 %v344
      %v441 = vunpack.c.l.b16 %v345
      %v442 = vunpack.c.l.b16 %v346
      %v443 = vunpack.c.l.b16 %v347
      %v444 = vunpack.c.l.b16 %v348
      %v445 = vunpack.c.l.b16 %v349
      %v446 = vunpack.c.l.b16 %v350
      %v447 = vunpack.c.l.b16 %v351
      %v448 = vunpack.c.l.b16 %v352
      %v449 = vunpack.c.l.b16 %v353
      %v450 = vunpack.c.l.b16 %v354
      %v451 = vunpack.c.l.b16 %v355
      %v452 = vunpack.c.l.b16 %v356
      %v453 = vunpack.c.l.b16 %v357
      %v454 = vunpack.c.l.b16 %v358
      %v455 = vunpack.c.l.b16 %v359
      %v456 = vunpack.c.l.b16 %v360
      %v457 = vunpack.c.l.b16 %v361
      %v458 = vunpack.c.l.b16 %v362
      %v459 = vunpack.c.l.b16 %v363
      %v460 = vunpack.c.l.b16 %v364
      %v461 = vunpack.c.l.b16 %v365
      %v462 = vunpack.c.l.b16 %v366
      %v463 = vunpack.c.l.b16 %v367
      %v464 = vunpack.c.l.b16 %v368
      %v465 = vunpack.c.l.b16 %v369
      %v466 = vunpack.c.l.b16 %v370
      %v467 = vunpack.c.l.b16 %v371
      %v468 = vunpack.c.l.b16 %v372
      %v469 = vpack.c.b16 %v438, %v437
      %v470 = vpack.c.b16 %v440, %v439
      %v471 = vpack.c.b16 %v442, %v441
      %v472 = vpack.c.b16 %v444, %v443
      %v473 = vpack.c.b16 %v446, %v445
      %v474 = vpack.c.b16 %v448, %v447
      %v475 = vpack.c.b16 %v450, %v449
      %v476 = vpack.c.b16 %v452, %v451
      %v477 = vpack.c.b16 %v454, %v453
      %v478 = vpack.c.b16 %v456, %v455
      %v479 = vpack.c.b16 %v458, %v457
      %v480 = vpack.c.b16 %v460, %v459
      %v481 = vpack.c.b16 %v462, %v461
      %v482 = vpack.c.b16 %v464, %v463
      %v483 = vpack.c.b16 %v466, %v465
      %v484 = vpack.c.b16 %v468, %v467
      %v517 = vunpack.c.l.b16 %v373
      %v518 = vunpack.c.l.b16 %v374
      %v519 = vunpack.c.l.b16 %v375
      %v520 = vunpack.c.l.b16 %v376
      %v521 = vunpack.c.l.b16 %v377
      %v522 = vunpack.c.l.b16 %v378
      %v523 = vunpack.c.l.b16 %v379
      %v524 = vunpack.c.l.b16 %v380
      %v525 = vunpack.c.l.b16 %v381
      %v526 = vunpack.c.l.b16 %v382
      %v527 = vunpack.c.l.b16 %v383
      %v528 = vunpack.c.l.b16 %v384
      %v529 = vunpack.c.l.b16 %v385
      %v530 = vunpack.c.l.b16 %v386
      %v531 = vunpack.c.l.b16 %v387
      %v532 = vunpack.c.l.b16 %v388
      %v533 = vpack.c.b16 %v517, %v517
      %v534 = vpack.c.b16 %v518, %v518
      %v535 = vpack.c.b16 %v519, %v519
      %v536 = vpack.c.b16 %v520, %v520
      %v537 = vpack.c.b16 %v521, %v521
      %v538 = vpack.c.b16 %v522, %v522
      %v539 = vpack.c.b16 %v523, %v523
      %v540 = vpack.c.b16 %v524, %v524
      %v541 = vpack.c.b16 %v525, %v525
      %v542 = vpack.c.b16 %v526, %v526
      %v543 = vpack.c.b16 %v527, %v527
      %v544 = vpack.c.b16 %v528, %v528
      %v545 = vpack.c.b16 %v529, %v529
      %v546 = vpack.c.b16 %v530, %v530
      %v547 = vpack.c.b16 %v531, %v531
      %v548 = vpack.c.b16 %v532, %v532
      %vm549 = vsmask.f32 7424
      %v551 = vshrl.u32 %v469, 16
      %v553 = vshll.u32 %v469, 16
      %v555 = vrot.slane %v553, 1
      %v556 = vor.u32 %v551, %v555
      %v558 = vshll.u32 %v533, 16
      %v560 = vrot.slane %v558, 1
      %v561 = vsel %vm549, %v556, %v560
      %v563 = vshrl.u32 %v470, 16
      %v565 = vshll.u32 %v470, 16
      %v567 = vrot.slane %v565, 1
      %v568 = vor.u32 %v563, %v567
      %v570 = vshll.u32 %v534, 16
      %v572 = vrot.slane %v570, 1
      %v573 = vsel %vm549, %v568, %v572
      %v575 = vshrl.u32 %v471, 16
      %v577 = vshll.u32 %v471, 16
      %v579 = vrot.slane %v577, 1
      %v580 = vor.u32 %v575, %v579
      %v582 = vshll.u32 %v535, 16
      %v584 = vrot.slane %v582, 1
      %v585 = vsel %vm549, %v580, %v584
      %v587 = vshrl.u32 %v472, 16
      %v589 = vshll.u32 %v472, 16
      %v591 = vrot.slane %v589, 1
      %v592 = vor.u32 %v587, %v591
      %v594 = vshll.u32 %v536, 16
      %v596 = vrot.slane %v594, 1
      %v597 = vsel %vm549, %v592, %v596
      %v599 = vshrl.u32 %v473, 16
      %v601 = vshll.u32 %v473, 16
      %v603 = vrot.slane %v601, 1
      %v604 = vor.u32 %v599, %v603
      %v606 = vshll.u32 %v537, 16
      %v608 = vrot.slane %v606, 1
      %v609 = vsel %vm549, %v604, %v608
      %v611 = vshrl.u32 %v474, 16
      %v613 = vshll.u32 %v474, 16
      %v615 = vrot.slane %v613, 1
      %v616 = vor.u32 %v611, %v615
      %v618 = vshll.u32 %v538, 16
      %v620 = vrot.slane %v618, 1
      %v621 = vsel %vm549, %v616, %v620
      %v623 = vshrl.u32 %v475, 16
      %v625 = vshll.u32 %v475, 16
      %v627 = vrot.slane %v625, 1
      %v628 = vor.u32 %v623, %v627
      %v630 = vshll.u32 %v539, 16
      %v632 = vrot.slane %v630, 1
      %v633 = vsel %vm549, %v628, %v632
      %v635 = vshrl.u32 %v476, 16
      %v637 = vshll.u32 %v476, 16
      %v639 = vrot.slane %v637, 1
      %v640 = vor.u32 %v635, %v639
      %v642 = vshll.u32 %v540, 16
      %v644 = vrot.slane %v642, 1
      %v645 = vsel %vm549, %v640, %v644
      %v647 = vshrl.u32 %v477, 16
      %v649 = vshll.u32 %v477, 16
      %v651 = vrot.slane %v649, 1
      %v652 = vor.u32 %v647, %v651
      %v654 = vshll.u32 %v541, 16
      %v656 = vrot.slane %v654, 1
      %v657 = vsel %vm549, %v652, %v656
      %v659 = vshrl.u32 %v478, 16
      %v661 = vshll.u32 %v478, 16
      %v663 = vrot.slane %v661, 1
      %v664 = vor.u32 %v659, %v663
      %v666 = vshll.u32 %v542, 16
      %v668 = vrot.slane %v666, 1
      %v669 = vsel %vm549, %v664, %v668
      %v671 = vshrl.u32 %v479, 16
      %v673 = vshll.u32 %v479, 16
      %v675 = vrot.slane %v673, 1
      %v676 = vor.u32 %v671, %v675
      %v678 = vshll.u32 %v543, 16
      %v680 = vrot.slane %v678, 1
      %v681 = vsel %vm549, %v676, %v680
      %v683 = vshrl.u32 %v480, 16
      %v685 = vshll.u32 %v480, 16
      %v687 = vrot.slane %v685, 1
      %v688 = vor.u32 %v683, %v687
      %v690 = vshll.u32 %v544, 16
      %v692 = vrot.slane %v690, 1
      %v693 = vsel %vm549, %v688, %v692
      %v695 = vshrl.u32 %v481, 16
      %v697 = vshll.u32 %v481, 16
      %v699 = vrot.slane %v697, 1
      %v700 = vor.u32 %v695, %v699
      %v702 = vshll.u32 %v545, 16
      %v704 = vrot.slane %v702, 1
      %v705 = vsel %vm549, %v700, %v704
      %v707 = vshrl.u32 %v482, 16
      %v709 = vshll.u32 %v482, 16
      %v711 = vrot.slane %v709, 1
      %v712 = vor.u32 %v707, %v711
      %v714 = vshll.u32 %v546, 16
      %v716 = vrot.slane %v714, 1
      %v717 = vsel %vm549, %v712, %v716
      %v719 = vshrl.u32 %v483, 16
      %v721 = vshll.u32 %v483, 16
      %v723 = vrot.slane %v721, 1
      %v724 = vor.u32 %v719, %v723
      %v726 = vshll.u32 %v547, 16
      %v728 = vrot.slane %v726, 1
      %v729 = vsel %vm549, %v724, %v728
      %v731 = vshrl.u32 %v484, 16
      %v733 = vshll.u32 %v484, 16
      %v735 = vrot.slane %v733, 1
      %v736 = vor.u32 %v731, %v735
      %v738 = vshll.u32 %v548, 16
      %v740 = vrot.slane %v738, 1
      %v741 = vsel %vm549, %v736, %v740
      %v774 = vunpack.c.l.b16 %v389
      %v775 = vunpack.c.l.b16 %v390
      %v776 = vunpack.c.l.b16 %v391
      %v777 = vunpack.c.l.b16 %v392
      %v778 = vunpack.c.l.b16 %v393
      %v779 = vunpack.c.l.b16 %v394
      %v780 = vunpack.c.l.b16 %v395
      %v781 = vunpack.c.l.b16 %v396
      %v782 = vunpack.c.l.b16 %v397
      %v783 = vunpack.c.l.b16 %v398
      %v784 = vunpack.c.l.b16 %v399
      %v785 = vunpack.c.l.b16 %v400
      %v786 = vunpack.c.l.b16 %v401
      %v787 = vunpack.c.l.b16 %v402
      %v788 = vunpack.c.l.b16 %v403
      %v789 = vunpack.c.l.b16 %v404
      %v790 = vpack.c.b16 %v438, %v774
      %v791 = vpack.c.b16 %v440, %v775
      %v792 = vpack.c.b16 %v442, %v776
      %v793 = vpack.c.b16 %v444, %v777
      %v794 = vpack.c.b16 %v446, %v778
      %v795 = vpack.c.b16 %v448, %v779
      %v796 = vpack.c.b16 %v450, %v780
      %v797 = vpack.c.b16 %v452, %v781
      %v798 = vpack.c.b16 %v454, %v782
      %v799 = vpack.c.b16 %v456, %v783
      %v800 = vpack.c.b16 %v458, %v784
      %v801 = vpack.c.b16 %v460, %v785
      %v802 = vpack.c.b16 %v462, %v786
      %v803 = vpack.c.b16 %v464, %v787
      %v804 = vpack.c.b16 %v466, %v788
      %v805 = vpack.c.b16 %v468, %v789
      %vm806 = vcmask 1046528
      %v807 = vrot.slane %v790, 1
      %v808 = vrot.slane %v533, 1
      %v809 = vsel %vm806, %v807, %v808
      %v810 = vrot.slane %v791, 1
      %v811 = vrot.slane %v534, 1
      %v812 = vsel %vm806, %v810, %v811
      %v813 = vrot.slane %v792, 1
      %v814 = vrot.slane %v535, 1
      %v815 = vsel %vm806, %v813, %v814
      %v816 = vrot.slane %v793, 1
      %v817 = vrot.slane %v536, 1
      %v818 = vsel %vm806, %v816, %v817
      %v819 = vrot.slane %v794, 1
      %v820 = vrot.slane %v537, 1
      %v821 = vsel %vm806, %v819, %v820
      %v822 = vrot.slane %v795, 1
      %v823 = vrot.slane %v538, 1
      %v824 = vsel %vm806, %v822, %v823
      %v825 = vrot.slane %v796, 1
      %v826 = vrot.slane %v539, 1
      %v827 = vsel %vm806, %v825, %v826
      %v828 = vrot.slane %v797, 1
      %v829 = vrot.slane %v540, 1
      %v830 = vsel %vm806, %v828, %v829
      %v831 = vrot.slane %v798, 1
      %v832 = vrot.slane %v541, 1
      %v833 = vsel %vm806, %v831, %v832
      %v834 = vrot.slane %v799, 1
      %v835 = vrot.slane %v542, 1
      %v836 = vsel %vm806, %v834, %v835
      %v837 = vrot.slane %v800, 1
      %v838 = vrot.slane %v543, 1
      %v839 = vsel %vm806, %v837, %v838
      %v840 = vrot.slane %v801, 1
      %v841 = vrot.slane %v544, 1
      %v842 = vsel %vm806, %v840, %v841
      %v843 = vrot.slane %v802, 1
      %v844 = vrot.slane %v545, 1
      %v845 = vsel %vm806, %v843, %v844
      %v846 = vrot.slane %v803, 1
      %v847 = vrot.slane %v546, 1
      %v848 = vsel %vm806, %v846, %v847
      %v849 = vrot.slane %v804, 1
      %v850 = vrot.slane %v547, 1
      %v851 = vsel %vm806, %v849, %v850
      %v852 = vrot.slane %v805, 1
      %v853 = vrot.slane %v548, 1
      %v854 = vsel %vm806, %v852, %v853
      %v871 = vld [vmem:[%s3] sm:$0xf]
      %v872 = vld [vmem:[%s3 + $0x4] sm:$0xf]
      %v873 = vld [vmem:[%s3 + $0x8] sm:$0xf]
      %v874 = vld [vmem:[%s3 + $0xc] sm:$0xf]
      %v875 = vld [vmem:[%s3 + $0x10] sm:$0xf]
      %v876 = vld [vmem:[%s3 + $0x14] sm:$0xf]
      %v877 = vld [vmem:[%s3 + $0x18] sm:$0xf]
      %v878 = vld [vmem:[%s3 + $0x1c] sm:$0xf]
      %v879 = vld [vmem:[%s3 + $0x20] sm:$0xf]
      %v880 = vld [vmem:[%s3 + $0x24] sm:$0xf]
      %v881 = vld [vmem:[%s3 + $0x28] sm:$0xf]
      %v882 = vld [vmem:[%s3 + $0x2c] sm:$0xf]
      %v883 = vld [vmem:[%s3 + $0x30] sm:$0xf]
      %v884 = vld [vmem:[%s3 + $0x34] sm:$0xf]
      %v885 = vld [vmem:[%s3 + $0x38] sm:$0xf]
      %v886 = vld [vmem:[%s3 + $0x3c] sm:$0xf]
      %v887 = vld [vmem:[%s3 + $0x40] sm:$0xf]
      %v888 = vld [vmem:[%s3 + $0x44] sm:$0xf]
      %v889 = vld [vmem:[%s3 + $0x48] sm:$0xf]
      %v890 = vld [vmem:[%s3 + $0x4c] sm:$0xf]
      %v891 = vld [vmem:[%s3 + $0x50] sm:$0xf]
      %v892 = vld [vmem:[%s3 + $0x54] sm:$0xf]
      %v893 = vld [vmem:[%s3 + $0x58] sm:$0xf]
      %v894 = vld [vmem:[%s3 + $0x5c] sm:$0xf]
      %v895 = vld [vmem:[%s3 + $0x60] sm:$0xf]
      %v896 = vld [vmem:[%s3 + $0x64] sm:$0xf]
      %v897 = vld [vmem:[%s3 + $0x68] sm:$0xf]
      %v898 = vld [vmem:[%s3 + $0x6c] sm:$0xf]
      %v899 = vld [vmem:[%s3 + $0x70] sm:$0xf]
      %v900 = vld [vmem:[%s3 + $0x74] sm:$0xf]
      %v901 = vld [vmem:[%s3 + $0x78] sm:$0xf]
      %v902 = vld [vmem:[%s3 + $0x7c] sm:$0xf]
      %v903 = vld [vmem:[%s3 + $0x80] sm:$0xf]
      %v904 = vld [vmem:[%s3 + $0x84] sm:$0xf]
      %v905 = vld [vmem:[%s3 + $0x88] sm:$0xf]
      %v906 = vld [vmem:[%s3 + $0x8c] sm:$0xf]
      %v907 = vld [vmem:[%s3 + $0x90] sm:$0xf]
      %v908 = vld [vmem:[%s3 + $0x94] sm:$0xf]
      %v909 = vld [vmem:[%s3 + $0x98] sm:$0xf]
      %v910 = vld [vmem:[%s3 + $0x9c] sm:$0xf]
      %v911 = vld [vmem:[%s3 + $0xa0] sm:$0xf]
      %v912 = vld [vmem:[%s3 + $0xa4] sm:$0xf]
      %v913 = vld [vmem:[%s3 + $0xa8] sm:$0xf]
      %v914 = vld [vmem:[%s3 + $0xac] sm:$0xf]
      %v915 = vld [vmem:[%s3 + $0xb0] sm:$0xf]
      %v916 = vld [vmem:[%s3 + $0xb4] sm:$0xf]
      %v917 = vld [vmem:[%s3 + $0xb8] sm:$0xf]
      %v918 = vld [vmem:[%s3 + $0xbc] sm:$0xf]
      %v919 = vld [vmem:[%s292] sm:$0xf]
      %v920 = vld [vmem:[%s292 + $0x4] sm:$0xf]
      %v921 = vld [vmem:[%s292 + $0xc] sm:$0xf]
      %v922 = vld [vmem:[%s292 + $0x10] sm:$0xf]
      %v923 = vld [vmem:[%s292 + $0x18] sm:$0xf]
      %v924 = vld [vmem:[%s292 + $0x1c] sm:$0xf]
      %v925 = vld [vmem:[%s292 + $0x24] sm:$0xf]
      %v926 = vld [vmem:[%s292 + $0x28] sm:$0xf]
      %v927 = vld [vmem:[%s292 + $0x30] sm:$0xf]
      %v928 = vld [vmem:[%s292 + $0x34] sm:$0xf]
      %v929 = vld [vmem:[%s292 + $0x3c] sm:$0xf]
      %v930 = vld [vmem:[%s292 + $0x40] sm:$0xf]
      %v931 = vld [vmem:[%s292 + $0x48] sm:$0xf]
      %v932 = vld [vmem:[%s292 + $0x4c] sm:$0xf]
      %v933 = vld [vmem:[%s292 + $0x54] sm:$0xf]
      %v934 = vld [vmem:[%s292 + $0x58] sm:$0xf]
      %v935 = vld [vmem:[%s292 + $0x60] sm:$0xf]
      %v936 = vld [vmem:[%s292 + $0x64] sm:$0xf]
      %v937 = vld [vmem:[%s292 + $0x6c] sm:$0xf]
      %v938 = vld [vmem:[%s292 + $0x70] sm:$0xf]
      %v939 = vld [vmem:[%s292 + $0x78] sm:$0xf]
      %v940 = vld [vmem:[%s292 + $0x7c] sm:$0xf]
      %v941 = vld [vmem:[%s292 + $0x84] sm:$0xf]
      %v942 = vld [vmem:[%s292 + $0x88] sm:$0xf]
      %v943 = vld [vmem:[%s292 + $0x90] sm:$0xf]
      %v944 = vld [vmem:[%s292 + $0x94] sm:$0xf]
      %v945 = vld [vmem:[%s292 + $0x9c] sm:$0xf]
      %v946 = vld [vmem:[%s292 + $0xa0] sm:$0xf]
      %v947 = vld [vmem:[%s292 + $0xa8] sm:$0xf]
      %v948 = vld [vmem:[%s292 + $0xac] sm:$0xf]
      %v949 = vld [vmem:[%s292 + $0xb4] sm:$0xf]
      %v950 = vld [vmem:[%s292 + $0xb8] sm:$0xf]
      %v951 = vld [vmem:[%s292 + $0x8] sm:$0x1]
      %v952 = vld [vmem:[%s292 + $0x14] sm:$0x1]
      %v953 = vld [vmem:[%s292 + $0x20] sm:$0x1]
      %v954 = vld [vmem:[%s292 + $0x2c] sm:$0x1]
      %v955 = vld [vmem:[%s292 + $0x38] sm:$0x1]
      %v956 = vld [vmem:[%s292 + $0x44] sm:$0x1]
      %v957 = vld [vmem:[%s292 + $0x50] sm:$0x1]
      %v958 = vld [vmem:[%s292 + $0x5c] sm:$0x1]
      %v959 = vld [vmem:[%s292 + $0x68] sm:$0x1]
      %v960 = vld [vmem:[%s292 + $0x74] sm:$0x1]
      %v961 = vld [vmem:[%s292 + $0x80] sm:$0x1]
      %v962 = vld [vmem:[%s292 + $0x8c] sm:$0x1]
      %v963 = vld [vmem:[%s292 + $0x98] sm:$0x1]
      %v964 = vld [vmem:[%s292 + $0xa4] sm:$0x1]
      %v965 = vld [vmem:[%s292 + $0xb0] sm:$0x1]
      %v966 = vld [vmem:[%s292 + $0xbc] sm:$0x1]
      %v967 = vld [vmem:[%s292] sm:$0xe]
      %v968 = vld [vmem:[%s292 + $0xc] sm:$0xe]
      %v969 = vld [vmem:[%s292 + $0x18] sm:$0xe]
      %v970 = vld [vmem:[%s292 + $0x24] sm:$0xe]
      %v971 = vld [vmem:[%s292 + $0x30] sm:$0xe]
      %v972 = vld [vmem:[%s292 + $0x3c] sm:$0xe]
      %v973 = vld [vmem:[%s292 + $0x48] sm:$0xe]
      %v974 = vld [vmem:[%s292 + $0x54] sm:$0xe]
      %v975 = vld [vmem:[%s292 + $0x60] sm:$0xe]
      %v976 = vld [vmem:[%s292 + $0x6c] sm:$0xe]
      %v977 = vld [vmem:[%s292 + $0x78] sm:$0xe]
      %v978 = vld [vmem:[%s292 + $0x84] sm:$0xe]
      %v979 = vld [vmem:[%s292 + $0x90] sm:$0xe]
      %v980 = vld [vmem:[%s292 + $0x9c] sm:$0xe]
      %v981 = vld [vmem:[%s292 + $0xa8] sm:$0xe]
      %v982 = vld [vmem:[%s292 + $0xb4] sm:$0xe]
      %v1015 = vunpack.c.l.b16 %v919
      %v1016 = vunpack.c.l.b16 %v920
      %v1017 = vunpack.c.l.b16 %v921
      %v1018 = vunpack.c.l.b16 %v922
      %v1019 = vunpack.c.l.b16 %v923
      %v1020 = vunpack.c.l.b16 %v924
      %v1021 = vunpack.c.l.b16 %v925
      %v1022 = vunpack.c.l.b16 %v926
      %v1023 = vunpack.c.l.b16 %v927
      %v1024 = vunpack.c.l.b16 %v928
      %v1025 = vunpack.c.l.b16 %v929
      %v1026 = vunpack.c.l.b16 %v930
      %v1027 = vunpack.c.l.b16 %v931
      %v1028 = vunpack.c.l.b16 %v932
      %v1029 = vunpack.c.l.b16 %v933
      %v1030 = vunpack.c.l.b16 %v934
      %v1031 = vunpack.c.l.b16 %v935
      %v1032 = vunpack.c.l.b16 %v936
      %v1033 = vunpack.c.l.b16 %v937
      %v1034 = vunpack.c.l.b16 %v938
      %v1035 = vunpack.c.l.b16 %v939
      %v1036 = vunpack.c.l.b16 %v940
      %v1037 = vunpack.c.l.b16 %v941
      %v1038 = vunpack.c.l.b16 %v942
      %v1039 = vunpack.c.l.b16 %v943
      %v1040 = vunpack.c.l.b16 %v944
      %v1041 = vunpack.c.l.b16 %v945
      %v1042 = vunpack.c.l.b16 %v946
      %v1043 = vunpack.c.l.b16 %v947
      %v1044 = vunpack.c.l.b16 %v948
      %v1045 = vunpack.c.l.b16 %v949
      %v1046 = vunpack.c.l.b16 %v950
      %v1047 = vpack.c.b16 %v1016, %v1015
      %v1048 = vpack.c.b16 %v1018, %v1017
      %v1049 = vpack.c.b16 %v1020, %v1019
      %v1050 = vpack.c.b16 %v1022, %v1021
      %v1051 = vpack.c.b16 %v1024, %v1023
      %v1052 = vpack.c.b16 %v1026, %v1025
      %v1053 = vpack.c.b16 %v1028, %v1027
      %v1054 = vpack.c.b16 %v1030, %v1029
      %v1055 = vpack.c.b16 %v1032, %v1031
      %v1056 = vpack.c.b16 %v1034, %v1033
      %v1057 = vpack.c.b16 %v1036, %v1035
      %v1058 = vpack.c.b16 %v1038, %v1037
      %v1059 = vpack.c.b16 %v1040, %v1039
      %v1060 = vpack.c.b16 %v1042, %v1041
      %v1061 = vpack.c.b16 %v1044, %v1043
      %v1062 = vpack.c.b16 %v1046, %v1045
      %v1095 = vunpack.c.l.b16 %v951
      %v1096 = vunpack.c.l.b16 %v952
      %v1097 = vunpack.c.l.b16 %v953
      %v1098 = vunpack.c.l.b16 %v954
      %v1099 = vunpack.c.l.b16 %v955
      %v1100 = vunpack.c.l.b16 %v956
      %v1101 = vunpack.c.l.b16 %v957
      %v1102 = vunpack.c.l.b16 %v958
      %v1103 = vunpack.c.l.b16 %v959
      %v1104 = vunpack.c.l.b16 %v960
      %v1105 = vunpack.c.l.b16 %v961
      %v1106 = vunpack.c.l.b16 %v962
      %v1107 = vunpack.c.l.b16 %v963
      %v1108 = vunpack.c.l.b16 %v964
      %v1109 = vunpack.c.l.b16 %v965
      %v1110 = vunpack.c.l.b16 %v966
      %v1111 = vpack.c.b16 %v1095, %v1095
      %v1112 = vpack.c.b16 %v1096, %v1096
      %v1113 = vpack.c.b16 %v1097, %v1097
      %v1114 = vpack.c.b16 %v1098, %v1098
      %v1115 = vpack.c.b16 %v1099, %v1099
      %v1116 = vpack.c.b16 %v1100, %v1100
      %v1117 = vpack.c.b16 %v1101, %v1101
      %v1118 = vpack.c.b16 %v1102, %v1102
      %v1119 = vpack.c.b16 %v1103, %v1103
      %v1120 = vpack.c.b16 %v1104, %v1104
      %v1121 = vpack.c.b16 %v1105, %v1105
      %v1122 = vpack.c.b16 %v1106, %v1106
      %v1123 = vpack.c.b16 %v1107, %v1107
      %v1124 = vpack.c.b16 %v1108, %v1108
      %v1125 = vpack.c.b16 %v1109, %v1109
      %v1126 = vpack.c.b16 %v1110, %v1110
      %v1128 = vshrl.u32 %v1047, 16
      %v1130 = vshll.u32 %v1047, 16
      %v1132 = vrot.slane %v1130, 1
      %v1133 = vor.u32 %v1128, %v1132
      %v1135 = vshll.u32 %v1111, 16
      %v1137 = vrot.slane %v1135, 1
      %v1138 = vsel %vm549, %v1133, %v1137
      %v1140 = vshrl.u32 %v1048, 16
      %v1142 = vshll.u32 %v1048, 16
      %v1144 = vrot.slane %v1142, 1
      %v1145 = vor.u32 %v1140, %v1144
      %v1147 = vshll.u32 %v1112, 16
      %v1149 = vrot.slane %v1147, 1
      %v1150 = vsel %vm549, %v1145, %v1149
      %v1152 = vshrl.u32 %v1049, 16
      %v1154 = vshll.u32 %v1049, 16
      %v1156 = vrot.slane %v1154, 1
      %v1157 = vor.u32 %v1152, %v1156
      %v1159 = vshll.u32 %v1113, 16
      %v1161 = vrot.slane %v1159, 1
      %v1162 = vsel %vm549, %v1157, %v1161
      %v1164 = vshrl.u32 %v1050, 16
      %v1166 = vshll.u32 %v1050, 16
      %v1168 = vrot.slane %v1166, 1
      %v1169 = vor.u32 %v1164, %v1168
      %v1171 = vshll.u32 %v1114, 16
      %v1173 = vrot.slane %v1171, 1
      %v1174 = vsel %vm549, %v1169, %v1173
      %v1176 = vshrl.u32 %v1051, 16
      %v1178 = vshll.u32 %v1051, 16
      %v1180 = vrot.slane %v1178, 1
      %v1181 = vor.u32 %v1176, %v1180
      %v1183 = vshll.u32 %v1115, 16
      %v1185 = vrot.slane %v1183, 1
      %v1186 = vsel %vm549, %v1181, %v1185
      %v1188 = vshrl.u32 %v1052, 16
      %v1190 = vshll.u32 %v1052, 16
      %v1192 = vrot.slane %v1190, 1
      %v1193 = vor.u32 %v1188, %v1192
      %v1195 = vshll.u32 %v1116, 16
      %v1197 = vrot.slane %v1195, 1
      %v1198 = vsel %vm549, %v1193, %v1197
      %v1200 = vshrl.u32 %v1053, 16
      %v1202 = vshll.u32 %v1053, 16
      %v1204 = vrot.slane %v1202, 1
      %v1205 = vor.u32 %v1200, %v1204
      %v1207 = vshll.u32 %v1117, 16
      %v1209 = vrot.slane %v1207, 1
      %v1210 = vsel %vm549, %v1205, %v1209
      %v1212 = vshrl.u32 %v1054, 16
      %v1214 = vshll.u32 %v1054, 16
      %v1216 = vrot.slane %v1214, 1
      %v1217 = vor.u32 %v1212, %v1216
      %v1219 = vshll.u32 %v1118, 16
      %v1221 = vrot.slane %v1219, 1
      %v1222 = vsel %vm549, %v1217, %v1221
      %v1224 = vshrl.u32 %v1055, 16
      %v1226 = vshll.u32 %v1055, 16
      %v1228 = vrot.slane %v1226, 1
      %v1229 = vor.u32 %v1224, %v1228
      %v1231 = vshll.u32 %v1119, 16
      %v1233 = vrot.slane %v1231, 1
      %v1234 = vsel %vm549, %v1229, %v1233
      %v1236 = vshrl.u32 %v1056, 16
      %v1238 = vshll.u32 %v1056, 16
      %v1240 = vrot.slane %v1238, 1
      %v1241 = vor.u32 %v1236, %v1240
      %v1243 = vshll.u32 %v1120, 16
      %v1245 = vrot.slane %v1243, 1
      %v1246 = vsel %vm549, %v1241, %v1245
      %v1248 = vshrl.u32 %v1057, 16
      %v1250 = vshll.u32 %v1057, 16
      %v1252 = vrot.slane %v1250, 1
      %v1253 = vor.u32 %v1248, %v1252
      %v1255 = vshll.u32 %v1121, 16
      %v1257 = vrot.slane %v1255, 1
      %v1258 = vsel %vm549, %v1253, %v1257
      %v1260 = vshrl.u32 %v1058, 16
      %v1262 = vshll.u32 %v1058, 16
      %v1264 = vrot.slane %v1262, 1
      %v1265 = vor.u32 %v1260, %v1264
      %v1267 = vshll.u32 %v1122, 16
      %v1269 = vrot.slane %v1267, 1
      %v1270 = vsel %vm549, %v1265, %v1269
      %v1272 = vshrl.u32 %v1059, 16
      %v1274 = vshll.u32 %v1059, 16
      %v1276 = vrot.slane %v1274, 1
      %v1277 = vor.u32 %v1272, %v1276
      %v1279 = vshll.u32 %v1123, 16
      %v1281 = vrot.slane %v1279, 1
      %v1282 = vsel %vm549, %v1277, %v1281
      %v1284 = vshrl.u32 %v1060, 16
      %v1286 = vshll.u32 %v1060, 16
      %v1288 = vrot.slane %v1286, 1
      %v1289 = vor.u32 %v1284, %v1288
      %v1291 = vshll.u32 %v1124, 16
      %v1293 = vrot.slane %v1291, 1
      %v1294 = vsel %vm549, %v1289, %v1293
      %v1296 = vshrl.u32 %v1061, 16
      %v1298 = vshll.u32 %v1061, 16
      %v1300 = vrot.slane %v1298, 1
      %v1301 = vor.u32 %v1296, %v1300
      %v1303 = vshll.u32 %v1125, 16
      %v1305 = vrot.slane %v1303, 1
      %v1306 = vsel %vm549, %v1301, %v1305
      %v1308 = vshrl.u32 %v1062, 16
      %v1310 = vshll.u32 %v1062, 16
      %v1312 = vrot.slane %v1310, 1
      %v1313 = vor.u32 %v1308, %v1312
      %v1315 = vshll.u32 %v1126, 16
      %v1317 = vrot.slane %v1315, 1
      %v1318 = vsel %vm549, %v1313, %v1317
      %v1351 = vunpack.c.l.b16 %v967
      %v1352 = vunpack.c.l.b16 %v968
      %v1353 = vunpack.c.l.b16 %v969
      %v1354 = vunpack.c.l.b16 %v970
      %v1355 = vunpack.c.l.b16 %v971
      %v1356 = vunpack.c.l.b16 %v972
      %v1357 = vunpack.c.l.b16 %v973
      %v1358 = vunpack.c.l.b16 %v974
      %v1359 = vunpack.c.l.b16 %v975
      %v1360 = vunpack.c.l.b16 %v976
      %v1361 = vunpack.c.l.b16 %v977
      %v1362 = vunpack.c.l.b16 %v978
      %v1363 = vunpack.c.l.b16 %v979
      %v1364 = vunpack.c.l.b16 %v980
      %v1365 = vunpack.c.l.b16 %v981
      %v1366 = vunpack.c.l.b16 %v982
      %v1367 = vpack.c.b16 %v1016, %v1351
      %v1368 = vpack.c.b16 %v1018, %v1352
      %v1369 = vpack.c.b16 %v1020, %v1353
      %v1370 = vpack.c.b16 %v1022, %v1354
      %v1371 = vpack.c.b16 %v1024, %v1355
      %v1372 = vpack.c.b16 %v1026, %v1356
      %v1373 = vpack.c.b16 %v1028, %v1357
      %v1374 = vpack.c.b16 %v1030, %v1358
      %v1375 = vpack.c.b16 %v1032, %v1359
      %v1376 = vpack.c.b16 %v1034, %v1360
      %v1377 = vpack.c.b16 %v1036, %v1361
      %v1378 = vpack.c.b16 %v1038, %v1362
      %v1379 = vpack.c.b16 %v1040, %v1363
      %v1380 = vpack.c.b16 %v1042, %v1364
      %v1381 = vpack.c.b16 %v1044, %v1365
      %v1382 = vpack.c.b16 %v1046, %v1366
      %v1383 = vrot.slane %v1367, 1
      %v1384 = vrot.slane %v1111, 1
      %v1385 = vsel %vm806, %v1383, %v1384
      %v1386 = vrot.slane %v1368, 1
      %v1387 = vrot.slane %v1112, 1
      %v1388 = vsel %vm806, %v1386, %v1387
      %v1389 = vrot.slane %v1369, 1
      %v1390 = vrot.slane %v1113, 1
      %v1391 = vsel %vm806, %v1389, %v1390
      %v1392 = vrot.slane %v1370, 1
      %v1393 = vrot.slane %v1114, 1
      %v1394 = vsel %vm806, %v1392, %v1393
      %v1395 = vrot.slane %v1371, 1
      %v1396 = vrot.slane %v1115, 1
      %v1397 = vsel %vm806, %v1395, %v1396
      %v1398 = vrot.slane %v1372, 1
      %v1399 = vrot.slane %v1116, 1
      %v1400 = vsel %vm806, %v1398, %v1399
      %v1401 = vrot.slane %v1373, 1
      %v1402 = vrot.slane %v1117, 1
      %v1403 = vsel %vm806, %v1401, %v1402
      %v1404 = vrot.slane %v1374, 1
      %v1405 = vrot.slane %v1118, 1
      %v1406 = vsel %vm806, %v1404, %v1405
      %v1407 = vrot.slane %v1375, 1
      %v1408 = vrot.slane %v1119, 1
      %v1409 = vsel %vm806, %v1407, %v1408
      %v1410 = vrot.slane %v1376, 1
      %v1411 = vrot.slane %v1120, 1
      %v1412 = vsel %vm806, %v1410, %v1411
      %v1413 = vrot.slane %v1377, 1
      %v1414 = vrot.slane %v1121, 1
      %v1415 = vsel %vm806, %v1413, %v1414
      %v1416 = vrot.slane %v1378, 1
      %v1417 = vrot.slane %v1122, 1
      %v1418 = vsel %vm806, %v1416, %v1417
      %v1419 = vrot.slane %v1379, 1
      %v1420 = vrot.slane %v1123, 1
      %v1421 = vsel %vm806, %v1419, %v1420
      %v1422 = vrot.slane %v1380, 1
      %v1423 = vrot.slane %v1124, 1
      %v1424 = vsel %vm806, %v1422, %v1423
      %v1425 = vrot.slane %v1381, 1
      %v1426 = vrot.slane %v1125, 1
      %v1427 = vsel %vm806, %v1425, %v1426
      %v1428 = vrot.slane %v1382, 1
      %v1429 = vrot.slane %v1126, 1
      %v1430 = vsel %vm806, %v1428, %v1429
      %s1447 = scalar_lea.vmem %s3, 192
      %v1448 = vld [vmem:[%s1447] sm:$0xf]
      %v1449 = vld [vmem:[%s1447 + $0x4] sm:$0xf]
      %v1450 = vld [vmem:[%s1447 + $0x8] sm:$0xf]
      %v1451 = vld [vmem:[%s1447 + $0xc] sm:$0xf]
      %v1452 = vld [vmem:[%s1447 + $0x10] sm:$0xf]
      %v1453 = vld [vmem:[%s1447 + $0x14] sm:$0xf]
      %v1454 = vld [vmem:[%s1447 + $0x18] sm:$0xf]
      %v1455 = vld [vmem:[%s1447 + $0x1c] sm:$0xf]
      %v1456 = vld [vmem:[%s1447 + $0x20] sm:$0xf]
      %v1457 = vld [vmem:[%s1447 + $0x24] sm:$0xf]
      %v1458 = vld [vmem:[%s1447 + $0x28] sm:$0xf]
      %v1459 = vld [vmem:[%s1447 + $0x2c] sm:$0xf]
      %v1460 = vld [vmem:[%s1447 + $0x30] sm:$0xf]
      %v1461 = vld [vmem:[%s1447 + $0x34] sm:$0xf]
      %v1462 = vld [vmem:[%s1447 + $0x38] sm:$0xf]
      %v1463 = vld [vmem:[%s1447 + $0x3c] sm:$0xf]
      %v1464 = vld [vmem:[%s1447 + $0x40] sm:$0xf]
      %v1465 = vld [vmem:[%s1447 + $0x44] sm:$0xf]
      %v1466 = vld [vmem:[%s1447 + $0x48] sm:$0xf]
      %v1467 = vld [vmem:[%s1447 + $0x4c] sm:$0xf]
      %v1468 = vld [vmem:[%s1447 + $0x50] sm:$0xf]
      %v1469 = vld [vmem:[%s1447 + $0x54] sm:$0xf]
      %v1470 = vld [vmem:[%s1447 + $0x58] sm:$0xf]
      %v1471 = vld [vmem:[%s1447 + $0x5c] sm:$0xf]
      %v1472 = vld [vmem:[%s1447 + $0x60] sm:$0xf]
      %v1473 = vld [vmem:[%s1447 + $0x64] sm:$0xf]
      %v1474 = vld [vmem:[%s1447 + $0x68] sm:$0xf]
      %v1475 = vld [vmem:[%s1447 + $0x6c] sm:$0xf]
      %v1476 = vld [vmem:[%s1447 + $0x70] sm:$0xf]
      %v1477 = vld [vmem:[%s1447 + $0x74] sm:$0xf]
      %v1478 = vld [vmem:[%s1447 + $0x78] sm:$0xf]
      %v1479 = vld [vmem:[%s1447 + $0x7c] sm:$0xf]
      %v1480 = vld [vmem:[%s1447 + $0x80] sm:$0xf]
      %v1481 = vld [vmem:[%s1447 + $0x84] sm:$0xf]
      %v1482 = vld [vmem:[%s1447 + $0x88] sm:$0xf]
      %v1483 = vld [vmem:[%s1447 + $0x8c] sm:$0xf]
      %v1484 = vld [vmem:[%s1447 + $0x90] sm:$0xf]
      %v1485 = vld [vmem:[%s1447 + $0x94] sm:$0xf]
      %v1486 = vld [vmem:[%s1447 + $0x98] sm:$0xf]
      %v1487 = vld [vmem:[%s1447 + $0x9c] sm:$0xf]
      %v1488 = vld [vmem:[%s1447 + $0xa0] sm:$0xf]
      %v1489 = vld [vmem:[%s1447 + $0xa4] sm:$0xf]
      %v1490 = vld [vmem:[%s1447 + $0xa8] sm:$0xf]
      %v1491 = vld [vmem:[%s1447 + $0xac] sm:$0xf]
      %v1492 = vld [vmem:[%s1447 + $0xb0] sm:$0xf]
      %v1493 = vld [vmem:[%s1447 + $0xb4] sm:$0xf]
      %v1494 = vld [vmem:[%s1447 + $0xb8] sm:$0xf]
      %v1495 = vld [vmem:[%s1447 + $0xbc] sm:$0xf]
      %v1544 = vunpack.c.l.b16 %v1448
      %v1545 = vunpack.c.l.b16 %v1449
      %v1546 = vunpack.c.l.b16 %v1450
      %v1547 = vunpack.c.l.b16 %v1451
      %v1548 = vunpack.c.l.b16 %v1452
      %v1549 = vunpack.c.l.b16 %v1453
      %v1550 = vunpack.c.l.b16 %v1454
      %v1551 = vunpack.c.l.b16 %v1455
      %v1552 = vunpack.c.l.b16 %v1456
      %v1553 = vunpack.c.l.b16 %v1457
      %v1554 = vunpack.c.l.b16 %v1458
      %v1555 = vunpack.c.l.b16 %v1459
      %v1556 = vunpack.c.l.b16 %v1460
      %v1557 = vunpack.c.l.b16 %v1461
      %v1558 = vunpack.c.l.b16 %v1462
      %v1559 = vunpack.c.l.b16 %v1463
      %v1560 = vunpack.c.l.b16 %v1464
      %v1561 = vunpack.c.l.b16 %v1465
      %v1562 = vunpack.c.l.b16 %v1466
      %v1563 = vunpack.c.l.b16 %v1467
      %v1564 = vunpack.c.l.b16 %v1468
      %v1565 = vunpack.c.l.b16 %v1469
      %v1566 = vunpack.c.l.b16 %v1470
      %v1567 = vunpack.c.l.b16 %v1471
      %v1568 = vunpack.c.l.b16 %v1472
      %v1569 = vunpack.c.l.b16 %v1473
      %v1570 = vunpack.c.l.b16 %v1474
      %v1571 = vunpack.c.l.b16 %v1475
      %v1572 = vunpack.c.l.b16 %v1476
      %v1573 = vunpack.c.l.b16 %v1477
      %v1574 = vunpack.c.l.b16 %v1478
      %v1575 = vunpack.c.l.b16 %v1479
      %v1576 = vunpack.c.l.b16 %v1480
      %v1577 = vunpack.c.l.b16 %v1481
      %v1578 = vunpack.c.l.b16 %v1482
      %v1579 = vunpack.c.l.b16 %v1483
      %v1580 = vunpack.c.l.b16 %v1484
      %v1581 = vunpack.c.l.b16 %v1485
      %v1582 = vunpack.c.l.b16 %v1486
      %v1583 = vunpack.c.l.b16 %v1487
      %v1584 = vunpack.c.l.b16 %v1488
      %v1585 = vunpack.c.l.b16 %v1489
      %v1586 = vunpack.c.l.b16 %v1490
      %v1587 = vunpack.c.l.b16 %v1491
      %v1588 = vunpack.c.l.b16 %v1492
      %v1589 = vunpack.c.l.b16 %v1493
      %v1590 = vunpack.c.l.b16 %v1494
      %v1591 = vunpack.c.l.b16 %v1495
      %v1592 = vpack.c.b16 %v1545, %v1544
      %v1593 = vpack.c.b16 %v1547, %v1546
      %v1594 = vpack.c.b16 %v1549, %v1548
      %v1595 = vpack.c.b16 %v1551, %v1550
      %v1596 = vpack.c.b16 %v1553, %v1552
      %v1597 = vpack.c.b16 %v1555, %v1554
      %v1598 = vpack.c.b16 %v1557, %v1556
      %v1599 = vpack.c.b16 %v1559, %v1558
      %v1600 = vpack.c.b16 %v1561, %v1560
      %v1601 = vpack.c.b16 %v1563, %v1562
      %v1602 = vpack.c.b16 %v1565, %v1564
      %v1603 = vpack.c.b16 %v1567, %v1566
      %v1604 = vpack.c.b16 %v1569, %v1568
      %v1605 = vpack.c.b16 %v1571, %v1570
      %v1606 = vpack.c.b16 %v1573, %v1572
      %v1607 = vpack.c.b16 %v1575, %v1574
      %v1608 = vpack.c.b16 %v1577, %v1576
      %v1609 = vpack.c.b16 %v1579, %v1578
      %v1610 = vpack.c.b16 %v1581, %v1580
      %v1611 = vpack.c.b16 %v1583, %v1582
      %v1612 = vpack.c.b16 %v1585, %v1584
      %v1613 = vpack.c.b16 %v1587, %v1586
      %v1614 = vpack.c.b16 %v1589, %v1588
      %v1615 = vpack.c.b16 %v1591, %v1590
      %1640 = vmatprep.subr.bf16.mxu0 0
      %1641 = vmatpush1.bf16.msra.mxu0 %v1599
      %1642 = vmatprep.subr.bf16.mxu0 0
      %1643 = vmatpush1.bf16.msra.mxu0 %v1598
      %1644 = vmatprep.subr.bf16.mxu0 0
      %1645 = vmatpush1.bf16.msra.mxu0 %v1597
      %1646 = vmatprep.subr.bf16.mxu0 0
      %1647 = vmatpush1.bf16.msra.mxu0 %v1596
      %1648 = vmatprep.subr.bf16.mxu0 0
      %1649 = vmatpush1.bf16.msra.mxu0 %v1595
      %1650 = vmatprep.subr.bf16.mxu0 0
      %1651 = vmatpush1.bf16.msra.mxu0 %v1594
      %1652 = vmatprep.subr.bf16.mxu0 0
      %1653 = vmatpush1.bf16.msra.mxu0 %v1593
      %1654 = vmatprep.subr.bf16.mxu0 0
      %1655 = vmatpush1.bf16.msra.mxu0 %v1592
      %1656 = vmatprep.subr.bf16.mxu0 0
      %1657 = vmatpush2.bf16.msra.mxu0 %v1607
      %1658 = vmatprep.subr.bf16.mxu0 0
      %1659 = vmatpush2.bf16.msra.mxu0 %v1606
      %1660 = vmatprep.subr.bf16.mxu0 0
      %1661 = vmatpush2.bf16.msra.mxu0 %v1605
      %1662 = vmatprep.subr.bf16.mxu0 0
      %1663 = vmatpush2.bf16.msra.mxu0 %v1604
      %1664 = vmatprep.subr.bf16.mxu0 0
      %1665 = vmatpush2.bf16.msra.mxu0 %v1603
      %1666 = vmatprep.subr.bf16.mxu0 0
      %1667 = vmatpush2.bf16.msra.mxu0 %v1602
      %1668 = vmatprep.subr.bf16.mxu0 0
      %1669 = vmatpush2.bf16.msra.mxu0 %v1601
      %1670 = vmatprep.subr.bf16.mxu0 0
      %1671 = vmatpush2.bf16.msra.mxu0 %v1600
      %1672 = vmatprep.mubr.bf16.mxu0 %v1138
      %1673 = vmatmul.mubr.bf16.gmra.mxu0 %v1047
      %v1674 = vpop.f32.mrf.mxu0
      %v1675 = vadd.f32 0.0, %v1674
      %v1676 = vpop.f32.mrf.mxu0
      %v1677 = vpop.f32.mrf.mxu0
      %v1678 = vadd.f32 0.0, %v1677
      %v1679 = vpop.f32.mrf.mxu0
      %1680 = vmatprep.mubr.bf16.mxu0 %v1150
      %1681 = vmatmul.mubr.bf16.gmra.mxu0 %v1048
      %v1682 = vpop.f32.mrf.mxu0
      %v1683 = vadd.f32 0.0, %v1682
      %v1684 = vpop.f32.mrf.mxu0
      %v1685 = vpop.f32.mrf.mxu0
      %v1686 = vadd.f32 0.0, %v1685
      %v1687 = vpop.f32.mrf.mxu0
      %1688 = vmatprep.mubr.bf16.mxu0 %v1162
      %1689 = vmatmul.mubr.bf16.gmra.mxu0 %v1049
      %v1690 = vpop.f32.mrf.mxu0
      %v1691 = vadd.f32 0.0, %v1690
      %v1692 = vpop.f32.mrf.mxu0
      %v1693 = vpop.f32.mrf.mxu0
      %v1694 = vadd.f32 0.0, %v1693
      %v1695 = vpop.f32.mrf.mxu0
      %1696 = vmatprep.mubr.bf16.mxu0 %v1174
      %1697 = vmatmul.mubr.bf16.gmra.mxu0 %v1050
      %v1698 = vpop.f32.mrf.mxu0
      %v1699 = vadd.f32 0.0, %v1698
      %v1700 = vpop.f32.mrf.mxu0
      %v1701 = vpop.f32.mrf.mxu0
      %v1702 = vadd.f32 0.0, %v1701
      %v1703 = vpop.f32.mrf.mxu0
      %1704 = vmatprep.mubr.bf16.mxu0 %v1186
      %1705 = vmatmul.mubr.bf16.gmra.mxu0 %v1051
      %v1706 = vpop.f32.mrf.mxu0
      %v1707 = vadd.f32 0.0, %v1706
      %v1708 = vpop.f32.mrf.mxu0
      %v1709 = vpop.f32.mrf.mxu0
      %v1710 = vadd.f32 0.0, %v1709
      %v1711 = vpop.f32.mrf.mxu0
      %1712 = vmatprep.mubr.bf16.mxu0 %v1198
      %1713 = vmatmul.mubr.bf16.gmra.mxu0 %v1052
      %v1714 = vpop.f32.mrf.mxu0
      %v1715 = vadd.f32 0.0, %v1714
      %v1716 = vpop.f32.mrf.mxu0
      %v1717 = vpop.f32.mrf.mxu0
      %v1718 = vadd.f32 0.0, %v1717
      %v1719 = vpop.f32.mrf.mxu0
      %1720 = vmatprep.mubr.bf16.mxu0 %v1210
      %1721 = vmatmul.mubr.bf16.gmra.mxu0 %v1053
      %v1722 = vpop.f32.mrf.mxu0
      %v1723 = vadd.f32 0.0, %v1722
      %v1724 = vpop.f32.mrf.mxu0
      %v1725 = vpop.f32.mrf.mxu0
      %v1726 = vadd.f32 0.0, %v1725
      %v1727 = vpop.f32.mrf.mxu0
      %1728 = vmatprep.mubr.bf16.mxu0 %v1222
      %1729 = vmatmul.mubr.bf16.gmra.mxu0 %v1054
      %v1730 = vpop.f32.mrf.mxu0
      %v1731 = vadd.f32 0.0, %v1730
      %v1732 = vpop.f32.mrf.mxu0
      %v1733 = vpop.f32.mrf.mxu0
      %v1734 = vadd.f32 0.0, %v1733
      %v1735 = vpop.f32.mrf.mxu0
      %1736 = vmatprep.mubr.bf16.mxu0 %v1234
      %1737 = vmatmul.mubr.bf16.gmra.mxu0 %v1055
      %v1738 = vpop.f32.mrf.mxu0
      %v1739 = vadd.f32 0.0, %v1738
      %v1740 = vpop.f32.mrf.mxu0
      %v1741 = vpop.f32.mrf.mxu0
      %v1742 = vadd.f32 0.0, %v1741
      %v1743 = vpop.f32.mrf.mxu0
      %1744 = vmatprep.mubr.bf16.mxu0 %v1246
      %1745 = vmatmul.mubr.bf16.gmra.mxu0 %v1056
      %v1746 = vpop.f32.mrf.mxu0
      %v1747 = vadd.f32 0.0, %v1746
      %v1748 = vpop.f32.mrf.mxu0
      %v1749 = vpop.f32.mrf.mxu0
      %v1750 = vadd.f32 0.0, %v1749
      %v1751 = vpop.f32.mrf.mxu0
      %1752 = vmatprep.mubr.bf16.mxu0 %v1258
      %1753 = vmatmul.mubr.bf16.gmra.mxu0 %v1057
      %v1754 = vpop.f32.mrf.mxu0
      %v1755 = vadd.f32 0.0, %v1754
      %v1756 = vpop.f32.mrf.mxu0
      %v1757 = vpop.f32.mrf.mxu0
      %v1758 = vadd.f32 0.0, %v1757
      %v1759 = vpop.f32.mrf.mxu0
      %1760 = vmatprep.mubr.bf16.mxu0 %v1270
      %1761 = vmatmul.mubr.bf16.gmra.mxu0 %v1058
      %v1762 = vpop.f32.mrf.mxu0
      %v1763 = vadd.f32 0.0, %v1762
      %v1764 = vpop.f32.mrf.mxu0
      %v1765 = vpop.f32.mrf.mxu0
      %v1766 = vadd.f32 0.0, %v1765
      %v1767 = vpop.f32.mrf.mxu0
      %1768 = vmatprep.mubr.bf16.mxu0 %v1282
      %1769 = vmatmul.mubr.bf16.gmra.mxu0 %v1059
      %v1770 = vpop.f32.mrf.mxu0
      %v1771 = vadd.f32 0.0, %v1770
      %v1772 = vpop.f32.mrf.mxu0
      %v1773 = vpop.f32.mrf.mxu0
      %v1774 = vadd.f32 0.0, %v1773
      %v1775 = vpop.f32.mrf.mxu0
      %1776 = vmatprep.mubr.bf16.mxu0 %v1294
      %1777 = vmatmul.mubr.bf16.gmra.mxu0 %v1060
      %v1778 = vpop.f32.mrf.mxu0
      %v1779 = vadd.f32 0.0, %v1778
      %v1780 = vpop.f32.mrf.mxu0
      %v1781 = vpop.f32.mrf.mxu0
      %v1782 = vadd.f32 0.0, %v1781
      %v1783 = vpop.f32.mrf.mxu0
      %1784 = vmatprep.mubr.bf16.mxu0 %v1306
      %1785 = vmatmul.mubr.bf16.gmra.mxu0 %v1061
      %v1786 = vpop.f32.mrf.mxu0
      %v1787 = vadd.f32 0.0, %v1786
      %v1788 = vpop.f32.mrf.mxu0
      %v1789 = vpop.f32.mrf.mxu0
      %v1790 = vadd.f32 0.0, %v1789
      %v1791 = vpop.f32.mrf.mxu0
      %1792 = vmatprep.mubr.bf16.mxu0 %v1318
      %1793 = vmatmul.mubr.bf16.gmra.mxu0 %v1062
      %v1794 = vpop.f32.mrf.mxu0
      %v1795 = vadd.f32 0.0, %v1794
      %v1796 = vpop.f32.mrf.mxu0
      %v1797 = vpop.f32.mrf.mxu0
      %v1798 = vadd.f32 0.0, %v1797
      %v1799 = vpop.f32.mrf.mxu0
      %1800 = vdwg.mxu0
      %1801 = vmatprep.subr.bf16.mxu0 0
      %1802 = vmatpush1.bf16.msra.mxu0 %v1615
      %1803 = vmatprep.subr.bf16.mxu0 0
      %1804 = vmatpush1.bf16.msra.mxu0 %v1614
      %1805 = vmatprep.subr.bf16.mxu0 0
      %1806 = vmatpush1.bf16.msra.mxu0 %v1613
      %1807 = vmatprep.subr.bf16.mxu0 0
      %1808 = vmatpush1.bf16.msra.mxu0 %v1612
      %1809 = vmatprep.subr.bf16.mxu0 0
      %1810 = vmatpush1.bf16.msra.mxu0 %v1611
      %1811 = vmatprep.subr.bf16.mxu0 0
      %1812 = vmatpush1.bf16.msra.mxu0 %v1610
      %1813 = vmatprep.subr.bf16.mxu0 0
      %1814 = vmatpush1.bf16.msra.mxu0 %v1609
      %1815 = vmatprep.subr.bf16.mxu0 0
      %1816 = vmatpush1.bf16.msra.mxu0 %v1608
      %1817 = vmatprep.subr.bf16.mxu0 0
      %1818 = vmatpush2.bf16.msra.mxu0 0
      %1819 = vmatprep.subr.bf16.mxu0 0
      %1820 = vmatpush2.bf16.msra.mxu0 0
      %1821 = vmatprep.subr.bf16.mxu0 0
      %1822 = vmatpush2.bf16.msra.mxu0 0
      %1823 = vmatprep.subr.bf16.mxu0 0
      %1824 = vmatpush2.bf16.msra.mxu0 0
      %1825 = vmatprep.subr.bf16.mxu0 0
      %1826 = vmatpush2.bf16.msra.mxu0 0
      %1827 = vmatprep.subr.bf16.mxu0 0
      %1828 = vmatpush2.bf16.msra.mxu0 0
      %1829 = vmatprep.subr.bf16.mxu0 0
      %1830 = vmatpush2.bf16.msra.mxu0 0
      %1831 = vmatprep.subr.bf16.mxu0 0
      %1832 = vmatpush2.bf16.msra.mxu0 0
      %1833 = vmatprep.mubr.bf16.mxu0 0
      %1834 = vmatmul.mubr.bf16.gmra.mxu0 %v1385
      %v1835 = vpop.f32.mrf.mxu0
      %v1836 = vadd.f32 %v1675, %v1835
      %v1837 = vpop.f32.mrf.mxu0
      %v1838 = vpop.f32.mrf.mxu0
      %v1839 = vadd.f32 %v1678, %v1838
      %v1840 = vpop.f32.mrf.mxu0
      %1841 = vmatprep.mubr.bf16.mxu0 0
      %1842 = vmatmul.mubr.bf16.gmra.mxu0 %v1388
      %v1843 = vpop.f32.mrf.mxu0
      %v1844 = vadd.f32 %v1683, %v1843
      %v1845 = vpop.f32.mrf.mxu0
      %v1846 = vpop.f32.mrf.mxu0
      %v1847 = vadd.f32 %v1686, %v1846
      %v1848 = vpop.f32.mrf.mxu0
      %1849 = vmatprep.mubr.bf16.mxu0 0
      %1850 = vmatmul.mubr.bf16.gmra.mxu0 %v1391
      %v1851 = vpop.f32.mrf.mxu0
      %v1852 = vadd.f32 %v1691, %v1851
      %v1853 = vpop.f32.mrf.mxu0
      %v1854 = vpop.f32.mrf.mxu0
      %v1855 = vadd.f32 %v1694, %v1854
      %v1856 = vpop.f32.mrf.mxu0
      %1857 = vmatprep.mubr.bf16.mxu0 0
      %1858 = vmatmul.mubr.bf16.gmra.mxu0 %v1394
      %v1859 = vpop.f32.mrf.mxu0
      %v1860 = vadd.f32 %v1699, %v1859
      %v1861 = vpop.f32.mrf.mxu0
      %v1862 = vpop.f32.mrf.mxu0
      %v1863 = vadd.f32 %v1702, %v1862
      %v1864 = vpop.f32.mrf.mxu0
      %1865 = vmatprep.mubr.bf16.mxu0 0
      %1866 = vmatmul.mubr.bf16.gmra.mxu0 %v1397
      %v1867 = vpop.f32.mrf.mxu0
      %v1868 = vadd.f32 %v1707, %v1867
      %v1869 = vpop.f32.mrf.mxu0
      %v1870 = vpop.f32.mrf.mxu0
      %v1871 = vadd.f32 %v1710, %v1870
      %v1872 = vpop.f32.mrf.mxu0
      %1873 = vmatprep.mubr.bf16.mxu0 0
      %1874 = vmatmul.mubr.bf16.gmra.mxu0 %v1400
      %v1875 = vpop.f32.mrf.mxu0
      %v1876 = vadd.f32 %v1715, %v1875
      %v1877 = vpop.f32.mrf.mxu0
      %v1878 = vpop.f32.mrf.mxu0
      %v1879 = vadd.f32 %v1718, %v1878
      %v1880 = vpop.f32.mrf.mxu0
      %1881 = vmatprep.mubr.bf16.mxu0 0
      %1882 = vmatmul.mubr.bf16.gmra.mxu0 %v1403
      %v1883 = vpop.f32.mrf.mxu0
      %v1884 = vadd.f32 %v1723, %v1883
      %v1885 = vpop.f32.mrf.mxu0
      %v1886 = vpop.f32.mrf.mxu0
      %v1887 = vadd.f32 %v1726, %v1886
      %v1888 = vpop.f32.mrf.mxu0
      %1889 = vmatprep.mubr.bf16.mxu0 0
      %1890 = vmatmul.mubr.bf16.gmra.mxu0 %v1406
      %v1891 = vpop.f32.mrf.mxu0
      %v1892 = vadd.f32 %v1731, %v1891
      %v1893 = vpop.f32.mrf.mxu0
      %v1894 = vpop.f32.mrf.mxu0
      %v1895 = vadd.f32 %v1734, %v1894
      %v1896 = vpop.f32.mrf.mxu0
      %1897 = vmatprep.mubr.bf16.mxu0 0
      %1898 = vmatmul.mubr.bf16.gmra.mxu0 %v1409
      %v1899 = vpop.f32.mrf.mxu0
      %v1900 = vadd.f32 %v1739, %v1899
      %v1901 = vpop.f32.mrf.mxu0
      %v1902 = vpop.f32.mrf.mxu0
      %v1903 = vadd.f32 %v1742, %v1902
      %v1904 = vpop.f32.mrf.mxu0
      %1905 = vmatprep.mubr.bf16.mxu0 0
      %1906 = vmatmul.mubr.bf16.gmra.mxu0 %v1412
      %v1907 = vpop.f32.mrf.mxu0
      %v1908 = vadd.f32 %v1747, %v1907
      %v1909 = vpop.f32.mrf.mxu0
      %v1910 = vpop.f32.mrf.mxu0
      %v1911 = vadd.f32 %v1750, %v1910
      %v1912 = vpop.f32.mrf.mxu0
      %1913 = vmatprep.mubr.bf16.mxu0 0
      %1914 = vmatmul.mubr.bf16.gmra.mxu0 %v1415
      %v1915 = vpop.f32.mrf.mxu0
      %v1916 = vadd.f32 %v1755, %v1915
      %v1917 = vpop.f32.mrf.mxu0
      %v1918 = vpop.f32.mrf.mxu0
      %v1919 = vadd.f32 %v1758, %v1918
      %v1920 = vpop.f32.mrf.mxu0
      %1921 = vmatprep.mubr.bf16.mxu0 0
      %1922 = vmatmul.mubr.bf16.gmra.mxu0 %v1418
      %v1923 = vpop.f32.mrf.mxu0
      %v1924 = vadd.f32 %v1763, %v1923
      %v1925 = vpop.f32.mrf.mxu0
      %v1926 = vpop.f32.mrf.mxu0
      %v1927 = vadd.f32 %v1766, %v1926
      %v1928 = vpop.f32.mrf.mxu0
      %1929 = vmatprep.mubr.bf16.mxu0 0
      %1930 = vmatmul.mubr.bf16.gmra.mxu0 %v1421
      %v1931 = vpop.f32.mrf.mxu0
      %v1932 = vadd.f32 %v1771, %v1931
      %v1933 = vpop.f32.mrf.mxu0
      %v1934 = vpop.f32.mrf.mxu0
      %v1935 = vadd.f32 %v1774, %v1934
      %v1936 = vpop.f32.mrf.mxu0
      %1937 = vmatprep.mubr.bf16.mxu0 0
      %1938 = vmatmul.mubr.bf16.gmra.mxu0 %v1424
      %v1939 = vpop.f32.mrf.mxu0
      %v1940 = vadd.f32 %v1779, %v1939
      %v1941 = vpop.f32.mrf.mxu0
      %v1942 = vpop.f32.mrf.mxu0
      %v1943 = vadd.f32 %v1782, %v1942
      %v1944 = vpop.f32.mrf.mxu0
      %1945 = vmatprep.mubr.bf16.mxu0 0
      %1946 = vmatmul.mubr.bf16.gmra.mxu0 %v1427
      %v1947 = vpop.f32.mrf.mxu0
      %v1948 = vadd.f32 %v1787, %v1947
      %v1949 = vpop.f32.mrf.mxu0
      %v1950 = vpop.f32.mrf.mxu0
      %v1951 = vadd.f32 %v1790, %v1950
      %v1952 = vpop.f32.mrf.mxu0
      %1953 = vmatprep.mubr.bf16.mxu0 0
      %1954 = vmatmul.mubr.bf16.gmra.mxu0 %v1430
      %v1955 = vpop.f32.mrf.mxu0
      %v1956 = vadd.f32 %v1795, %v1955
      %v1957 = vpop.f32.mrf.mxu0
      %v1958 = vpop.f32.mrf.mxu0
      %v1959 = vadd.f32 %v1798, %v1958
      %v1960 = vpop.f32.mrf.mxu0
      %1961 = vdwg.mxu0
      %v2010 = vunpack.c.l.b16 %v871
      %v2011 = vunpack.c.l.b16 %v872
      %v2012 = vunpack.c.l.b16 %v873
      %v2013 = vunpack.c.l.b16 %v874
      %v2014 = vunpack.c.l.b16 %v875
      %v2015 = vunpack.c.l.b16 %v876
      %v2016 = vunpack.c.l.b16 %v877
      %v2017 = vunpack.c.l.b16 %v878
      %v2018 = vunpack.c.l.b16 %v879
      %v2019 = vunpack.c.l.b16 %v880
      %v2020 = vunpack.c.l.b16 %v881
      %v2021 = vunpack.c.l.b16 %v882
      %v2022 = vunpack.c.l.b16 %v883
      %v2023 = vunpack.c.l.b16 %v884
      %v2024 = vunpack.c.l.b16 %v885
      %v2025 = vunpack.c.l.b16 %v886
      %v2026 = vunpack.c.l.b16 %v887
      %v2027 = vunpack.c.l.b16 %v888
      %v2028 = vunpack.c.l.b16 %v889
      %v2029 = vunpack.c.l.b16 %v890
      %v2030 = vunpack.c.l.b16 %v891
      %v2031 = vunpack.c.l.b16 %v892
      %v2032 = vunpack.c.l.b16 %v893
      %v2033 = vunpack.c.l.b16 %v894
      %v2034 = vunpack.c.l.b16 %v895
      %v2035 = vunpack.c.l.b16 %v896
      %v2036 = vunpack.c.l.b16 %v897
      %v2037 = vunpack.c.l.b16 %v898
      %v2038 = vunpack.c.l.b16 %v899
      %v2039 = vunpack.c.l.b16 %v900
      %v2040 = vunpack.c.l.b16 %v901
      %v2041 = vunpack.c.l.b16 %v902
      %v2042 = vunpack.c.l.b16 %v903
      %v2043 = vunpack.c.l.b16 %v904
      %v2044 = vunpack.c.l.b16 %v905
      %v2045 = vunpack.c.l.b16 %v906
      %v2046 = vunpack.c.l.b16 %v907
      %v2047 = vunpack.c.l.b16 %v908
      %v2048 = vunpack.c.l.b16 %v909
      %v2049 = vunpack.c.l.b16 %v910
      %v2050 = vunpack.c.l.b16 %v911
      %v2051 = vunpack.c.l.b16 %v912
      %v2052 = vunpack.c.l.b16 %v913
      %v2053 = vunpack.c.l.b16 %v914
      %v2054 = vunpack.c.l.b16 %v915
      %v2055 = vunpack.c.l.b16 %v916
      %v2056 = vunpack.c.l.b16 %v917
      %v2057 = vunpack.c.l.b16 %v918
      %v2058 = vpack.c.b16 %v2011, %v2010
      %v2059 = vpack.c.b16 %v2013, %v2012
      %v2060 = vpack.c.b16 %v2015, %v2014
      %v2061 = vpack.c.b16 %v2017, %v2016
      %v2062 = vpack.c.b16 %v2019, %v2018
      %v2063 = vpack.c.b16 %v2021, %v2020
      %v2064 = vpack.c.b16 %v2023, %v2022
      %v2065 = vpack.c.b16 %v2025, %v2024
      %v2066 = vpack.c.b16 %v2027, %v2026
      %v2067 = vpack.c.b16 %v2029, %v2028
      %v2068 = vpack.c.b16 %v2031, %v2030
      %v2069 = vpack.c.b16 %v2033, %v2032
      %v2070 = vpack.c.b16 %v2035, %v2034
      %v2071 = vpack.c.b16 %v2037, %v2036
      %v2072 = vpack.c.b16 %v2039, %v2038
      %v2073 = vpack.c.b16 %v2041, %v2040
      %v2074 = vpack.c.b16 %v2043, %v2042
      %v2075 = vpack.c.b16 %v2045, %v2044
      %v2076 = vpack.c.b16 %v2047, %v2046
      %v2077 = vpack.c.b16 %v2049, %v2048
      %v2078 = vpack.c.b16 %v2051, %v2050
      %v2079 = vpack.c.b16 %v2053, %v2052
      %v2080 = vpack.c.b16 %v2055, %v2054
      %v2081 = vpack.c.b16 %v2057, %v2056
      %2106 = vmatprep.subr.bf16.mxu0 0
      %2107 = vmatpush1.bf16.msra.mxu0 %v2065
      %2108 = vmatprep.subr.bf16.mxu0 0
      %2109 = vmatpush1.bf16.msra.mxu0 %v2064
      %2110 = vmatprep.subr.bf16.mxu0 0
      %2111 = vmatpush1.bf16.msra.mxu0 %v2063
      %2112 = vmatprep.subr.bf16.mxu0 0
      %2113 = vmatpush1.bf16.msra.mxu0 %v2062
      %2114 = vmatprep.subr.bf16.mxu0 0
      %2115 = vmatpush1.bf16.msra.mxu0 %v2061
      %2116 = vmatprep.subr.bf16.mxu0 0
      %2117 = vmatpush1.bf16.msra.mxu0 %v2060
      %2118 = vmatprep.subr.bf16.mxu0 0
      %2119 = vmatpush1.bf16.msra.mxu0 %v2059
      %2120 = vmatprep.subr.bf16.mxu0 0
      %2121 = vmatpush1.bf16.msra.mxu0 %v2058
      %2122 = vmatprep.subr.bf16.mxu0 0
      %2123 = vmatpush2.bf16.msra.mxu0 %v2073
      %2124 = vmatprep.subr.bf16.mxu0 0
      %2125 = vmatpush2.bf16.msra.mxu0 %v2072
      %2126 = vmatprep.subr.bf16.mxu0 0
      %2127 = vmatpush2.bf16.msra.mxu0 %v2071
      %2128 = vmatprep.subr.bf16.mxu0 0
      %2129 = vmatpush2.bf16.msra.mxu0 %v2070
      %2130 = vmatprep.subr.bf16.mxu0 0
      %2131 = vmatpush2.bf16.msra.mxu0 %v2069
      %2132 = vmatprep.subr.bf16.mxu0 0
      %2133 = vmatpush2.bf16.msra.mxu0 %v2068
      %2134 = vmatprep.subr.bf16.mxu0 0
      %2135 = vmatpush2.bf16.msra.mxu0 %v2067
      %2136 = vmatprep.subr.bf16.mxu0 0
      %2137 = vmatpush2.bf16.msra.mxu0 %v2066
      %2138 = vmatprep.mubr.bf16.mxu0 %v561
      %2139 = vmatmul.mubr.bf16.gmra.mxu0 %v469
      %v2140 = vpop.f32.mrf.mxu0
      %v2141 = vadd.f32 %v1836, %v2140
      %v2142 = vpop.f32.mrf.mxu0
      %v2143 = vpop.f32.mrf.mxu0
      %v2144 = vadd.f32 %v1839, %v2143
      %v2145 = vpop.f32.mrf.mxu0
      %2146 = vmatprep.mubr.bf16.mxu0 %v573
      %2147 = vmatmul.mubr.bf16.gmra.mxu0 %v470
      %v2148 = vpop.f32.mrf.mxu0
      %v2149 = vadd.f32 %v1844, %v2148
      %v2150 = vpop.f32.mrf.mxu0
      %v2151 = vpop.f32.mrf.mxu0
      %v2152 = vadd.f32 %v1847, %v2151
      %v2153 = vpop.f32.mrf.mxu0
      %2154 = vmatprep.mubr.bf16.mxu0 %v585
      %2155 = vmatmul.mubr.bf16.gmra.mxu0 %v471
      %v2156 = vpop.f32.mrf.mxu0
      %v2157 = vadd.f32 %v1852, %v2156
      %v2158 = vpop.f32.mrf.mxu0
      %v2159 = vpop.f32.mrf.mxu0
      %v2160 = vadd.f32 %v1855, %v2159
      %v2161 = vpop.f32.mrf.mxu0
      %2162 = vmatprep.mubr.bf16.mxu0 %v597
      %2163 = vmatmul.mubr.bf16.gmra.mxu0 %v472
      %v2164 = vpop.f32.mrf.mxu0
      %v2165 = vadd.f32 %v1860, %v2164
      %v2166 = vpop.f32.mrf.mxu0
      %v2167 = vpop.f32.mrf.mxu0
      %v2168 = vadd.f32 %v1863, %v2167
      %v2169 = vpop.f32.mrf.mxu0
      %2170 = vmatprep.mubr.bf16.mxu0 %v609
      %2171 = vmatmul.mubr.bf16.gmra.mxu0 %v473
      %v2172 = vpop.f32.mrf.mxu0
      %v2173 = vadd.f32 %v1868, %v2172
      %v2174 = vpop.f32.mrf.mxu0
      %v2175 = vpop.f32.mrf.mxu0
      %v2176 = vadd.f32 %v1871, %v2175
      %v2177 = vpop.f32.mrf.mxu0
      %2178 = vmatprep.mubr.bf16.mxu0 %v621
      %2179 = vmatmul.mubr.bf16.gmra.mxu0 %v474
      %v2180 = vpop.f32.mrf.mxu0
      %v2181 = vadd.f32 %v1876, %v2180
      %v2182 = vpop.f32.mrf.mxu0
      %v2183 = vpop.f32.mrf.mxu0
      %v2184 = vadd.f32 %v1879, %v2183
      %v2185 = vpop.f32.mrf.mxu0
      %2186 = vmatprep.mubr.bf16.mxu0 %v633
      %2187 = vmatmul.mubr.bf16.gmra.mxu0 %v475
      %v2188 = vpop.f32.mrf.mxu0
      %v2189 = vadd.f32 %v1884, %v2188
      %v2190 = vpop.f32.mrf.mxu0
      %v2191 = vpop.f32.mrf.mxu0
      %v2192 = vadd.f32 %v1887, %v2191
      %v2193 = vpop.f32.mrf.mxu0
      %2194 = vmatprep.mubr.bf16.mxu0 %v645
      %2195 = vmatmul.mubr.bf16.gmra.mxu0 %v476
      %v2196 = vpop.f32.mrf.mxu0
      %v2197 = vadd.f32 %v1892, %v2196
      %v2198 = vpop.f32.mrf.mxu0
      %v2199 = vpop.f32.mrf.mxu0
      %v2200 = vadd.f32 %v1895, %v2199
      %v2201 = vpop.f32.mrf.mxu0
      %2202 = vmatprep.mubr.bf16.mxu0 %v657
      %2203 = vmatmul.mubr.bf16.gmra.mxu0 %v477
      %v2204 = vpop.f32.mrf.mxu0
      %v2205 = vadd.f32 %v1900, %v2204
      %v2206 = vpop.f32.mrf.mxu0
      %v2207 = vpop.f32.mrf.mxu0
      %v2208 = vadd.f32 %v1903, %v2207
      %v2209 = vpop.f32.mrf.mxu0
      %2210 = vmatprep.mubr.bf16.mxu0 %v669
      %2211 = vmatmul.mubr.bf16.gmra.mxu0 %v478
      %v2212 = vpop.f32.mrf.mxu0
      %v2213 = vadd.f32 %v1908, %v2212
      %v2214 = vpop.f32.mrf.mxu0
      %v2215 = vpop.f32.mrf.mxu0
      %v2216 = vadd.f32 %v1911, %v2215
      %v2217 = vpop.f32.mrf.mxu0
      %2218 = vmatprep.mubr.bf16.mxu0 %v681
      %2219 = vmatmul.mubr.bf16.gmra.mxu0 %v479
      %v2220 = vpop.f32.mrf.mxu0
      %v2221 = vadd.f32 %v1916, %v2220
      %v2222 = vpop.f32.mrf.mxu0
      %v2223 = vpop.f32.mrf.mxu0
      %v2224 = vadd.f32 %v1919, %v2223
      %v2225 = vpop.f32.mrf.mxu0
      %2226 = vmatprep.mubr.bf16.mxu0 %v693
      %2227 = vmatmul.mubr.bf16.gmra.mxu0 %v480
      %v2228 = vpop.f32.mrf.mxu0
      %v2229 = vadd.f32 %v1924, %v2228
      %v2230 = vpop.f32.mrf.mxu0
      %v2231 = vpop.f32.mrf.mxu0
      %v2232 = vadd.f32 %v1927, %v2231
      %v2233 = vpop.f32.mrf.mxu0
      %2234 = vmatprep.mubr.bf16.mxu0 %v705
      %2235 = vmatmul.mubr.bf16.gmra.mxu0 %v481
      %v2236 = vpop.f32.mrf.mxu0
      %v2237 = vadd.f32 %v1932, %v2236
      %v2238 = vpop.f32.mrf.mxu0
      %v2239 = vpop.f32.mrf.mxu0
      %v2240 = vadd.f32 %v1935, %v2239
      %v2241 = vpop.f32.mrf.mxu0
      %2242 = vmatprep.mubr.bf16.mxu0 %v717
      %2243 = vmatmul.mubr.bf16.gmra.mxu0 %v482
      %v2244 = vpop.f32.mrf.mxu0
      %v2245 = vadd.f32 %v1940, %v2244
      %v2246 = vpop.f32.mrf.mxu0
      %v2247 = vpop.f32.mrf.mxu0
      %v2248 = vadd.f32 %v1943, %v2247
      %v2249 = vpop.f32.mrf.mxu0
      %2250 = vmatprep.mubr.bf16.mxu0 %v729
      %2251 = vmatmul.mubr.bf16.gmra.mxu0 %v483
      %v2252 = vpop.f32.mrf.mxu0
      %v2253 = vadd.f32 %v1948, %v2252
      %v2254 = vpop.f32.mrf.mxu0
      %v2255 = vpop.f32.mrf.mxu0
      %v2256 = vadd.f32 %v1951, %v2255
      %v2257 = vpop.f32.mrf.mxu0
      %2258 = vmatprep.mubr.bf16.mxu0 %v741
      %2259 = vmatmul.mubr.bf16.gmra.mxu0 %v484
      %v2260 = vpop.f32.mrf.mxu0
      %v2261 = vadd.f32 %v1956, %v2260
      %v2262 = vpop.f32.mrf.mxu0
      %v2263 = vpop.f32.mrf.mxu0
      %v2264 = vadd.f32 %v1959, %v2263
      %v2265 = vpop.f32.mrf.mxu0
      %2266 = vdwg.mxu0
      %2267 = vmatprep.subr.bf16.mxu0 0
      %2268 = vmatpush1.bf16.msra.mxu0 %v2081
      %2269 = vmatprep.subr.bf16.mxu0 0
      %2270 = vmatpush1.bf16.msra.mxu0 %v2080
      %2271 = vmatprep.subr.bf16.mxu0 0
      %2272 = vmatpush1.bf16.msra.mxu0 %v2079
      %2273 = vmatprep.subr.bf16.mxu0 0
      %2274 = vmatpush1.bf16.msra.mxu0 %v2078
      %2275 = vmatprep.subr.bf16.mxu0 0
      %2276 = vmatpush1.bf16.msra.mxu0 %v2077
      %2277 = vmatprep.subr.bf16.mxu0 0
      %2278 = vmatpush1.bf16.msra.mxu0 %v2076
      %2279 = vmatprep.subr.bf16.mxu0 0
      %2280 = vmatpush1.bf16.msra.mxu0 %v2075
      %2281 = vmatprep.subr.bf16.mxu0 0
      %2282 = vmatpush1.bf16.msra.mxu0 %v2074
      %2283 = vmatprep.subr.bf16.mxu0 0
      %2284 = vmatpush2.bf16.msra.mxu0 0
      %2285 = vmatprep.subr.bf16.mxu0 0
      %2286 = vmatpush2.bf16.msra.mxu0 0
      %2287 = vmatprep.subr.bf16.mxu0 0
      %2288 = vmatpush2.bf16.msra.mxu0 0
      %2289 = vmatprep.subr.bf16.mxu0 0
      %2290 = vmatpush2.bf16.msra.mxu0 0
      %2291 = vmatprep.subr.bf16.mxu0 0
      %2292 = vmatpush2.bf16.msra.mxu0 0
      %2293 = vmatprep.subr.bf16.mxu0 0
      %2294 = vmatpush2.bf16.msra.mxu0 0
      %2295 = vmatprep.subr.bf16.mxu0 0
      %2296 = vmatpush2.bf16.msra.mxu0 0
      %2297 = vmatprep.subr.bf16.mxu0 0
      %2298 = vmatpush2.bf16.msra.mxu0 0
      %2299 = vmatprep.mubr.bf16.mxu0 0
      %2300 = vmatmul.mubr.bf16.gmra.mxu0 %v809
      %v2301 = vpop.f32.mrf.mxu0
      %v2302 = vadd.f32 %v2141, %v2301
      %v2303 = vpop.f32.mrf.mxu0
      %v2304 = vpop.f32.mrf.mxu0
      %v2305 = vadd.f32 %v2144, %v2304
      %v2306 = vpop.f32.mrf.mxu0
      %2307 = vmatprep.mubr.bf16.mxu0 0
      %2308 = vmatmul.mubr.bf16.gmra.mxu0 %v812
      %v2309 = vpop.f32.mrf.mxu0
      %v2310 = vadd.f32 %v2149, %v2309
      %v2311 = vpop.f32.mrf.mxu0
      %v2312 = vpop.f32.mrf.mxu0
      %v2313 = vadd.f32 %v2152, %v2312
      %v2314 = vpop.f32.mrf.mxu0
      %2315 = vmatprep.mubr.bf16.mxu0 0
      %2316 = vmatmul.mubr.bf16.gmra.mxu0 %v815
      %v2317 = vpop.f32.mrf.mxu0
      %v2318 = vadd.f32 %v2157, %v2317
      %v2319 = vpop.f32.mrf.mxu0
      %v2320 = vpop.f32.mrf.mxu0
      %v2321 = vadd.f32 %v2160, %v2320
      %v2322 = vpop.f32.mrf.mxu0
      %2323 = vmatprep.mubr.bf16.mxu0 0
      %2324 = vmatmul.mubr.bf16.gmra.mxu0 %v818
      %v2325 = vpop.f32.mrf.mxu0
      %v2326 = vadd.f32 %v2165, %v2325
      %v2327 = vpop.f32.mrf.mxu0
      %v2328 = vpop.f32.mrf.mxu0
      %v2329 = vadd.f32 %v2168, %v2328
      %v2330 = vpop.f32.mrf.mxu0
      %2331 = vmatprep.mubr.bf16.mxu0 0
      %2332 = vmatmul.mubr.bf16.gmra.mxu0 %v821
      %v2333 = vpop.f32.mrf.mxu0
      %v2334 = vadd.f32 %v2173, %v2333
      %v2335 = vpop.f32.mrf.mxu0
      %v2336 = vpop.f32.mrf.mxu0
      %v2337 = vadd.f32 %v2176, %v2336
      %v2338 = vpop.f32.mrf.mxu0
      %2339 = vmatprep.mubr.bf16.mxu0 0
      %2340 = vmatmul.mubr.bf16.gmra.mxu0 %v824
      %v2341 = vpop.f32.mrf.mxu0
      %v2342 = vadd.f32 %v2181, %v2341
      %v2343 = vpop.f32.mrf.mxu0
      %v2344 = vpop.f32.mrf.mxu0
      %v2345 = vadd.f32 %v2184, %v2344
      %v2346 = vpop.f32.mrf.mxu0
      %2347 = vmatprep.mubr.bf16.mxu0 0
      %2348 = vmatmul.mubr.bf16.gmra.mxu0 %v827
      %v2349 = vpop.f32.mrf.mxu0
      %v2350 = vadd.f32 %v2189, %v2349
      %v2351 = vpop.f32.mrf.mxu0
      %v2352 = vpop.f32.mrf.mxu0
      %v2353 = vadd.f32 %v2192, %v2352
      %v2354 = vpop.f32.mrf.mxu0
      %2355 = vmatprep.mubr.bf16.mxu0 0
      %2356 = vmatmul.mubr.bf16.gmra.mxu0 %v830
      %v2357 = vpop.f32.mrf.mxu0
      %v2358 = vadd.f32 %v2197, %v2357
      %v2359 = vpop.f32.mrf.mxu0
      %v2360 = vpop.f32.mrf.mxu0
      %v2361 = vadd.f32 %v2200, %v2360
      %v2362 = vpop.f32.mrf.mxu0
      %2363 = vmatprep.mubr.bf16.mxu0 0
      %2364 = vmatmul.mubr.bf16.gmra.mxu0 %v833
      %v2365 = vpop.f32.mrf.mxu0
      %v2366 = vadd.f32 %v2205, %v2365
      %v2367 = vpop.f32.mrf.mxu0
      %v2368 = vpop.f32.mrf.mxu0
      %v2369 = vadd.f32 %v2208, %v2368
      %v2370 = vpop.f32.mrf.mxu0
      %2371 = vmatprep.mubr.bf16.mxu0 0
      %2372 = vmatmul.mubr.bf16.gmra.mxu0 %v836
      %v2373 = vpop.f32.mrf.mxu0
      %v2374 = vadd.f32 %v2213, %v2373
      %v2375 = vpop.f32.mrf.mxu0
      %v2376 = vpop.f32.mrf.mxu0
      %v2377 = vadd.f32 %v2216, %v2376
      %v2378 = vpop.f32.mrf.mxu0
      %2379 = vmatprep.mubr.bf16.mxu0 0
      %2380 = vmatmul.mubr.bf16.gmra.mxu0 %v839
      %v2381 = vpop.f32.mrf.mxu0
      %v2382 = vadd.f32 %v2221, %v2381
      %v2383 = vpop.f32.mrf.mxu0
      %v2384 = vpop.f32.mrf.mxu0
      %v2385 = vadd.f32 %v2224, %v2384
      %v2386 = vpop.f32.mrf.mxu0
      %2387 = vmatprep.mubr.bf16.mxu0 0
      %2388 = vmatmul.mubr.bf16.gmra.mxu0 %v842
      %v2389 = vpop.f32.mrf.mxu0
      %v2390 = vadd.f32 %v2229, %v2389
      %v2391 = vpop.f32.mrf.mxu0
      %v2392 = vpop.f32.mrf.mxu0
      %v2393 = vadd.f32 %v2232, %v2392
      %v2394 = vpop.f32.mrf.mxu0
      %2395 = vmatprep.mubr.bf16.mxu0 0
      %2396 = vmatmul.mubr.bf16.gmra.mxu0 %v845
      %v2397 = vpop.f32.mrf.mxu0
      %v2398 = vadd.f32 %v2237, %v2397
      %v2399 = vpop.f32.mrf.mxu0
      %v2400 = vpop.f32.mrf.mxu0
      %v2401 = vadd.f32 %v2240, %v2400
      %v2402 = vpop.f32.mrf.mxu0
      %2403 = vmatprep.mubr.bf16.mxu0 0
      %2404 = vmatmul.mubr.bf16.gmra.mxu0 %v848
      %v2405 = vpop.f32.mrf.mxu0
      %v2406 = vadd.f32 %v2245, %v2405
      %v2407 = vpop.f32.mrf.mxu0
      %v2408 = vpop.f32.mrf.mxu0
      %v2409 = vadd.f32 %v2248, %v2408
      %v2410 = vpop.f32.mrf.mxu0
      %2411 = vmatprep.mubr.bf16.mxu0 0
      %2412 = vmatmul.mubr.bf16.gmra.mxu0 %v851
      %v2413 = vpop.f32.mrf.mxu0
      %v2414 = vadd.f32 %v2253, %v2413
      %v2415 = vpop.f32.mrf.mxu0
      %v2416 = vpop.f32.mrf.mxu0
      %v2417 = vadd.f32 %v2256, %v2416
      %v2418 = vpop.f32.mrf.mxu0
      %2419 = vmatprep.mubr.bf16.mxu0 0
      %2420 = vmatmul.mubr.bf16.gmra.mxu0 %v854
      %v2421 = vpop.f32.mrf.mxu0
      %v2422 = vadd.f32 %v2261, %v2421
      %v2423 = vpop.f32.mrf.mxu0
      %v2424 = vpop.f32.mrf.mxu0
      %v2425 = vadd.f32 %v2264, %v2424
      %v2426 = vpop.f32.mrf.mxu0
      %2427 = vdwg.mxu0
      %s2428 = scalar_lea.vmem [#allocation2], 24
      %v2429 = vld [vmem:[%s2428] sm:$0xf]
      %v2430 = vld [vmem:[%s2428 + $0x4] sm:$0xf]
      %v2431 = vld [vmem:[%s2428 + $0xc] sm:$0xf]
      %v2432 = vld [vmem:[%s2428 + $0x10] sm:$0xf]
      %v2433 = vld [vmem:[%s2428 + $0x18] sm:$0xf]
      %v2434 = vld [vmem:[%s2428 + $0x1c] sm:$0xf]
      %v2435 = vld [vmem:[%s2428 + $0x24] sm:$0xf]
      %v2436 = vld [vmem:[%s2428 + $0x28] sm:$0xf]
      %v2437 = vld [vmem:[%s2428 + $0x30] sm:$0xf]
      %v2438 = vld [vmem:[%s2428 + $0x34] sm:$0xf]
      %v2439 = vld [vmem:[%s2428 + $0x3c] sm:$0xf]
      %v2440 = vld [vmem:[%s2428 + $0x40] sm:$0xf]
      %v2441 = vld [vmem:[%s2428 + $0x48] sm:$0xf]
      %v2442 = vld [vmem:[%s2428 + $0x4c] sm:$0xf]
      %v2443 = vld [vmem:[%s2428 + $0x54] sm:$0xf]
      %v2444 = vld [vmem:[%s2428 + $0x58] sm:$0xf]
      %v2445 = vld [vmem:[%s2428 + $0x60] sm:$0xf]
      %v2446 = vld [vmem:[%s2428 + $0x64] sm:$0xf]
      %v2447 = vld [vmem:[%s2428 + $0x6c] sm:$0xf]
      %v2448 = vld [vmem:[%s2428 + $0x70] sm:$0xf]
      %v2449 = vld [vmem:[%s2428 + $0x78] sm:$0xf]
      %v2450 = vld [vmem:[%s2428 + $0x7c] sm:$0xf]
      %v2451 = vld [vmem:[%s2428 + $0x84] sm:$0xf]
      %v2452 = vld [vmem:[%s2428 + $0x88] sm:$0xf]
      %v2453 = vld [vmem:[%s2428 + $0x90] sm:$0xf]
      %v2454 = vld [vmem:[%s2428 + $0x94] sm:$0xf]
      %v2455 = vld [vmem:[%s2428 + $0x9c] sm:$0xf]
      %v2456 = vld [vmem:[%s2428 + $0xa0] sm:$0xf]
      %v2457 = vld [vmem:[%s2428 + $0xa8] sm:$0xf]
      %v2458 = vld [vmem:[%s2428 + $0xac] sm:$0xf]
      %v2459 = vld [vmem:[%s2428 + $0xb4] sm:$0xf]
      %v2460 = vld [vmem:[%s2428 + $0xb8] sm:$0xf]
      %v2461 = vld [vmem:[%s2428 + $0x8] sm:$0x1]
      %v2462 = vld [vmem:[%s2428 + $0x14] sm:$0x1]
      %v2463 = vld [vmem:[%s2428 + $0x20] sm:$0x1]
      %v2464 = vld [vmem:[%s2428 + $0x2c] sm:$0x1]
      %v2465 = vld [vmem:[%s2428 + $0x38] sm:$0x1]
      %v2466 = vld [vmem:[%s2428 + $0x44] sm:$0x1]
      %v2467 = vld [vmem:[%s2428 + $0x50] sm:$0x1]
      %v2468 = vld [vmem:[%s2428 + $0x5c] sm:$0x1]
      %v2469 = vld [vmem:[%s2428 + $0x68] sm:$0x1]
      %v2470 = vld [vmem:[%s2428 + $0x74] sm:$0x1]
      %v2471 = vld [vmem:[%s2428 + $0x80] sm:$0x1]
      %v2472 = vld [vmem:[%s2428 + $0x8c] sm:$0x1]
      %v2473 = vld [vmem:[%s2428 + $0x98] sm:$0x1]
      %v2474 = vld [vmem:[%s2428 + $0xa4] sm:$0x1]
      %v2475 = vld [vmem:[%s2428 + $0xb0] sm:$0x1]
      %v2476 = vld [vmem:[%s2428 + $0xbc] sm:$0x1]
      %v2477 = vld [vmem:[%s2428] sm:$0xe]
      %v2478 = vld [vmem:[%s2428 + $0xc] sm:$0xe]
      %v2479 = vld [vmem:[%s2428 + $0x18] sm:$0xe]
      %v2480 = vld [vmem:[%s2428 + $0x24] sm:$0xe]
      %v2481 = vld [vmem:[%s2428 + $0x30] sm:$0xe]
      %v2482 = vld [vmem:[%s2428 + $0x3c] sm:$0xe]
      %v2483 = vld [vmem:[%s2428 + $0x48] sm:$0xe]
      %v2484 = vld [vmem:[%s2428 + $0x54] sm:$0xe]
      %v2485 = vld [vmem:[%s2428 + $0x60] sm:$0xe]
      %v2486 = vld [vmem:[%s2428 + $0x6c] sm:$0xe]
      %v2487 = vld [vmem:[%s2428 + $0x78] sm:$0xe]
      %v2488 = vld [vmem:[%s2428 + $0x84] sm:$0xe]
      %v2489 = vld [vmem:[%s2428 + $0x90] sm:$0xe]
      %v2490 = vld [vmem:[%s2428 + $0x9c] sm:$0xe]
      %v2491 = vld [vmem:[%s2428 + $0xa8] sm:$0xe]
      %v2492 = vld [vmem:[%s2428 + $0xb4] sm:$0xe]
      %v2525 = vunpack.c.l.b16 %v2429
      %v2526 = vunpack.c.l.b16 %v2430
      %v2527 = vunpack.c.l.b16 %v2431
      %v2528 = vunpack.c.l.b16 %v2432
      %v2529 = vunpack.c.l.b16 %v2433
      %v2530 = vunpack.c.l.b16 %v2434
      %v2531 = vunpack.c.l.b16 %v2435
      %v2532 = vunpack.c.l.b16 %v2436
      %v2533 = vunpack.c.l.b16 %v2437
      %v2534 = vunpack.c.l.b16 %v2438
      %v2535 = vunpack.c.l.b16 %v2439
      %v2536 = vunpack.c.l.b16 %v2440
      %v2537 = vunpack.c.l.b16 %v2441
      %v2538 = vunpack.c.l.b16 %v2442
      %v2539 = vunpack.c.l.b16 %v2443
      %v2540 = vunpack.c.l.b16 %v2444
      %v2541 = vunpack.c.l.b16 %v2445
      %v2542 = vunpack.c.l.b16 %v2446
      %v2543 = vunpack.c.l.b16 %v2447
      %v2544 = vunpack.c.l.b16 %v2448
      %v2545 = vunpack.c.l.b16 %v2449
      %v2546 = vunpack.c.l.b16 %v2450
      %v2547 = vunpack.c.l.b16 %v2451
      %v2548 = vunpack.c.l.b16 %v2452
      %v2549 = vunpack.c.l.b16 %v2453
      %v2550 = vunpack.c.l.b16 %v2454
      %v2551 = vunpack.c.l.b16 %v2455
      %v2552 = vunpack.c.l.b16 %v2456
      %v2553 = vunpack.c.l.b16 %v2457
      %v2554 = vunpack.c.l.b16 %v2458
      %v2555 = vunpack.c.l.b16 %v2459
      %v2556 = vunpack.c.l.b16 %v2460
      %v2557 = vpack.c.b16 %v2526, %v2525
      %v2558 = vpack.c.b16 %v2528, %v2527
      %v2559 = vpack.c.b16 %v2530, %v2529
      %v2560 = vpack.c.b16 %v2532, %v2531
      %v2561 = vpack.c.b16 %v2534, %v2533
      %v2562 = vpack.c.b16 %v2536, %v2535
      %v2563 = vpack.c.b16 %v2538, %v2537
      %v2564 = vpack.c.b16 %v2540, %v2539
      %v2565 = vpack.c.b16 %v2542, %v2541
      %v2566 = vpack.c.b16 %v2544, %v2543
      %v2567 = vpack.c.b16 %v2546, %v2545
      %v2568 = vpack.c.b16 %v2548, %v2547
      %v2569 = vpack.c.b16 %v2550, %v2549
      %v2570 = vpack.c.b16 %v2552, %v2551
      %v2571 = vpack.c.b16 %v2554, %v2553
      %v2572 = vpack.c.b16 %v2556, %v2555
      %v2605 = vunpack.c.l.b16 %v2461
      %v2606 = vunpack.c.l.b16 %v2462
      %v2607 = vunpack.c.l.b16 %v2463
      %v2608 = vunpack.c.l.b16 %v2464
      %v2609 = vunpack.c.l.b16 %v2465
      %v2610 = vunpack.c.l.b16 %v2466
      %v2611 = vunpack.c.l.b16 %v2467
      %v2612 = vunpack.c.l.b16 %v2468
      %v2613 = vunpack.c.l.b16 %v2469
      %v2614 = vunpack.c.l.b16 %v2470
      %v2615 = vunpack.c.l.b16 %v2471
      %v2616 = vunpack.c.l.b16 %v2472
      %v2617 = vunpack.c.l.b16 %v2473
      %v2618 = vunpack.c.l.b16 %v2474
      %v2619 = vunpack.c.l.b16 %v2475
      %v2620 = vunpack.c.l.b16 %v2476
      %v2621 = vpack.c.b16 %v2605, %v2605
      %v2622 = vpack.c.b16 %v2606, %v2606
      %v2623 = vpack.c.b16 %v2607, %v2607
      %v2624 = vpack.c.b16 %v2608, %v2608
      %v2625 = vpack.c.b16 %v2609, %v2609
      %v2626 = vpack.c.b16 %v2610, %v2610
      %v2627 = vpack.c.b16 %v2611, %v2611
      %v2628 = vpack.c.b16 %v2612, %v2612
      %v2629 = vpack.c.b16 %v2613, %v2613
      %v2630 = vpack.c.b16 %v2614, %v2614
      %v2631 = vpack.c.b16 %v2615, %v2615
      %v2632 = vpack.c.b16 %v2616, %v2616
      %v2633 = vpack.c.b16 %v2617, %v2617
      %v2634 = vpack.c.b16 %v2618, %v2618
      %v2635 = vpack.c.b16 %v2619, %v2619
      %v2636 = vpack.c.b16 %v2620, %v2620
      %v2638 = vshrl.u32 %v2557, 16
      %v2640 = vshll.u32 %v2557, 16
      %v2642 = vrot.slane %v2640, 1
      %v2643 = vor.u32 %v2638, %v2642
      %v2645 = vshll.u32 %v2621, 16
      %v2647 = vrot.slane %v2645, 1
      %v2648 = vsel %vm549, %v2643, %v2647
      %v2650 = vshrl.u32 %v2558, 16
      %v2652 = vshll.u32 %v2558, 16
      %v2654 = vrot.slane %v2652, 1
      %v2655 = vor.u32 %v2650, %v2654
      %v2657 = vshll.u32 %v2622, 16
      %v2659 = vrot.slane %v2657, 1
      %v2660 = vsel %vm549, %v2655, %v2659
      %v2662 = vshrl.u32 %v2559, 16
      %v2664 = vshll.u32 %v2559, 16
      %v2666 = vrot.slane %v2664, 1
      %v2667 = vor.u32 %v2662, %v2666
      %v2669 = vshll.u32 %v2623, 16
      %v2671 = vrot.slane %v2669, 1
      %v2672 = vsel %vm549, %v2667, %v2671
      %v2674 = vshrl.u32 %v2560, 16
      %v2676 = vshll.u32 %v2560, 16
      %v2678 = vrot.slane %v2676, 1
      %v2679 = vor.u32 %v2674, %v2678
      %v2681 = vshll.u32 %v2624, 16
      %v2683 = vrot.slane %v2681, 1
      %v2684 = vsel %vm549, %v2679, %v2683
      %v2686 = vshrl.u32 %v2561, 16
      %v2688 = vshll.u32 %v2561, 16
      %v2690 = vrot.slane %v2688, 1
      %v2691 = vor.u32 %v2686, %v2690
      %v2693 = vshll.u32 %v2625, 16
      %v2695 = vrot.slane %v2693, 1
      %v2696 = vsel %vm549, %v2691, %v2695
      %v2698 = vshrl.u32 %v2562, 16
      %v2700 = vshll.u32 %v2562, 16
      %v2702 = vrot.slane %v2700, 1
      %v2703 = vor.u32 %v2698, %v2702
      %v2705 = vshll.u32 %v2626, 16
      %v2707 = vrot.slane %v2705, 1
      %v2708 = vsel %vm549, %v2703, %v2707
      %v2710 = vshrl.u32 %v2563, 16
      %v2712 = vshll.u32 %v2563, 16
      %v2714 = vrot.slane %v2712, 1
      %v2715 = vor.u32 %v2710, %v2714
      %v2717 = vshll.u32 %v2627, 16
      %v2719 = vrot.slane %v2717, 1
      %v2720 = vsel %vm549, %v2715, %v2719
      %v2722 = vshrl.u32 %v2564, 16
      %v2724 = vshll.u32 %v2564, 16
      %v2726 = vrot.slane %v2724, 1
      %v2727 = vor.u32 %v2722, %v2726
      %v2729 = vshll.u32 %v2628, 16
      %v2731 = vrot.slane %v2729, 1
      %v2732 = vsel %vm549, %v2727, %v2731
      %v2734 = vshrl.u32 %v2565, 16
      %v2736 = vshll.u32 %v2565, 16
      %v2738 = vrot.slane %v2736, 1
      %v2739 = vor.u32 %v2734, %v2738
      %v2741 = vshll.u32 %v2629, 16
      %v2743 = vrot.slane %v2741, 1
      %v2744 = vsel %vm549, %v2739, %v2743
      %v2746 = vshrl.u32 %v2566, 16
      %v2748 = vshll.u32 %v2566, 16
      %v2750 = vrot.slane %v2748, 1
      %v2751 = vor.u32 %v2746, %v2750
      %v2753 = vshll.u32 %v2630, 16
      %v2755 = vrot.slane %v2753, 1
      %v2756 = vsel %vm549, %v2751, %v2755
      %v2758 = vshrl.u32 %v2567, 16
      %v2760 = vshll.u32 %v2567, 16
      %v2762 = vrot.slane %v2760, 1
      %v2763 = vor.u32 %v2758, %v2762
      %v2765 = vshll.u32 %v2631, 16
      %v2767 = vrot.slane %v2765, 1
      %v2768 = vsel %vm549, %v2763, %v2767
      %v2770 = vshrl.u32 %v2568, 16
      %v2772 = vshll.u32 %v2568, 16
      %v2774 = vrot.slane %v2772, 1
      %v2775 = vor.u32 %v2770, %v2774
      %v2777 = vshll.u32 %v2632, 16
      %v2779 = vrot.slane %v2777, 1
      %v2780 = vsel %vm549, %v2775, %v2779
      %v2782 = vshrl.u32 %v2569, 16
      %v2784 = vshll.u32 %v2569, 16
      %v2786 = vrot.slane %v2784, 1
      %v2787 = vor.u32 %v2782, %v2786
      %v2789 = vshll.u32 %v2633, 16
      %v2791 = vrot.slane %v2789, 1
      %v2792 = vsel %vm549, %v2787, %v2791
      %v2794 = vshrl.u32 %v2570, 16
      %v2796 = vshll.u32 %v2570, 16
      %v2798 = vrot.slane %v2796, 1
      %v2799 = vor.u32 %v2794, %v2798
      %v2801 = vshll.u32 %v2634, 16
      %v2803 = vrot.slane %v2801, 1
      %v2804 = vsel %vm549, %v2799, %v2803
      %v2806 = vshrl.u32 %v2571, 16
      %v2808 = vshll.u32 %v2571, 16
      %v2810 = vrot.slane %v2808, 1
      %v2811 = vor.u32 %v2806, %v2810
      %v2813 = vshll.u32 %v2635, 16
      %v2815 = vrot.slane %v2813, 1
      %v2816 = vsel %vm549, %v2811, %v2815
      %v2818 = vshrl.u32 %v2572, 16
      %v2820 = vshll.u32 %v2572, 16
      %v2822 = vrot.slane %v2820, 1
      %v2823 = vor.u32 %v2818, %v2822
      %v2825 = vshll.u32 %v2636, 16
      %v2827 = vrot.slane %v2825, 1
      %v2828 = vsel %vm549, %v2823, %v2827
      %v2861 = vunpack.c.l.b16 %v2477
      %v2862 = vunpack.c.l.b16 %v2478
      %v2863 = vunpack.c.l.b16 %v2479
      %v2864 = vunpack.c.l.b16 %v2480
      %v2865 = vunpack.c.l.b16 %v2481
      %v2866 = vunpack.c.l.b16 %v2482
      %v2867 = vunpack.c.l.b16 %v2483
      %v2868 = vunpack.c.l.b16 %v2484
      %v2869 = vunpack.c.l.b16 %v2485
      %v2870 = vunpack.c.l.b16 %v2486
      %v2871 = vunpack.c.l.b16 %v2487
      %v2872 = vunpack.c.l.b16 %v2488
      %v2873 = vunpack.c.l.b16 %v2489
      %v2874 = vunpack.c.l.b16 %v2490
      %v2875 = vunpack.c.l.b16 %v2491
      %v2876 = vunpack.c.l.b16 %v2492
      %v2877 = vpack.c.b16 %v2526, %v2861
      %v2878 = vpack.c.b16 %v2528, %v2862
      %v2879 = vpack.c.b16 %v2530, %v2863
      %v2880 = vpack.c.b16 %v2532, %v2864
      %v2881 = vpack.c.b16 %v2534, %v2865
      %v2882 = vpack.c.b16 %v2536, %v2866
      %v2883 = vpack.c.b16 %v2538, %v2867
      %v2884 = vpack.c.b16 %v2540, %v2868
      %v2885 = vpack.c.b16 %v2542, %v2869
      %v2886 = vpack.c.b16 %v2544, %v2870
      %v2887 = vpack.c.b16 %v2546, %v2871
      %v2888 = vpack.c.b16 %v2548, %v2872
      %v2889 = vpack.c.b16 %v2550, %v2873
      %v2890 = vpack.c.b16 %v2552, %v2874
      %v2891 = vpack.c.b16 %v2554, %v2875
      %v2892 = vpack.c.b16 %v2556, %v2876
      %v2893 = vrot.slane %v2877, 1
      %v2894 = vrot.slane %v2621, 1
      %v2895 = vsel %vm806, %v2893, %v2894
      %v2896 = vrot.slane %v2878, 1
      %v2897 = vrot.slane %v2622, 1
      %v2898 = vsel %vm806, %v2896, %v2897
      %v2899 = vrot.slane %v2879, 1
      %v2900 = vrot.slane %v2623, 1
      %v2901 = vsel %vm806, %v2899, %v2900
      %v2902 = vrot.slane %v2880, 1
      %v2903 = vrot.slane %v2624, 1
      %v2904 = vsel %vm806, %v2902, %v2903
      %v2905 = vrot.slane %v2881, 1
      %v2906 = vrot.slane %v2625, 1
      %v2907 = vsel %vm806, %v2905, %v2906
      %v2908 = vrot.slane %v2882, 1
      %v2909 = vrot.slane %v2626, 1
      %v2910 = vsel %vm806, %v2908, %v2909
      %v2911 = vrot.slane %v2883, 1
      %v2912 = vrot.slane %v2627, 1
      %v2913 = vsel %vm806, %v2911, %v2912
      %v2914 = vrot.slane %v2884, 1
      %v2915 = vrot.slane %v2628, 1
      %v2916 = vsel %vm806, %v2914, %v2915
      %v2917 = vrot.slane %v2885, 1
      %v2918 = vrot.slane %v2629, 1
      %v2919 = vsel %vm806, %v2917, %v2918
      %v2920 = vrot.slane %v2886, 1
      %v2921 = vrot.slane %v2630, 1
      %v2922 = vsel %vm806, %v2920, %v2921
      %v2923 = vrot.slane %v2887, 1
      %v2924 = vrot.slane %v2631, 1
      %v2925 = vsel %vm806, %v2923, %v2924
      %v2926 = vrot.slane %v2888, 1
      %v2927 = vrot.slane %v2632, 1
      %v2928 = vsel %vm806, %v2926, %v2927
      %v2929 = vrot.slane %v2889, 1
      %v2930 = vrot.slane %v2633, 1
      %v2931 = vsel %vm806, %v2929, %v2930
      %v2932 = vrot.slane %v2890, 1
      %v2933 = vrot.slane %v2634, 1
      %v2934 = vsel %vm806, %v2932, %v2933
      %v2935 = vrot.slane %v2891, 1
      %v2936 = vrot.slane %v2635, 1
      %v2937 = vsel %vm806, %v2935, %v2936
      %v2938 = vrot.slane %v2892, 1
      %v2939 = vrot.slane %v2636, 1
      %v2940 = vsel %vm806, %v2938, %v2939
      %s2957 = scalar_lea.vmem %s3, 384
      %v2958 = vld [vmem:[%s2957] sm:$0xf]
      %v2959 = vld [vmem:[%s2957 + $0x4] sm:$0xf]
      %v2960 = vld [vmem:[%s2957 + $0x8] sm:$0xf]
      %v2961 = vld [vmem:[%s2957 + $0xc] sm:$0xf]
      %v2962 = vld [vmem:[%s2957 + $0x10] sm:$0xf]
      %v2963 = vld [vmem:[%s2957 + $0x14] sm:$0xf]
      %v2964 = vld [vmem:[%s2957 + $0x18] sm:$0xf]
      %v2965 = vld [vmem:[%s2957 + $0x1c] sm:$0xf]
      %v2966 = vld [vmem:[%s2957 + $0x20] sm:$0xf]
      %v2967 = vld [vmem:[%s2957 + $0x24] sm:$0xf]
      %v2968 = vld [vmem:[%s2957 + $0x28] sm:$0xf]
      %v2969 = vld [vmem:[%s2957 + $0x2c] sm:$0xf]
      %v2970 = vld [vmem:[%s2957 + $0x30] sm:$0xf]
      %v2971 = vld [vmem:[%s2957 + $0x34] sm:$0xf]
      %v2972 = vld [vmem:[%s2957 + $0x38] sm:$0xf]
      %v2973 = vld [vmem:[%s2957 + $0x3c] sm:$0xf]
      %v2974 = vld [vmem:[%s2957 + $0x40] sm:$0xf]
      %v2975 = vld [vmem:[%s2957 + $0x44] sm:$0xf]
      %v2976 = vld [vmem:[%s2957 + $0x48] sm:$0xf]
      %v2977 = vld [vmem:[%s2957 + $0x4c] sm:$0xf]
      %v2978 = vld [vmem:[%s2957 + $0x50] sm:$0xf]
      %v2979 = vld [vmem:[%s2957 + $0x54] sm:$0xf]
      %v2980 = vld [vmem:[%s2957 + $0x58] sm:$0xf]
      %v2981 = vld [vmem:[%s2957 + $0x5c] sm:$0xf]
      %v2982 = vld [vmem:[%s2957 + $0x60] sm:$0xf]
      %v2983 = vld [vmem:[%s2957 + $0x64] sm:$0xf]
      %v2984 = vld [vmem:[%s2957 + $0x68] sm:$0xf]
      %v2985 = vld [vmem:[%s2957 + $0x6c] sm:$0xf]
      %v2986 = vld [vmem:[%s2957 + $0x70] sm:$0xf]
      %v2987 = vld [vmem:[%s2957 + $0x74] sm:$0xf]
      %v2988 = vld [vmem:[%s2957 + $0x78] sm:$0xf]
      %v2989 = vld [vmem:[%s2957 + $0x7c] sm:$0xf]
      %v2990 = vld [vmem:[%s2957 + $0x80] sm:$0xf]
      %v2991 = vld [vmem:[%s2957 + $0x84] sm:$0xf]
      %v2992 = vld [vmem:[%s2957 + $0x88] sm:$0xf]
      %v2993 = vld [vmem:[%s2957 + $0x8c] sm:$0xf]
      %v2994 = vld [vmem:[%s2957 + $0x90] sm:$0xf]
      %v2995 = vld [vmem:[%s2957 + $0x94] sm:$0xf]
      %v2996 = vld [vmem:[%s2957 + $0x98] sm:$0xf]
      %v2997 = vld [vmem:[%s2957 + $0x9c] sm:$0xf]
      %v2998 = vld [vmem:[%s2957 + $0xa0] sm:$0xf]
      %v2999 = vld [vmem:[%s2957 + $0xa4] sm:$0xf]
      %v3000 = vld [vmem:[%s2957 + $0xa8] sm:$0xf]
      %v3001 = vld [vmem:[%s2957 + $0xac] sm:$0xf]
      %v3002 = vld [vmem:[%s2957 + $0xb0] sm:$0xf]
      %v3003 = vld [vmem:[%s2957 + $0xb4] sm:$0xf]
      %v3004 = vld [vmem:[%s2957 + $0xb8] sm:$0xf]
      %v3005 = vld [vmem:[%s2957 + $0xbc] sm:$0xf]
      %v3054 = vunpack.c.l.b16 %v2958
      %v3055 = vunpack.c.l.b16 %v2959
      %v3056 = vunpack.c.l.b16 %v2960
      %v3057 = vunpack.c.l.b16 %v2961
      %v3058 = vunpack.c.l.b16 %v2962
      %v3059 = vunpack.c.l.b16 %v2963
      %v3060 = vunpack.c.l.b16 %v2964
      %v3061 = vunpack.c.l.b16 %v2965
      %v3062 = vunpack.c.l.b16 %v2966
      %v3063 = vunpack.c.l.b16 %v2967
      %v3064 = vunpack.c.l.b16 %v2968
      %v3065 = vunpack.c.l.b16 %v2969
      %v3066 = vunpack.c.l.b16 %v2970
      %v3067 = vunpack.c.l.b16 %v2971
      %v3068 = vunpack.c.l.b16 %v2972
      %v3069 = vunpack.c.l.b16 %v2973
      %v3070 = vunpack.c.l.b16 %v2974
      %v3071 = vunpack.c.l.b16 %v2975
      %v3072 = vunpack.c.l.b16 %v2976
      %v3073 = vunpack.c.l.b16 %v2977
      %v3074 = vunpack.c.l.b16 %v2978
      %v3075 = vunpack.c.l.b16 %v2979
      %v3076 = vunpack.c.l.b16 %v2980
      %v3077 = vunpack.c.l.b16 %v2981
      %v3078 = vunpack.c.l.b16 %v2982
      %v3079 = vunpack.c.l.b16 %v2983
      %v3080 = vunpack.c.l.b16 %v2984
      %v3081 = vunpack.c.l.b16 %v2985
      %v3082 = vunpack.c.l.b16 %v2986
      %v3083 = vunpack.c.l.b16 %v2987
      %v3084 = vunpack.c.l.b16 %v2988
      %v3085 = vunpack.c.l.b16 %v2989
      %v3086 = vunpack.c.l.b16 %v2990
      %v3087 = vunpack.c.l.b16 %v2991
      %v3088 = vunpack.c.l.b16 %v2992
      %v3089 = vunpack.c.l.b16 %v2993
      %v3090 = vunpack.c.l.b16 %v2994
      %v3091 = vunpack.c.l.b16 %v2995
      %v3092 = vunpack.c.l.b16 %v2996
      %v3093 = vunpack.c.l.b16 %v2997
      %v3094 = vunpack.c.l.b16 %v2998
      %v3095 = vunpack.c.l.b16 %v2999
      %v3096 = vunpack.c.l.b16 %v3000
      %v3097 = vunpack.c.l.b16 %v3001
      %v3098 = vunpack.c.l.b16 %v3002
      %v3099 = vunpack.c.l.b16 %v3003
      %v3100 = vunpack.c.l.b16 %v3004
      %v3101 = vunpack.c.l.b16 %v3005
      %v3102 = vpack.c.b16 %v3055, %v3054
      %v3103 = vpack.c.b16 %v3057, %v3056
      %v3104 = vpack.c.b16 %v3059, %v3058
      %v3105 = vpack.c.b16 %v3061, %v3060
      %v3106 = vpack.c.b16 %v3063, %v3062
      %v3107 = vpack.c.b16 %v3065, %v3064
      %v3108 = vpack.c.b16 %v3067, %v3066
      %v3109 = vpack.c.b16 %v3069, %v3068
      %v3110 = vpack.c.b16 %v3071, %v3070
      %v3111 = vpack.c.b16 %v3073, %v3072
      %v3112 = vpack.c.b16 %v3075, %v3074
      %v3113 = vpack.c.b16 %v3077, %v3076
      %v3114 = vpack.c.b16 %v3079, %v3078
      %v3115 = vpack.c.b16 %v3081, %v3080
      %v3116 = vpack.c.b16 %v3083, %v3082
      %v3117 = vpack.c.b16 %v3085, %v3084
      %v3118 = vpack.c.b16 %v3087, %v3086
      %v3119 = vpack.c.b16 %v3089, %v3088
      %v3120 = vpack.c.b16 %v3091, %v3090
      %v3121 = vpack.c.b16 %v3093, %v3092
      %v3122 = vpack.c.b16 %v3095, %v3094
      %v3123 = vpack.c.b16 %v3097, %v3096
      %v3124 = vpack.c.b16 %v3099, %v3098
      %v3125 = vpack.c.b16 %v3101, %v3100
      %3150 = vmatprep.subr.bf16.mxu0 0
      %3151 = vmatpush1.bf16.msra.mxu0 %v3109
      %3152 = vmatprep.subr.bf16.mxu0 0
      %3153 = vmatpush1.bf16.msra.mxu0 %v3108
      %3154 = vmatprep.subr.bf16.mxu0 0
      %3155 = vmatpush1.bf16.msra.mxu0 %v3107
      %3156 = vmatprep.subr.bf16.mxu0 0
      %3157 = vmatpush1.bf16.msra.mxu0 %v3106
      %3158 = vmatprep.subr.bf16.mxu0 0
      %3159 = vmatpush1.bf16.msra.mxu0 %v3105
      %3160 = vmatprep.subr.bf16.mxu0 0
      %3161 = vmatpush1.bf16.msra.mxu0 %v3104
      %3162 = vmatprep.subr.bf16.mxu0 0
      %3163 = vmatpush1.bf16.msra.mxu0 %v3103
      %3164 = vmatprep.subr.bf16.mxu0 0
      %3165 = vmatpush1.bf16.msra.mxu0 %v3102
      %3166 = vmatprep.subr.bf16.mxu0 0
      %3167 = vmatpush2.bf16.msra.mxu0 %v3117
      %3168 = vmatprep.subr.bf16.mxu0 0
      %3169 = vmatpush2.bf16.msra.mxu0 %v3116
      %3170 = vmatprep.subr.bf16.mxu0 0
      %3171 = vmatpush2.bf16.msra.mxu0 %v3115
      %3172 = vmatprep.subr.bf16.mxu0 0
      %3173 = vmatpush2.bf16.msra.mxu0 %v3114
      %3174 = vmatprep.subr.bf16.mxu0 0
      %3175 = vmatpush2.bf16.msra.mxu0 %v3113
      %3176 = vmatprep.subr.bf16.mxu0 0
      %3177 = vmatpush2.bf16.msra.mxu0 %v3112
      %3178 = vmatprep.subr.bf16.mxu0 0
      %3179 = vmatpush2.bf16.msra.mxu0 %v3111
      %3180 = vmatprep.subr.bf16.mxu0 0
      %3181 = vmatpush2.bf16.msra.mxu0 %v3110
      %3182 = vmatprep.mubr.bf16.mxu0 %v2648
      %3183 = vmatmul.mubr.bf16.gmra.mxu0 %v2557
      %v3184 = vpop.f32.mrf.mxu0
      %v3185 = vadd.f32 0.0, %v3184
      %v3186 = vpop.f32.mrf.mxu0
      %v3187 = vpop.f32.mrf.mxu0
      %v3188 = vadd.f32 0.0, %v3187
      %v3189 = vpop.f32.mrf.mxu0
      %3190 = vmatprep.mubr.bf16.mxu0 %v2660
      %3191 = vmatmul.mubr.bf16.gmra.mxu0 %v2558
      %v3192 = vpop.f32.mrf.mxu0
      %v3193 = vadd.f32 0.0, %v3192
      %v3194 = vpop.f32.mrf.mxu0
      %v3195 = vpop.f32.mrf.mxu0
      %v3196 = vadd.f32 0.0, %v3195
      %v3197 = vpop.f32.mrf.mxu0
      %3198 = vmatprep.mubr.bf16.mxu0 %v2672
      %3199 = vmatmul.mubr.bf16.gmra.mxu0 %v2559
      %v3200 = vpop.f32.mrf.mxu0
      %v3201 = vadd.f32 0.0, %v3200
      %v3202 = vpop.f32.mrf.mxu0
      %v3203 = vpop.f32.mrf.mxu0
      %v3204 = vadd.f32 0.0, %v3203
      %v3205 = vpop.f32.mrf.mxu0
      %3206 = vmatprep.mubr.bf16.mxu0 %v2684
      %3207 = vmatmul.mubr.bf16.gmra.mxu0 %v2560
      %v3208 = vpop.f32.mrf.mxu0
      %v3209 = vadd.f32 0.0, %v3208
      %v3210 = vpop.f32.mrf.mxu0
      %v3211 = vpop.f32.mrf.mxu0
      %v3212 = vadd.f32 0.0, %v3211
      %v3213 = vpop.f32.mrf.mxu0
      %3214 = vmatprep.mubr.bf16.mxu0 %v2696
      %3215 = vmatmul.mubr.bf16.gmra.mxu0 %v2561
      %v3216 = vpop.f32.mrf.mxu0
      %v3217 = vadd.f32 0.0, %v3216
      %v3218 = vpop.f32.mrf.mxu0
      %v3219 = vpop.f32.mrf.mxu0
      %v3220 = vadd.f32 0.0, %v3219
      %v3221 = vpop.f32.mrf.mxu0
      %3222 = vmatprep.mubr.bf16.mxu0 %v2708
      %3223 = vmatmul.mubr.bf16.gmra.mxu0 %v2562
      %v3224 = vpop.f32.mrf.mxu0
      %v3225 = vadd.f32 0.0, %v3224
      %v3226 = vpop.f32.mrf.mxu0
      %v3227 = vpop.f32.mrf.mxu0
      %v3228 = vadd.f32 0.0, %v3227
      %v3229 = vpop.f32.mrf.mxu0
      %3230 = vmatprep.mubr.bf16.mxu0 %v2720
      %3231 = vmatmul.mubr.bf16.gmra.mxu0 %v2563
      %v3232 = vpop.f32.mrf.mxu0
      %v3233 = vadd.f32 0.0, %v3232
      %v3234 = vpop.f32.mrf.mxu0
      %v3235 = vpop.f32.mrf.mxu0
      %v3236 = vadd.f32 0.0, %v3235
      %v3237 = vpop.f32.mrf.mxu0
      %3238 = vmatprep.mubr.bf16.mxu0 %v2732
      %3239 = vmatmul.mubr.bf16.gmra.mxu0 %v2564
      %v3240 = vpop.f32.mrf.mxu0
      %v3241 = vadd.f32 0.0, %v3240
      %v3242 = vpop.f32.mrf.mxu0
      %v3243 = vpop.f32.mrf.mxu0
      %v3244 = vadd.f32 0.0, %v3243
      %v3245 = vpop.f32.mrf.mxu0
      %3246 = vmatprep.mubr.bf16.mxu0 %v2744
      %3247 = vmatmul.mubr.bf16.gmra.mxu0 %v2565
      %v3248 = vpop.f32.mrf.mxu0
      %v3249 = vadd.f32 0.0, %v3248
      %v3250 = vpop.f32.mrf.mxu0
      %v3251 = vpop.f32.mrf.mxu0
      %v3252 = vadd.f32 0.0, %v3251
      %v3253 = vpop.f32.mrf.mxu0
      %3254 = vmatprep.mubr.bf16.mxu0 %v2756
      %3255 = vmatmul.mubr.bf16.gmra.mxu0 %v2566
      %v3256 = vpop.f32.mrf.mxu0
      %v3257 = vadd.f32 0.0, %v3256
      %v3258 = vpop.f32.mrf.mxu0
      %v3259 = vpop.f32.mrf.mxu0
      %v3260 = vadd.f32 0.0, %v3259
      %v3261 = vpop.f32.mrf.mxu0
      %3262 = vmatprep.mubr.bf16.mxu0 %v2768
      %3263 = vmatmul.mubr.bf16.gmra.mxu0 %v2567
      %v3264 = vpop.f32.mrf.mxu0
      %v3265 = vadd.f32 0.0, %v3264
      %v3266 = vpop.f32.mrf.mxu0
      %v3267 = vpop.f32.mrf.mxu0
      %v3268 = vadd.f32 0.0, %v3267
      %v3269 = vpop.f32.mrf.mxu0
      %3270 = vmatprep.mubr.bf16.mxu0 %v2780
      %3271 = vmatmul.mubr.bf16.gmra.mxu0 %v2568
      %v3272 = vpop.f32.mrf.mxu0
      %v3273 = vadd.f32 0.0, %v3272
      %v3274 = vpop.f32.mrf.mxu0
      %v3275 = vpop.f32.mrf.mxu0
      %v3276 = vadd.f32 0.0, %v3275
      %v3277 = vpop.f32.mrf.mxu0
      %3278 = vmatprep.mubr.bf16.mxu0 %v2792
      %3279 = vmatmul.mubr.bf16.gmra.mxu0 %v2569
      %v3280 = vpop.f32.mrf.mxu0
      %v3281 = vadd.f32 0.0, %v3280
      %v3282 = vpop.f32.mrf.mxu0
      %v3283 = vpop.f32.mrf.mxu0
      %v3284 = vadd.f32 0.0, %v3283
      %v3285 = vpop.f32.mrf.mxu0
      %3286 = vmatprep.mubr.bf16.mxu0 %v2804
      %3287 = vmatmul.mubr.bf16.gmra.mxu0 %v2570
      %v3288 = vpop.f32.mrf.mxu0
      %v3289 = vadd.f32 0.0, %v3288
      %v3290 = vpop.f32.mrf.mxu0
      %v3291 = vpop.f32.mrf.mxu0
      %v3292 = vadd.f32 0.0, %v3291
      %v3293 = vpop.f32.mrf.mxu0
      %3294 = vmatprep.mubr.bf16.mxu0 %v2816
      %3295 = vmatmul.mubr.bf16.gmra.mxu0 %v2571
      %v3296 = vpop.f32.mrf.mxu0
      %v3297 = vadd.f32 0.0, %v3296
      %v3298 = vpop.f32.mrf.mxu0
      %v3299 = vpop.f32.mrf.mxu0
      %v3300 = vadd.f32 0.0, %v3299
      %v3301 = vpop.f32.mrf.mxu0
      %3302 = vmatprep.mubr.bf16.mxu0 %v2828
      %3303 = vmatmul.mubr.bf16.gmra.mxu0 %v2572
      %v3304 = vpop.f32.mrf.mxu0
      %v3305 = vadd.f32 0.0, %v3304
      %v3306 = vpop.f32.mrf.mxu0
      %v3307 = vpop.f32.mrf.mxu0
      %v3308 = vadd.f32 0.0, %v3307
      %v3309 = vpop.f32.mrf.mxu0
      %3310 = vdwg.mxu0
      %3311 = vmatprep.subr.bf16.mxu0 0
      %3312 = vmatpush1.bf16.msra.mxu0 %v3125
      %3313 = vmatprep.subr.bf16.mxu0 0
      %3314 = vmatpush1.bf16.msra.mxu0 %v3124
      %3315 = vmatprep.subr.bf16.mxu0 0
      %3316 = vmatpush1.bf16.msra.mxu0 %v3123
      %3317 = vmatprep.subr.bf16.mxu0 0
      %3318 = vmatpush1.bf16.msra.mxu0 %v3122
      %3319 = vmatprep.subr.bf16.mxu0 0
      %3320 = vmatpush1.bf16.msra.mxu0 %v3121
      %3321 = vmatprep.subr.bf16.mxu0 0
      %3322 = vmatpush1.bf16.msra.mxu0 %v3120
      %3323 = vmatprep.subr.bf16.mxu0 0
      %3324 = vmatpush1.bf16.msra.mxu0 %v3119
      %3325 = vmatprep.subr.bf16.mxu0 0
      %3326 = vmatpush1.bf16.msra.mxu0 %v3118
      %3327 = vmatprep.subr.bf16.mxu0 0
      %3328 = vmatpush2.bf16.msra.mxu0 0
      %3329 = vmatprep.subr.bf16.mxu0 0
      %3330 = vmatpush2.bf16.msra.mxu0 0
      %3331 = vmatprep.subr.bf16.mxu0 0
      %3332 = vmatpush2.bf16.msra.mxu0 0
      %3333 = vmatprep.subr.bf16.mxu0 0
      %3334 = vmatpush2.bf16.msra.mxu0 0
      %3335 = vmatprep.subr.bf16.mxu0 0
      %3336 = vmatpush2.bf16.msra.mxu0 0
      %3337 = vmatprep.subr.bf16.mxu0 0
      %3338 = vmatpush2.bf16.msra.mxu0 0
      %3339 = vmatprep.subr.bf16.mxu0 0
      %3340 = vmatpush2.bf16.msra.mxu0 0
      %3341 = vmatprep.subr.bf16.mxu0 0
      %3342 = vmatpush2.bf16.msra.mxu0 0
      %3343 = vmatprep.mubr.bf16.mxu0 0
      %3344 = vmatmul.mubr.bf16.gmra.mxu0 %v2895
      %v3345 = vpop.f32.mrf.mxu0
      %v3346 = vadd.f32 %v3185, %v3345
      %v3347 = vpop.f32.mrf.mxu0
      %v3348 = vpop.f32.mrf.mxu0
      %v3349 = vadd.f32 %v3188, %v3348
      %v3350 = vpop.f32.mrf.mxu0
      %3351 = vmatprep.mubr.bf16.mxu0 0
      %3352 = vmatmul.mubr.bf16.gmra.mxu0 %v2898
      %v3353 = vpop.f32.mrf.mxu0
      %v3354 = vadd.f32 %v3193, %v3353
      %v3355 = vpop.f32.mrf.mxu0
      %v3356 = vpop.f32.mrf.mxu0
      %v3357 = vadd.f32 %v3196, %v3356
      %v3358 = vpop.f32.mrf.mxu0
      %3359 = vmatprep.mubr.bf16.mxu0 0
      %3360 = vmatmul.mubr.bf16.gmra.mxu0 %v2901
      %v3361 = vpop.f32.mrf.mxu0
      %v3362 = vadd.f32 %v3201, %v3361
      %v3363 = vpop.f32.mrf.mxu0
      %v3364 = vpop.f32.mrf.mxu0
      %v3365 = vadd.f32 %v3204, %v3364
      %v3366 = vpop.f32.mrf.mxu0
      %3367 = vmatprep.mubr.bf16.mxu0 0
      %3368 = vmatmul.mubr.bf16.gmra.mxu0 %v2904
      %v3369 = vpop.f32.mrf.mxu0
      %v3370 = vadd.f32 %v3209, %v3369
      %v3371 = vpop.f32.mrf.mxu0
      %v3372 = vpop.f32.mrf.mxu0
      %v3373 = vadd.f32 %v3212, %v3372
      %v3374 = vpop.f32.mrf.mxu0
      %3375 = vmatprep.mubr.bf16.mxu0 0
      %3376 = vmatmul.mubr.bf16.gmra.mxu0 %v2907
      %v3377 = vpop.f32.mrf.mxu0
      %v3378 = vadd.f32 %v3217, %v3377
      %v3379 = vpop.f32.mrf.mxu0
      %v3380 = vpop.f32.mrf.mxu0
      %v3381 = vadd.f32 %v3220, %v3380
      %v3382 = vpop.f32.mrf.mxu0
      %3383 = vmatprep.mubr.bf16.mxu0 0
      %3384 = vmatmul.mubr.bf16.gmra.mxu0 %v2910
      %v3385 = vpop.f32.mrf.mxu0
      %v3386 = vadd.f32 %v3225, %v3385
      %v3387 = vpop.f32.mrf.mxu0
      %v3388 = vpop.f32.mrf.mxu0
      %v3389 = vadd.f32 %v3228, %v3388
      %v3390 = vpop.f32.mrf.mxu0
      %3391 = vmatprep.mubr.bf16.mxu0 0
      %3392 = vmatmul.mubr.bf16.gmra.mxu0 %v2913
      %v3393 = vpop.f32.mrf.mxu0
      %v3394 = vadd.f32 %v3233, %v3393
      %v3395 = vpop.f32.mrf.mxu0
      %v3396 = vpop.f32.mrf.mxu0
      %v3397 = vadd.f32 %v3236, %v3396
      %v3398 = vpop.f32.mrf.mxu0
      %3399 = vmatprep.mubr.bf16.mxu0 0
      %3400 = vmatmul.mubr.bf16.gmra.mxu0 %v2916
      %v3401 = vpop.f32.mrf.mxu0
      %v3402 = vadd.f32 %v3241, %v3401
      %v3403 = vpop.f32.mrf.mxu0
      %v3404 = vpop.f32.mrf.mxu0
      %v3405 = vadd.f32 %v3244, %v3404
      %v3406 = vpop.f32.mrf.mxu0
      %3407 = vmatprep.mubr.bf16.mxu0 0
      %3408 = vmatmul.mubr.bf16.gmra.mxu0 %v2919
      %v3409 = vpop.f32.mrf.mxu0
      %v3410 = vadd.f32 %v3249, %v3409
      %v3411 = vpop.f32.mrf.mxu0
      %v3412 = vpop.f32.mrf.mxu0
      %v3413 = vadd.f32 %v3252, %v3412
      %v3414 = vpop.f32.mrf.mxu0
      %3415 = vmatprep.mubr.bf16.mxu0 0
      %3416 = vmatmul.mubr.bf16.gmra.mxu0 %v2922
      %v3417 = vpop.f32.mrf.mxu0
      %v3418 = vadd.f32 %v3257, %v3417
      %v3419 = vpop.f32.mrf.mxu0
      %v3420 = vpop.f32.mrf.mxu0
      %v3421 = vadd.f32 %v3260, %v3420
      %v3422 = vpop.f32.mrf.mxu0
      %3423 = vmatprep.mubr.bf16.mxu0 0
      %3424 = vmatmul.mubr.bf16.gmra.mxu0 %v2925
      %v3425 = vpop.f32.mrf.mxu0
      %v3426 = vadd.f32 %v3265, %v3425
      %v3427 = vpop.f32.mrf.mxu0
      %v3428 = vpop.f32.mrf.mxu0
      %v3429 = vadd.f32 %v3268, %v3428
      %v3430 = vpop.f32.mrf.mxu0
      %3431 = vmatprep.mubr.bf16.mxu0 0
      %3432 = vmatmul.mubr.bf16.gmra.mxu0 %v2928
      %v3433 = vpop.f32.mrf.mxu0
      %v3434 = vadd.f32 %v3273, %v3433
      %v3435 = vpop.f32.mrf.mxu0
      %v3436 = vpop.f32.mrf.mxu0
      %v3437 = vadd.f32 %v3276, %v3436
      %v3438 = vpop.f32.mrf.mxu0
      %3439 = vmatprep.mubr.bf16.mxu0 0
      %3440 = vmatmul.mubr.bf16.gmra.mxu0 %v2931
      %v3441 = vpop.f32.mrf.mxu0
      %v3442 = vadd.f32 %v3281, %v3441
      %v3443 = vpop.f32.mrf.mxu0
      %v3444 = vpop.f32.mrf.mxu0
      %v3445 = vadd.f32 %v3284, %v3444
      %v3446 = vpop.f32.mrf.mxu0
      %3447 = vmatprep.mubr.bf16.mxu0 0
      %3448 = vmatmul.mubr.bf16.gmra.mxu0 %v2934
      %v3449 = vpop.f32.mrf.mxu0
      %v3450 = vadd.f32 %v3289, %v3449
      %v3451 = vpop.f32.mrf.mxu0
      %v3452 = vpop.f32.mrf.mxu0
      %v3453 = vadd.f32 %v3292, %v3452
      %v3454 = vpop.f32.mrf.mxu0
      %3455 = vmatprep.mubr.bf16.mxu0 0
      %3456 = vmatmul.mubr.bf16.gmra.mxu0 %v2937
      %v3457 = vpop.f32.mrf.mxu0
      %v3458 = vadd.f32 %v3297, %v3457
      %v3459 = vpop.f32.mrf.mxu0
      %v3460 = vpop.f32.mrf.mxu0
      %v3461 = vadd.f32 %v3300, %v3460
      %v3462 = vpop.f32.mrf.mxu0
      %3463 = vmatprep.mubr.bf16.mxu0 0
      %3464 = vmatmul.mubr.bf16.gmra.mxu0 %v2940
      %v3465 = vpop.f32.mrf.mxu0
      %v3466 = vadd.f32 %v3305, %v3465
      %v3467 = vpop.f32.mrf.mxu0
      %v3468 = vpop.f32.mrf.mxu0
      %v3469 = vadd.f32 %v3308, %v3468
      %v3470 = vpop.f32.mrf.mxu0
      %3471 = vdwg.mxu0
      %v3472 = vadd.f32 %v2302, %v3346
      %v3473 = vadd.f32 %v2305, %v3349
      %v3474 = vadd.f32 %v2310, %v3354
      %v3475 = vadd.f32 %v2313, %v3357
      %v3476 = vadd.f32 %v2318, %v3362
      %v3477 = vadd.f32 %v2321, %v3365
      %v3478 = vadd.f32 %v2326, %v3370
      %v3479 = vadd.f32 %v2329, %v3373
      %v3480 = vadd.f32 %v2334, %v3378
      %v3481 = vadd.f32 %v2337, %v3381
      %v3482 = vadd.f32 %v2342, %v3386
      %v3483 = vadd.f32 %v2345, %v3389
      %v3484 = vadd.f32 %v2350, %v3394
      %v3485 = vadd.f32 %v2353, %v3397
      %v3486 = vadd.f32 %v2358, %v3402
      %v3487 = vadd.f32 %v2361, %v3405
      %v3488 = vadd.f32 %v2366, %v3410
      %v3489 = vadd.f32 %v2369, %v3413
      %v3490 = vadd.f32 %v2374, %v3418
      %v3491 = vadd.f32 %v2377, %v3421
      %v3492 = vadd.f32 %v2382, %v3426
      %v3493 = vadd.f32 %v2385, %v3429
      %v3494 = vadd.f32 %v2390, %v3434
      %v3495 = vadd.f32 %v2393, %v3437
      %v3496 = vadd.f32 %v2398, %v3442
      %v3497 = vadd.f32 %v2401, %v3445
      %v3498 = vadd.f32 %v2406, %v3450
      %v3499 = vadd.f32 %v2409, %v3453
      %v3500 = vadd.f32 %v2414, %v3458
      %v3501 = vadd.f32 %v2417, %v3461
      %v3502 = vadd.f32 %v2422, %v3466
      %v3503 = vadd.f32 %v2425, %v3469
      %v3504 = vpack.c.bf16 %v3473, %v3472
      %v3505 = vpack.c.bf16 %v3475, %v3474
      %v3506 = vpack.c.bf16 %v3477, %v3476
      %v3507 = vpack.c.bf16 %v3479, %v3478
      %v3508 = vpack.c.bf16 %v3481, %v3480
      %v3509 = vpack.c.bf16 %v3483, %v3482
      %v3510 = vpack.c.bf16 %v3485, %v3484
      %v3511 = vpack.c.bf16 %v3487, %v3486
      %v3512 = vpack.c.bf16 %v3489, %v3488
      %v3513 = vpack.c.bf16 %v3491, %v3490
      %v3514 = vpack.c.bf16 %v3493, %v3492
      %v3515 = vpack.c.bf16 %v3495, %v3494
      %v3516 = vpack.c.bf16 %v3497, %v3496
      %v3517 = vpack.c.bf16 %v3499, %v3498
      %v3518 = vpack.c.bf16 %v3501, %v3500
      %v3519 = vpack.c.bf16 %v3503, %v3502
      %v3536 = vunpack.c.l.b16 %v3504
      %v3537 = vunpack.c.h.b16 %v3504
      %v3538 = vunpack.c.l.b16 %v3505
      %v3539 = vunpack.c.h.b16 %v3505
      %v3540 = vunpack.c.l.b16 %v3506
      %v3541 = vunpack.c.h.b16 %v3506
      %v3542 = vunpack.c.l.b16 %v3507
      %v3543 = vunpack.c.h.b16 %v3507
      %v3544 = vunpack.c.l.b16 %v3508
      %v3545 = vunpack.c.h.b16 %v3508
      %v3546 = vunpack.c.l.b16 %v3509
      %v3547 = vunpack.c.h.b16 %v3509
      %v3548 = vunpack.c.l.b16 %v3510
      %v3549 = vunpack.c.h.b16 %v3510
      %v3550 = vunpack.c.l.b16 %v3511
      %v3551 = vunpack.c.h.b16 %v3511
      %v3552 = vunpack.c.l.b16 %v3512
      %v3553 = vunpack.c.h.b16 %v3512
      %v3554 = vunpack.c.l.b16 %v3513
      %v3555 = vunpack.c.h.b16 %v3513
      %v3556 = vunpack.c.l.b16 %v3514
      %v3557 = vunpack.c.h.b16 %v3514
      %v3558 = vunpack.c.l.b16 %v3515
      %v3559 = vunpack.c.h.b16 %v3515
      %v3560 = vunpack.c.l.b16 %v3516
      %v3561 = vunpack.c.h.b16 %v3516
      %v3562 = vunpack.c.l.b16 %v3517
      %v3563 = vunpack.c.h.b16 %v3517
      %v3564 = vunpack.c.l.b16 %v3518
      %v3565 = vunpack.c.h.b16 %v3518
      %v3566 = vunpack.c.l.b16 %v3519
      %v3567 = vunpack.c.h.b16 %v3519
      %v3568 = vpack.c.b16 %v3536, %v3536
      %v3569 = vpack.c.b16 %v3537, %v3537
      %v3570 = vpack.c.b16 %v3538, %v3538
      %v3571 = vpack.c.b16 %v3539, %v3539
      %v3572 = vpack.c.b16 %v3540, %v3540
      %v3573 = vpack.c.b16 %v3541, %v3541
      %v3574 = vpack.c.b16 %v3542, %v3542
      %v3575 = vpack.c.b16 %v3543, %v3543
      %v3576 = vpack.c.b16 %v3544, %v3544
      %v3577 = vpack.c.b16 %v3545, %v3545
      %v3578 = vpack.c.b16 %v3546, %v3546
      %v3579 = vpack.c.b16 %v3547, %v3547
      %v3580 = vpack.c.b16 %v3548, %v3548
      %v3581 = vpack.c.b16 %v3549, %v3549
      %v3582 = vpack.c.b16 %v3550, %v3550
      %v3583 = vpack.c.b16 %v3551, %v3551
      %v3584 = vpack.c.b16 %v3552, %v3552
      %v3585 = vpack.c.b16 %v3553, %v3553
      %v3586 = vpack.c.b16 %v3554, %v3554
      %v3587 = vpack.c.b16 %v3555, %v3555
      %v3588 = vpack.c.b16 %v3556, %v3556
      %v3589 = vpack.c.b16 %v3557, %v3557
      %v3590 = vpack.c.b16 %v3558, %v3558
      %v3591 = vpack.c.b16 %v3559, %v3559
      %v3592 = vpack.c.b16 %v3560, %v3560
      %v3593 = vpack.c.b16 %v3561, %v3561
      %v3594 = vpack.c.b16 %v3562, %v3562
      %v3595 = vpack.c.b16 %v3563, %v3563
      %v3596 = vpack.c.b16 %v3564, %v3564
      %v3597 = vpack.c.b16 %v3565, %v3565
      %v3598 = vpack.c.b16 %v3566, %v3566
      %v3599 = vpack.c.b16 %v3567, %v3567
      %3632 = vst [vmem:[%s231] sm:$0xf] %v3568
      %3633 = vst [vmem:[%s231 + $0x4] sm:$0xf] %v3569
      %3634 = vst [vmem:[%s231 + $0x8] sm:$0xf] %v3570
      %3635 = vst [vmem:[%s231 + $0xc] sm:$0xf] %v3571
      %3636 = vst [vmem:[%s231 + $0x10] sm:$0xf] %v3572
      %3637 = vst [vmem:[%s231 + $0x14] sm:$0xf] %v3573
      %3638 = vst [vmem:[%s231 + $0x18] sm:$0xf] %v3574
      %3639 = vst [vmem:[%s231 + $0x1c] sm:$0xf] %v3575
      %3640 = vst [vmem:[%s231 + $0x20] sm:$0xf] %v3576
      %3641 = vst [vmem:[%s231 + $0x24] sm:$0xf] %v3577
      %3642 = vst [vmem:[%s231 + $0x28] sm:$0xf] %v3578
      %3643 = vst [vmem:[%s231 + $0x2c] sm:$0xf] %v3579
      %3644 = vst [vmem:[%s231 + $0x30] sm:$0xf] %v3580
      %3645 = vst [vmem:[%s231 + $0x34] sm:$0xf] %v3581
      %3646 = vst [vmem:[%s231 + $0x38] sm:$0xf] %v3582
      %3647 = vst [vmem:[%s231 + $0x3c] sm:$0xf] %v3583
      %3648 = vst [vmem:[%s231 + $0x40] sm:$0xf] %v3584
      %3649 = vst [vmem:[%s231 + $0x44] sm:$0xf] %v3585
      %3650 = vst [vmem:[%s231 + $0x48] sm:$0xf] %v3586
      %3651 = vst [vmem:[%s231 + $0x4c] sm:$0xf] %v3587
      %3652 = vst [vmem:[%s231 + $0x50] sm:$0xf] %v3588
      %3653 = vst [vmem:[%s231 + $0x54] sm:$0xf] %v3589
      %3654 = vst [vmem:[%s231 + $0x58] sm:$0xf] %v3590
      %3655 = vst [vmem:[%s231 + $0x5c] sm:$0xf] %v3591
      %3656 = vst [vmem:[%s231 + $0x60] sm:$0xf] %v3592
      %3657 = vst [vmem:[%s231 + $0x64] sm:$0xf] %v3593
      %3658 = vst [vmem:[%s231 + $0x68] sm:$0xf] %v3594
      %3659 = vst [vmem:[%s231 + $0x6c] sm:$0xf] %v3595
      %3660 = vst [vmem:[%s231 + $0x70] sm:$0xf] %v3596
      %3661 = vst [vmem:[%s231 + $0x74] sm:$0xf] %v3597
      %3662 = vst [vmem:[%s231 + $0x78] sm:$0xf] %v3598
      %3663 = vst [vmem:[%s231 + $0x7c] sm:$0xf] %v3599
      %v3664 = vadd.f32 %v3472, %v3473
      %v3665 = vadd.f32 %v3664, %v3474
      %v3666 = vadd.f32 %v3665, %v3475
      %v3667 = vadd.f32 %v3666, %v3476
      %v3668 = vadd.f32 %v3667, %v3477
      %v3669 = vadd.f32 %v3668, %v3478
      %v3670 = vadd.f32 %v3669, %v3479
      %v3671 = vadd.f32 %v3670, %v3480
      %v3672 = vadd.f32 %v3671, %v3481
      %v3673 = vadd.f32 %v3672, %v3482
      %v3674 = vadd.f32 %v3673, %v3483
      %v3675 = vadd.f32 %v3674, %v3484
      %v3676 = vadd.f32 %v3675, %v3485
      %v3677 = vadd.f32 %v3676, %v3486
      %v3678 = vadd.f32 %v3677, %v3487
      %v3679 = vadd.f32 %v3678, %v3488
      %v3680 = vadd.f32 %v3679, %v3489
      %v3681 = vadd.f32 %v3680, %v3490
      %v3682 = vadd.f32 %v3681, %v3491
      %v3683 = vadd.f32 %v3682, %v3492
      %v3684 = vadd.f32 %v3683, %v3493
      %v3685 = vadd.f32 %v3684, %v3494
      %v3686 = vadd.f32 %v3685, %v3495
      %v3687 = vadd.f32 %v3686, %v3496
      %v3688 = vadd.f32 %v3687, %v3497
      %v3689 = vadd.f32 %v3688, %v3498
      %v3690 = vadd.f32 %v3689, %v3499
      %v3691 = vadd.f32 %v3690, %v3500
      %v3692 = vadd.f32 %v3691, %v3501
      %v3693 = vadd.f32 %v3692, %v3502
      %v3694 = vadd.f32 %v3693, %v3503
      %v3695 = vrot.slane %v3694, 4
      %v3696 = vadd.f32 %v3694, %v3695
      %v3697 = vrot.slane %v3696, 2
      %v3698 = vadd.f32 %v3696, %v3697
      %v3699 = vrot.slane %v3698, 1
      %v3700 = vadd.f32 %v3698, %v3699
      %v3701 = vadd.f32 %v3700, 0.0
      %v3702 = vmul.f32 %v3472, %v3472
      %v3703 = vmul.f32 %v3473, %v3473
      %v3704 = vmul.f32 %v3474, %v3474
      %v3705 = vmul.f32 %v3475, %v3475
      %v3706 = vmul.f32 %v3476, %v3476
      %v3707 = vmul.f32 %v3477, %v3477
      %v3708 = vmul.f32 %v3478, %v3478
      %v3709 = vmul.f32 %v3479, %v3479
      %v3710 = vmul.f32 %v3480, %v3480
      %v3711 = vmul.f32 %v3481, %v3481
      %v3712 = vmul.f32 %v3482, %v3482
      %v3713 = vmul.f32 %v3483, %v3483
      %v3714 = vmul.f32 %v3484, %v3484
      %v3715 = vmul.f32 %v3485, %v3485
      %v3716 = vmul.f32 %v3486, %v3486
      %v3717 = vmul.f32 %v3487, %v3487
      %v3718 = vmul.f32 %v3488, %v3488
      %v3719 = vmul.f32 %v3489, %v3489
      %v3720 = vmul.f32 %v3490, %v3490
      %v3721 = vmul.f32 %v3491, %v3491
      %v3722 = vmul.f32 %v3492, %v3492
      %v3723 = vmul.f32 %v3493, %v3493
      %v3724 = vmul.f32 %v3494, %v3494
      %v3725 = vmul.f32 %v3495, %v3495
      %v3726 = vmul.f32 %v3496, %v3496
      %v3727 = vmul.f32 %v3497, %v3497
      %v3728 = vmul.f32 %v3498, %v3498
      %v3729 = vmul.f32 %v3499, %v3499
      %v3730 = vmul.f32 %v3500, %v3500
      %v3731 = vmul.f32 %v3501, %v3501
      %v3732 = vmul.f32 %v3502, %v3502
      %v3733 = vmul.f32 %v3503, %v3503
      %v3734 = vadd.f32 %v3702, %v3703
      %v3735 = vadd.f32 %v3734, %v3704
      %v3736 = vadd.f32 %v3735, %v3705
      %v3737 = vadd.f32 %v3736, %v3706
      %v3738 = vadd.f32 %v3737, %v3707
      %v3739 = vadd.f32 %v3738, %v3708
      %v3740 = vadd.f32 %v3739, %v3709
      %v3741 = vadd.f32 %v3740, %v3710
      %v3742 = vadd.f32 %v3741, %v3711
      %v3743 = vadd.f32 %v3742, %v3712
      %v3744 = vadd.f32 %v3743, %v3713
      %v3745 = vadd.f32 %v3744, %v3714
      %v3746 = vadd.f32 %v3745, %v3715
      %v3747 = vadd.f32 %v3746, %v3716
      %v3748 = vadd.f32 %v3747, %v3717
      %v3749 = vadd.f32 %v3748, %v3718
      %v3750 = vadd.f32 %v3749, %v3719
      %v3751 = vadd.f32 %v3750, %v3720
      %v3752 = vadd.f32 %v3751, %v3721
      %v3753 = vadd.f32 %v3752, %v3722
      %v3754 = vadd.f32 %v3753, %v3723
      %v3755 = vadd.f32 %v3754, %v3724
      %v3756 = vadd.f32 %v3755, %v3725
      %v3757 = vadd.f32 %v3756, %v3726
      %v3758 = vadd.f32 %v3757, %v3727
      %v3759 = vadd.f32 %v3758, %v3728
      %v3760 = vadd.f32 %v3759, %v3729
      %v3761 = vadd.f32 %v3760, %v3730
      %v3762 = vadd.f32 %v3761, %v3731
      %v3763 = vadd.f32 %v3762, %v3732
      %v3764 = vadd.f32 %v3763, %v3733
      %v3765 = vrot.slane %v3764, 4
      %v3766 = vadd.f32 %v3764, %v3765
      %v3767 = vrot.slane %v3766, 2
      %v3768 = vadd.f32 %v3766, %v3767
      %v3769 = vrot.slane %v3768, 1
      %v3770 = vadd.f32 %v3768, %v3769
      %v3771 = vadd.f32 %v3770, 0.0
      %vm3772 = vcmask 1040384
      %v3773 = vsel %vm3772, %v3701, %v3771
      %3774 = vst [vmem:[%s235] sm:$0x3] %v3773
      %p3775 = scmp.lt.s32.totalorder %s17, 1
      %s3776 = scalar_select %p3775, %s17, 1
      %s3777 = smul.addr %s3776, 32
      %s3778 = smul.addr %s3777, 4
      %s3779 = scalar_lea.vmem %s4, %s3778
      %p3780 = scmp.lt.s32.totalorder %s17, 1
      %s3781 = scalar_select %p3780, %s17, 1
      %s3782 = smul.addr %s3781, 2
      %s3783 = scalar_lea.vmem %s5, %s3782
      // Predicated region
      $region37: #{basic_block_forward.3} parent=35 // pred_check
        %p3784 = pneg %p124
      $region38: #{basic_block_forward.3} parent=35 // pred_check_branch
        %3786 = sbr.rel (%p3784) target = $region40
      $region39: #{basic_block_forward.3} parent=35 // pred_region
        _
      $region40: #{basic_block_forward.3} parent=35 // pred_fallthru
        _
      // Predicated region
      $region41: #{basic_block_forward.3} parent=35 // pred_check
        %p3787 = pneg %p150
      $region42: #{basic_block_forward.3} parent=35 // pred_check_branch
        %3789 = sbr.rel (%p3787) target = $region44
      $region43: #{basic_block_forward.3} parent=35 // pred_region
        _
      $region44: #{basic_block_forward.3} parent=35 // pred_fallthru
        _
    $region36: #{basic_block_forward.3} parent=5 // pred_fallthru
      _
    %p3790 = scmp.le.s32.totalorder 2, %s12
    // Predicated region
    $region45: #{basic_block_forward.3} parent=5 // pred_check
      %p3791 = pneg %p3790
    $region46: #{basic_block_forward.3} parent=5 // pred_check_branch
      %3793 = sbr.rel (%p3791) target = $region48
    $region47: #{basic_block_forward.3} parent=5 // pred_region
      %s3794 = ssub.s32 %s12, 2
      // Predicated region
      $region49: #{basic_block_forward.3} parent=47 // pred_check
        %p3795 = pneg %p130
      $region50: #{basic_block_forward.3} parent=47 // pred_check_branch
        %3797 = sbr.rel (%p3795) target = $region52
      $region51: #{basic_block_forward.3} parent=47 // pred_region
        %p3798 = scmp.lt.s32.totalorder %s18, 1
        %s3799 = scalar_select %p3798, %s18, 1
        %s3800 = smul.addr %s3799, 32
        %s3801 = smul.addr %s3800, 4
        %s3802 = scalar_lea.vmem %s4, %s3801
      $region52: #{basic_block_forward.3} parent=47 // pred_fallthru
        _
      // Predicated region
      $region53: #{basic_block_forward.3} parent=47 // pred_check
        %p3803 = pneg %p156
      $region54: #{basic_block_forward.3} parent=47 // pred_check_branch
        %3805 = sbr.rel (%p3803) target = $region56
      $region55: #{basic_block_forward.3} parent=47 // pred_region
        %p3806 = scmp.lt.s32.totalorder %s18, 1
        %s3807 = scalar_select %p3806, %s18, 1
        %s3808 = smul.addr %s3807, 2
        %s3809 = scalar_lea.vmem %s5, %s3808
      $region56: #{basic_block_forward.3} parent=47 // pred_fallthru
        _
    $region48: #{basic_block_forward.3} parent=5 // pred_fallthru
      _
  $region6: #{basic_block_forward.3} parent=0 // loop_footer
    %s16 = sadd.s32 1, %s12
  $region7: #{basic_block_forward.3} parent=0 // loop_footer_branch
    %11 = sbr.rel target = $region3
  $region8: #{basic_block_forward.3} parent=0 // loop_exit
    _

// kernel: basic_block_forward.4
$region0: #{basic_block_forward.4}
  #allocation0 [shape = 'u32[]', space=smem, size = 0x4, offset = 0x4, fixed_abs, tag = 'smem constant byte address 0x4 - core index']
  #allocation1 [shape = 'u32[144,128]{1,0:T(1,128)}', space=vmem, size = 0x12000, scoped, tag = 'internal scratch']
  #allocation2 [shape = 'bf16[18,18,128]{2,1,0:T(8,128)(2,1)}', space=vmem, size = 0x1b000, scoped, tag = 'scratch operand']
  %s0 = inlined_call_operand.vmem [shape: bf16[2,16,18,128], index: 0, kind: input, shape index: {}]
  %s1 = inlined_call_operand.vmem [shape: f32[1,128], index: 1, kind: input, shape index: {}]
  %s2 = inlined_call_operand.vmem [shape: f32[1,128], index: 2, kind: input, shape index: {}]
  %s3 = inlined_call_operand.vmem [shape: bf16[3,384,128], index: 3, kind: input, shape index: {}]
  %s4 = inlined_call_operand.vmem [shape: bf16[2,16,16,128], index: 4, kind: output, shape index: {0}]
  %s5 = inlined_call_operand.vmem [shape: f32[2,2,128], index: 5, kind: output, shape index: {1}]
  %6 = xla_tuple %s4, %s5
  %s7 = sld [smem:[#allocation0]]
  $region57: #{basic_block_forward.4} parent=0
    _
  %s9 = ssub.s32 1, %s7
  %s10 = scalar_select 0, %s9, %s7
  loop: start=0, step=1, limit=4
  $region2: #{basic_block_forward.4} parent=0 // loop_pre_header
    _
  $region3: #{basic_block_forward.4} parent=0 // loop_header
    %s12 = sphi 0, %s16
    %p13 = scmp.ge.s32.totalorder %s12, 4
    %s22 = sphi 0, %s24
    %s25 = sphi 0, %s22
    %s26 = sphi 0, %s25
    %s42 = sphi 0, %s26
    %s46 = sphi 0, %s46
    %s48 = sphi 0, %s46
    %s49 = sphi 0, %s48
    %s63 = sphi 0, %s49
    %s67 = sphi 0, %s67
    %s69 = sphi 0, %s67
    %s70 = sphi 0, %s69
    %s84 = sphi 0, %s70
    %s88 = sphi 0, %s88
    %s90 = sphi 0, %s88
    %s91 = sphi 0, %s90
    %s105 = sphi 0, %s91
    %s111 = sphi 0, %s113
    %s114 = sphi 0, %s111
    %s115 = sphi 0, %s114
    %s131 = sphi 0, %s115
    %s137 = sphi 0, %s139
    %s140 = sphi 0, %s137
    %s141 = sphi 0, %s140
    %s157 = sphi 0, %s141
  $region4: #{basic_block_forward.4} parent=0 // loop_header_branch
    %15 = sbr.rel (%p13) target = $region8
  $region5: #{basic_block_forward.4} parent=0 // loop_body
    %s17 = ssub.s32 %s12, 1
    %s18 = ssub.s32 %s12, 2
    %s19 = sadd.s32 %s12, 1
    %s20 = ssub.s32 %s12, %s19
    %p21 = scmp.eq.s32.totalorder %s20, 0
    %s23 = sadd.s32 %s22, 1
    %s24 = scalar_select %p21, %s22, %s23
    %p27 = pneg %p21
    %p28 = scmp.eq.s32.totalorder %s12, 1
    %p29 = por %p27, %p28
    %p30 = scmp.ne.s32.totalorder %s22, %s25
    %p31 = scmp.eq.s32.totalorder %s12, 0
    %p32 = por %p30, %p31
    %p33 = scmp.ne.s32.totalorder %s22, %s25
    %p34 = scmp.eq.s32.totalorder %s17, 1
    %p35 = por %p33, %p34
    %p36 = scmp.ne.s32.totalorder %s25, %s26
    %p37 = scmp.eq.s32.totalorder %s17, 0
    %p38 = por %p36, %p37
    %p39 = scmp.ne.s32.totalorder %s25, %s26
    %p40 = scmp.eq.s32.totalorder %s18, 1
    %p41 = por %p39, %p40
    %p43 = scmp.ne.s32.totalorder %s26, %s42
    %p44 = scmp.eq.s32.totalorder %s18, 0
    %p45 = por %p43, %p44
    %s47 = sadd.s32 %s46, 1
    %p50 = scmp.eq.s32.totalorder %s12, 1
    %p51 = scmp.ne.s32.totalorder %s46, %s48
    %p52 = scmp.eq.s32.totalorder %s12, 0
    %p53 = por %p51, %p52
    %p54 = scmp.ne.s32.totalorder %s46, %s48
    %p55 = scmp.eq.s32.totalorder %s17, 1
    %p56 = por %p54, %p55
    %p57 = scmp.ne.s32.totalorder %s48, %s49
    %p58 = scmp.eq.s32.totalorder %s17, 0
    %p59 = por %p57, %p58
    %p60 = scmp.ne.s32.totalorder %s48, %s49
    %p61 = scmp.eq.s32.totalorder %s18, 1
    %p62 = por %p60, %p61
    %p64 = scmp.ne.s32.totalorder %s49, %s63
    %p65 = scmp.eq.s32.totalorder %s18, 0
    %p66 = por %p64, %p65
    %s68 = sadd.s32 %s67, 1
    %p71 = scmp.eq.s32.totalorder %s12, 1
    %p72 = scmp.ne.s32.totalorder %s67, %s69
    %p73 = scmp.eq.s32.totalorder %s12, 0
    %p74 = por %p72, %p73
    %p75 = scmp.ne.s32.totalorder %s67, %s69
    %p76 = scmp.eq.s32.totalorder %s17, 1
    %p77 = por %p75, %p76
    %p78 = scmp.ne.s32.totalorder %s69, %s70
    %p79 = scmp.eq.s32.totalorder %s17, 0
    %p80 = por %p78, %p79
    %p81 = scmp.ne.s32.totalorder %s69, %s70
    %p82 = scmp.eq.s32.totalorder %s18, 1
    %p83 = por %p81, %p82
    %p85 = scmp.ne.s32.totalorder %s70, %s84
    %p86 = scmp.eq.s32.totalorder %s18, 0
    %p87 = por %p85, %p86
    %s89 = sadd.s32 %s88, 1
    %p92 = scmp.eq.s32.totalorder %s12, 1
    %p93 = scmp.ne.s32.totalorder %s88, %s90
    %p94 = scmp.eq.s32.totalorder %s12, 0
    %p95 = por %p93, %p94
    %p96 = scmp.ne.s32.totalorder %s88, %s90
    %p97 = scmp.eq.s32.totalorder %s17, 1
    %p98 = por %p96, %p97
    %p99 = scmp.ne.s32.totalorder %s90, %s91
    %p100 = scmp.eq.s32.totalorder %s17, 0
    %p101 = por %p99, %p100
    %p102 = scmp.ne.s32.totalorder %s90, %s91
    %p103 = scmp.eq.s32.totalorder %s18, 1
    %p104 = por %p102, %p103
    %p106 = scmp.ne.s32.totalorder %s91, %s105
    %p107 = scmp.eq.s32.totalorder %s18, 0
    %p108 = por %p106, %p107
    %s109 = ssub.s32 %s12, %s19
    %p110 = scmp.eq.s32.totalorder %s109, 0
    %s112 = sadd.s32 %s111, 1
    %s113 = scalar_select %p110, %s111, %s112
    %p116 = pneg %p110
    %p117 = scmp.eq.s32.totalorder %s12, 1
    %p118 = por %p116, %p117
    %p119 = scmp.ne.s32.totalorder %s111, %s114
    %p120 = scmp.eq.s32.totalorder %s12, 0
    %p121 = por %p119, %p120
    %p122 = scmp.ne.s32.totalorder %s111, %s114
    %p123 = scmp.eq.s32.totalorder %s17, 1
    %p124 = por %p122, %p123
    %p125 = scmp.ne.s32.totalorder %s114, %s115
    %p126 = scmp.eq.s32.totalorder %s17, 0
    %p127 = por %p125, %p126
    %p128 = scmp.ne.s32.totalorder %s114, %s115
    %p129 = scmp.eq.s32.totalorder %s18, 1
    %p130 = por %p128, %p129
    %p132 = scmp.ne.s32.totalorder %s115, %s131
    %p133 = scmp.eq.s32.totalorder %s18, 0
    %p134 = por %p132, %p133
    %s135 = ssub.s32 %s12, %s19
    %p136 = scmp.eq.s32.totalorder %s135, 0
    %s138 = sadd.s32 %s137, 1
    %s139 = scalar_select %p136, %s137, %s138
    %p142 = pneg %p136
    %p143 = scmp.eq.s32.totalorder %s12, 1
    %p144 = por %p142, %p143
    %p145 = scmp.ne.s32.totalorder %s137, %s140
    %p146 = scmp.eq.s32.totalorder %s12, 0
    %p147 = por %p145, %p146
    %p148 = scmp.ne.s32.totalorder %s137, %s140
    %p149 = scmp.eq.s32.totalorder %s17, 1
    %p150 = por %p148, %p149
    %p151 = scmp.ne.s32.totalorder %s140, %s141
    %p152 = scmp.eq.s32.totalorder %s17, 0
    %p153 = por %p151, %p152
    %p154 = scmp.ne.s32.totalorder %s140, %s141
    %p155 = scmp.eq.s32.totalorder %s18, 1
    %p156 = por %p154, %p155
    %p158 = scmp.ne.s32.totalorder %s141, %s157
    %p159 = scmp.eq.s32.totalorder %s18, 0
    %p160 = por %p158, %p159
    %p161 = scmp.le.s32.totalorder 1, %s12
    %p162 = scmp.lt.s32.totalorder %s12, 3
    %p163 = pnand %p161, %p162
    %p164 = pneg %p163
    // Predicated region
    $region9: #{basic_block_forward.4} parent=5 // pred_check
      _
    $region10: #{basic_block_forward.4} parent=5 // pred_check_branch
      %166 = sbr.rel (%p163) target = $region12
    $region11: #{basic_block_forward.4} parent=5 // pred_region
      %s167 = ssub.s32 %s12, 1
      // Predicated region
      $region13: #{basic_block_forward.4} parent=11 // pred_check
        %p168 = pneg %p59
      $region14: #{basic_block_forward.4} parent=11 // pred_check_branch
        %170 = sbr.rel (%p168) target = $region16
      $region15: #{basic_block_forward.4} parent=11 // pred_region
        _
      $region16: #{basic_block_forward.4} parent=11 // pred_fallthru
        _
      // Predicated region
      $region17: #{basic_block_forward.4} parent=11 // pred_check
        %p171 = pneg %p80
      $region18: #{basic_block_forward.4} parent=11 // pred_check_branch
        %173 = sbr.rel (%p171) target = $region20
      $region19: #{basic_block_forward.4} parent=11 // pred_region
        _
      $region20: #{basic_block_forward.4} parent=11 // pred_fallthru
        _
      // Predicated region
      $region21: #{basic_block_forward.4} parent=11 // pred_check
        %p174 = pneg %p101
      $region22: #{basic_block_forward.4} parent=11 // pred_check_branch
        %176 = sbr.rel (%p174) target = $region24
      $region23: #{basic_block_forward.4} parent=11 // pred_region
        _
      $region24: #{basic_block_forward.4} parent=11 // pred_fallthru
        _
    $region12: #{basic_block_forward.4} parent=5 // pred_fallthru
      _
    %p177 = scmp.lt.s32.totalorder %s12, 2
    // Predicated region
    $region25: #{basic_block_forward.4} parent=5 // pred_check
      %p178 = pneg %p177
    $region26: #{basic_block_forward.4} parent=5 // pred_check_branch
      %180 = sbr.rel (%p178) target = $region28
    $region27: #{basic_block_forward.4} parent=5 // pred_region
      // Predicated region
      $region29: #{basic_block_forward.4} parent=27 // pred_check
        %p181 = pneg %p32
      $region30: #{basic_block_forward.4} parent=27 // pred_check_branch
        %183 = sbr.rel (%p181) target = $region32
      $region31: #{basic_block_forward.4} parent=27 // pred_region
        %p184 = scmp.lt.s32.totalorder %s12, 1
        %s185 = scalar_select %p184, %s12, 1
        %s186 = smul.addr %s185, 48
        %s187 = smul.addr %s186, 4
        %s188 = scalar_lea.vmem %s0, %s187
      $region32: #{basic_block_forward.4} parent=27 // pred_fallthru
        _
    $region28: #{basic_block_forward.4} parent=5 // pred_fallthru
      _
    %p189 = scmp.le.s32.totalorder 1, %s12
    %p190 = scmp.lt.s32.totalorder %s12, 3
    %p191 = pnand %p189, %p190
    %p192 = pneg %p191
    // Predicated region
    $region33: #{basic_block_forward.4} parent=5 // pred_check
      _
    $region34: #{basic_block_forward.4} parent=5 // pred_check_branch
      %194 = sbr.rel (%p191) target = $region36
    $region35: #{basic_block_forward.4} parent=5 // pred_region
      %s195 = ssub.s32 %s12, 1
      %p196 = scmp.lt.s32.totalorder %s17, 1
      %s197 = scalar_select %p196, %s17, 1
      %s198 = smul.addr %s197, 48
      %s199 = smul.addr %s198, 4
      %s200 = scalar_lea.vmem %s0, %s199
      %p201 = pneg %p38
      %p202 = pneg %p35
      %p203 = pneg %p59
      %p204 = pneg %p56
      %p205 = pneg %p80
      %p206 = pneg %p77
      %p207 = pneg %p101
      %p208 = pneg %p98
      %p209 = pneg %p127
      %p210 = pneg %p124
      %p211 = scmp.lt.s32.totalorder %s17, 1
      %s212 = scalar_select %p211, %s17, 1
      %s213 = smul.addr %s212, 32
      %s214 = smul.addr %s213, 4
      %s215 = scalar_lea.vmem %s4, %s214
      %p216 = pneg %p153
      %p217 = pneg %p150
      %p218 = scmp.lt.s32.totalorder %s17, 1
      %s219 = scalar_select %p218, %s17, 1
      %s220 = smul.addr %s219, 2
      %s221 = scalar_lea.vmem %s5, %s220
      %p222 = scmp.lt.s32.totalorder %s17, 1
      %s223 = scalar_select %p222, %s17, 1
      %s224 = smul.addr %s223, 48
      %s225 = smul.addr %s224, 4
      %s226 = scalar_lea.vmem %s0, %s225
      %p227 = scmp.lt.s32.totalorder %s17, 1
      %s228 = scalar_select %p227, %s17, 1
      %s229 = smul.addr %s228, 32
      %s230 = smul.addr %s229, 4
      %s231 = scalar_lea.vmem %s4, %s230
      %p232 = scmp.lt.s32.totalorder %s17, 1
      %s233 = scalar_select %p232, %s17, 1
      %s234 = smul.addr %s233, 2
      %s235 = scalar_lea.vmem %s5, %s234
      %237 = vst [vmem:[#allocation2] sm:$0xf] 0
      %238 = vst [vmem:[#allocation2 + $0x4] sm:$0xf] 0
      %239 = vst [vmem:[#allocation2 + $0x8] sm:$0x1] 0
      %s240 = scalar_lea.vmem [#allocation2], 204
      %241 = vst [vmem:[%s240] sm:$0xf] 0
      %242 = vst [vmem:[%s240 + $0x4] sm:$0xf] 0
      %243 = vst [vmem:[%s240 + $0x8] sm:$0x1] 0
      %v244 = vlaneseq
      %v245 = vshrl.u32 %v244, 7
      %v246 = vadd.s32 %v245, 8
      %v247 = vadd.s32 %v245, 16
      %vm248 = vcmp.ge.s32.totalorder %v245, 1
      %vm249 = vcmp.ge.s32.totalorder %v246, 1
      %vm250 = vcmp.ge.s32.totalorder %v247, 1
      %vm251 = vcmp.le.s32.totalorder %v245, 16
      %vm252 = vcmp.le.s32.totalorder %v246, 16
      %vm253 = vcmp.le.s32.totalorder %v247, 16
      %vm254 = vmand %vm248, %vm251
      %vm255 = vmand %vm249, %vm252
      %vm256 = vmand %vm250, %vm253
      %v257 = vld [vmem:[%s226] sm:$0xf]
      %v258 = vld [vmem:[%s226 + $0x4] sm:$0xf]
      %v259 = vld [vmem:[%s226 + $0x8] sm:$0x1]
      %v260 = vld [vmem:[%s226 + $0xc] sm:$0xf]
      %v261 = vld [vmem:[%s226 + $0x10] sm:$0xf]
      %v262 = vld [vmem:[%s226 + $0x14] sm:$0x1]
      %v263 = vld [vmem:[%s226 + $0x18] sm:$0xf]
      %v264 = vld [vmem:[%s226 + $0x1c] sm:$0xf]
      %v265 = vld [vmem:[%s226 + $0x20] sm:$0x1]
      %v266 = vld [vmem:[%s226 + $0x24] sm:$0xf]
      %v267 = vld [vmem:[%s226 + $0x28] sm:$0xf]
      %v268 = vld [vmem:[%s226 + $0x2c] sm:$0x1]
      %v269 = vld [vmem:[%s226 + $0x30] sm:$0xf]
      %v270 = vld [vmem:[%s226 + $0x34] sm:$0xf]
      %v271 = vld [vmem:[%s226 + $0x38] sm:$0x1]
      %v272 = vld [vmem:[%s226 + $0x3c] sm:$0xf]
      %v273 = vld [vmem:[%s226 + $0x40] sm:$0xf]
      %v274 = vld [vmem:[%s226 + $0x44] sm:$0x1]
      %v275 = vld [vmem:[%s226 + $0x48] sm:$0xf]
      %v276 = vld [vmem:[%s226 + $0x4c] sm:$0xf]
      %v277 = vld [vmem:[%s226 + $0x50] sm:$0x1]
      %v278 = vld [vmem:[%s226 + $0x54] sm:$0xf]
      %v279 = vld [vmem:[%s226 + $0x58] sm:$0xf]
      %v280 = vld [vmem:[%s226 + $0x5c] sm:$0x1]
      %v281 = vld [vmem:[%s226 + $0x60] sm:$0xf]
      %v282 = vld [vmem:[%s226 + $0x64] sm:$0xf]
      %v283 = vld [vmem:[%s226 + $0x68] sm:$0x1]
      %v284 = vld [vmem:[%s226 + $0x6c] sm:$0xf]
      %v285 = vld [vmem:[%s226 + $0x70] sm:$0xf]
      %v286 = vld [vmem:[%s226 + $0x74] sm:$0x1]
      %v287 = vld [vmem:[%s226 + $0x78] sm:$0xf]
      %v288 = vld [vmem:[%s226 + $0x7c] sm:$0xf]
      %v289 = vld [vmem:[%s226 + $0x80] sm:$0x1]
      %v290 = vld [vmem:[%s226 + $0x84] sm:$0xf]
      %v291 = vld [vmem:[%s226 + $0x88] sm:$0xf]
      %v292 = vld [vmem:[%s226 + $0x8c] sm:$0x1]
      %v293 = vld [vmem:[%s226 + $0x90] sm:$0xf]
      %v294 = vld [vmem:[%s226 + $0x94] sm:$0xf]
      %v295 = vld [vmem:[%s226 + $0x98] sm:$0x1]
      %v296 = vld [vmem:[%s226 + $0x9c] sm:$0xf]
      %v297 = vld [vmem:[%s226 + $0xa0] sm:$0xf]
      %v298 = vld [vmem:[%s226 + $0xa4] sm:$0x1]
      %v299 = vld [vmem:[%s226 + $0xa8] sm:$0xf]
      %v300 = vld [vmem:[%s226 + $0xac] sm:$0xf]
      %v301 = vld [vmem:[%s226 + $0xb0] sm:$0x1]
      %v302 = vld [vmem:[%s226 + $0xb4] sm:$0xf]
      %v303 = vld [vmem:[%s226 + $0xb8] sm:$0xf]
      %v304 = vld [vmem:[%s226 + $0xbc] sm:$0x1]
      %v305 = vunpack.c.l.bf16 %v257
      %v306 = vunpack.c.l.bf16 %v258
      %v307 = vunpack.c.l.bf16 %v259
      %v308 = vunpack.c.l.bf16 %v260
      %v309 = vunpack.c.l.bf16 %v261
      %v310 = vunpack.c.l.bf16 %v262
      %v311 = vunpack.c.l.bf16 %v263
      %v312 = vunpack.c.l.bf16 %v264
      %v313 = vunpack.c.l.bf16 %v265
      %v314 = vunpack.c.l.bf16 %v266
      %v315 = vunpack.c.l.bf16 %v267
      %v316 = vunpack.c.l.bf16 %v268
      %v317 = vunpack.c.l.bf16 %v269
      %v318 = vunpack.c.l.bf16 %v270
      %v319 = vunpack.c.l.bf16 %v271
      %v320 = vunpack.c.l.bf16 %v272
      %v321 = vunpack.c.l.bf16 %v273
      %v322 = vunpack.c.l.bf16 %v274
      %v323 = vunpack.c.l.bf16 %v275
      %v324 = vunpack.c.l.bf16 %v276
      %v325 = vunpack.c.l.bf16 %v277
      %v326 = vunpack.c.l.bf16 %v278
      %v327 = vunpack.c.l.bf16 %v279
      %v328 = vunpack.c.l.bf16 %v280
      %v329 = vunpack.c.l.bf16 %v281
      %v330 = vunpack.c.l.bf16 %v282
      %v331 = vunpack.c.l.bf16 %v283
      %v332 = vunpack.c.l.bf16 %v284
      %v333 = vunpack.c.l.bf16 %v285
      %v334 = vunpack.c.l.bf16 %v286
      %v335 = vunpack.c.l.bf16 %v287
      %v336 = vunpack.c.l.bf16 %v288
      %v337 = vunpack.c.l.bf16 %v289
      %v338 = vunpack.c.l.bf16 %v290
      %v339 = vunpack.c.l.bf16 %v291
      %v340 = vunpack.c.l.bf16 %v292
      %v341 = vunpack.c.l.bf16 %v293
      %v342 = vunpack.c.l.bf16 %v294
      %v343 = vunpack.c.l.bf16 %v295
      %v344 = vunpack.c.l.bf16 %v296
      %v345 = vunpack.c.l.bf16 %v297
      %v346 = vunpack.c.l.bf16 %v298
      %v347 = vunpack.c.l.bf16 %v299
      %v348 = vunpack.c.l.bf16 %v300
      %v349 = vunpack.c.l.bf16 %v301
      %v350 = vunpack.c.l.bf16 %v302
      %v351 = vunpack.c.l.bf16 %v303
      %v352 = vunpack.c.l.bf16 %v304
      %v353 = vld [vmem:[%s1] sm:$0x1]
      %v355 = vlaneseq
      %v356 = vshrl.u32 %v355, 7
      %v357 = vsub.s32 0, %v356
      %v358 = vrot.slane %v353, %v357
      %v360 = vmul.f32 %v305, %v358
      %v361 = vmul.f32 %v306, %v358
      %v362 = vmul.f32 %v307, %v358
      %v363 = vmul.f32 %v308, %v358
      %v364 = vmul.f32 %v309, %v358
      %v365 = vmul.f32 %v310, %v358
      %v366 = vmul.f32 %v311, %v358
      %v367 = vmul.f32 %v312, %v358
      %v368 = vmul.f32 %v313, %v358
      %v369 = vmul.f32 %v314, %v358
      %v370 = vmul.f32 %v315, %v358
      %v371 = vmul.f32 %v316, %v358
      %v372 = vmul.f32 %v317, %v358
      %v373 = vmul.f32 %v318, %v358
      %v374 = vmul.f32 %v319, %v358
      %v375 = vmul.f32 %v320, %v358
      %v376 = vmul.f32 %v321, %v358
      %v377 = vmul.f32 %v322, %v358
      %v378 = vmul.f32 %v323, %v358
      %v379 = vmul.f32 %v324, %v358
      %v380 = vmul.f32 %v325, %v358
      %v381 = vmul.f32 %v326, %v358
      %v382 = vmul.f32 %v327, %v358
      %v383 = vmul.f32 %v328, %v358
      %v384 = vmul.f32 %v329, %v358
      %v385 = vmul.f32 %v330, %v358
      %v386 = vmul.f32 %v331, %v358
      %v387 = vmul.f32 %v332, %v358
      %v388 = vmul.f32 %v333, %v358
      %v389 = vmul.f32 %v334, %v358
      %v390 = vmul.f32 %v335, %v358
      %v391 = vmul.f32 %v336, %v358
      %v392 = vmul.f32 %v337, %v358
      %v393 = vmul.f32 %v338, %v358
      %v394 = vmul.f32 %v339, %v358
      %v395 = vmul.f32 %v340, %v358
      %v396 = vmul.f32 %v341, %v358
      %v397 = vmul.f32 %v342, %v358
      %v398 = vmul.f32 %v343, %v358
      %v399 = vmul.f32 %v344, %v358
      %v400 = vmul.f32 %v345, %v358
      %v401 = vmul.f32 %v346, %v358
      %v402 = vmul.f32 %v347, %v358
      %v403 = vmul.f32 %v348, %v358
      %v404 = vmul.f32 %v349, %v358
      %v405 = vmul.f32 %v350, %v358
      %v406 = vmul.f32 %v351, %v358
      %v407 = vmul.f32 %v352, %v358
      %v408 = vld [vmem:[%s2] sm:$0x1]
      %v410 = vlaneseq
      %v411 = vshrl.u32 %v410, 7
      %v412 = vsub.s32 0, %v411
      %v413 = vrot.slane %v408, %v412
      %v415 = vadd.f32 %v360, %v413
      %v416 = vadd.f32 %v361, %v413
      %v417 = vadd.f32 %v362, %v413
      %v418 = vadd.f32 %v363, %v413
      %v419 = vadd.f32 %v364, %v413
      %v420 = vadd.f32 %v365, %v413
      %v421 = vadd.f32 %v366, %v413
      %v422 = vadd.f32 %v367, %v413
      %v423 = vadd.f32 %v368, %v413
      %v424 = vadd.f32 %v369, %v413
      %v425 = vadd.f32 %v370, %v413
      %v426 = vadd.f32 %v371, %v413
      %v427 = vadd.f32 %v372, %v413
      %v428 = vadd.f32 %v373, %v413
      %v429 = vadd.f32 %v374, %v413
      %v430 = vadd.f32 %v375, %v413
      %v431 = vadd.f32 %v376, %v413
      %v432 = vadd.f32 %v377, %v413
      %v433 = vadd.f32 %v378, %v413
      %v434 = vadd.f32 %v379, %v413
      %v435 = vadd.f32 %v380, %v413
      %v436 = vadd.f32 %v381, %v413
      %v437 = vadd.f32 %v382, %v413
      %v438 = vadd.f32 %v383, %v413
      %v439 = vadd.f32 %v384, %v413
      %v440 = vadd.f32 %v385, %v413
      %v441 = vadd.f32 %v386, %v413
      %v442 = vadd.f32 %v387, %v413
      %v443 = vadd.f32 %v388, %v413
      %v444 = vadd.f32 %v389, %v413
      %v445 = vadd.f32 %v390, %v413
      %v446 = vadd.f32 %v391, %v413
      %v447 = vadd.f32 %v392, %v413
      %v448 = vadd.f32 %v393, %v413
      %v449 = vadd.f32 %v394, %v413
      %v450 = vadd.f32 %v395, %v413
      %v451 = vadd.f32 %v396, %v413
      %v452 = vadd.f32 %v397, %v413
      %v453 = vadd.f32 %v398, %v413
      %v454 = vadd.f32 %v399, %v413
      %v455 = vadd.f32 %v400, %v413
      %v456 = vadd.f32 %v401, %v413
      %v457 = vadd.f32 %v402, %v413
      %v458 = vadd.f32 %v403, %v413
      %v459 = vadd.f32 %v404, %v413
      %v460 = vadd.f32 %v405, %v413
      %v461 = vadd.f32 %v406, %v413
      %v462 = vadd.f32 %v407, %v413
      %v463 = vmax.f32 %v415, 0.0
      %v464 = vmax.f32 %v416, 0.0
      %v465 = vmax.f32 %v417, 0.0
      %v466 = vmax.f32 %v418, 0.0
      %v467 = vmax.f32 %v419, 0.0
      %v468 = vmax.f32 %v420, 0.0
      %v469 = vmax.f32 %v421, 0.0
      %v470 = vmax.f32 %v422, 0.0
      %v471 = vmax.f32 %v423, 0.0
      %v472 = vmax.f32 %v424, 0.0
      %v473 = vmax.f32 %v425, 0.0
      %v474 = vmax.f32 %v426, 0.0
      %v475 = vmax.f32 %v427, 0.0
      %v476 = vmax.f32 %v428, 0.0
      %v477 = vmax.f32 %v429, 0.0
      %v478 = vmax.f32 %v430, 0.0
      %v479 = vmax.f32 %v431, 0.0
      %v480 = vmax.f32 %v432, 0.0
      %v481 = vmax.f32 %v433, 0.0
      %v482 = vmax.f32 %v434, 0.0
      %v483 = vmax.f32 %v435, 0.0
      %v484 = vmax.f32 %v436, 0.0
      %v485 = vmax.f32 %v437, 0.0
      %v486 = vmax.f32 %v438, 0.0
      %v487 = vmax.f32 %v439, 0.0
      %v488 = vmax.f32 %v440, 0.0
      %v489 = vmax.f32 %v441, 0.0
      %v490 = vmax.f32 %v442, 0.0
      %v491 = vmax.f32 %v443, 0.0
      %v492 = vmax.f32 %v444, 0.0
      %v493 = vmax.f32 %v445, 0.0
      %v494 = vmax.f32 %v446, 0.0
      %v495 = vmax.f32 %v447, 0.0
      %v496 = vmax.f32 %v448, 0.0
      %v497 = vmax.f32 %v449, 0.0
      %v498 = vmax.f32 %v450, 0.0
      %v499 = vmax.f32 %v451, 0.0
      %v500 = vmax.f32 %v452, 0.0
      %v501 = vmax.f32 %v453, 0.0
      %v502 = vmax.f32 %v454, 0.0
      %v503 = vmax.f32 %v455, 0.0
      %v504 = vmax.f32 %v456, 0.0
      %v505 = vmax.f32 %v457, 0.0
      %v506 = vmax.f32 %v458, 0.0
      %v507 = vmax.f32 %v459, 0.0
      %v508 = vmax.f32 %v460, 0.0
      %v509 = vmax.f32 %v461, 0.0
      %v510 = vmax.f32 %v462, 0.0
      %v511 = vsel %vm254, %v463, 0.0
      %v512 = vsel %vm255, %v464, 0.0
      %v513 = vsel %vm256, %v465, 0.0
      %v514 = vsel %vm254, %v466, 0.0
      %v515 = vsel %vm255, %v467, 0.0
      %v516 = vsel %vm256, %v468, 0.0
      %v517 = vsel %vm254, %v469, 0.0
      %v518 = vsel %vm255, %v470, 0.0
      %v519 = vsel %vm256, %v471, 0.0
      %v520 = vsel %vm254, %v472, 0.0
      %v521 = vsel %vm255, %v473, 0.0
      %v522 = vsel %vm256, %v474, 0.0
      %v523 = vsel %vm254, %v475, 0.0
      %v524 = vsel %vm255, %v476, 0.0
      %v525 = vsel %vm256, %v477, 0.0
      %v526 = vsel %vm254, %v478, 0.0
      %v527 = vsel %vm255, %v479, 0.0
      %v528 = vsel %vm256, %v480, 0.0
      %v529 = vsel %vm254, %v481, 0.0
      %v530 = vsel %vm255, %v482, 0.0
      %v531 = vsel %vm256, %v483, 0.0
      %v532 = vsel %vm254, %v484, 0.0
      %v533 = vsel %vm255, %v485, 0.0
      %v534 = vsel %vm256, %v486, 0.0
      %v535 = vsel %vm254, %v487, 0.0
      %v536 = vsel %vm255, %v488, 0.0
      %v537 = vsel %vm256, %v489, 0.0
      %v538 = vsel %vm254, %v490, 0.0
      %v539 = vsel %vm255, %v491, 0.0
      %v540 = vsel %vm256, %v492, 0.0
      %v541 = vsel %vm254, %v493, 0.0
      %v542 = vsel %vm255, %v494, 0.0
      %v543 = vsel %vm256, %v495, 0.0
      %v544 = vsel %vm254, %v496, 0.0
      %v545 = vsel %vm255, %v497, 0.0
      %v546 = vsel %vm256, %v498, 0.0
      %v547 = vsel %vm254, %v499, 0.0
      %v548 = vsel %vm255, %v500, 0.0
      %v549 = vsel %vm256, %v501, 0.0
      %v550 = vsel %vm254, %v502, 0.0
      %v551 = vsel %vm255, %v503, 0.0
      %v552 = vsel %vm256, %v504, 0.0
      %v553 = vsel %vm254, %v505, 0.0
      %v554 = vsel %vm255, %v506, 0.0
      %v555 = vsel %vm256, %v507, 0.0
      %v556 = vsel %vm254, %v508, 0.0
      %v557 = vsel %vm255, %v509, 0.0
      %v558 = vsel %vm256, %v510, 0.0
      %v559 = vpack.c.bf16 %v512, %v511
      %v560 = vpack.c.bf16 %v513, %v513
      %v561 = vpack.c.bf16 %v515, %v514
      %v562 = vpack.c.bf16 %v516, %v516
      %v563 = vpack.c.bf16 %v518, %v517
      %v564 = vpack.c.bf16 %v519, %v519
      %v565 = vpack.c.bf16 %v521, %v520
      %v566 = vpack.c.bf16 %v522, %v522
      %v567 = vpack.c.bf16 %v524, %v523
      %v568 = vpack.c.bf16 %v525, %v525
      %v569 = vpack.c.bf16 %v527, %v526
      %v570 = vpack.c.bf16 %v528, %v528
      %v571 = vpack.c.bf16 %v530, %v529
      %v572 = vpack.c.bf16 %v531, %v531
      %v573 = vpack.c.bf16 %v533, %v532
      %v574 = vpack.c.bf16 %v534, %v534
      %v575 = vpack.c.bf16 %v536, %v535
      %v576 = vpack.c.bf16 %v537, %v537
      %v577 = vpack.c.bf16 %v539, %v538
      %v578 = vpack.c.bf16 %v540, %v540
      %v579 = vpack.c.bf16 %v542, %v541
      %v580 = vpack.c.bf16 %v543, %v543
      %v581 = vpack.c.bf16 %v545, %v544
      %v582 = vpack.c.bf16 %v546, %v546
      %v583 = vpack.c.bf16 %v548, %v547
      %v584 = vpack.c.bf16 %v549, %v549
      %v585 = vpack.c.bf16 %v551, %v550
      %v586 = vpack.c.bf16 %v552, %v552
      %v587 = vpack.c.bf16 %v554, %v553
      %v588 = vpack.c.bf16 %v555, %v555
      %v589 = vpack.c.bf16 %v557, %v556
      %v590 = vpack.c.bf16 %v558, %v558
      %v623 = vunpack.c.l.b16 %v559
      %v624 = vunpack.c.h.b16 %v559
      %v625 = vunpack.c.l.b16 %v560
      %v626 = vunpack.c.l.b16 %v561
      %v627 = vunpack.c.h.b16 %v561
      %v628 = vunpack.c.l.b16 %v562
      %v629 = vunpack.c.l.b16 %v563
      %v630 = vunpack.c.h.b16 %v563
      %v631 = vunpack.c.l.b16 %v564
      %v632 = vunpack.c.l.b16 %v565
      %v633 = vunpack.c.h.b16 %v565
      %v634 = vunpack.c.l.b16 %v566
      %v635 = vunpack.c.l.b16 %v567
      %v636 = vunpack.c.h.b16 %v567
      %v637 = vunpack.c.l.b16 %v568
      %v638 = vunpack.c.l.b16 %v569
      %v639 = vunpack.c.h.b16 %v569
      %v640 = vunpack.c.l.b16 %v570
      %v641 = vunpack.c.l.b16 %v571
      %v642 = vunpack.c.h.b16 %v571
      %v643 = vunpack.c.l.b16 %v572
      %v644 = vunpack.c.l.b16 %v573
      %v645 = vunpack.c.h.b16 %v573
      %v646 = vunpack.c.l.b16 %v574
      %v647 = vunpack.c.l.b16 %v575
      %v648 = vunpack.c.h.b16 %v575
      %v649 = vunpack.c.l.b16 %v576
      %v650 = vunpack.c.l.b16 %v577
      %v651 = vunpack.c.h.b16 %v577
      %v652 = vunpack.c.l.b16 %v578
      %v653 = vunpack.c.l.b16 %v579
      %v654 = vunpack.c.h.b16 %v579
      %v655 = vunpack.c.l.b16 %v580
      %v656 = vunpack.c.l.b16 %v581
      %v657 = vunpack.c.h.b16 %v581
      %v658 = vunpack.c.l.b16 %v582
      %v659 = vunpack.c.l.b16 %v583
      %v660 = vunpack.c.h.b16 %v583
      %v661 = vunpack.c.l.b16 %v584
      %v662 = vunpack.c.l.b16 %v585
      %v663 = vunpack.c.h.b16 %v585
      %v664 = vunpack.c.l.b16 %v586
      %v665 = vunpack.c.l.b16 %v587
      %v666 = vunpack.c.h.b16 %v587
      %v667 = vunpack.c.l.b16 %v588
      %v668 = vunpack.c.l.b16 %v589
      %v669 = vunpack.c.h.b16 %v589
      %v670 = vunpack.c.l.b16 %v590
      %v671 = vpack.c.b16 %v623, %v623
      %v672 = vpack.c.b16 %v624, %v624
      %v673 = vpack.c.b16 %v625, %v625
      %v674 = vpack.c.b16 %v626, %v626
      %v675 = vpack.c.b16 %v627, %v627
      %v676 = vpack.c.b16 %v628, %v628
      %v677 = vpack.c.b16 %v629, %v629
      %v678 = vpack.c.b16 %v630, %v630
      %v679 = vpack.c.b16 %v631, %v631
      %v680 = vpack.c.b16 %v632, %v632
      %v681 = vpack.c.b16 %v633, %v633
      %v682 = vpack.c.b16 %v634, %v634
      %v683 = vpack.c.b16 %v635, %v635
      %v684 = vpack.c.b16 %v636, %v636
      %v685 = vpack.c.b16 %v637, %v637
      %v686 = vpack.c.b16 %v638, %v638
      %v687 = vpack.c.b16 %v639, %v639
      %v688 = vpack.c.b16 %v640, %v640
      %v689 = vpack.c.b16 %v641, %v641
      %v690 = vpack.c.b16 %v642, %v642
      %v691 = vpack.c.b16 %v643, %v643
      %v692 = vpack.c.b16 %v644, %v644
      %v693 = vpack.c.b16 %v645, %v645
      %v694 = vpack.c.b16 %v646, %v646
      %v695 = vpack.c.b16 %v647, %v647
      %v696 = vpack.c.b16 %v648, %v648
      %v697 = vpack.c.b16 %v649, %v649
      %v698 = vpack.c.b16 %v650, %v650
      %v699 = vpack.c.b16 %v651, %v651
      %v700 = vpack.c.b16 %v652, %v652
      %v701 = vpack.c.b16 %v653, %v653
      %v702 = vpack.c.b16 %v654, %v654
      %v703 = vpack.c.b16 %v655, %v655
      %v704 = vpack.c.b16 %v656, %v656
      %v705 = vpack.c.b16 %v657, %v657
      %v706 = vpack.c.b16 %v658, %v658
      %v707 = vpack.c.b16 %v659, %v659
      %v708 = vpack.c.b16 %v660, %v660
      %v709 = vpack.c.b16 %v661, %v661
      %v710 = vpack.c.b16 %v662, %v662
      %v711 = vpack.c.b16 %v663, %v663
      %v712 = vpack.c.b16 %v664, %v664
      %v713 = vpack.c.b16 %v665, %v665
      %v714 = vpack.c.b16 %v666, %v666
      %v715 = vpack.c.b16 %v667, %v667
      %v716 = vpack.c.b16 %v668, %v668
      %v717 = vpack.c.b16 %v669, %v669
      %v718 = vpack.c.b16 %v670, %v670
      %s767 = scalar_lea.vmem [#allocation2], 12
      %768 = vst [vmem:[%s767] sm:$0xf] %v671
      %769 = vst [vmem:[%s767 + $0x4] sm:$0xf] %v672
      %770 = vst [vmem:[%s767 + $0x8] sm:$0x1] %v673
      %771 = vst [vmem:[%s767 + $0xc] sm:$0xf] %v674
      %772 = vst [vmem:[%s767 + $0x10] sm:$0xf] %v675
      %773 = vst [vmem:[%s767 + $0x14] sm:$0x1] %v676
      %774 = vst [vmem:[%s767 + $0x18] sm:$0xf] %v677
      %775 = vst [vmem:[%s767 + $0x1c] sm:$0xf] %v678
      %776 = vst [vmem:[%s767 + $0x20] sm:$0x1] %v679
      %777 = vst [vmem:[%s767 + $0x24] sm:$0xf] %v680
      %778 = vst [vmem:[%s767 + $0x28] sm:$0xf] %v681
      %779 = vst [vmem:[%s767 + $0x2c] sm:$0x1] %v682
      %780 = vst [vmem:[%s767 + $0x30] sm:$0xf] %v683
      %781 = vst [vmem:[%s767 + $0x34] sm:$0xf] %v684
      %782 = vst [vmem:[%s767 + $0x38] sm:$0x1] %v685
      %783 = vst [vmem:[%s767 + $0x3c] sm:$0xf] %v686
      %784 = vst [vmem:[%s767 + $0x40] sm:$0xf] %v687
      %785 = vst [vmem:[%s767 + $0x44] sm:$0x1] %v688
      %786 = vst [vmem:[%s767 + $0x48] sm:$0xf] %v689
      %787 = vst [vmem:[%s767 + $0x4c] sm:$0xf] %v690
      %788 = vst [vmem:[%s767 + $0x50] sm:$0x1] %v691
      %789 = vst [vmem:[%s767 + $0x54] sm:$0xf] %v692
      %790 = vst [vmem:[%s767 + $0x58] sm:$0xf] %v693
      %791 = vst [vmem:[%s767 + $0x5c] sm:$0x1] %v694
      %792 = vst [vmem:[%s767 + $0x60] sm:$0xf] %v695
      %793 = vst [vmem:[%s767 + $0x64] sm:$0xf] %v696
      %794 = vst [vmem:[%s767 + $0x68] sm:$0x1] %v697
      %795 = vst [vmem:[%s767 + $0x6c] sm:$0xf] %v698
      %796 = vst [vmem:[%s767 + $0x70] sm:$0xf] %v699
      %797 = vst [vmem:[%s767 + $0x74] sm:$0x1] %v700
      %798 = vst [vmem:[%s767 + $0x78] sm:$0xf] %v701
      %799 = vst [vmem:[%s767 + $0x7c] sm:$0xf] %v702
      %800 = vst [vmem:[%s767 + $0x80] sm:$0x1] %v703
      %801 = vst [vmem:[%s767 + $0x84] sm:$0xf] %v704
      %802 = vst [vmem:[%s767 + $0x88] sm:$0xf] %v705
      %803 = vst [vmem:[%s767 + $0x8c] sm:$0x1] %v706
      %804 = vst [vmem:[%s767 + $0x90] sm:$0xf] %v707
      %805 = vst [vmem:[%s767 + $0x94] sm:$0xf] %v708
      %806 = vst [vmem:[%s767 + $0x98] sm:$0x1] %v709
      %807 = vst [vmem:[%s767 + $0x9c] sm:$0xf] %v710
      %808 = vst [vmem:[%s767 + $0xa0] sm:$0xf] %v711
      %809 = vst [vmem:[%s767 + $0xa4] sm:$0x1] %v712
      %810 = vst [vmem:[%s767 + $0xa8] sm:$0xf] %v713
      %811 = vst [vmem:[%s767 + $0xac] sm:$0xf] %v714
      %812 = vst [vmem:[%s767 + $0xb0] sm:$0x1] %v715
      %813 = vst [vmem:[%s767 + $0xb4] sm:$0xf] %v716
      %814 = vst [vmem:[%s767 + $0xb8] sm:$0xf] %v717
      %815 = vst [vmem:[%s767 + $0xbc] sm:$0x1] %v718
      %v816 = vld [vmem:[#allocation2] sm:$0xf]
      %v817 = vld [vmem:[#allocation2 + $0x4] sm:$0xf]
      %v818 = vld [vmem:[#allocation2 + $0xc] sm:$0xf]
      %v819 = vld [vmem:[#allocation2 + $0x10] sm:$0xf]
      %v820 = vld [vmem:[#allocation2 + $0x18] sm:$0xf]
      %v821 = vld [vmem:[#allocation2 + $0x1c] sm:$0xf]
      %v822 = vld [vmem:[#allocation2 + $0x24] sm:$0xf]
      %v823 = vld [vmem:[#allocation2 + $0x28] sm:$0xf]
      %v824 = vld [vmem:[#allocation2 + $0x30] sm:$0xf]
      %v825 = vld [vmem:[#allocation2 + $0x34] sm:$0xf]
      %v826 = vld [vmem:[#allocation2 + $0x3c] sm:$0xf]
      %v827 = vld [vmem:[#allocation2 + $0x40] sm:$0xf]
      %v828 = vld [vmem:[#allocation2 + $0x48] sm:$0xf]
      %v829 = vld [vmem:[#allocation2 + $0x4c] sm:$0xf]
      %v830 = vld [vmem:[#allocation2 + $0x54] sm:$0xf]
      %v831 = vld [vmem:[#allocation2 + $0x58] sm:$0xf]
      %v832 = vld [vmem:[#allocation2 + $0x60] sm:$0xf]
      %v833 = vld [vmem:[#allocation2 + $0x64] sm:$0xf]
      %v834 = vld [vmem:[#allocation2 + $0x6c] sm:$0xf]
      %v835 = vld [vmem:[#allocation2 + $0x70] sm:$0xf]
      %v836 = vld [vmem:[#allocation2 + $0x78] sm:$0xf]
      %v837 = vld [vmem:[#allocation2 + $0x7c] sm:$0xf]
      %v838 = vld [vmem:[#allocation2 + $0x84] sm:$0xf]
      %v839 = vld [vmem:[#allocation2 + $0x88] sm:$0xf]
      %v840 = vld [vmem:[#allocation2 + $0x90] sm:$0xf]
      %v841 = vld [vmem:[#allocation2 + $0x94] sm:$0xf]
      %v842 = vld [vmem:[#allocation2 + $0x9c] sm:$0xf]
      %v843 = vld [vmem:[#allocation2 + $0xa0] sm:$0xf]
      %v844 = vld [vmem:[#allocation2 + $0xa8] sm:$0xf]
      %v845 = vld [vmem:[#allocation2 + $0xac] sm:$0xf]
      %v846 = vld [vmem:[#allocation2 + $0xb4] sm:$0xf]
      %v847 = vld [vmem:[#allocation2 + $0xb8] sm:$0xf]
      %v848 = vld [vmem:[#allocation2 + $0x8] sm:$0x1]
      %v849 = vld [vmem:[#allocation2 + $0x14] sm:$0x1]
      %v850 = vld [vmem:[#allocation2 + $0x20] sm:$0x1]
      %v851 = vld [vmem:[#allocation2 + $0x2c] sm:$0x1]
      %v852 = vld [vmem:[#allocation2 + $0x38] sm:$0x1]
      %v853 = vld [vmem:[#allocation2 + $0x44] sm:$0x1]
      %v854 = vld [vmem:[#allocation2 + $0x50] sm:$0x1]
      %v855 = vld [vmem:[#allocation2 + $0x5c] sm:$0x1]
      %v856 = vld [vmem:[#allocation2 + $0x68] sm:$0x1]
      %v857 = vld [vmem:[#allocation2 + $0x74] sm:$0x1]
      %v858 = vld [vmem:[#allocation2 + $0x80] sm:$0x1]
      %v859 = vld [vmem:[#allocation2 + $0x8c] sm:$0x1]
      %v860 = vld [vmem:[#allocation2 + $0x98] sm:$0x1]
      %v861 = vld [vmem:[#allocation2 + $0xa4] sm:$0x1]
      %v862 = vld [vmem:[#allocation2 + $0xb0] sm:$0x1]
      %v863 = vld [vmem:[#allocation2 + $0xbc] sm:$0x1]
      %v864 = vld [vmem:[#allocation2] sm:$0xe]
      %v865 = vld [vmem:[#allocation2 + $0xc] sm:$0xe]
      %v866 = vld [vmem:[#allocation2 + $0x18] sm:$0xe]
      %v867 = vld [vmem:[#allocation2 + $0x24] sm:$0xe]
      %v868 = vld [vmem:[#allocation2 + $0x30] sm:$0xe]
      %v869 = vld [vmem:[#allocation2 + $0x3c] sm:$0xe]
      %v870 = vld [vmem:[#allocation2 + $0x48] sm:$0xe]
      %v871 = vld [vmem:[#allocation2 + $0x54] sm:$0xe]
      %v872 = vld [vmem:[#allocation2 + $0x60] sm:$0xe]
      %v873 = vld [vmem:[#allocation2 + $0x6c] sm:$0xe]
      %v874 = vld [vmem:[#allocation2 + $0x78] sm:$0xe]
      %v875 = vld [vmem:[#allocation2 + $0x84] sm:$0xe]
      %v876 = vld [vmem:[#allocation2 + $0x90] sm:$0xe]
      %v877 = vld [vmem:[#allocation2 + $0x9c] sm:$0xe]
      %v878 = vld [vmem:[#allocation2 + $0xa8] sm:$0xe]
      %v879 = vld [vmem:[#allocation2 + $0xb4] sm:$0xe]
      %v912 = vunpack.c.l.b16 %v816
      %v913 = vunpack.c.l.b16 %v817
      %v914 = vunpack.c.l.b16 %v818
      %v915 = vunpack.c.l.b16 %v819
      %v916 = vunpack.c.l.b16 %v820
      %v917 = vunpack.c.l.b16 %v821
      %v918 = vunpack.c.l.b16 %v822
      %v919 = vunpack.c.l.b16 %v823
      %v920 = vunpack.c.l.b16 %v824
      %v921 = vunpack.c.l.b16 %v825
      %v922 = vunpack.c.l.b16 %v826
      %v923 = vunpack.c.l.b16 %v827
      %v924 = vunpack.c.l.b16 %v828
      %v925 = vunpack.c.l.b16 %v829
      %v926 = vunpack.c.l.b16 %v830
      %v927 = vunpack.c.l.b16 %v831
      %v928 = vunpack.c.l.b16 %v832
      %v929 = vunpack.c.l.b16 %v833
      %v930 = vunpack.c.l.b16 %v834
      %v931 = vunpack.c.l.b16 %v835
      %v932 = vunpack.c.l.b16 %v836
      %v933 = vunpack.c.l.b16 %v837
      %v934 = vunpack.c.l.b16 %v838
      %v935 = vunpack.c.l.b16 %v839
      %v936 = vunpack.c.l.b16 %v840
      %v937 = vunpack.c.l.b16 %v841
      %v938 = vunpack.c.l.b16 %v842
      %v939 = vunpack.c.l.b16 %v843
      %v940 = vunpack.c.l.b16 %v844
      %v941 = vunpack.c.l.b16 %v845
      %v942 = vunpack.c.l.b16 %v846
      %v943 = vunpack.c.l.b16 %v847
      %v944 = vpack.c.b16 %v913, %v912
      %v945 = vpack.c.b16 %v915, %v914
      %v946 = vpack.c.b16 %v917, %v916
      %v947 = vpack.c.b16 %v919, %v918
      %v948 = vpack.c.b16 %v921, %v920
      %v949 = vpack.c.b16 %v923, %v922
      %v950 = vpack.c.b16 %v925, %v924
      %v951 = vpack.c.b16 %v927, %v926
      %v952 = vpack.c.b16 %v929, %v928
      %v953 = vpack.c.b16 %v931, %v930
      %v954 = vpack.c.b16 %v933, %v932
      %v955 = vpack.c.b16 %v935, %v934
      %v956 = vpack.c.b16 %v937, %v936
      %v957 = vpack.c.b16 %v939, %v938
      %v958 = vpack.c.b16 %v941, %v940
      %v959 = vpack.c.b16 %v943, %v942
      %v992 = vunpack.c.l.b16 %v848
      %v993 = vunpack.c.l.b16 %v849
      %v994 = vunpack.c.l.b16 %v850
      %v995 = vunpack.c.l.b16 %v851
      %v996 = vunpack.c.l.b16 %v852
      %v997 = vunpack.c.l.b16 %v853
      %v998 = vunpack.c.l.b16 %v854
      %v999 = vunpack.c.l.b16 %v855
      %v1000 = vunpack.c.l.b16 %v856
      %v1001 = vunpack.c.l.b16 %v857
      %v1002 = vunpack.c.l.b16 %v858
      %v1003 = vunpack.c.l.b16 %v859
      %v1004 = vunpack.c.l.b16 %v860
      %v1005 = vunpack.c.l.b16 %v861
      %v1006 = vunpack.c.l.b16 %v862
      %v1007 = vunpack.c.l.b16 %v863
      %v1008 = vpack.c.b16 %v992, %v992
      %v1009 = vpack.c.b16 %v993, %v993
      %v1010 = vpack.c.b16 %v994, %v994
      %v1011 = vpack.c.b16 %v995, %v995
      %v1012 = vpack.c.b16 %v996, %v996
      %v1013 = vpack.c.b16 %v997, %v997
      %v1014 = vpack.c.b16 %v998, %v998
      %v1015 = vpack.c.b16 %v999, %v999
      %v1016 = vpack.c.b16 %v1000, %v1000
      %v1017 = vpack.c.b16 %v1001, %v1001
      %v1018 = vpack.c.b16 %v1002, %v1002
      %v1019 = vpack.c.b16 %v1003, %v1003
      %v1020 = vpack.c.b16 %v1004, %v1004
      %v1021 = vpack.c.b16 %v1005, %v1005
      %v1022 = vpack.c.b16 %v1006, %v1006
      %v1023 = vpack.c.b16 %v1007, %v1007
      %vm1024 = vsmask.f32 7424
      %v1026 = vshrl.u32 %v944, 16
      %v1028 = vshll.u32 %v944, 16
      %v1030 = vrot.slane %v1028, 1
      %v1031 = vor.u32 %v1026, %v1030
      %v1033 = vshll.u32 %v1008, 16
      %v1035 = vrot.slane %v1033, 1
      %v1036 = vsel %vm1024, %v1031, %v1035
      %v1038 = vshrl.u32 %v945, 16
      %v1040 = vshll.u32 %v945, 16
      %v1042 = vrot.slane %v1040, 1
      %v1043 = vor.u32 %v1038, %v1042
      %v1045 = vshll.u32 %v1009, 16
      %v1047 = vrot.slane %v1045, 1
      %v1048 = vsel %vm1024, %v1043, %v1047
      %v1050 = vshrl.u32 %v946, 16
      %v1052 = vshll.u32 %v946, 16
      %v1054 = vrot.slane %v1052, 1
      %v1055 = vor.u32 %v1050, %v1054
      %v1057 = vshll.u32 %v1010, 16
      %v1059 = vrot.slane %v1057, 1
      %v1060 = vsel %vm1024, %v1055, %v1059
      %v1062 = vshrl.u32 %v947, 16
      %v1064 = vshll.u32 %v947, 16
      %v1066 = vrot.slane %v1064, 1
      %v1067 = vor.u32 %v1062, %v1066
      %v1069 = vshll.u32 %v1011, 16
      %v1071 = vrot.slane %v1069, 1
      %v1072 = vsel %vm1024, %v1067, %v1071
      %v1074 = vshrl.u32 %v948, 16
      %v1076 = vshll.u32 %v948, 16
      %v1078 = vrot.slane %v1076, 1
      %v1079 = vor.u32 %v1074, %v1078
      %v1081 = vshll.u32 %v1012, 16
      %v1083 = vrot.slane %v1081, 1
      %v1084 = vsel %vm1024, %v1079, %v1083
      %v1086 = vshrl.u32 %v949, 16
      %v1088 = vshll.u32 %v949, 16
      %v1090 = vrot.slane %v1088, 1
      %v1091 = vor.u32 %v1086, %v1090
      %v1093 = vshll.u32 %v1013, 16
      %v1095 = vrot.slane %v1093, 1
      %v1096 = vsel %vm1024, %v1091, %v1095
      %v1098 = vshrl.u32 %v950, 16
      %v1100 = vshll.u32 %v950, 16
      %v1102 = vrot.slane %v1100, 1
      %v1103 = vor.u32 %v1098, %v1102
      %v1105 = vshll.u32 %v1014, 16
      %v1107 = vrot.slane %v1105, 1
      %v1108 = vsel %vm1024, %v1103, %v1107
      %v1110 = vshrl.u32 %v951, 16
      %v1112 = vshll.u32 %v951, 16
      %v1114 = vrot.slane %v1112, 1
      %v1115 = vor.u32 %v1110, %v1114
      %v1117 = vshll.u32 %v1015, 16
      %v1119 = vrot.slane %v1117, 1
      %v1120 = vsel %vm1024, %v1115, %v1119
      %v1122 = vshrl.u32 %v952, 16
      %v1124 = vshll.u32 %v952, 16
      %v1126 = vrot.slane %v1124, 1
      %v1127 = vor.u32 %v1122, %v1126
      %v1129 = vshll.u32 %v1016, 16
      %v1131 = vrot.slane %v1129, 1
      %v1132 = vsel %vm1024, %v1127, %v1131
      %v1134 = vshrl.u32 %v953, 16
      %v1136 = vshll.u32 %v953, 16
      %v1138 = vrot.slane %v1136, 1
      %v1139 = vor.u32 %v1134, %v1138
      %v1141 = vshll.u32 %v1017, 16
      %v1143 = vrot.slane %v1141, 1
      %v1144 = vsel %vm1024, %v1139, %v1143
      %v1146 = vshrl.u32 %v954, 16
      %v1148 = vshll.u32 %v954, 16
      %v1150 = vrot.slane %v1148, 1
      %v1151 = vor.u32 %v1146, %v1150
      %v1153 = vshll.u32 %v1018, 16
      %v1155 = vrot.slane %v1153, 1
      %v1156 = vsel %vm1024, %v1151, %v1155
      %v1158 = vshrl.u32 %v955, 16
      %v1160 = vshll.u32 %v955, 16
      %v1162 = vrot.slane %v1160, 1
      %v1163 = vor.u32 %v1158, %v1162
      %v1165 = vshll.u32 %v1019, 16
      %v1167 = vrot.slane %v1165, 1
      %v1168 = vsel %vm1024, %v1163, %v1167
      %v1170 = vshrl.u32 %v956, 16
      %v1172 = vshll.u32 %v956, 16
      %v1174 = vrot.slane %v1172, 1
      %v1175 = vor.u32 %v1170, %v1174
      %v1177 = vshll.u32 %v1020, 16
      %v1179 = vrot.slane %v1177, 1
      %v1180 = vsel %vm1024, %v1175, %v1179
      %v1182 = vshrl.u32 %v957, 16
      %v1184 = vshll.u32 %v957, 16
      %v1186 = vrot.slane %v1184, 1
      %v1187 = vor.u32 %v1182, %v1186
      %v1189 = vshll.u32 %v1021, 16
      %v1191 = vrot.slane %v1189, 1
      %v1192 = vsel %vm1024, %v1187, %v1191
      %v1194 = vshrl.u32 %v958, 16
      %v1196 = vshll.u32 %v958, 16
      %v1198 = vrot.slane %v1196, 1
      %v1199 = vor.u32 %v1194, %v1198
      %v1201 = vshll.u32 %v1022, 16
      %v1203 = vrot.slane %v1201, 1
      %v1204 = vsel %vm1024, %v1199, %v1203
      %v1206 = vshrl.u32 %v959, 16
      %v1208 = vshll.u32 %v959, 16
      %v1210 = vrot.slane %v1208, 1
      %v1211 = vor.u32 %v1206, %v1210
      %v1213 = vshll.u32 %v1023, 16
      %v1215 = vrot.slane %v1213, 1
      %v1216 = vsel %vm1024, %v1211, %v1215
      %v1249 = vunpack.c.l.b16 %v864
      %v1250 = vunpack.c.l.b16 %v865
      %v1251 = vunpack.c.l.b16 %v866
      %v1252 = vunpack.c.l.b16 %v867
      %v1253 = vunpack.c.l.b16 %v868
      %v1254 = vunpack.c.l.b16 %v869
      %v1255 = vunpack.c.l.b16 %v870
      %v1256 = vunpack.c.l.b16 %v871
      %v1257 = vunpack.c.l.b16 %v872
      %v1258 = vunpack.c.l.b16 %v873
      %v1259 = vunpack.c.l.b16 %v874
      %v1260 = vunpack.c.l.b16 %v875
      %v1261 = vunpack.c.l.b16 %v876
      %v1262 = vunpack.c.l.b16 %v877
      %v1263 = vunpack.c.l.b16 %v878
      %v1264 = vunpack.c.l.b16 %v879
      %v1265 = vpack.c.b16 %v913, %v1249
      %v1266 = vpack.c.b16 %v915, %v1250
      %v1267 = vpack.c.b16 %v917, %v1251
      %v1268 = vpack.c.b16 %v919, %v1252
      %v1269 = vpack.c.b16 %v921, %v1253
      %v1270 = vpack.c.b16 %v923, %v1254
      %v1271 = vpack.c.b16 %v925, %v1255
      %v1272 = vpack.c.b16 %v927, %v1256
      %v1273 = vpack.c.b16 %v929, %v1257
      %v1274 = vpack.c.b16 %v931, %v1258
      %v1275 = vpack.c.b16 %v933, %v1259
      %v1276 = vpack.c.b16 %v935, %v1260
      %v1277 = vpack.c.b16 %v937, %v1261
      %v1278 = vpack.c.b16 %v939, %v1262
      %v1279 = vpack.c.b16 %v941, %v1263
      %v1280 = vpack.c.b16 %v943, %v1264
      %vm1281 = vcmask 1046528
      %v1282 = vrot.slane %v1265, 1
      %v1283 = vrot.slane %v1008, 1
      %v1284 = vsel %vm1281, %v1282, %v1283
      %v1285 = vrot.slane %v1266, 1
      %v1286 = vrot.slane %v1009, 1
      %v1287 = vsel %vm1281, %v1285, %v1286
      %v1288 = vrot.slane %v1267, 1
      %v1289 = vrot.slane %v1010, 1
      %v1290 = vsel %vm1281, %v1288, %v1289
      %v1291 = vrot.slane %v1268, 1
      %v1292 = vrot.slane %v1011, 1
      %v1293 = vsel %vm1281, %v1291, %v1292
      %v1294 = vrot.slane %v1269, 1
      %v1295 = vrot.slane %v1012, 1
      %v1296 = vsel %vm1281, %v1294, %v1295
      %v1297 = vrot.slane %v1270, 1
      %v1298 = vrot.slane %v1013, 1
      %v1299 = vsel %vm1281, %v1297, %v1298
      %v1300 = vrot.slane %v1271, 1
      %v1301 = vrot.slane %v1014, 1
      %v1302 = vsel %vm1281, %v1300, %v1301
      %v1303 = vrot.slane %v1272, 1
      %v1304 = vrot.slane %v1015, 1
      %v1305 = vsel %vm1281, %v1303, %v1304
      %v1306 = vrot.slane %v1273, 1
      %v1307 = vrot.slane %v1016, 1
      %v1308 = vsel %vm1281, %v1306, %v1307
      %v1309 = vrot.slane %v1274, 1
      %v1310 = vrot.slane %v1017, 1
      %v1311 = vsel %vm1281, %v1309, %v1310
      %v1312 = vrot.slane %v1275, 1
      %v1313 = vrot.slane %v1018, 1
      %v1314 = vsel %vm1281, %v1312, %v1313
      %v1315 = vrot.slane %v1276, 1
      %v1316 = vrot.slane %v1019, 1
      %v1317 = vsel %vm1281, %v1315, %v1316
      %v1318 = vrot.slane %v1277, 1
      %v1319 = vrot.slane %v1020, 1
      %v1320 = vsel %vm1281, %v1318, %v1319
      %v1321 = vrot.slane %v1278, 1
      %v1322 = vrot.slane %v1021, 1
      %v1323 = vsel %vm1281, %v1321, %v1322
      %v1324 = vrot.slane %v1279, 1
      %v1325 = vrot.slane %v1022, 1
      %v1326 = vsel %vm1281, %v1324, %v1325
      %v1327 = vrot.slane %v1280, 1
      %v1328 = vrot.slane %v1023, 1
      %v1329 = vsel %vm1281, %v1327, %v1328
      %v1346 = vld [vmem:[%s3] sm:$0xf]
      %v1347 = vld [vmem:[%s3 + $0x4] sm:$0xf]
      %v1348 = vld [vmem:[%s3 + $0x8] sm:$0xf]
      %v1349 = vld [vmem:[%s3 + $0xc] sm:$0xf]
      %v1350 = vld [vmem:[%s3 + $0x10] sm:$0xf]
      %v1351 = vld [vmem:[%s3 + $0x14] sm:$0xf]
      %v1352 = vld [vmem:[%s3 + $0x18] sm:$0xf]
      %v1353 = vld [vmem:[%s3 + $0x1c] sm:$0xf]
      %v1354 = vld [vmem:[%s3 + $0x20] sm:$0xf]
      %v1355 = vld [vmem:[%s3 + $0x24] sm:$0xf]
      %v1356 = vld [vmem:[%s3 + $0x28] sm:$0xf]
      %v1357 = vld [vmem:[%s3 + $0x2c] sm:$0xf]
      %v1358 = vld [vmem:[%s3 + $0x30] sm:$0xf]
      %v1359 = vld [vmem:[%s3 + $0x34] sm:$0xf]
      %v1360 = vld [vmem:[%s3 + $0x38] sm:$0xf]
      %v1361 = vld [vmem:[%s3 + $0x3c] sm:$0xf]
      %v1362 = vld [vmem:[%s3 + $0x40] sm:$0xf]
      %v1363 = vld [vmem:[%s3 + $0x44] sm:$0xf]
      %v1364 = vld [vmem:[%s3 + $0x48] sm:$0xf]
      %v1365 = vld [vmem:[%s3 + $0x4c] sm:$0xf]
      %v1366 = vld [vmem:[%s3 + $0x50] sm:$0xf]
      %v1367 = vld [vmem:[%s3 + $0x54] sm:$0xf]
      %v1368 = vld [vmem:[%s3 + $0x58] sm:$0xf]
      %v1369 = vld [vmem:[%s3 + $0x5c] sm:$0xf]
      %v1370 = vld [vmem:[%s3 + $0x60] sm:$0xf]
      %v1371 = vld [vmem:[%s3 + $0x64] sm:$0xf]
      %v1372 = vld [vmem:[%s3 + $0x68] sm:$0xf]
      %v1373 = vld [vmem:[%s3 + $0x6c] sm:$0xf]
      %v1374 = vld [vmem:[%s3 + $0x70] sm:$0xf]
      %v1375 = vld [vmem:[%s3 + $0x74] sm:$0xf]
      %v1376 = vld [vmem:[%s3 + $0x78] sm:$0xf]
      %v1377 = vld [vmem:[%s3 + $0x7c] sm:$0xf]
      %v1378 = vld [vmem:[%s3 + $0x80] sm:$0xf]
      %v1379 = vld [vmem:[%s3 + $0x84] sm:$0xf]
      %v1380 = vld [vmem:[%s3 + $0x88] sm:$0xf]
      %v1381 = vld [vmem:[%s3 + $0x8c] sm:$0xf]
      %v1382 = vld [vmem:[%s3 + $0x90] sm:$0xf]
      %v1383 = vld [vmem:[%s3 + $0x94] sm:$0xf]
      %v1384 = vld [vmem:[%s3 + $0x98] sm:$0xf]
      %v1385 = vld [vmem:[%s3 + $0x9c] sm:$0xf]
      %v1386 = vld [vmem:[%s3 + $0xa0] sm:$0xf]
      %v1387 = vld [vmem:[%s3 + $0xa4] sm:$0xf]
      %v1388 = vld [vmem:[%s3 + $0xa8] sm:$0xf]
      %v1389 = vld [vmem:[%s3 + $0xac] sm:$0xf]
      %v1390 = vld [vmem:[%s3 + $0xb0] sm:$0xf]
      %v1391 = vld [vmem:[%s3 + $0xb4] sm:$0xf]
      %v1392 = vld [vmem:[%s3 + $0xb8] sm:$0xf]
      %v1393 = vld [vmem:[%s3 + $0xbc] sm:$0xf]
      %v1394 = vld [vmem:[%s767] sm:$0xf]
      %v1395 = vld [vmem:[%s767 + $0x4] sm:$0xf]
      %v1396 = vld [vmem:[%s767 + $0xc] sm:$0xf]
      %v1397 = vld [vmem:[%s767 + $0x10] sm:$0xf]
      %v1398 = vld [vmem:[%s767 + $0x18] sm:$0xf]
      %v1399 = vld [vmem:[%s767 + $0x1c] sm:$0xf]
      %v1400 = vld [vmem:[%s767 + $0x24] sm:$0xf]
      %v1401 = vld [vmem:[%s767 + $0x28] sm:$0xf]
      %v1402 = vld [vmem:[%s767 + $0x30] sm:$0xf]
      %v1403 = vld [vmem:[%s767 + $0x34] sm:$0xf]
      %v1404 = vld [vmem:[%s767 + $0x3c] sm:$0xf]
      %v1405 = vld [vmem:[%s767 + $0x40] sm:$0xf]
      %v1406 = vld [vmem:[%s767 + $0x48] sm:$0xf]
      %v1407 = vld [vmem:[%s767 + $0x4c] sm:$0xf]
      %v1408 = vld [vmem:[%s767 + $0x54] sm:$0xf]
      %v1409 = vld [vmem:[%s767 + $0x58] sm:$0xf]
      %v1410 = vld [vmem:[%s767 + $0x60] sm:$0xf]
      %v1411 = vld [vmem:[%s767 + $0x64] sm:$0xf]
      %v1412 = vld [vmem:[%s767 + $0x6c] sm:$0xf]
      %v1413 = vld [vmem:[%s767 + $0x70] sm:$0xf]
      %v1414 = vld [vmem:[%s767 + $0x78] sm:$0xf]
      %v1415 = vld [vmem:[%s767 + $0x7c] sm:$0xf]
      %v1416 = vld [vmem:[%s767 + $0x84] sm:$0xf]
      %v1417 = vld [vmem:[%s767 + $0x88] sm:$0xf]
      %v1418 = vld [vmem:[%s767 + $0x90] sm:$0xf]
      %v1419 = vld [vmem:[%s767 + $0x94] sm:$0xf]
      %v1420 = vld [vmem:[%s767 + $0x9c] sm:$0xf]
      %v1421 = vld [vmem:[%s767 + $0xa0] sm:$0xf]
      %v1422 = vld [vmem:[%s767 + $0xa8] sm:$0xf]
      %v1423 = vld [vmem:[%s767 + $0xac] sm:$0xf]
      %v1424 = vld [vmem:[%s767 + $0xb4] sm:$0xf]
      %v1425 = vld [vmem:[%s767 + $0xb8] sm:$0xf]
      %v1426 = vld [vmem:[%s767 + $0x8] sm:$0x1]
      %v1427 = vld [vmem:[%s767 + $0x14] sm:$0x1]
      %v1428 = vld [vmem:[%s767 + $0x20] sm:$0x1]
      %v1429 = vld [vmem:[%s767 + $0x2c] sm:$0x1]
      %v1430 = vld [vmem:[%s767 + $0x38] sm:$0x1]
      %v1431 = vld [vmem:[%s767 + $0x44] sm:$0x1]
      %v1432 = vld [vmem:[%s767 + $0x50] sm:$0x1]
      %v1433 = vld [vmem:[%s767 + $0x5c] sm:$0x1]
      %v1434 = vld [vmem:[%s767 + $0x68] sm:$0x1]
      %v1435 = vld [vmem:[%s767 + $0x74] sm:$0x1]
      %v1436 = vld [vmem:[%s767 + $0x80] sm:$0x1]
      %v1437 = vld [vmem:[%s767 + $0x8c] sm:$0x1]
      %v1438 = vld [vmem:[%s767 + $0x98] sm:$0x1]
      %v1439 = vld [vmem:[%s767 + $0xa4] sm:$0x1]
      %v1440 = vld [vmem:[%s767 + $0xb0] sm:$0x1]
      %v1441 = vld [vmem:[%s767 + $0xbc] sm:$0x1]
      %v1442 = vld [vmem:[%s767] sm:$0xe]
      %v1443 = vld [vmem:[%s767 + $0xc] sm:$0xe]
      %v1444 = vld [vmem:[%s767 + $0x18] sm:$0xe]
      %v1445 = vld [vmem:[%s767 + $0x24] sm:$0xe]
      %v1446 = vld [vmem:[%s767 + $0x30] sm:$0xe]
      %v1447 = vld [vmem:[%s767 + $0x3c] sm:$0xe]
      %v1448 = vld [vmem:[%s767 + $0x48] sm:$0xe]
      %v1449 = vld [vmem:[%s767 + $0x54] sm:$0xe]
      %v1450 = vld [vmem:[%s767 + $0x60] sm:$0xe]
      %v1451 = vld [vmem:[%s767 + $0x6c] sm:$0xe]
      %v1452 = vld [vmem:[%s767 + $0x78] sm:$0xe]
      %v1453 = vld [vmem:[%s767 + $0x84] sm:$0xe]
      %v1454 = vld [vmem:[%s767 + $0x90] sm:$0xe]
      %v1455 = vld [vmem:[%s767 + $0x9c] sm:$0xe]
      %v1456 = vld [vmem:[%s767 + $0xa8] sm:$0xe]
      %v1457 = vld [vmem:[%s767 + $0xb4] sm:$0xe]
      %v1490 = vunpack.c.l.b16 %v1394
      %v1491 = vunpack.c.l.b16 %v1395
      %v1492 = vunpack.c.l.b16 %v1396
      %v1493 = vunpack.c.l.b16 %v1397
      %v1494 = vunpack.c.l.b16 %v1398
      %v1495 = vunpack.c.l.b16 %v1399
      %v1496 = vunpack.c.l.b16 %v1400
      %v1497 = vunpack.c.l.b16 %v1401
      %v1498 = vunpack.c.l.b16 %v1402
      %v1499 = vunpack.c.l.b16 %v1403
      %v1500 = vunpack.c.l.b16 %v1404
      %v1501 = vunpack.c.l.b16 %v1405
      %v1502 = vunpack.c.l.b16 %v1406
      %v1503 = vunpack.c.l.b16 %v1407
      %v1504 = vunpack.c.l.b16 %v1408
      %v1505 = vunpack.c.l.b16 %v1409
      %v1506 = vunpack.c.l.b16 %v1410
      %v1507 = vunpack.c.l.b16 %v1411
      %v1508 = vunpack.c.l.b16 %v1412
      %v1509 = vunpack.c.l.b16 %v1413
      %v1510 = vunpack.c.l.b16 %v1414
      %v1511 = vunpack.c.l.b16 %v1415
      %v1512 = vunpack.c.l.b16 %v1416
      %v1513 = vunpack.c.l.b16 %v1417
      %v1514 = vunpack.c.l.b16 %v1418
      %v1515 = vunpack.c.l.b16 %v1419
      %v1516 = vunpack.c.l.b16 %v1420
      %v1517 = vunpack.c.l.b16 %v1421
      %v1518 = vunpack.c.l.b16 %v1422
      %v1519 = vunpack.c.l.b16 %v1423
      %v1520 = vunpack.c.l.b16 %v1424
      %v1521 = vunpack.c.l.b16 %v1425
      %v1522 = vpack.c.b16 %v1491, %v1490
      %v1523 = vpack.c.b16 %v1493, %v1492
      %v1524 = vpack.c.b16 %v1495, %v1494
      %v1525 = vpack.c.b16 %v1497, %v1496
      %v1526 = vpack.c.b16 %v1499, %v1498
      %v1527 = vpack.c.b16 %v1501, %v1500
      %v1528 = vpack.c.b16 %v1503, %v1502
      %v1529 = vpack.c.b16 %v1505, %v1504
      %v1530 = vpack.c.b16 %v1507, %v1506
      %v1531 = vpack.c.b16 %v1509, %v1508
      %v1532 = vpack.c.b16 %v1511, %v1510
      %v1533 = vpack.c.b16 %v1513, %v1512
      %v1534 = vpack.c.b16 %v1515, %v1514
      %v1535 = vpack.c.b16 %v1517, %v1516
      %v1536 = vpack.c.b16 %v1519, %v1518
      %v1537 = vpack.c.b16 %v1521, %v1520
      %v1570 = vunpack.c.l.b16 %v1426
      %v1571 = vunpack.c.l.b16 %v1427
      %v1572 = vunpack.c.l.b16 %v1428
      %v1573 = vunpack.c.l.b16 %v1429
      %v1574 = vunpack.c.l.b16 %v1430
      %v1575 = vunpack.c.l.b16 %v1431
      %v1576 = vunpack.c.l.b16 %v1432
      %v1577 = vunpack.c.l.b16 %v1433
      %v1578 = vunpack.c.l.b16 %v1434
      %v1579 = vunpack.c.l.b16 %v1435
      %v1580 = vunpack.c.l.b16 %v1436
      %v1581 = vunpack.c.l.b16 %v1437
      %v1582 = vunpack.c.l.b16 %v1438
      %v1583 = vunpack.c.l.b16 %v1439
      %v1584 = vunpack.c.l.b16 %v1440
      %v1585 = vunpack.c.l.b16 %v1441
      %v1586 = vpack.c.b16 %v1570, %v1570
      %v1587 = vpack.c.b16 %v1571, %v1571
      %v1588 = vpack.c.b16 %v1572, %v1572
      %v1589 = vpack.c.b16 %v1573, %v1573
      %v1590 = vpack.c.b16 %v1574, %v1574
      %v1591 = vpack.c.b16 %v1575, %v1575
      %v1592 = vpack.c.b16 %v1576, %v1576
      %v1593 = vpack.c.b16 %v1577, %v1577
      %v1594 = vpack.c.b16 %v1578, %v1578
      %v1595 = vpack.c.b16 %v1579, %v1579
      %v1596 = vpack.c.b16 %v1580, %v1580
      %v1597 = vpack.c.b16 %v1581, %v1581
      %v1598 = vpack.c.b16 %v1582, %v1582
      %v1599 = vpack.c.b16 %v1583, %v1583
      %v1600 = vpack.c.b16 %v1584, %v1584
      %v1601 = vpack.c.b16 %v1585, %v1585
      %v1603 = vshrl.u32 %v1522, 16
      %v1605 = vshll.u32 %v1522, 16
      %v1607 = vrot.slane %v1605, 1
      %v1608 = vor.u32 %v1603, %v1607
      %v1610 = vshll.u32 %v1586, 16
      %v1612 = vrot.slane %v1610, 1
      %v1613 = vsel %vm1024, %v1608, %v1612
      %v1615 = vshrl.u32 %v1523, 16
      %v1617 = vshll.u32 %v1523, 16
      %v1619 = vrot.slane %v1617, 1
      %v1620 = vor.u32 %v1615, %v1619
      %v1622 = vshll.u32 %v1587, 16
      %v1624 = vrot.slane %v1622, 1
      %v1625 = vsel %vm1024, %v1620, %v1624
      %v1627 = vshrl.u32 %v1524, 16
      %v1629 = vshll.u32 %v1524, 16
      %v1631 = vrot.slane %v1629, 1
      %v1632 = vor.u32 %v1627, %v1631
      %v1634 = vshll.u32 %v1588, 16
      %v1636 = vrot.slane %v1634, 1
      %v1637 = vsel %vm1024, %v1632, %v1636
      %v1639 = vshrl.u32 %v1525, 16
      %v1641 = vshll.u32 %v1525, 16
      %v1643 = vrot.slane %v1641, 1
      %v1644 = vor.u32 %v1639, %v1643
      %v1646 = vshll.u32 %v1589, 16
      %v1648 = vrot.slane %v1646, 1
      %v1649 = vsel %vm1024, %v1644, %v1648
      %v1651 = vshrl.u32 %v1526, 16
      %v1653 = vshll.u32 %v1526, 16
      %v1655 = vrot.slane %v1653, 1
      %v1656 = vor.u32 %v1651, %v1655
      %v1658 = vshll.u32 %v1590, 16
      %v1660 = vrot.slane %v1658, 1
      %v1661 = vsel %vm1024, %v1656, %v1660
      %v1663 = vshrl.u32 %v1527, 16
      %v1665 = vshll.u32 %v1527, 16
      %v1667 = vrot.slane %v1665, 1
      %v1668 = vor.u32 %v1663, %v1667
      %v1670 = vshll.u32 %v1591, 16
      %v1672 = vrot.slane %v1670, 1
      %v1673 = vsel %vm1024, %v1668, %v1672
      %v1675 = vshrl.u32 %v1528, 16
      %v1677 = vshll.u32 %v1528, 16
      %v1679 = vrot.slane %v1677, 1
      %v1680 = vor.u32 %v1675, %v1679
      %v1682 = vshll.u32 %v1592, 16
      %v1684 = vrot.slane %v1682, 1
      %v1685 = vsel %vm1024, %v1680, %v1684
      %v1687 = vshrl.u32 %v1529, 16
      %v1689 = vshll.u32 %v1529, 16
      %v1691 = vrot.slane %v1689, 1
      %v1692 = vor.u32 %v1687, %v1691
      %v1694 = vshll.u32 %v1593, 16
      %v1696 = vrot.slane %v1694, 1
      %v1697 = vsel %vm1024, %v1692, %v1696
      %v1699 = vshrl.u32 %v1530, 16
      %v1701 = vshll.u32 %v1530, 16
      %v1703 = vrot.slane %v1701, 1
      %v1704 = vor.u32 %v1699, %v1703
      %v1706 = vshll.u32 %v1594, 16
      %v1708 = vrot.slane %v1706, 1
      %v1709 = vsel %vm1024, %v1704, %v1708
      %v1711 = vshrl.u32 %v1531, 16
      %v1713 = vshll.u32 %v1531, 16
      %v1715 = vrot.slane %v1713, 1
      %v1716 = vor.u32 %v1711, %v1715
      %v1718 = vshll.u32 %v1595, 16
      %v1720 = vrot.slane %v1718, 1
      %v1721 = vsel %vm1024, %v1716, %v1720
      %v1723 = vshrl.u32 %v1532, 16
      %v1725 = vshll.u32 %v1532, 16
      %v1727 = vrot.slane %v1725, 1
      %v1728 = vor.u32 %v1723, %v1727
      %v1730 = vshll.u32 %v1596, 16
      %v1732 = vrot.slane %v1730, 1
      %v1733 = vsel %vm1024, %v1728, %v1732
      %v1735 = vshrl.u32 %v1533, 16
      %v1737 = vshll.u32 %v1533, 16
      %v1739 = vrot.slane %v1737, 1
      %v1740 = vor.u32 %v1735, %v1739
      %v1742 = vshll.u32 %v1597, 16
      %v1744 = vrot.slane %v1742, 1
      %v1745 = vsel %vm1024, %v1740, %v1744
      %v1747 = vshrl.u32 %v1534, 16
      %v1749 = vshll.u32 %v1534, 16
      %v1751 = vrot.slane %v1749, 1
      %v1752 = vor.u32 %v1747, %v1751
      %v1754 = vshll.u32 %v1598, 16
      %v1756 = vrot.slane %v1754, 1
      %v1757 = vsel %vm1024, %v1752, %v1756
      %v1759 = vshrl.u32 %v1535, 16
      %v1761 = vshll.u32 %v1535, 16
      %v1763 = vrot.slane %v1761, 1
      %v1764 = vor.u32 %v1759, %v1763
      %v1766 = vshll.u32 %v1599, 16
      %v1768 = vrot.slane %v1766, 1
      %v1769 = vsel %vm1024, %v1764, %v1768
      %v1771 = vshrl.u32 %v1536, 16
      %v1773 = vshll.u32 %v1536, 16
      %v1775 = vrot.slane %v1773, 1
      %v1776 = vor.u32 %v1771, %v1775
      %v1778 = vshll.u32 %v1600, 16
      %v1780 = vrot.slane %v1778, 1
      %v1781 = vsel %vm1024, %v1776, %v1780
      %v1783 = vshrl.u32 %v1537, 16
      %v1785 = vshll.u32 %v1537, 16
      %v1787 = vrot.slane %v1785, 1
      %v1788 = vor.u32 %v1783, %v1787
      %v1790 = vshll.u32 %v1601, 16
      %v1792 = vrot.slane %v1790, 1
      %v1793 = vsel %vm1024, %v1788, %v1792
      %v1826 = vunpack.c.l.b16 %v1442
      %v1827 = vunpack.c.l.b16 %v1443
      %v1828 = vunpack.c.l.b16 %v1444
      %v1829 = vunpack.c.l.b16 %v1445
      %v1830 = vunpack.c.l.b16 %v1446
      %v1831 = vunpack.c.l.b16 %v1447
      %v1832 = vunpack.c.l.b16 %v1448
      %v1833 = vunpack.c.l.b16 %v1449
      %v1834 = vunpack.c.l.b16 %v1450
      %v1835 = vunpack.c.l.b16 %v1451
      %v1836 = vunpack.c.l.b16 %v1452
      %v1837 = vunpack.c.l.b16 %v1453
      %v1838 = vunpack.c.l.b16 %v1454
      %v1839 = vunpack.c.l.b16 %v1455
      %v1840 = vunpack.c.l.b16 %v1456
      %v1841 = vunpack.c.l.b16 %v1457
      %v1842 = vpack.c.b16 %v1491, %v1826
      %v1843 = vpack.c.b16 %v1493, %v1827
      %v1844 = vpack.c.b16 %v1495, %v1828
      %v1845 = vpack.c.b16 %v1497, %v1829
      %v1846 = vpack.c.b16 %v1499, %v1830
      %v1847 = vpack.c.b16 %v1501, %v1831
      %v1848 = vpack.c.b16 %v1503, %v1832
      %v1849 = vpack.c.b16 %v1505, %v1833
      %v1850 = vpack.c.b16 %v1507, %v1834
      %v1851 = vpack.c.b16 %v1509, %v1835
      %v1852 = vpack.c.b16 %v1511, %v1836
      %v1853 = vpack.c.b16 %v1513, %v1837
      %v1854 = vpack.c.b16 %v1515, %v1838
      %v1855 = vpack.c.b16 %v1517, %v1839
      %v1856 = vpack.c.b16 %v1519, %v1840
      %v1857 = vpack.c.b16 %v1521, %v1841
      %v1858 = vrot.slane %v1842, 1
      %v1859 = vrot.slane %v1586, 1
      %v1860 = vsel %vm1281, %v1858, %v1859
      %v1861 = vrot.slane %v1843, 1
      %v1862 = vrot.slane %v1587, 1
      %v1863 = vsel %vm1281, %v1861, %v1862
      %v1864 = vrot.slane %v1844, 1
      %v1865 = vrot.slane %v1588, 1
      %v1866 = vsel %vm1281, %v1864, %v1865
      %v1867 = vrot.slane %v1845, 1
      %v1868 = vrot.slane %v1589, 1
      %v1869 = vsel %vm1281, %v1867, %v1868
      %v1870 = vrot.slane %v1846, 1
      %v1871 = vrot.slane %v1590, 1
      %v1872 = vsel %vm1281, %v1870, %v1871
      %v1873 = vrot.slane %v1847, 1
      %v1874 = vrot.slane %v1591, 1
      %v1875 = vsel %vm1281, %v1873, %v1874
      %v1876 = vrot.slane %v1848, 1
      %v1877 = vrot.slane %v1592, 1
      %v1878 = vsel %vm1281, %v1876, %v1877
      %v1879 = vrot.slane %v1849, 1
      %v1880 = vrot.slane %v1593, 1
      %v1881 = vsel %vm1281, %v1879, %v1880
      %v1882 = vrot.slane %v1850, 1
      %v1883 = vrot.slane %v1594, 1
      %v1884 = vsel %vm1281, %v1882, %v1883
      %v1885 = vrot.slane %v1851, 1
      %v1886 = vrot.slane %v1595, 1
      %v1887 = vsel %vm1281, %v1885, %v1886
      %v1888 = vrot.slane %v1852, 1
      %v1889 = vrot.slane %v1596, 1
      %v1890 = vsel %vm1281, %v1888, %v1889
      %v1891 = vrot.slane %v1853, 1
      %v1892 = vrot.slane %v1597, 1
      %v1893 = vsel %vm1281, %v1891, %v1892
      %v1894 = vrot.slane %v1854, 1
      %v1895 = vrot.slane %v1598, 1
      %v1896 = vsel %vm1281, %v1894, %v1895
      %v1897 = vrot.slane %v1855, 1
      %v1898 = vrot.slane %v1599, 1
      %v1899 = vsel %vm1281, %v1897, %v1898
      %v1900 = vrot.slane %v1856, 1
      %v1901 = vrot.slane %v1600, 1
      %v1902 = vsel %vm1281, %v1900, %v1901
      %v1903 = vrot.slane %v1857, 1
      %v1904 = vrot.slane %v1601, 1
      %v1905 = vsel %vm1281, %v1903, %v1904
      %s1922 = scalar_lea.vmem %s3, 192
      %v1923 = vld [vmem:[%s1922] sm:$0xf]
      %v1924 = vld [vmem:[%s1922 + $0x4] sm:$0xf]
      %v1925 = vld [vmem:[%s1922 + $0x8] sm:$0xf]
      %v1926 = vld [vmem:[%s1922 + $0xc] sm:$0xf]
      %v1927 = vld [vmem:[%s1922 + $0x10] sm:$0xf]
      %v1928 = vld [vmem:[%s1922 + $0x14] sm:$0xf]
      %v1929 = vld [vmem:[%s1922 + $0x18] sm:$0xf]
      %v1930 = vld [vmem:[%s1922 + $0x1c] sm:$0xf]
      %v1931 = vld [vmem:[%s1922 + $0x20] sm:$0xf]
      %v1932 = vld [vmem:[%s1922 + $0x24] sm:$0xf]
      %v1933 = vld [vmem:[%s1922 + $0x28] sm:$0xf]
      %v1934 = vld [vmem:[%s1922 + $0x2c] sm:$0xf]
      %v1935 = vld [vmem:[%s1922 + $0x30] sm:$0xf]
      %v1936 = vld [vmem:[%s1922 + $0x34] sm:$0xf]
      %v1937 = vld [vmem:[%s1922 + $0x38] sm:$0xf]
      %v1938 = vld [vmem:[%s1922 + $0x3c] sm:$0xf]
      %v1939 = vld [vmem:[%s1922 + $0x40] sm:$0xf]
      %v1940 = vld [vmem:[%s1922 + $0x44] sm:$0xf]
      %v1941 = vld [vmem:[%s1922 + $0x48] sm:$0xf]
      %v1942 = vld [vmem:[%s1922 + $0x4c] sm:$0xf]
      %v1943 = vld [vmem:[%s1922 + $0x50] sm:$0xf]
      %v1944 = vld [vmem:[%s1922 + $0x54] sm:$0xf]
      %v1945 = vld [vmem:[%s1922 + $0x58] sm:$0xf]
      %v1946 = vld [vmem:[%s1922 + $0x5c] sm:$0xf]
      %v1947 = vld [vmem:[%s1922 + $0x60] sm:$0xf]
      %v1948 = vld [vmem:[%s1922 + $0x64] sm:$0xf]
      %v1949 = vld [vmem:[%s1922 + $0x68] sm:$0xf]
      %v1950 = vld [vmem:[%s1922 + $0x6c] sm:$0xf]
      %v1951 = vld [vmem:[%s1922 + $0x70] sm:$0xf]
      %v1952 = vld [vmem:[%s1922 + $0x74] sm:$0xf]
      %v1953 = vld [vmem:[%s1922 + $0x78] sm:$0xf]
      %v1954 = vld [vmem:[%s1922 + $0x7c] sm:$0xf]
      %v1955 = vld [vmem:[%s1922 + $0x80] sm:$0xf]
      %v1956 = vld [vmem:[%s1922 + $0x84] sm:$0xf]
      %v1957 = vld [vmem:[%s1922 + $0x88] sm:$0xf]
      %v1958 = vld [vmem:[%s1922 + $0x8c] sm:$0xf]
      %v1959 = vld [vmem:[%s1922 + $0x90] sm:$0xf]
      %v1960 = vld [vmem:[%s1922 + $0x94] sm:$0xf]
      %v1961 = vld [vmem:[%s1922 + $0x98] sm:$0xf]
      %v1962 = vld [vmem:[%s1922 + $0x9c] sm:$0xf]
      %v1963 = vld [vmem:[%s1922 + $0xa0] sm:$0xf]
      %v1964 = vld [vmem:[%s1922 + $0xa4] sm:$0xf]
      %v1965 = vld [vmem:[%s1922 + $0xa8] sm:$0xf]
      %v1966 = vld [vmem:[%s1922 + $0xac] sm:$0xf]
      %v1967 = vld [vmem:[%s1922 + $0xb0] sm:$0xf]
      %v1968 = vld [vmem:[%s1922 + $0xb4] sm:$0xf]
      %v1969 = vld [vmem:[%s1922 + $0xb8] sm:$0xf]
      %v1970 = vld [vmem:[%s1922 + $0xbc] sm:$0xf]
      %v2019 = vunpack.c.l.b16 %v1923
      %v2020 = vunpack.c.l.b16 %v1924
      %v2021 = vunpack.c.l.b16 %v1925
      %v2022 = vunpack.c.l.b16 %v1926
      %v2023 = vunpack.c.l.b16 %v1927
      %v2024 = vunpack.c.l.b16 %v1928
      %v2025 = vunpack.c.l.b16 %v1929
      %v2026 = vunpack.c.l.b16 %v1930
      %v2027 = vunpack.c.l.b16 %v1931
      %v2028 = vunpack.c.l.b16 %v1932
      %v2029 = vunpack.c.l.b16 %v1933
      %v2030 = vunpack.c.l.b16 %v1934
      %v2031 = vunpack.c.l.b16 %v1935
      %v2032 = vunpack.c.l.b16 %v1936
      %v2033 = vunpack.c.l.b16 %v1937
      %v2034 = vunpack.c.l.b16 %v1938
      %v2035 = vunpack.c.l.b16 %v1939
      %v2036 = vunpack.c.l.b16 %v1940
      %v2037 = vunpack.c.l.b16 %v1941
      %v2038 = vunpack.c.l.b16 %v1942
      %v2039 = vunpack.c.l.b16 %v1943
      %v2040 = vunpack.c.l.b16 %v1944
      %v2041 = vunpack.c.l.b16 %v1945
      %v2042 = vunpack.c.l.b16 %v1946
      %v2043 = vunpack.c.l.b16 %v1947
      %v2044 = vunpack.c.l.b16 %v1948
      %v2045 = vunpack.c.l.b16 %v1949
      %v2046 = vunpack.c.l.b16 %v1950
      %v2047 = vunpack.c.l.b16 %v1951
      %v2048 = vunpack.c.l.b16 %v1952
      %v2049 = vunpack.c.l.b16 %v1953
      %v2050 = vunpack.c.l.b16 %v1954
      %v2051 = vunpack.c.l.b16 %v1955
      %v2052 = vunpack.c.l.b16 %v1956
      %v2053 = vunpack.c.l.b16 %v1957
      %v2054 = vunpack.c.l.b16 %v1958
      %v2055 = vunpack.c.l.b16 %v1959
      %v2056 = vunpack.c.l.b16 %v1960
      %v2057 = vunpack.c.l.b16 %v1961
      %v2058 = vunpack.c.l.b16 %v1962
      %v2059 = vunpack.c.l.b16 %v1963
      %v2060 = vunpack.c.l.b16 %v1964
      %v2061 = vunpack.c.l.b16 %v1965
      %v2062 = vunpack.c.l.b16 %v1966
      %v2063 = vunpack.c.l.b16 %v1967
      %v2064 = vunpack.c.l.b16 %v1968
      %v2065 = vunpack.c.l.b16 %v1969
      %v2066 = vunpack.c.l.b16 %v1970
      %v2067 = vpack.c.b16 %v2020, %v2019
      %v2068 = vpack.c.b16 %v2022, %v2021
      %v2069 = vpack.c.b16 %v2024, %v2023
      %v2070 = vpack.c.b16 %v2026, %v2025
      %v2071 = vpack.c.b16 %v2028, %v2027
      %v2072 = vpack.c.b16 %v2030, %v2029
      %v2073 = vpack.c.b16 %v2032, %v2031
      %v2074 = vpack.c.b16 %v2034, %v2033
      %v2075 = vpack.c.b16 %v2036, %v2035
      %v2076 = vpack.c.b16 %v2038, %v2037
      %v2077 = vpack.c.b16 %v2040, %v2039
      %v2078 = vpack.c.b16 %v2042, %v2041
      %v2079 = vpack.c.b16 %v2044, %v2043
      %v2080 = vpack.c.b16 %v2046, %v2045
      %v2081 = vpack.c.b16 %v2048, %v2047
      %v2082 = vpack.c.b16 %v2050, %v2049
      %v2083 = vpack.c.b16 %v2052, %v2051
      %v2084 = vpack.c.b16 %v2054, %v2053
      %v2085 = vpack.c.b16 %v2056, %v2055
      %v2086 = vpack.c.b16 %v2058, %v2057
      %v2087 = vpack.c.b16 %v2060, %v2059
      %v2088 = vpack.c.b16 %v2062, %v2061
      %v2089 = vpack.c.b16 %v2064, %v2063
      %v2090 = vpack.c.b16 %v2066, %v2065
      %2115 = vmatprep.subr.bf16.mxu0 0
      %2116 = vmatpush1.bf16.msra.mxu0 %v2074
      %2117 = vmatprep.subr.bf16.mxu0 0
      %2118 = vmatpush1.bf16.msra.mxu0 %v2073
      %2119 = vmatprep.subr.bf16.mxu0 0
      %2120 = vmatpush1.bf16.msra.mxu0 %v2072
      %2121 = vmatprep.subr.bf16.mxu0 0
      %2122 = vmatpush1.bf16.msra.mxu0 %v2071
      %2123 = vmatprep.subr.bf16.mxu0 0
      %2124 = vmatpush1.bf16.msra.mxu0 %v2070
      %2125 = vmatprep.subr.bf16.mxu0 0
      %2126 = vmatpush1.bf16.msra.mxu0 %v2069
      %2127 = vmatprep.subr.bf16.mxu0 0
      %2128 = vmatpush1.bf16.msra.mxu0 %v2068
      %2129 = vmatprep.subr.bf16.mxu0 0
      %2130 = vmatpush1.bf16.msra.mxu0 %v2067
      %2131 = vmatprep.subr.bf16.mxu0 0
      %2132 = vmatpush2.bf16.msra.mxu0 %v2082
      %2133 = vmatprep.subr.bf16.mxu0 0
      %2134 = vmatpush2.bf16.msra.mxu0 %v2081
      %2135 = vmatprep.subr.bf16.mxu0 0
      %2136 = vmatpush2.bf16.msra.mxu0 %v2080
      %2137 = vmatprep.subr.bf16.mxu0 0
      %2138 = vmatpush2.bf16.msra.mxu0 %v2079
      %2139 = vmatprep.subr.bf16.mxu0 0
      %2140 = vmatpush2.bf16.msra.mxu0 %v2078
      %2141 = vmatprep.subr.bf16.mxu0 0
      %2142 = vmatpush2.bf16.msra.mxu0 %v2077
      %2143 = vmatprep.subr.bf16.mxu0 0
      %2144 = vmatpush2.bf16.msra.mxu0 %v2076
      %2145 = vmatprep.subr.bf16.mxu0 0
      %2146 = vmatpush2.bf16.msra.mxu0 %v2075
      %2147 = vmatprep.mubr.bf16.mxu0 %v1613
      %2148 = vmatmul.mubr.bf16.gmra.mxu0 %v1522
      %v2149 = vpop.f32.mrf.mxu0
      %v2150 = vadd.f32 0.0, %v2149
      %v2151 = vpop.f32.mrf.mxu0
      %v2152 = vpop.f32.mrf.mxu0
      %v2153 = vadd.f32 0.0, %v2152
      %v2154 = vpop.f32.mrf.mxu0
      %2155 = vmatprep.mubr.bf16.mxu0 %v1625
      %2156 = vmatmul.mubr.bf16.gmra.mxu0 %v1523
      %v2157 = vpop.f32.mrf.mxu0
      %v2158 = vadd.f32 0.0, %v2157
      %v2159 = vpop.f32.mrf.mxu0
      %v2160 = vpop.f32.mrf.mxu0
      %v2161 = vadd.f32 0.0, %v2160
      %v2162 = vpop.f32.mrf.mxu0
      %2163 = vmatprep.mubr.bf16.mxu0 %v1637
      %2164 = vmatmul.mubr.bf16.gmra.mxu0 %v1524
      %v2165 = vpop.f32.mrf.mxu0
      %v2166 = vadd.f32 0.0, %v2165
      %v2167 = vpop.f32.mrf.mxu0
      %v2168 = vpop.f32.mrf.mxu0
      %v2169 = vadd.f32 0.0, %v2168
      %v2170 = vpop.f32.mrf.mxu0
      %2171 = vmatprep.mubr.bf16.mxu0 %v1649
      %2172 = vmatmul.mubr.bf16.gmra.mxu0 %v1525
      %v2173 = vpop.f32.mrf.mxu0
      %v2174 = vadd.f32 0.0, %v2173
      %v2175 = vpop.f32.mrf.mxu0
      %v2176 = vpop.f32.mrf.mxu0
      %v2177 = vadd.f32 0.0, %v2176
      %v2178 = vpop.f32.mrf.mxu0
      %2179 = vmatprep.mubr.bf16.mxu0 %v1661
      %2180 = vmatmul.mubr.bf16.gmra.mxu0 %v1526
      %v2181 = vpop.f32.mrf.mxu0
      %v2182 = vadd.f32 0.0, %v2181
      %v2183 = vpop.f32.mrf.mxu0
      %v2184 = vpop.f32.mrf.mxu0
      %v2185 = vadd.f32 0.0, %v2184
      %v2186 = vpop.f32.mrf.mxu0
      %2187 = vmatprep.mubr.bf16.mxu0 %v1673
      %2188 = vmatmul.mubr.bf16.gmra.mxu0 %v1527
      %v2189 = vpop.f32.mrf.mxu0
      %v2190 = vadd.f32 0.0, %v2189
      %v2191 = vpop.f32.mrf.mxu0
      %v2192 = vpop.f32.mrf.mxu0
      %v2193 = vadd.f32 0.0, %v2192
      %v2194 = vpop.f32.mrf.mxu0
      %2195 = vmatprep.mubr.bf16.mxu0 %v1685
      %2196 = vmatmul.mubr.bf16.gmra.mxu0 %v1528
      %v2197 = vpop.f32.mrf.mxu0
      %v2198 = vadd.f32 0.0, %v2197
      %v2199 = vpop.f32.mrf.mxu0
      %v2200 = vpop.f32.mrf.mxu0
      %v2201 = vadd.f32 0.0, %v2200
      %v2202 = vpop.f32.mrf.mxu0
      %2203 = vmatprep.mubr.bf16.mxu0 %v1697
      %2204 = vmatmul.mubr.bf16.gmra.mxu0 %v1529
      %v2205 = vpop.f32.mrf.mxu0
      %v2206 = vadd.f32 0.0, %v2205
      %v2207 = vpop.f32.mrf.mxu0
      %v2208 = vpop.f32.mrf.mxu0
      %v2209 = vadd.f32 0.0, %v2208
      %v2210 = vpop.f32.mrf.mxu0
      %2211 = vmatprep.mubr.bf16.mxu0 %v1709
      %2212 = vmatmul.mubr.bf16.gmra.mxu0 %v1530
      %v2213 = vpop.f32.mrf.mxu0
      %v2214 = vadd.f32 0.0, %v2213
      %v2215 = vpop.f32.mrf.mxu0
      %v2216 = vpop.f32.mrf.mxu0
      %v2217 = vadd.f32 0.0, %v2216
      %v2218 = vpop.f32.mrf.mxu0
      %2219 = vmatprep.mubr.bf16.mxu0 %v1721
      %2220 = vmatmul.mubr.bf16.gmra.mxu0 %v1531
      %v2221 = vpop.f32.mrf.mxu0
      %v2222 = vadd.f32 0.0, %v2221
      %v2223 = vpop.f32.mrf.mxu0
      %v2224 = vpop.f32.mrf.mxu0
      %v2225 = vadd.f32 0.0, %v2224
      %v2226 = vpop.f32.mrf.mxu0
      %2227 = vmatprep.mubr.bf16.mxu0 %v1733
      %2228 = vmatmul.mubr.bf16.gmra.mxu0 %v1532
      %v2229 = vpop.f32.mrf.mxu0
      %v2230 = vadd.f32 0.0, %v2229
      %v2231 = vpop.f32.mrf.mxu0
      %v2232 = vpop.f32.mrf.mxu0
      %v2233 = vadd.f32 0.0, %v2232
      %v2234 = vpop.f32.mrf.mxu0
      %2235 = vmatprep.mubr.bf16.mxu0 %v1745
      %2236 = vmatmul.mubr.bf16.gmra.mxu0 %v1533
      %v2237 = vpop.f32.mrf.mxu0
      %v2238 = vadd.f32 0.0, %v2237
      %v2239 = vpop.f32.mrf.mxu0
      %v2240 = vpop.f32.mrf.mxu0
      %v2241 = vadd.f32 0.0, %v2240
      %v2242 = vpop.f32.mrf.mxu0
      %2243 = vmatprep.mubr.bf16.mxu0 %v1757
      %2244 = vmatmul.mubr.bf16.gmra.mxu0 %v1534
      %v2245 = vpop.f32.mrf.mxu0
      %v2246 = vadd.f32 0.0, %v2245
      %v2247 = vpop.f32.mrf.mxu0
      %v2248 = vpop.f32.mrf.mxu0
      %v2249 = vadd.f32 0.0, %v2248
      %v2250 = vpop.f32.mrf.mxu0
      %2251 = vmatprep.mubr.bf16.mxu0 %v1769
      %2252 = vmatmul.mubr.bf16.gmra.mxu0 %v1535
      %v2253 = vpop.f32.mrf.mxu0
      %v2254 = vadd.f32 0.0, %v2253
      %v2255 = vpop.f32.mrf.mxu0
      %v2256 = vpop.f32.mrf.mxu0
      %v2257 = vadd.f32 0.0, %v2256
      %v2258 = vpop.f32.mrf.mxu0
      %2259 = vmatprep.mubr.bf16.mxu0 %v1781
      %2260 = vmatmul.mubr.bf16.gmra.mxu0 %v1536
      %v2261 = vpop.f32.mrf.mxu0
      %v2262 = vadd.f32 0.0, %v2261
      %v2263 = vpop.f32.mrf.mxu0
      %v2264 = vpop.f32.mrf.mxu0
      %v2265 = vadd.f32 0.0, %v2264
      %v2266 = vpop.f32.mrf.mxu0
      %2267 = vmatprep.mubr.bf16.mxu0 %v1793
      %2268 = vmatmul.mubr.bf16.gmra.mxu0 %v1537
      %v2269 = vpop.f32.mrf.mxu0
      %v2270 = vadd.f32 0.0, %v2269
      %v2271 = vpop.f32.mrf.mxu0
      %v2272 = vpop.f32.mrf.mxu0
      %v2273 = vadd.f32 0.0, %v2272
      %v2274 = vpop.f32.mrf.mxu0
      %2275 = vdwg.mxu0
      %2276 = vmatprep.subr.bf16.mxu0 0
      %2277 = vmatpush1.bf16.msra.mxu0 %v2090
      %2278 = vmatprep.subr.bf16.mxu0 0
      %2279 = vmatpush1.bf16.msra.mxu0 %v2089
      %2280 = vmatprep.subr.bf16.mxu0 0
      %2281 = vmatpush1.bf16.msra.mxu0 %v2088
      %2282 = vmatprep.subr.bf16.mxu0 0
      %2283 = vmatpush1.bf16.msra.mxu0 %v2087
      %2284 = vmatprep.subr.bf16.mxu0 0
      %2285 = vmatpush1.bf16.msra.mxu0 %v2086
      %2286 = vmatprep.subr.bf16.mxu0 0
      %2287 = vmatpush1.bf16.msra.mxu0 %v2085
      %2288 = vmatprep.subr.bf16.mxu0 0
      %2289 = vmatpush1.bf16.msra.mxu0 %v2084
      %2290 = vmatprep.subr.bf16.mxu0 0
      %2291 = vmatpush1.bf16.msra.mxu0 %v2083
      %2292 = vmatprep.subr.bf16.mxu0 0
      %2293 = vmatpush2.bf16.msra.mxu0 0
      %2294 = vmatprep.subr.bf16.mxu0 0
      %2295 = vmatpush2.bf16.msra.mxu0 0
      %2296 = vmatprep.subr.bf16.mxu0 0
      %2297 = vmatpush2.bf16.msra.mxu0 0
      %2298 = vmatprep.subr.bf16.mxu0 0
      %2299 = vmatpush2.bf16.msra.mxu0 0
      %2300 = vmatprep.subr.bf16.mxu0 0
      %2301 = vmatpush2.bf16.msra.mxu0 0
      %2302 = vmatprep.subr.bf16.mxu0 0
      %2303 = vmatpush2.bf16.msra.mxu0 0
      %2304 = vmatprep.subr.bf16.mxu0 0
      %2305 = vmatpush2.bf16.msra.mxu0 0
      %2306 = vmatprep.subr.bf16.mxu0 0
      %2307 = vmatpush2.bf16.msra.mxu0 0
      %2308 = vmatprep.mubr.bf16.mxu0 0
      %2309 = vmatmul.mubr.bf16.gmra.mxu0 %v1860
      %v2310 = vpop.f32.mrf.mxu0
      %v2311 = vadd.f32 %v2150, %v2310
      %v2312 = vpop.f32.mrf.mxu0
      %v2313 = vpop.f32.mrf.mxu0
      %v2314 = vadd.f32 %v2153, %v2313
      %v2315 = vpop.f32.mrf.mxu0
      %2316 = vmatprep.mubr.bf16.mxu0 0
      %2317 = vmatmul.mubr.bf16.gmra.mxu0 %v1863
      %v2318 = vpop.f32.mrf.mxu0
      %v2319 = vadd.f32 %v2158, %v2318
      %v2320 = vpop.f32.mrf.mxu0
      %v2321 = vpop.f32.mrf.mxu0
      %v2322 = vadd.f32 %v2161, %v2321
      %v2323 = vpop.f32.mrf.mxu0
      %2324 = vmatprep.mubr.bf16.mxu0 0
      %2325 = vmatmul.mubr.bf16.gmra.mxu0 %v1866
      %v2326 = vpop.f32.mrf.mxu0
      %v2327 = vadd.f32 %v2166, %v2326
      %v2328 = vpop.f32.mrf.mxu0
      %v2329 = vpop.f32.mrf.mxu0
      %v2330 = vadd.f32 %v2169, %v2329
      %v2331 = vpop.f32.mrf.mxu0
      %2332 = vmatprep.mubr.bf16.mxu0 0
      %2333 = vmatmul.mubr.bf16.gmra.mxu0 %v1869
      %v2334 = vpop.f32.mrf.mxu0
      %v2335 = vadd.f32 %v2174, %v2334
      %v2336 = vpop.f32.mrf.mxu0
      %v2337 = vpop.f32.mrf.mxu0
      %v2338 = vadd.f32 %v2177, %v2337
      %v2339 = vpop.f32.mrf.mxu0
      %2340 = vmatprep.mubr.bf16.mxu0 0
      %2341 = vmatmul.mubr.bf16.gmra.mxu0 %v1872
      %v2342 = vpop.f32.mrf.mxu0
      %v2343 = vadd.f32 %v2182, %v2342
      %v2344 = vpop.f32.mrf.mxu0
      %v2345 = vpop.f32.mrf.mxu0
      %v2346 = vadd.f32 %v2185, %v2345
      %v2347 = vpop.f32.mrf.mxu0
      %2348 = vmatprep.mubr.bf16.mxu0 0
      %2349 = vmatmul.mubr.bf16.gmra.mxu0 %v1875
      %v2350 = vpop.f32.mrf.mxu0
      %v2351 = vadd.f32 %v2190, %v2350
      %v2352 = vpop.f32.mrf.mxu0
      %v2353 = vpop.f32.mrf.mxu0
      %v2354 = vadd.f32 %v2193, %v2353
      %v2355 = vpop.f32.mrf.mxu0
      %2356 = vmatprep.mubr.bf16.mxu0 0
      %2357 = vmatmul.mubr.bf16.gmra.mxu0 %v1878
      %v2358 = vpop.f32.mrf.mxu0
      %v2359 = vadd.f32 %v2198, %v2358
      %v2360 = vpop.f32.mrf.mxu0
      %v2361 = vpop.f32.mrf.mxu0
      %v2362 = vadd.f32 %v2201, %v2361
      %v2363 = vpop.f32.mrf.mxu0
      %2364 = vmatprep.mubr.bf16.mxu0 0
      %2365 = vmatmul.mubr.bf16.gmra.mxu0 %v1881
      %v2366 = vpop.f32.mrf.mxu0
      %v2367 = vadd.f32 %v2206, %v2366
      %v2368 = vpop.f32.mrf.mxu0
      %v2369 = vpop.f32.mrf.mxu0
      %v2370 = vadd.f32 %v2209, %v2369
      %v2371 = vpop.f32.mrf.mxu0
      %2372 = vmatprep.mubr.bf16.mxu0 0
      %2373 = vmatmul.mubr.bf16.gmra.mxu0 %v1884
      %v2374 = vpop.f32.mrf.mxu0
      %v2375 = vadd.f32 %v2214, %v2374
      %v2376 = vpop.f32.mrf.mxu0
      %v2377 = vpop.f32.mrf.mxu0
      %v2378 = vadd.f32 %v2217, %v2377
      %v2379 = vpop.f32.mrf.mxu0
      %2380 = vmatprep.mubr.bf16.mxu0 0
      %2381 = vmatmul.mubr.bf16.gmra.mxu0 %v1887
      %v2382 = vpop.f32.mrf.mxu0
      %v2383 = vadd.f32 %v2222, %v2382
      %v2384 = vpop.f32.mrf.mxu0
      %v2385 = vpop.f32.mrf.mxu0
      %v2386 = vadd.f32 %v2225, %v2385
      %v2387 = vpop.f32.mrf.mxu0
      %2388 = vmatprep.mubr.bf16.mxu0 0
      %2389 = vmatmul.mubr.bf16.gmra.mxu0 %v1890
      %v2390 = vpop.f32.mrf.mxu0
      %v2391 = vadd.f32 %v2230, %v2390
      %v2392 = vpop.f32.mrf.mxu0
      %v2393 = vpop.f32.mrf.mxu0
      %v2394 = vadd.f32 %v2233, %v2393
      %v2395 = vpop.f32.mrf.mxu0
      %2396 = vmatprep.mubr.bf16.mxu0 0
      %2397 = vmatmul.mubr.bf16.gmra.mxu0 %v1893
      %v2398 = vpop.f32.mrf.mxu0
      %v2399 = vadd.f32 %v2238, %v2398
      %v2400 = vpop.f32.mrf.mxu0
      %v2401 = vpop.f32.mrf.mxu0
      %v2402 = vadd.f32 %v2241, %v2401
      %v2403 = vpop.f32.mrf.mxu0
      %2404 = vmatprep.mubr.bf16.mxu0 0
      %2405 = vmatmul.mubr.bf16.gmra.mxu0 %v1896
      %v2406 = vpop.f32.mrf.mxu0
      %v2407 = vadd.f32 %v2246, %v2406
      %v2408 = vpop.f32.mrf.mxu0
      %v2409 = vpop.f32.mrf.mxu0
      %v2410 = vadd.f32 %v2249, %v2409
      %v2411 = vpop.f32.mrf.mxu0
      %2412 = vmatprep.mubr.bf16.mxu0 0
      %2413 = vmatmul.mubr.bf16.gmra.mxu0 %v1899
      %v2414 = vpop.f32.mrf.mxu0
      %v2415 = vadd.f32 %v2254, %v2414
      %v2416 = vpop.f32.mrf.mxu0
      %v2417 = vpop.f32.mrf.mxu0
      %v2418 = vadd.f32 %v2257, %v2417
      %v2419 = vpop.f32.mrf.mxu0
      %2420 = vmatprep.mubr.bf16.mxu0 0
      %2421 = vmatmul.mubr.bf16.gmra.mxu0 %v1902
      %v2422 = vpop.f32.mrf.mxu0
      %v2423 = vadd.f32 %v2262, %v2422
      %v2424 = vpop.f32.mrf.mxu0
      %v2425 = vpop.f32.mrf.mxu0
      %v2426 = vadd.f32 %v2265, %v2425
      %v2427 = vpop.f32.mrf.mxu0
      %2428 = vmatprep.mubr.bf16.mxu0 0
      %2429 = vmatmul.mubr.bf16.gmra.mxu0 %v1905
      %v2430 = vpop.f32.mrf.mxu0
      %v2431 = vadd.f32 %v2270, %v2430
      %v2432 = vpop.f32.mrf.mxu0
      %v2433 = vpop.f32.mrf.mxu0
      %v2434 = vadd.f32 %v2273, %v2433
      %v2435 = vpop.f32.mrf.mxu0
      %2436 = vdwg.mxu0
      %v2485 = vunpack.c.l.b16 %v1346
      %v2486 = vunpack.c.l.b16 %v1347
      %v2487 = vunpack.c.l.b16 %v1348
      %v2488 = vunpack.c.l.b16 %v1349
      %v2489 = vunpack.c.l.b16 %v1350
      %v2490 = vunpack.c.l.b16 %v1351
      %v2491 = vunpack.c.l.b16 %v1352
      %v2492 = vunpack.c.l.b16 %v1353
      %v2493 = vunpack.c.l.b16 %v1354
      %v2494 = vunpack.c.l.b16 %v1355
      %v2495 = vunpack.c.l.b16 %v1356
      %v2496 = vunpack.c.l.b16 %v1357
      %v2497 = vunpack.c.l.b16 %v1358
      %v2498 = vunpack.c.l.b16 %v1359
      %v2499 = vunpack.c.l.b16 %v1360
      %v2500 = vunpack.c.l.b16 %v1361
      %v2501 = vunpack.c.l.b16 %v1362
      %v2502 = vunpack.c.l.b16 %v1363
      %v2503 = vunpack.c.l.b16 %v1364
      %v2504 = vunpack.c.l.b16 %v1365
      %v2505 = vunpack.c.l.b16 %v1366
      %v2506 = vunpack.c.l.b16 %v1367
      %v2507 = vunpack.c.l.b16 %v1368
      %v2508 = vunpack.c.l.b16 %v1369
      %v2509 = vunpack.c.l.b16 %v1370
      %v2510 = vunpack.c.l.b16 %v1371
      %v2511 = vunpack.c.l.b16 %v1372
      %v2512 = vunpack.c.l.b16 %v1373
      %v2513 = vunpack.c.l.b16 %v1374
      %v2514 = vunpack.c.l.b16 %v1375
      %v2515 = vunpack.c.l.b16 %v1376
      %v2516 = vunpack.c.l.b16 %v1377
      %v2517 = vunpack.c.l.b16 %v1378
      %v2518 = vunpack.c.l.b16 %v1379
      %v2519 = vunpack.c.l.b16 %v1380
      %v2520 = vunpack.c.l.b16 %v1381
      %v2521 = vunpack.c.l.b16 %v1382
      %v2522 = vunpack.c.l.b16 %v1383
      %v2523 = vunpack.c.l.b16 %v1384
      %v2524 = vunpack.c.l.b16 %v1385
      %v2525 = vunpack.c.l.b16 %v1386
      %v2526 = vunpack.c.l.b16 %v1387
      %v2527 = vunpack.c.l.b16 %v1388
      %v2528 = vunpack.c.l.b16 %v1389
      %v2529 = vunpack.c.l.b16 %v1390
      %v2530 = vunpack.c.l.b16 %v1391
      %v2531 = vunpack.c.l.b16 %v1392
      %v2532 = vunpack.c.l.b16 %v1393
      %v2533 = vpack.c.b16 %v2486, %v2485
      %v2534 = vpack.c.b16 %v2488, %v2487
      %v2535 = vpack.c.b16 %v2490, %v2489
      %v2536 = vpack.c.b16 %v2492, %v2491
      %v2537 = vpack.c.b16 %v2494, %v2493
      %v2538 = vpack.c.b16 %v2496, %v2495
      %v2539 = vpack.c.b16 %v2498, %v2497
      %v2540 = vpack.c.b16 %v2500, %v2499
      %v2541 = vpack.c.b16 %v2502, %v2501
      %v2542 = vpack.c.b16 %v2504, %v2503
      %v2543 = vpack.c.b16 %v2506, %v2505
      %v2544 = vpack.c.b16 %v2508, %v2507
      %v2545 = vpack.c.b16 %v2510, %v2509
      %v2546 = vpack.c.b16 %v2512, %v2511
      %v2547 = vpack.c.b16 %v2514, %v2513
      %v2548 = vpack.c.b16 %v2516, %v2515
      %v2549 = vpack.c.b16 %v2518, %v2517
      %v2550 = vpack.c.b16 %v2520, %v2519
      %v2551 = vpack.c.b16 %v2522, %v2521
      %v2552 = vpack.c.b16 %v2524, %v2523
      %v2553 = vpack.c.b16 %v2526, %v2525
      %v2554 = vpack.c.b16 %v2528, %v2527
      %v2555 = vpack.c.b16 %v2530, %v2529
      %v2556 = vpack.c.b16 %v2532, %v2531
      %2581 = vmatprep.subr.bf16.mxu0 0
      %2582 = vmatpush1.bf16.msra.mxu0 %v2540
      %2583 = vmatprep.subr.bf16.mxu0 0
      %2584 = vmatpush1.bf16.msra.mxu0 %v2539
      %2585 = vmatprep.subr.bf16.mxu0 0
      %2586 = vmatpush1.bf16.msra.mxu0 %v2538
      %2587 = vmatprep.subr.bf16.mxu0 0
      %2588 = vmatpush1.bf16.msra.mxu0 %v2537
      %2589 = vmatprep.subr.bf16.mxu0 0
      %2590 = vmatpush1.bf16.msra.mxu0 %v2536
      %2591 = vmatprep.subr.bf16.mxu0 0
      %2592 = vmatpush1.bf16.msra.mxu0 %v2535
      %2593 = vmatprep.subr.bf16.mxu0 0
      %2594 = vmatpush1.bf16.msra.mxu0 %v2534
      %2595 = vmatprep.subr.bf16.mxu0 0
      %2596 = vmatpush1.bf16.msra.mxu0 %v2533
      %2597 = vmatprep.subr.bf16.mxu0 0
      %2598 = vmatpush2.bf16.msra.mxu0 %v2548
      %2599 = vmatprep.subr.bf16.mxu0 0
      %2600 = vmatpush2.bf16.msra.mxu0 %v2547
      %2601 = vmatprep.subr.bf16.mxu0 0
      %2602 = vmatpush2.bf16.msra.mxu0 %v2546
      %2603 = vmatprep.subr.bf16.mxu0 0
      %2604 = vmatpush2.bf16.msra.mxu0 %v2545
      %2605 = vmatprep.subr.bf16.mxu0 0
      %2606 = vmatpush2.bf16.msra.mxu0 %v2544
      %2607 = vmatprep.subr.bf16.mxu0 0
      %2608 = vmatpush2.bf16.msra.mxu0 %v2543
      %2609 = vmatprep.subr.bf16.mxu0 0
      %2610 = vmatpush2.bf16.msra.mxu0 %v2542
      %2611 = vmatprep.subr.bf16.mxu0 0
      %2612 = vmatpush2.bf16.msra.mxu0 %v2541
      %2613 = vmatprep.mubr.bf16.mxu0 %v1036
      %2614 = vmatmul.mubr.bf16.gmra.mxu0 %v944
      %v2615 = vpop.f32.mrf.mxu0
      %v2616 = vadd.f32 %v2311, %v2615
      %v2617 = vpop.f32.mrf.mxu0
      %v2618 = vpop.f32.mrf.mxu0
      %v2619 = vadd.f32 %v2314, %v2618
      %v2620 = vpop.f32.mrf.mxu0
      %2621 = vmatprep.mubr.bf16.mxu0 %v1048
      %2622 = vmatmul.mubr.bf16.gmra.mxu0 %v945
      %v2623 = vpop.f32.mrf.mxu0
      %v2624 = vadd.f32 %v2319, %v2623
      %v2625 = vpop.f32.mrf.mxu0
      %v2626 = vpop.f32.mrf.mxu0
      %v2627 = vadd.f32 %v2322, %v2626
      %v2628 = vpop.f32.mrf.mxu0
      %2629 = vmatprep.mubr.bf16.mxu0 %v1060
      %2630 = vmatmul.mubr.bf16.gmra.mxu0 %v946
      %v2631 = vpop.f32.mrf.mxu0
      %v2632 = vadd.f32 %v2327, %v2631
      %v2633 = vpop.f32.mrf.mxu0
      %v2634 = vpop.f32.mrf.mxu0
      %v2635 = vadd.f32 %v2330, %v2634
      %v2636 = vpop.f32.mrf.mxu0
      %2637 = vmatprep.mubr.bf16.mxu0 %v1072
      %2638 = vmatmul.mubr.bf16.gmra.mxu0 %v947
      %v2639 = vpop.f32.mrf.mxu0
      %v2640 = vadd.f32 %v2335, %v2639
      %v2641 = vpop.f32.mrf.mxu0
      %v2642 = vpop.f32.mrf.mxu0
      %v2643 = vadd.f32 %v2338, %v2642
      %v2644 = vpop.f32.mrf.mxu0
      %2645 = vmatprep.mubr.bf16.mxu0 %v1084
      %2646 = vmatmul.mubr.bf16.gmra.mxu0 %v948
      %v2647 = vpop.f32.mrf.mxu0
      %v2648 = vadd.f32 %v2343, %v2647
      %v2649 = vpop.f32.mrf.mxu0
      %v2650 = vpop.f32.mrf.mxu0
      %v2651 = vadd.f32 %v2346, %v2650
      %v2652 = vpop.f32.mrf.mxu0
      %2653 = vmatprep.mubr.bf16.mxu0 %v1096
      %2654 = vmatmul.mubr.bf16.gmra.mxu0 %v949
      %v2655 = vpop.f32.mrf.mxu0
      %v2656 = vadd.f32 %v2351, %v2655
      %v2657 = vpop.f32.mrf.mxu0
      %v2658 = vpop.f32.mrf.mxu0
      %v2659 = vadd.f32 %v2354, %v2658
      %v2660 = vpop.f32.mrf.mxu0
      %2661 = vmatprep.mubr.bf16.mxu0 %v1108
      %2662 = vmatmul.mubr.bf16.gmra.mxu0 %v950
      %v2663 = vpop.f32.mrf.mxu0
      %v2664 = vadd.f32 %v2359, %v2663
      %v2665 = vpop.f32.mrf.mxu0
      %v2666 = vpop.f32.mrf.mxu0
      %v2667 = vadd.f32 %v2362, %v2666
      %v2668 = vpop.f32.mrf.mxu0
      %2669 = vmatprep.mubr.bf16.mxu0 %v1120
      %2670 = vmatmul.mubr.bf16.gmra.mxu0 %v951
      %v2671 = vpop.f32.mrf.mxu0
      %v2672 = vadd.f32 %v2367, %v2671
      %v2673 = vpop.f32.mrf.mxu0
      %v2674 = vpop.f32.mrf.mxu0
      %v2675 = vadd.f32 %v2370, %v2674
      %v2676 = vpop.f32.mrf.mxu0
      %2677 = vmatprep.mubr.bf16.mxu0 %v1132
      %2678 = vmatmul.mubr.bf16.gmra.mxu0 %v952
      %v2679 = vpop.f32.mrf.mxu0
      %v2680 = vadd.f32 %v2375, %v2679
      %v2681 = vpop.f32.mrf.mxu0
      %v2682 = vpop.f32.mrf.mxu0
      %v2683 = vadd.f32 %v2378, %v2682
      %v2684 = vpop.f32.mrf.mxu0
      %2685 = vmatprep.mubr.bf16.mxu0 %v1144
      %2686 = vmatmul.mubr.bf16.gmra.mxu0 %v953
      %v2687 = vpop.f32.mrf.mxu0
      %v2688 = vadd.f32 %v2383, %v2687
      %v2689 = vpop.f32.mrf.mxu0
      %v2690 = vpop.f32.mrf.mxu0
      %v2691 = vadd.f32 %v2386, %v2690
      %v2692 = vpop.f32.mrf.mxu0
      %2693 = vmatprep.mubr.bf16.mxu0 %v1156
      %2694 = vmatmul.mubr.bf16.gmra.mxu0 %v954
      %v2695 = vpop.f32.mrf.mxu0
      %v2696 = vadd.f32 %v2391, %v2695
      %v2697 = vpop.f32.mrf.mxu0
      %v2698 = vpop.f32.mrf.mxu0
      %v2699 = vadd.f32 %v2394, %v2698
      %v2700 = vpop.f32.mrf.mxu0
      %2701 = vmatprep.mubr.bf16.mxu0 %v1168
      %2702 = vmatmul.mubr.bf16.gmra.mxu0 %v955
      %v2703 = vpop.f32.mrf.mxu0
      %v2704 = vadd.f32 %v2399, %v2703
      %v2705 = vpop.f32.mrf.mxu0
      %v2706 = vpop.f32.mrf.mxu0
      %v2707 = vadd.f32 %v2402, %v2706
      %v2708 = vpop.f32.mrf.mxu0
      %2709 = vmatprep.mubr.bf16.mxu0 %v1180
      %2710 = vmatmul.mubr.bf16.gmra.mxu0 %v956
      %v2711 = vpop.f32.mrf.mxu0
      %v2712 = vadd.f32 %v2407, %v2711
      %v2713 = vpop.f32.mrf.mxu0
      %v2714 = vpop.f32.mrf.mxu0
      %v2715 = vadd.f32 %v2410, %v2714
      %v2716 = vpop.f32.mrf.mxu0
      %2717 = vmatprep.mubr.bf16.mxu0 %v1192
      %2718 = vmatmul.mubr.bf16.gmra.mxu0 %v957
      %v2719 = vpop.f32.mrf.mxu0
      %v2720 = vadd.f32 %v2415, %v2719
      %v2721 = vpop.f32.mrf.mxu0
      %v2722 = vpop.f32.mrf.mxu0
      %v2723 = vadd.f32 %v2418, %v2722
      %v2724 = vpop.f32.mrf.mxu0
      %2725 = vmatprep.mubr.bf16.mxu0 %v1204
      %2726 = vmatmul.mubr.bf16.gmra.mxu0 %v958
      %v2727 = vpop.f32.mrf.mxu0
      %v2728 = vadd.f32 %v2423, %v2727
      %v2729 = vpop.f32.mrf.mxu0
      %v2730 = vpop.f32.mrf.mxu0
      %v2731 = vadd.f32 %v2426, %v2730
      %v2732 = vpop.f32.mrf.mxu0
      %2733 = vmatprep.mubr.bf16.mxu0 %v1216
      %2734 = vmatmul.mubr.bf16.gmra.mxu0 %v959
      %v2735 = vpop.f32.mrf.mxu0
      %v2736 = vadd.f32 %v2431, %v2735
      %v2737 = vpop.f32.mrf.mxu0
      %v2738 = vpop.f32.mrf.mxu0
      %v2739 = vadd.f32 %v2434, %v2738
      %v2740 = vpop.f32.mrf.mxu0
      %2741 = vdwg.mxu0
      %2742 = vmatprep.subr.bf16.mxu0 0
      %2743 = vmatpush1.bf16.msra.mxu0 %v2556
      %2744 = vmatprep.subr.bf16.mxu0 0
      %2745 = vmatpush1.bf16.msra.mxu0 %v2555
      %2746 = vmatprep.subr.bf16.mxu0 0
      %2747 = vmatpush1.bf16.msra.mxu0 %v2554
      %2748 = vmatprep.subr.bf16.mxu0 0
      %2749 = vmatpush1.bf16.msra.mxu0 %v2553
      %2750 = vmatprep.subr.bf16.mxu0 0
      %2751 = vmatpush1.bf16.msra.mxu0 %v2552
      %2752 = vmatprep.subr.bf16.mxu0 0
      %2753 = vmatpush1.bf16.msra.mxu0 %v2551
      %2754 = vmatprep.subr.bf16.mxu0 0
      %2755 = vmatpush1.bf16.msra.mxu0 %v2550
      %2756 = vmatprep.subr.bf16.mxu0 0
      %2757 = vmatpush1.bf16.msra.mxu0 %v2549
      %2758 = vmatprep.subr.bf16.mxu0 0
      %2759 = vmatpush2.bf16.msra.mxu0 0
      %2760 = vmatprep.subr.bf16.mxu0 0
      %2761 = vmatpush2.bf16.msra.mxu0 0
      %2762 = vmatprep.subr.bf16.mxu0 0
      %2763 = vmatpush2.bf16.msra.mxu0 0
      %2764 = vmatprep.subr.bf16.mxu0 0
      %2765 = vmatpush2.bf16.msra.mxu0 0
      %2766 = vmatprep.subr.bf16.mxu0 0
      %2767 = vmatpush2.bf16.msra.mxu0 0
      %2768 = vmatprep.subr.bf16.mxu0 0
      %2769 = vmatpush2.bf16.msra.mxu0 0
      %2770 = vmatprep.subr.bf16.mxu0 0
      %2771 = vmatpush2.bf16.msra.mxu0 0
      %2772 = vmatprep.subr.bf16.mxu0 0
      %2773 = vmatpush2.bf16.msra.mxu0 0
      %2774 = vmatprep.mubr.bf16.mxu0 0
      %2775 = vmatmul.mubr.bf16.gmra.mxu0 %v1284
      %v2776 = vpop.f32.mrf.mxu0
      %v2777 = vadd.f32 %v2616, %v2776
      %v2778 = vpop.f32.mrf.mxu0
      %v2779 = vpop.f32.mrf.mxu0
      %v2780 = vadd.f32 %v2619, %v2779
      %v2781 = vpop.f32.mrf.mxu0
      %2782 = vmatprep.mubr.bf16.mxu0 0
      %2783 = vmatmul.mubr.bf16.gmra.mxu0 %v1287
      %v2784 = vpop.f32.mrf.mxu0
      %v2785 = vadd.f32 %v2624, %v2784
      %v2786 = vpop.f32.mrf.mxu0
      %v2787 = vpop.f32.mrf.mxu0
      %v2788 = vadd.f32 %v2627, %v2787
      %v2789 = vpop.f32.mrf.mxu0
      %2790 = vmatprep.mubr.bf16.mxu0 0
      %2791 = vmatmul.mubr.bf16.gmra.mxu0 %v1290
      %v2792 = vpop.f32.mrf.mxu0
      %v2793 = vadd.f32 %v2632, %v2792
      %v2794 = vpop.f32.mrf.mxu0
      %v2795 = vpop.f32.mrf.mxu0
      %v2796 = vadd.f32 %v2635, %v2795
      %v2797 = vpop.f32.mrf.mxu0
      %2798 = vmatprep.mubr.bf16.mxu0 0
      %2799 = vmatmul.mubr.bf16.gmra.mxu0 %v1293
      %v2800 = vpop.f32.mrf.mxu0
      %v2801 = vadd.f32 %v2640, %v2800
      %v2802 = vpop.f32.mrf.mxu0
      %v2803 = vpop.f32.mrf.mxu0
      %v2804 = vadd.f32 %v2643, %v2803
      %v2805 = vpop.f32.mrf.mxu0
      %2806 = vmatprep.mubr.bf16.mxu0 0
      %2807 = vmatmul.mubr.bf16.gmra.mxu0 %v1296
      %v2808 = vpop.f32.mrf.mxu0
      %v2809 = vadd.f32 %v2648, %v2808
      %v2810 = vpop.f32.mrf.mxu0
      %v2811 = vpop.f32.mrf.mxu0
      %v2812 = vadd.f32 %v2651, %v2811
      %v2813 = vpop.f32.mrf.mxu0
      %2814 = vmatprep.mubr.bf16.mxu0 0
      %2815 = vmatmul.mubr.bf16.gmra.mxu0 %v1299
      %v2816 = vpop.f32.mrf.mxu0
      %v2817 = vadd.f32 %v2656, %v2816
      %v2818 = vpop.f32.mrf.mxu0
      %v2819 = vpop.f32.mrf.mxu0
      %v2820 = vadd.f32 %v2659, %v2819
      %v2821 = vpop.f32.mrf.mxu0
      %2822 = vmatprep.mubr.bf16.mxu0 0
      %2823 = vmatmul.mubr.bf16.gmra.mxu0 %v1302
      %v2824 = vpop.f32.mrf.mxu0
      %v2825 = vadd.f32 %v2664, %v2824
      %v2826 = vpop.f32.mrf.mxu0
      %v2827 = vpop.f32.mrf.mxu0
      %v2828 = vadd.f32 %v2667, %v2827
      %v2829 = vpop.f32.mrf.mxu0
      %2830 = vmatprep.mubr.bf16.mxu0 0
      %2831 = vmatmul.mubr.bf16.gmra.mxu0 %v1305
      %v2832 = vpop.f32.mrf.mxu0
      %v2833 = vadd.f32 %v2672, %v2832
      %v2834 = vpop.f32.mrf.mxu0
      %v2835 = vpop.f32.mrf.mxu0
      %v2836 = vadd.f32 %v2675, %v2835
      %v2837 = vpop.f32.mrf.mxu0
      %2838 = vmatprep.mubr.bf16.mxu0 0
      %2839 = vmatmul.mubr.bf16.gmra.mxu0 %v1308
      %v2840 = vpop.f32.mrf.mxu0
      %v2841 = vadd.f32 %v2680, %v2840
      %v2842 = vpop.f32.mrf.mxu0
      %v2843 = vpop.f32.mrf.mxu0
      %v2844 = vadd.f32 %v2683, %v2843
      %v2845 = vpop.f32.mrf.mxu0
      %2846 = vmatprep.mubr.bf16.mxu0 0
      %2847 = vmatmul.mubr.bf16.gmra.mxu0 %v1311
      %v2848 = vpop.f32.mrf.mxu0
      %v2849 = vadd.f32 %v2688, %v2848
      %v2850 = vpop.f32.mrf.mxu0
      %v2851 = vpop.f32.mrf.mxu0
      %v2852 = vadd.f32 %v2691, %v2851
      %v2853 = vpop.f32.mrf.mxu0
      %2854 = vmatprep.mubr.bf16.mxu0 0
      %2855 = vmatmul.mubr.bf16.gmra.mxu0 %v1314
      %v2856 = vpop.f32.mrf.mxu0
      %v2857 = vadd.f32 %v2696, %v2856
      %v2858 = vpop.f32.mrf.mxu0
      %v2859 = vpop.f32.mrf.mxu0
      %v2860 = vadd.f32 %v2699, %v2859
      %v2861 = vpop.f32.mrf.mxu0
      %2862 = vmatprep.mubr.bf16.mxu0 0
      %2863 = vmatmul.mubr.bf16.gmra.mxu0 %v1317
      %v2864 = vpop.f32.mrf.mxu0
      %v2865 = vadd.f32 %v2704, %v2864
      %v2866 = vpop.f32.mrf.mxu0
      %v2867 = vpop.f32.mrf.mxu0
      %v2868 = vadd.f32 %v2707, %v2867
      %v2869 = vpop.f32.mrf.mxu0
      %2870 = vmatprep.mubr.bf16.mxu0 0
      %2871 = vmatmul.mubr.bf16.gmra.mxu0 %v1320
      %v2872 = vpop.f32.mrf.mxu0
      %v2873 = vadd.f32 %v2712, %v2872
      %v2874 = vpop.f32.mrf.mxu0
      %v2875 = vpop.f32.mrf.mxu0
      %v2876 = vadd.f32 %v2715, %v2875
      %v2877 = vpop.f32.mrf.mxu0
      %2878 = vmatprep.mubr.bf16.mxu0 0
      %2879 = vmatmul.mubr.bf16.gmra.mxu0 %v1323
      %v2880 = vpop.f32.mrf.mxu0
      %v2881 = vadd.f32 %v2720, %v2880
      %v2882 = vpop.f32.mrf.mxu0
      %v2883 = vpop.f32.mrf.mxu0
      %v2884 = vadd.f32 %v2723, %v2883
      %v2885 = vpop.f32.mrf.mxu0
      %2886 = vmatprep.mubr.bf16.mxu0 0
      %2887 = vmatmul.mubr.bf16.gmra.mxu0 %v1326
      %v2888 = vpop.f32.mrf.mxu0
      %v2889 = vadd.f32 %v2728, %v2888
      %v2890 = vpop.f32.mrf.mxu0
      %v2891 = vpop.f32.mrf.mxu0
      %v2892 = vadd.f32 %v2731, %v2891
      %v2893 = vpop.f32.mrf.mxu0
      %2894 = vmatprep.mubr.bf16.mxu0 0
      %2895 = vmatmul.mubr.bf16.gmra.mxu0 %v1329
      %v2896 = vpop.f32.mrf.mxu0
      %v2897 = vadd.f32 %v2736, %v2896
      %v2898 = vpop.f32.mrf.mxu0
      %v2899 = vpop.f32.mrf.mxu0
      %v2900 = vadd.f32 %v2739, %v2899
      %v2901 = vpop.f32.mrf.mxu0
      %2902 = vdwg.mxu0
      %s2903 = scalar_lea.vmem [#allocation2], 24
      %v2904 = vld [vmem:[%s2903] sm:$0xf]
      %v2905 = vld [vmem:[%s2903 + $0x4] sm:$0xf]
      %v2906 = vld [vmem:[%s2903 + $0xc] sm:$0xf]
      %v2907 = vld [vmem:[%s2903 + $0x10] sm:$0xf]
      %v2908 = vld [vmem:[%s2903 + $0x18] sm:$0xf]
      %v2909 = vld [vmem:[%s2903 + $0x1c] sm:$0xf]
      %v2910 = vld [vmem:[%s2903 + $0x24] sm:$0xf]
      %v2911 = vld [vmem:[%s2903 + $0x28] sm:$0xf]
      %v2912 = vld [vmem:[%s2903 + $0x30] sm:$0xf]
      %v2913 = vld [vmem:[%s2903 + $0x34] sm:$0xf]
      %v2914 = vld [vmem:[%s2903 + $0x3c] sm:$0xf]
      %v2915 = vld [vmem:[%s2903 + $0x40] sm:$0xf]
      %v2916 = vld [vmem:[%s2903 + $0x48] sm:$0xf]
      %v2917 = vld [vmem:[%s2903 + $0x4c] sm:$0xf]
      %v2918 = vld [vmem:[%s2903 + $0x54] sm:$0xf]
      %v2919 = vld [vmem:[%s2903 + $0x58] sm:$0xf]
      %v2920 = vld [vmem:[%s2903 + $0x60] sm:$0xf]
      %v2921 = vld [vmem:[%s2903 + $0x64] sm:$0xf]
      %v2922 = vld [vmem:[%s2903 + $0x6c] sm:$0xf]
      %v2923 = vld [vmem:[%s2903 + $0x70] sm:$0xf]
      %v2924 = vld [vmem:[%s2903 + $0x78] sm:$0xf]
      %v2925 = vld [vmem:[%s2903 + $0x7c] sm:$0xf]
      %v2926 = vld [vmem:[%s2903 + $0x84] sm:$0xf]
      %v2927 = vld [vmem:[%s2903 + $0x88] sm:$0xf]
      %v2928 = vld [vmem:[%s2903 + $0x90] sm:$0xf]
      %v2929 = vld [vmem:[%s2903 + $0x94] sm:$0xf]
      %v2930 = vld [vmem:[%s2903 + $0x9c] sm:$0xf]
      %v2931 = vld [vmem:[%s2903 + $0xa0] sm:$0xf]
      %v2932 = vld [vmem:[%s2903 + $0xa8] sm:$0xf]
      %v2933 = vld [vmem:[%s2903 + $0xac] sm:$0xf]
      %v2934 = vld [vmem:[%s2903 + $0xb4] sm:$0xf]
      %v2935 = vld [vmem:[%s2903 + $0xb8] sm:$0xf]
      %v2936 = vld [vmem:[%s2903 + $0x8] sm:$0x1]
      %v2937 = vld [vmem:[%s2903 + $0x14] sm:$0x1]
      %v2938 = vld [vmem:[%s2903 + $0x20] sm:$0x1]
      %v2939 = vld [vmem:[%s2903 + $0x2c] sm:$0x1]
      %v2940 = vld [vmem:[%s2903 + $0x38] sm:$0x1]
      %v2941 = vld [vmem:[%s2903 + $0x44] sm:$0x1]
      %v2942 = vld [vmem:[%s2903 + $0x50] sm:$0x1]
      %v2943 = vld [vmem:[%s2903 + $0x5c] sm:$0x1]
      %v2944 = vld [vmem:[%s2903 + $0x68] sm:$0x1]
      %v2945 = vld [vmem:[%s2903 + $0x74] sm:$0x1]
      %v2946 = vld [vmem:[%s2903 + $0x80] sm:$0x1]
      %v2947 = vld [vmem:[%s2903 + $0x8c] sm:$0x1]
      %v2948 = vld [vmem:[%s2903 + $0x98] sm:$0x1]
      %v2949 = vld [vmem:[%s2903 + $0xa4] sm:$0x1]
      %v2950 = vld [vmem:[%s2903 + $0xb0] sm:$0x1]
      %v2951 = vld [vmem:[%s2903 + $0xbc] sm:$0x1]
      %v2952 = vld [vmem:[%s2903] sm:$0xe]
      %v2953 = vld [vmem:[%s2903 + $0xc] sm:$0xe]
      %v2954 = vld [vmem:[%s2903 + $0x18] sm:$0xe]
      %v2955 = vld [vmem:[%s2903 + $0x24] sm:$0xe]
      %v2956 = vld [vmem:[%s2903 + $0x30] sm:$0xe]
      %v2957 = vld [vmem:[%s2903 + $0x3c] sm:$0xe]
      %v2958 = vld [vmem:[%s2903 + $0x48] sm:$0xe]
      %v2959 = vld [vmem:[%s2903 + $0x54] sm:$0xe]
      %v2960 = vld [vmem:[%s2903 + $0x60] sm:$0xe]
      %v2961 = vld [vmem:[%s2903 + $0x6c] sm:$0xe]
      %v2962 = vld [vmem:[%s2903 + $0x78] sm:$0xe]
      %v2963 = vld [vmem:[%s2903 + $0x84] sm:$0xe]
      %v2964 = vld [vmem:[%s2903 + $0x90] sm:$0xe]
      %v2965 = vld [vmem:[%s2903 + $0x9c] sm:$0xe]
      %v2966 = vld [vmem:[%s2903 + $0xa8] sm:$0xe]
      %v2967 = vld [vmem:[%s2903 + $0xb4] sm:$0xe]
      %v3000 = vunpack.c.l.b16 %v2904
      %v3001 = vunpack.c.l.b16 %v2905
      %v3002 = vunpack.c.l.b16 %v2906
      %v3003 = vunpack.c.l.b16 %v2907
      %v3004 = vunpack.c.l.b16 %v2908
      %v3005 = vunpack.c.l.b16 %v2909
      %v3006 = vunpack.c.l.b16 %v2910
      %v3007 = vunpack.c.l.b16 %v2911
      %v3008 = vunpack.c.l.b16 %v2912
      %v3009 = vunpack.c.l.b16 %v2913
      %v3010 = vunpack.c.l.b16 %v2914
      %v3011 = vunpack.c.l.b16 %v2915
      %v3012 = vunpack.c.l.b16 %v2916
      %v3013 = vunpack.c.l.b16 %v2917
      %v3014 = vunpack.c.l.b16 %v2918
      %v3015 = vunpack.c.l.b16 %v2919
      %v3016 = vunpack.c.l.b16 %v2920
      %v3017 = vunpack.c.l.b16 %v2921
      %v3018 = vunpack.c.l.b16 %v2922
      %v3019 = vunpack.c.l.b16 %v2923
      %v3020 = vunpack.c.l.b16 %v2924
      %v3021 = vunpack.c.l.b16 %v2925
      %v3022 = vunpack.c.l.b16 %v2926
      %v3023 = vunpack.c.l.b16 %v2927
      %v3024 = vunpack.c.l.b16 %v2928
      %v3025 = vunpack.c.l.b16 %v2929
      %v3026 = vunpack.c.l.b16 %v2930
      %v3027 = vunpack.c.l.b16 %v2931
      %v3028 = vunpack.c.l.b16 %v2932
      %v3029 = vunpack.c.l.b16 %v2933
      %v3030 = vunpack.c.l.b16 %v2934
      %v3031 = vunpack.c.l.b16 %v2935
      %v3032 = vpack.c.b16 %v3001, %v3000
      %v3033 = vpack.c.b16 %v3003, %v3002
      %v3034 = vpack.c.b16 %v3005, %v3004
      %v3035 = vpack.c.b16 %v3007, %v3006
      %v3036 = vpack.c.b16 %v3009, %v3008
      %v3037 = vpack.c.b16 %v3011, %v3010
      %v3038 = vpack.c.b16 %v3013, %v3012
      %v3039 = vpack.c.b16 %v3015, %v3014
      %v3040 = vpack.c.b16 %v3017, %v3016
      %v3041 = vpack.c.b16 %v3019, %v3018
      %v3042 = vpack.c.b16 %v3021, %v3020
      %v3043 = vpack.c.b16 %v3023, %v3022
      %v3044 = vpack.c.b16 %v3025, %v3024
      %v3045 = vpack.c.b16 %v3027, %v3026
      %v3046 = vpack.c.b16 %v3029, %v3028
      %v3047 = vpack.c.b16 %v3031, %v3030
      %v3080 = vunpack.c.l.b16 %v2936
      %v3081 = vunpack.c.l.b16 %v2937
      %v3082 = vunpack.c.l.b16 %v2938
      %v3083 = vunpack.c.l.b16 %v2939
      %v3084 = vunpack.c.l.b16 %v2940
      %v3085 = vunpack.c.l.b16 %v2941
      %v3086 = vunpack.c.l.b16 %v2942
      %v3087 = vunpack.c.l.b16 %v2943
      %v3088 = vunpack.c.l.b16 %v2944
      %v3089 = vunpack.c.l.b16 %v2945
      %v3090 = vunpack.c.l.b16 %v2946
      %v3091 = vunpack.c.l.b16 %v2947
      %v3092 = vunpack.c.l.b16 %v2948
      %v3093 = vunpack.c.l.b16 %v2949
      %v3094 = vunpack.c.l.b16 %v2950
      %v3095 = vunpack.c.l.b16 %v2951
      %v3096 = vpack.c.b16 %v3080, %v3080
      %v3097 = vpack.c.b16 %v3081, %v3081
      %v3098 = vpack.c.b16 %v3082, %v3082
      %v3099 = vpack.c.b16 %v3083, %v3083
      %v3100 = vpack.c.b16 %v3084, %v3084
      %v3101 = vpack.c.b16 %v3085, %v3085
      %v3102 = vpack.c.b16 %v3086, %v3086
      %v3103 = vpack.c.b16 %v3087, %v3087
      %v3104 = vpack.c.b16 %v3088, %v3088
      %v3105 = vpack.c.b16 %v3089, %v3089
      %v3106 = vpack.c.b16 %v3090, %v3090
      %v3107 = vpack.c.b16 %v3091, %v3091
      %v3108 = vpack.c.b16 %v3092, %v3092
      %v3109 = vpack.c.b16 %v3093, %v3093
      %v3110 = vpack.c.b16 %v3094, %v3094
      %v3111 = vpack.c.b16 %v3095, %v3095
      %v3113 = vshrl.u32 %v3032, 16
      %v3115 = vshll.u32 %v3032, 16
      %v3117 = vrot.slane %v3115, 1
      %v3118 = vor.u32 %v3113, %v3117
      %v3120 = vshll.u32 %v3096, 16
      %v3122 = vrot.slane %v3120, 1
      %v3123 = vsel %vm1024, %v3118, %v3122
      %v3125 = vshrl.u32 %v3033, 16
      %v3127 = vshll.u32 %v3033, 16
      %v3129 = vrot.slane %v3127, 1
      %v3130 = vor.u32 %v3125, %v3129
      %v3132 = vshll.u32 %v3097, 16
      %v3134 = vrot.slane %v3132, 1
      %v3135 = vsel %vm1024, %v3130, %v3134
      %v3137 = vshrl.u32 %v3034, 16
      %v3139 = vshll.u32 %v3034, 16
      %v3141 = vrot.slane %v3139, 1
      %v3142 = vor.u32 %v3137, %v3141
      %v3144 = vshll.u32 %v3098, 16
      %v3146 = vrot.slane %v3144, 1
      %v3147 = vsel %vm1024, %v3142, %v3146
      %v3149 = vshrl.u32 %v3035, 16
      %v3151 = vshll.u32 %v3035, 16
      %v3153 = vrot.slane %v3151, 1
      %v3154 = vor.u32 %v3149, %v3153
      %v3156 = vshll.u32 %v3099, 16
      %v3158 = vrot.slane %v3156, 1
      %v3159 = vsel %vm1024, %v3154, %v3158
      %v3161 = vshrl.u32 %v3036, 16
      %v3163 = vshll.u32 %v3036, 16
      %v3165 = vrot.slane %v3163, 1
      %v3166 = vor.u32 %v3161, %v3165
      %v3168 = vshll.u32 %v3100, 16
      %v3170 = vrot.slane %v3168, 1
      %v3171 = vsel %vm1024, %v3166, %v3170
      %v3173 = vshrl.u32 %v3037, 16
      %v3175 = vshll.u32 %v3037, 16
      %v3177 = vrot.slane %v3175, 1
      %v3178 = vor.u32 %v3173, %v3177
      %v3180 = vshll.u32 %v3101, 16
      %v3182 = vrot.slane %v3180, 1
      %v3183 = vsel %vm1024, %v3178, %v3182
      %v3185 = vshrl.u32 %v3038, 16
      %v3187 = vshll.u32 %v3038, 16
      %v3189 = vrot.slane %v3187, 1
      %v3190 = vor.u32 %v3185, %v3189
      %v3192 = vshll.u32 %v3102, 16
      %v3194 = vrot.slane %v3192, 1
      %v3195 = vsel %vm1024, %v3190, %v3194
      %v3197 = vshrl.u32 %v3039, 16
      %v3199 = vshll.u32 %v3039, 16
      %v3201 = vrot.slane %v3199, 1
      %v3202 = vor.u32 %v3197, %v3201
      %v3204 = vshll.u32 %v3103, 16
      %v3206 = vrot.slane %v3204, 1
      %v3207 = vsel %vm1024, %v3202, %v3206
      %v3209 = vshrl.u32 %v3040, 16
      %v3211 = vshll.u32 %v3040, 16
      %v3213 = vrot.slane %v3211, 1
      %v3214 = vor.u32 %v3209, %v3213
      %v3216 = vshll.u32 %v3104, 16
      %v3218 = vrot.slane %v3216, 1
      %v3219 = vsel %vm1024, %v3214, %v3218
      %v3221 = vshrl.u32 %v3041, 16
      %v3223 = vshll.u32 %v3041, 16
      %v3225 = vrot.slane %v3223, 1
      %v3226 = vor.u32 %v3221, %v3225
      %v3228 = vshll.u32 %v3105, 16
      %v3230 = vrot.slane %v3228, 1
      %v3231 = vsel %vm1024, %v3226, %v3230
      %v3233 = vshrl.u32 %v3042, 16
      %v3235 = vshll.u32 %v3042, 16
      %v3237 = vrot.slane %v3235, 1
      %v3238 = vor.u32 %v3233, %v3237
      %v3240 = vshll.u32 %v3106, 16
      %v3242 = vrot.slane %v3240, 1
      %v3243 = vsel %vm1024, %v3238, %v3242
      %v3245 = vshrl.u32 %v3043, 16
      %v3247 = vshll.u32 %v3043, 16
      %v3249 = vrot.slane %v3247, 1
      %v3250 = vor.u32 %v3245, %v3249
      %v3252 = vshll.u32 %v3107, 16
      %v3254 = vrot.slane %v3252, 1
      %v3255 = vsel %vm1024, %v3250, %v3254
      %v3257 = vshrl.u32 %v3044, 16
      %v3259 = vshll.u32 %v3044, 16
      %v3261 = vrot.slane %v3259, 1
      %v3262 = vor.u32 %v3257, %v3261
      %v3264 = vshll.u32 %v3108, 16
      %v3266 = vrot.slane %v3264, 1
      %v3267 = vsel %vm1024, %v3262, %v3266
      %v3269 = vshrl.u32 %v3045, 16
      %v3271 = vshll.u32 %v3045, 16
      %v3273 = vrot.slane %v3271, 1
      %v3274 = vor.u32 %v3269, %v3273
      %v3276 = vshll.u32 %v3109, 16
      %v3278 = vrot.slane %v3276, 1
      %v3279 = vsel %vm1024, %v3274, %v3278
      %v3281 = vshrl.u32 %v3046, 16
      %v3283 = vshll.u32 %v3046, 16
      %v3285 = vrot.slane %v3283, 1
      %v3286 = vor.u32 %v3281, %v3285
      %v3288 = vshll.u32 %v3110, 16
      %v3290 = vrot.slane %v3288, 1
      %v3291 = vsel %vm1024, %v3286, %v3290
      %v3293 = vshrl.u32 %v3047, 16
      %v3295 = vshll.u32 %v3047, 16
      %v3297 = vrot.slane %v3295, 1
      %v3298 = vor.u32 %v3293, %v3297
      %v3300 = vshll.u32 %v3111, 16
      %v3302 = vrot.slane %v3300, 1
      %v3303 = vsel %vm1024, %v3298, %v3302
      %v3336 = vunpack.c.l.b16 %v2952
      %v3337 = vunpack.c.l.b16 %v2953
      %v3338 = vunpack.c.l.b16 %v2954
      %v3339 = vunpack.c.l.b16 %v2955
      %v3340 = vunpack.c.l.b16 %v2956
      %v3341 = vunpack.c.l.b16 %v2957
      %v3342 = vunpack.c.l.b16 %v2958
      %v3343 = vunpack.c.l.b16 %v2959
      %v3344 = vunpack.c.l.b16 %v2960
      %v3345 = vunpack.c.l.b16 %v2961
      %v3346 = vunpack.c.l.b16 %v2962
      %v3347 = vunpack.c.l.b16 %v2963
      %v3348 = vunpack.c.l.b16 %v2964
      %v3349 = vunpack.c.l.b16 %v2965
      %v3350 = vunpack.c.l.b16 %v2966
      %v3351 = vunpack.c.l.b16 %v2967
      %v3352 = vpack.c.b16 %v3001, %v3336
      %v3353 = vpack.c.b16 %v3003, %v3337
      %v3354 = vpack.c.b16 %v3005, %v3338
      %v3355 = vpack.c.b16 %v3007, %v3339
      %v3356 = vpack.c.b16 %v3009, %v3340
      %v3357 = vpack.c.b16 %v3011, %v3341
      %v3358 = vpack.c.b16 %v3013, %v3342
      %v3359 = vpack.c.b16 %v3015, %v3343
      %v3360 = vpack.c.b16 %v3017, %v3344
      %v3361 = vpack.c.b16 %v3019, %v3345
      %v3362 = vpack.c.b16 %v3021, %v3346
      %v3363 = vpack.c.b16 %v3023, %v3347
      %v3364 = vpack.c.b16 %v3025, %v3348
      %v3365 = vpack.c.b16 %v3027, %v3349
      %v3366 = vpack.c.b16 %v3029, %v3350
      %v3367 = vpack.c.b16 %v3031, %v3351
      %v3368 = vrot.slane %v3352, 1
      %v3369 = vrot.slane %v3096, 1
      %v3370 = vsel %vm1281, %v3368, %v3369
      %v3371 = vrot.slane %v3353, 1
      %v3372 = vrot.slane %v3097, 1
      %v3373 = vsel %vm1281, %v3371, %v3372
      %v3374 = vrot.slane %v3354, 1
      %v3375 = vrot.slane %v3098, 1
      %v3376 = vsel %vm1281, %v3374, %v3375
      %v3377 = vrot.slane %v3355, 1
      %v3378 = vrot.slane %v3099, 1
      %v3379 = vsel %vm1281, %v3377, %v3378
      %v3380 = vrot.slane %v3356, 1
      %v3381 = vrot.slane %v3100, 1
      %v3382 = vsel %vm1281, %v3380, %v3381
      %v3383 = vrot.slane %v3357, 1
      %v3384 = vrot.slane %v3101, 1
      %v3385 = vsel %vm1281, %v3383, %v3384
      %v3386 = vrot.slane %v3358, 1
      %v3387 = vrot.slane %v3102, 1
      %v3388 = vsel %vm1281, %v3386, %v3387
      %v3389 = vrot.slane %v3359, 1
      %v3390 = vrot.slane %v3103, 1
      %v3391 = vsel %vm1281, %v3389, %v3390
      %v3392 = vrot.slane %v3360, 1
      %v3393 = vrot.slane %v3104, 1
      %v3394 = vsel %vm1281, %v3392, %v3393
      %v3395 = vrot.slane %v3361, 1
      %v3396 = vrot.slane %v3105, 1
      %v3397 = vsel %vm1281, %v3395, %v3396
      %v3398 = vrot.slane %v3362, 1
      %v3399 = vrot.slane %v3106, 1
      %v3400 = vsel %vm1281, %v3398, %v3399
      %v3401 = vrot.slane %v3363, 1
      %v3402 = vrot.slane %v3107, 1
      %v3403 = vsel %vm1281, %v3401, %v3402
      %v3404 = vrot.slane %v3364, 1
      %v3405 = vrot.slane %v3108, 1
      %v3406 = vsel %vm1281, %v3404, %v3405
      %v3407 = vrot.slane %v3365, 1
      %v3408 = vrot.slane %v3109, 1
      %v3409 = vsel %vm1281, %v3407, %v3408
      %v3410 = vrot.slane %v3366, 1
      %v3411 = vrot.slane %v3110, 1
      %v3412 = vsel %vm1281, %v3410, %v3411
      %v3413 = vrot.slane %v3367, 1
      %v3414 = vrot.slane %v3111, 1
      %v3415 = vsel %vm1281, %v3413, %v3414
      %s3432 = scalar_lea.vmem %s3, 384
      %v3433 = vld [vmem:[%s3432] sm:$0xf]
      %v3434 = vld [vmem:[%s3432 + $0x4] sm:$0xf]
      %v3435 = vld [vmem:[%s3432 + $0x8] sm:$0xf]
      %v3436 = vld [vmem:[%s3432 + $0xc] sm:$0xf]
      %v3437 = vld [vmem:[%s3432 + $0x10] sm:$0xf]
      %v3438 = vld [vmem:[%s3432 + $0x14] sm:$0xf]
      %v3439 = vld [vmem:[%s3432 + $0x18] sm:$0xf]
      %v3440 = vld [vmem:[%s3432 + $0x1c] sm:$0xf]
      %v3441 = vld [vmem:[%s3432 + $0x20] sm:$0xf]
      %v3442 = vld [vmem:[%s3432 + $0x24] sm:$0xf]
      %v3443 = vld [vmem:[%s3432 + $0x28] sm:$0xf]
      %v3444 = vld [vmem:[%s3432 + $0x2c] sm:$0xf]
      %v3445 = vld [vmem:[%s3432 + $0x30] sm:$0xf]
      %v3446 = vld [vmem:[%s3432 + $0x34] sm:$0xf]
      %v3447 = vld [vmem:[%s3432 + $0x38] sm:$0xf]
      %v3448 = vld [vmem:[%s3432 + $0x3c] sm:$0xf]
      %v3449 = vld [vmem:[%s3432 + $0x40] sm:$0xf]
      %v3450 = vld [vmem:[%s3432 + $0x44] sm:$0xf]
      %v3451 = vld [vmem:[%s3432 + $0x48] sm:$0xf]
      %v3452 = vld [vmem:[%s3432 + $0x4c] sm:$0xf]
      %v3453 = vld [vmem:[%s3432 + $0x50] sm:$0xf]
      %v3454 = vld [vmem:[%s3432 + $0x54] sm:$0xf]
      %v3455 = vld [vmem:[%s3432 + $0x58] sm:$0xf]
      %v3456 = vld [vmem:[%s3432 + $0x5c] sm:$0xf]
      %v3457 = vld [vmem:[%s3432 + $0x60] sm:$0xf]
      %v3458 = vld [vmem:[%s3432 + $0x64] sm:$0xf]
      %v3459 = vld [vmem:[%s3432 + $0x68] sm:$0xf]
      %v3460 = vld [vmem:[%s3432 + $0x6c] sm:$0xf]
      %v3461 = vld [vmem:[%s3432 + $0x70] sm:$0xf]
      %v3462 = vld [vmem:[%s3432 + $0x74] sm:$0xf]
      %v3463 = vld [vmem:[%s3432 + $0x78] sm:$0xf]
      %v3464 = vld [vmem:[%s3432 + $0x7c] sm:$0xf]
      %v3465 = vld [vmem:[%s3432 + $0x80] sm:$0xf]
      %v3466 = vld [vmem:[%s3432 + $0x84] sm:$0xf]
      %v3467 = vld [vmem:[%s3432 + $0x88] sm:$0xf]
      %v3468 = vld [vmem:[%s3432 + $0x8c] sm:$0xf]
      %v3469 = vld [vmem:[%s3432 + $0x90] sm:$0xf]
      %v3470 = vld [vmem:[%s3432 + $0x94] sm:$0xf]
      %v3471 = vld [vmem:[%s3432 + $0x98] sm:$0xf]
      %v3472 = vld [vmem:[%s3432 + $0x9c] sm:$0xf]
      %v3473 = vld [vmem:[%s3432 + $0xa0] sm:$0xf]
      %v3474 = vld [vmem:[%s3432 + $0xa4] sm:$0xf]
      %v3475 = vld [vmem:[%s3432 + $0xa8] sm:$0xf]
      %v3476 = vld [vmem:[%s3432 + $0xac] sm:$0xf]
      %v3477 = vld [vmem:[%s3432 + $0xb0] sm:$0xf]
      %v3478 = vld [vmem:[%s3432 + $0xb4] sm:$0xf]
      %v3479 = vld [vmem:[%s3432 + $0xb8] sm:$0xf]
      %v3480 = vld [vmem:[%s3432 + $0xbc] sm:$0xf]
      %v3529 = vunpack.c.l.b16 %v3433
      %v3530 = vunpack.c.l.b16 %v3434
      %v3531 = vunpack.c.l.b16 %v3435
      %v3532 = vunpack.c.l.b16 %v3436
      %v3533 = vunpack.c.l.b16 %v3437
      %v3534 = vunpack.c.l.b16 %v3438
      %v3535 = vunpack.c.l.b16 %v3439
      %v3536 = vunpack.c.l.b16 %v3440
      %v3537 = vunpack.c.l.b16 %v3441
      %v3538 = vunpack.c.l.b16 %v3442
      %v3539 = vunpack.c.l.b16 %v3443
      %v3540 = vunpack.c.l.b16 %v3444
      %v3541 = vunpack.c.l.b16 %v3445
      %v3542 = vunpack.c.l.b16 %v3446
      %v3543 = vunpack.c.l.b16 %v3447
      %v3544 = vunpack.c.l.b16 %v3448
      %v3545 = vunpack.c.l.b16 %v3449
      %v3546 = vunpack.c.l.b16 %v3450
      %v3547 = vunpack.c.l.b16 %v3451
      %v3548 = vunpack.c.l.b16 %v3452
      %v3549 = vunpack.c.l.b16 %v3453
      %v3550 = vunpack.c.l.b16 %v3454
      %v3551 = vunpack.c.l.b16 %v3455
      %v3552 = vunpack.c.l.b16 %v3456
      %v3553 = vunpack.c.l.b16 %v3457
      %v3554 = vunpack.c.l.b16 %v3458
      %v3555 = vunpack.c.l.b16 %v3459
      %v3556 = vunpack.c.l.b16 %v3460
      %v3557 = vunpack.c.l.b16 %v3461
      %v3558 = vunpack.c.l.b16 %v3462
      %v3559 = vunpack.c.l.b16 %v3463
      %v3560 = vunpack.c.l.b16 %v3464
      %v3561 = vunpack.c.l.b16 %v3465
      %v3562 = vunpack.c.l.b16 %v3466
      %v3563 = vunpack.c.l.b16 %v3467
      %v3564 = vunpack.c.l.b16 %v3468
      %v3565 = vunpack.c.l.b16 %v3469
      %v3566 = vunpack.c.l.b16 %v3470
      %v3567 = vunpack.c.l.b16 %v3471
      %v3568 = vunpack.c.l.b16 %v3472
      %v3569 = vunpack.c.l.b16 %v3473
      %v3570 = vunpack.c.l.b16 %v3474
      %v3571 = vunpack.c.l.b16 %v3475
      %v3572 = vunpack.c.l.b16 %v3476
      %v3573 = vunpack.c.l.b16 %v3477
      %v3574 = vunpack.c.l.b16 %v3478
      %v3575 = vunpack.c.l.b16 %v3479
      %v3576 = vunpack.c.l.b16 %v3480
      %v3577 = vpack.c.b16 %v3530, %v3529
      %v3578 = vpack.c.b16 %v3532, %v3531
      %v3579 = vpack.c.b16 %v3534, %v3533
      %v3580 = vpack.c.b16 %v3536, %v3535
      %v3581 = vpack.c.b16 %v3538, %v3537
      %v3582 = vpack.c.b16 %v3540, %v3539
      %v3583 = vpack.c.b16 %v3542, %v3541
      %v3584 = vpack.c.b16 %v3544, %v3543
      %v3585 = vpack.c.b16 %v3546, %v3545
      %v3586 = vpack.c.b16 %v3548, %v3547
      %v3587 = vpack.c.b16 %v3550, %v3549
      %v3588 = vpack.c.b16 %v3552, %v3551
      %v3589 = vpack.c.b16 %v3554, %v3553
      %v3590 = vpack.c.b16 %v3556, %v3555
      %v3591 = vpack.c.b16 %v3558, %v3557
      %v3592 = vpack.c.b16 %v3560, %v3559
      %v3593 = vpack.c.b16 %v3562, %v3561
      %v3594 = vpack.c.b16 %v3564, %v3563
      %v3595 = vpack.c.b16 %v3566, %v3565
      %v3596 = vpack.c.b16 %v3568, %v3567
      %v3597 = vpack.c.b16 %v3570, %v3569
      %v3598 = vpack.c.b16 %v3572, %v3571
      %v3599 = vpack.c.b16 %v3574, %v3573
      %v3600 = vpack.c.b16 %v3576, %v3575
      %3625 = vmatprep.subr.bf16.mxu0 0
      %3626 = vmatpush1.bf16.msra.mxu0 %v3584
      %3627 = vmatprep.subr.bf16.mxu0 0
      %3628 = vmatpush1.bf16.msra.mxu0 %v3583
      %3629 = vmatprep.subr.bf16.mxu0 0
      %3630 = vmatpush1.bf16.msra.mxu0 %v3582
      %3631 = vmatprep.subr.bf16.mxu0 0
      %3632 = vmatpush1.bf16.msra.mxu0 %v3581
      %3633 = vmatprep.subr.bf16.mxu0 0
      %3634 = vmatpush1.bf16.msra.mxu0 %v3580
      %3635 = vmatprep.subr.bf16.mxu0 0
      %3636 = vmatpush1.bf16.msra.mxu0 %v3579
      %3637 = vmatprep.subr.bf16.mxu0 0
      %3638 = vmatpush1.bf16.msra.mxu0 %v3578
      %3639 = vmatprep.subr.bf16.mxu0 0
      %3640 = vmatpush1.bf16.msra.mxu0 %v3577
      %3641 = vmatprep.subr.bf16.mxu0 0
      %3642 = vmatpush2.bf16.msra.mxu0 %v3592
      %3643 = vmatprep.subr.bf16.mxu0 0
      %3644 = vmatpush2.bf16.msra.mxu0 %v3591
      %3645 = vmatprep.subr.bf16.mxu0 0
      %3646 = vmatpush2.bf16.msra.mxu0 %v3590
      %3647 = vmatprep.subr.bf16.mxu0 0
      %3648 = vmatpush2.bf16.msra.mxu0 %v3589
      %3649 = vmatprep.subr.bf16.mxu0 0
      %3650 = vmatpush2.bf16.msra.mxu0 %v3588
      %3651 = vmatprep.subr.bf16.mxu0 0
      %3652 = vmatpush2.bf16.msra.mxu0 %v3587
      %3653 = vmatprep.subr.bf16.mxu0 0
      %3654 = vmatpush2.bf16.msra.mxu0 %v3586
      %3655 = vmatprep.subr.bf16.mxu0 0
      %3656 = vmatpush2.bf16.msra.mxu0 %v3585
      %3657 = vmatprep.mubr.bf16.mxu0 %v3123
      %3658 = vmatmul.mubr.bf16.gmra.mxu0 %v3032
      %v3659 = vpop.f32.mrf.mxu0
      %v3660 = vadd.f32 0.0, %v3659
      %v3661 = vpop.f32.mrf.mxu0
      %v3662 = vpop.f32.mrf.mxu0
      %v3663 = vadd.f32 0.0, %v3662
      %v3664 = vpop.f32.mrf.mxu0
      %3665 = vmatprep.mubr.bf16.mxu0 %v3135
      %3666 = vmatmul.mubr.bf16.gmra.mxu0 %v3033
      %v3667 = vpop.f32.mrf.mxu0
      %v3668 = vadd.f32 0.0, %v3667
      %v3669 = vpop.f32.mrf.mxu0
      %v3670 = vpop.f32.mrf.mxu0
      %v3671 = vadd.f32 0.0, %v3670
      %v3672 = vpop.f32.mrf.mxu0
      %3673 = vmatprep.mubr.bf16.mxu0 %v3147
      %3674 = vmatmul.mubr.bf16.gmra.mxu0 %v3034
      %v3675 = vpop.f32.mrf.mxu0
      %v3676 = vadd.f32 0.0, %v3675
      %v3677 = vpop.f32.mrf.mxu0
      %v3678 = vpop.f32.mrf.mxu0
      %v3679 = vadd.f32 0.0, %v3678
      %v3680 = vpop.f32.mrf.mxu0
      %3681 = vmatprep.mubr.bf16.mxu0 %v3159
      %3682 = vmatmul.mubr.bf16.gmra.mxu0 %v3035
      %v3683 = vpop.f32.mrf.mxu0
      %v3684 = vadd.f32 0.0, %v3683
      %v3685 = vpop.f32.mrf.mxu0
      %v3686 = vpop.f32.mrf.mxu0
      %v3687 = vadd.f32 0.0, %v3686
      %v3688 = vpop.f32.mrf.mxu0
      %3689 = vmatprep.mubr.bf16.mxu0 %v3171
      %3690 = vmatmul.mubr.bf16.gmra.mxu0 %v3036
      %v3691 = vpop.f32.mrf.mxu0
      %v3692 = vadd.f32 0.0, %v3691
      %v3693 = vpop.f32.mrf.mxu0
      %v3694 = vpop.f32.mrf.mxu0
      %v3695 = vadd.f32 0.0, %v3694
      %v3696 = vpop.f32.mrf.mxu0
      %3697 = vmatprep.mubr.bf16.mxu0 %v3183
      %3698 = vmatmul.mubr.bf16.gmra.mxu0 %v3037
      %v3699 = vpop.f32.mrf.mxu0
      %v3700 = vadd.f32 0.0, %v3699
      %v3701 = vpop.f32.mrf.mxu0
      %v3702 = vpop.f32.mrf.mxu0
      %v3703 = vadd.f32 0.0, %v3702
      %v3704 = vpop.f32.mrf.mxu0
      %3705 = vmatprep.mubr.bf16.mxu0 %v3195
      %3706 = vmatmul.mubr.bf16.gmra.mxu0 %v3038
      %v3707 = vpop.f32.mrf.mxu0
      %v3708 = vadd.f32 0.0, %v3707
      %v3709 = vpop.f32.mrf.mxu0
      %v3710 = vpop.f32.mrf.mxu0
      %v3711 = vadd.f32 0.0, %v3710
      %v3712 = vpop.f32.mrf.mxu0
      %3713 = vmatprep.mubr.bf16.mxu0 %v3207
      %3714 = vmatmul.mubr.bf16.gmra.mxu0 %v3039
      %v3715 = vpop.f32.mrf.mxu0
      %v3716 = vadd.f32 0.0, %v3715
      %v3717 = vpop.f32.mrf.mxu0
      %v3718 = vpop.f32.mrf.mxu0
      %v3719 = vadd.f32 0.0, %v3718
      %v3720 = vpop.f32.mrf.mxu0
      %3721 = vmatprep.mubr.bf16.mxu0 %v3219
      %3722 = vmatmul.mubr.bf16.gmra.mxu0 %v3040
      %v3723 = vpop.f32.mrf.mxu0
      %v3724 = vadd.f32 0.0, %v3723
      %v3725 = vpop.f32.mrf.mxu0
      %v3726 = vpop.f32.mrf.mxu0
      %v3727 = vadd.f32 0.0, %v3726
      %v3728 = vpop.f32.mrf.mxu0
      %3729 = vmatprep.mubr.bf16.mxu0 %v3231
      %3730 = vmatmul.mubr.bf16.gmra.mxu0 %v3041
      %v3731 = vpop.f32.mrf.mxu0
      %v3732 = vadd.f32 0.0, %v3731
      %v3733 = vpop.f32.mrf.mxu0
      %v3734 = vpop.f32.mrf.mxu0
      %v3735 = vadd.f32 0.0, %v3734
      %v3736 = vpop.f32.mrf.mxu0
      %3737 = vmatprep.mubr.bf16.mxu0 %v3243
      %3738 = vmatmul.mubr.bf16.gmra.mxu0 %v3042
      %v3739 = vpop.f32.mrf.mxu0
      %v3740 = vadd.f32 0.0, %v3739
      %v3741 = vpop.f32.mrf.mxu0
      %v3742 = vpop.f32.mrf.mxu0
      %v3743 = vadd.f32 0.0, %v3742
      %v3744 = vpop.f32.mrf.mxu0
      %3745 = vmatprep.mubr.bf16.mxu0 %v3255
      %3746 = vmatmul.mubr.bf16.gmra.mxu0 %v3043
      %v3747 = vpop.f32.mrf.mxu0
      %v3748 = vadd.f32 0.0, %v3747
      %v3749 = vpop.f32.mrf.mxu0
      %v3750 = vpop.f32.mrf.mxu0
      %v3751 = vadd.f32 0.0, %v3750
      %v3752 = vpop.f32.mrf.mxu0
      %3753 = vmatprep.mubr.bf16.mxu0 %v3267
      %3754 = vmatmul.mubr.bf16.gmra.mxu0 %v3044
      %v3755 = vpop.f32.mrf.mxu0
      %v3756 = vadd.f32 0.0, %v3755
      %v3757 = vpop.f32.mrf.mxu0
      %v3758 = vpop.f32.mrf.mxu0
      %v3759 = vadd.f32 0.0, %v3758
      %v3760 = vpop.f32.mrf.mxu0
      %3761 = vmatprep.mubr.bf16.mxu0 %v3279
      %3762 = vmatmul.mubr.bf16.gmra.mxu0 %v3045
      %v3763 = vpop.f32.mrf.mxu0
      %v3764 = vadd.f32 0.0, %v3763
      %v3765 = vpop.f32.mrf.mxu0
      %v3766 = vpop.f32.mrf.mxu0
      %v3767 = vadd.f32 0.0, %v3766
      %v3768 = vpop.f32.mrf.mxu0
      %3769 = vmatprep.mubr.bf16.mxu0 %v3291
      %3770 = vmatmul.mubr.bf16.gmra.mxu0 %v3046
      %v3771 = vpop.f32.mrf.mxu0
      %v3772 = vadd.f32 0.0, %v3771
      %v3773 = vpop.f32.mrf.mxu0
      %v3774 = vpop.f32.mrf.mxu0
      %v3775 = vadd.f32 0.0, %v3774
      %v3776 = vpop.f32.mrf.mxu0
      %3777 = vmatprep.mubr.bf16.mxu0 %v3303
      %3778 = vmatmul.mubr.bf16.gmra.mxu0 %v3047
      %v3779 = vpop.f32.mrf.mxu0
      %v3780 = vadd.f32 0.0, %v3779
      %v3781 = vpop.f32.mrf.mxu0
      %v3782 = vpop.f32.mrf.mxu0
      %v3783 = vadd.f32 0.0, %v3782
      %v3784 = vpop.f32.mrf.mxu0
      %3785 = vdwg.mxu0
      %3786 = vmatprep.subr.bf16.mxu0 0
      %3787 = vmatpush1.bf16.msra.mxu0 %v3600
      %3788 = vmatprep.subr.bf16.mxu0 0
      %3789 = vmatpush1.bf16.msra.mxu0 %v3599
      %3790 = vmatprep.subr.bf16.mxu0 0
      %3791 = vmatpush1.bf16.msra.mxu0 %v3598
      %3792 = vmatprep.subr.bf16.mxu0 0
      %3793 = vmatpush1.bf16.msra.mxu0 %v3597
      %3794 = vmatprep.subr.bf16.mxu0 0
      %3795 = vmatpush1.bf16.msra.mxu0 %v3596
      %3796 = vmatprep.subr.bf16.mxu0 0
      %3797 = vmatpush1.bf16.msra.mxu0 %v3595
      %3798 = vmatprep.subr.bf16.mxu0 0
      %3799 = vmatpush1.bf16.msra.mxu0 %v3594
      %3800 = vmatprep.subr.bf16.mxu0 0
      %3801 = vmatpush1.bf16.msra.mxu0 %v3593
      %3802 = vmatprep.subr.bf16.mxu0 0
      %3803 = vmatpush2.bf16.msra.mxu0 0
      %3804 = vmatprep.subr.bf16.mxu0 0
      %3805 = vmatpush2.bf16.msra.mxu0 0
      %3806 = vmatprep.subr.bf16.mxu0 0
      %3807 = vmatpush2.bf16.msra.mxu0 0
      %3808 = vmatprep.subr.bf16.mxu0 0
      %3809 = vmatpush2.bf16.msra.mxu0 0
      %3810 = vmatprep.subr.bf16.mxu0 0
      %3811 = vmatpush2.bf16.msra.mxu0 0
      %3812 = vmatprep.subr.bf16.mxu0 0
      %3813 = vmatpush2.bf16.msra.mxu0 0
      %3814 = vmatprep.subr.bf16.mxu0 0
      %3815 = vmatpush2.bf16.msra.mxu0 0
      %3816 = vmatprep.subr.bf16.mxu0 0
      %3817 = vmatpush2.bf16.msra.mxu0 0
      %3818 = vmatprep.mubr.bf16.mxu0 0
      %3819 = vmatmul.mubr.bf16.gmra.mxu0 %v3370
      %v3820 = vpop.f32.mrf.mxu0
      %v3821 = vadd.f32 %v3660, %v3820
      %v3822 = vpop.f32.mrf.mxu0
      %v3823 = vpop.f32.mrf.mxu0
      %v3824 = vadd.f32 %v3663, %v3823
      %v3825 = vpop.f32.mrf.mxu0
      %3826 = vmatprep.mubr.bf16.mxu0 0
      %3827 = vmatmul.mubr.bf16.gmra.mxu0 %v3373
      %v3828 = vpop.f32.mrf.mxu0
      %v3829 = vadd.f32 %v3668, %v3828
      %v3830 = vpop.f32.mrf.mxu0
      %v3831 = vpop.f32.mrf.mxu0
      %v3832 = vadd.f32 %v3671, %v3831
      %v3833 = vpop.f32.mrf.mxu0
      %3834 = vmatprep.mubr.bf16.mxu0 0
      %3835 = vmatmul.mubr.bf16.gmra.mxu0 %v3376
      %v3836 = vpop.f32.mrf.mxu0
      %v3837 = vadd.f32 %v3676, %v3836
      %v3838 = vpop.f32.mrf.mxu0
      %v3839 = vpop.f32.mrf.mxu0
      %v3840 = vadd.f32 %v3679, %v3839
      %v3841 = vpop.f32.mrf.mxu0
      %3842 = vmatprep.mubr.bf16.mxu0 0
      %3843 = vmatmul.mubr.bf16.gmra.mxu0 %v3379
      %v3844 = vpop.f32.mrf.mxu0
      %v3845 = vadd.f32 %v3684, %v3844
      %v3846 = vpop.f32.mrf.mxu0
      %v3847 = vpop.f32.mrf.mxu0
      %v3848 = vadd.f32 %v3687, %v3847
      %v3849 = vpop.f32.mrf.mxu0
      %3850 = vmatprep.mubr.bf16.mxu0 0
      %3851 = vmatmul.mubr.bf16.gmra.mxu0 %v3382
      %v3852 = vpop.f32.mrf.mxu0
      %v3853 = vadd.f32 %v3692, %v3852
      %v3854 = vpop.f32.mrf.mxu0
      %v3855 = vpop.f32.mrf.mxu0
      %v3856 = vadd.f32 %v3695, %v3855
      %v3857 = vpop.f32.mrf.mxu0
      %3858 = vmatprep.mubr.bf16.mxu0 0
      %3859 = vmatmul.mubr.bf16.gmra.mxu0 %v3385
      %v3860 = vpop.f32.mrf.mxu0
      %v3861 = vadd.f32 %v3700, %v3860
      %v3862 = vpop.f32.mrf.mxu0
      %v3863 = vpop.f32.mrf.mxu0
      %v3864 = vadd.f32 %v3703, %v3863
      %v3865 = vpop.f32.mrf.mxu0
      %3866 = vmatprep.mubr.bf16.mxu0 0
      %3867 = vmatmul.mubr.bf16.gmra.mxu0 %v3388
      %v3868 = vpop.f32.mrf.mxu0
      %v3869 = vadd.f32 %v3708, %v3868
      %v3870 = vpop.f32.mrf.mxu0
      %v3871 = vpop.f32.mrf.mxu0
      %v3872 = vadd.f32 %v3711, %v3871
      %v3873 = vpop.f32.mrf.mxu0
      %3874 = vmatprep.mubr.bf16.mxu0 0
      %3875 = vmatmul.mubr.bf16.gmra.mxu0 %v3391
      %v3876 = vpop.f32.mrf.mxu0
      %v3877 = vadd.f32 %v3716, %v3876
      %v3878 = vpop.f32.mrf.mxu0
      %v3879 = vpop.f32.mrf.mxu0
      %v3880 = vadd.f32 %v3719, %v3879
      %v3881 = vpop.f32.mrf.mxu0
      %3882 = vmatprep.mubr.bf16.mxu0 0
      %3883 = vmatmul.mubr.bf16.gmra.mxu0 %v3394
      %v3884 = vpop.f32.mrf.mxu0
      %v3885 = vadd.f32 %v3724, %v3884
      %v3886 = vpop.f32.mrf.mxu0
      %v3887 = vpop.f32.mrf.mxu0
      %v3888 = vadd.f32 %v3727, %v3887
      %v3889 = vpop.f32.mrf.mxu0
      %3890 = vmatprep.mubr.bf16.mxu0 0
      %3891 = vmatmul.mubr.bf16.gmra.mxu0 %v3397
      %v3892 = vpop.f32.mrf.mxu0
      %v3893 = vadd.f32 %v3732, %v3892
      %v3894 = vpop.f32.mrf.mxu0
      %v3895 = vpop.f32.mrf.mxu0
      %v3896 = vadd.f32 %v3735, %v3895
      %v3897 = vpop.f32.mrf.mxu0
      %3898 = vmatprep.mubr.bf16.mxu0 0
      %3899 = vmatmul.mubr.bf16.gmra.mxu0 %v3400
      %v3900 = vpop.f32.mrf.mxu0
      %v3901 = vadd.f32 %v3740, %v3900
      %v3902 = vpop.f32.mrf.mxu0
      %v3903 = vpop.f32.mrf.mxu0
      %v3904 = vadd.f32 %v3743, %v3903
      %v3905 = vpop.f32.mrf.mxu0
      %3906 = vmatprep.mubr.bf16.mxu0 0
      %3907 = vmatmul.mubr.bf16.gmra.mxu0 %v3403
      %v3908 = vpop.f32.mrf.mxu0
      %v3909 = vadd.f32 %v3748, %v3908
      %v3910 = vpop.f32.mrf.mxu0
      %v3911 = vpop.f32.mrf.mxu0
      %v3912 = vadd.f32 %v3751, %v3911
      %v3913 = vpop.f32.mrf.mxu0
      %3914 = vmatprep.mubr.bf16.mxu0 0
      %3915 = vmatmul.mubr.bf16.gmra.mxu0 %v3406
      %v3916 = vpop.f32.mrf.mxu0
      %v3917 = vadd.f32 %v3756, %v3916
      %v3918 = vpop.f32.mrf.mxu0
      %v3919 = vpop.f32.mrf.mxu0
      %v3920 = vadd.f32 %v3759, %v3919
      %v3921 = vpop.f32.mrf.mxu0
      %3922 = vmatprep.mubr.bf16.mxu0 0
      %3923 = vmatmul.mubr.bf16.gmra.mxu0 %v3409
      %v3924 = vpop.f32.mrf.mxu0
      %v3925 = vadd.f32 %v3764, %v3924
      %v3926 = vpop.f32.mrf.mxu0
      %v3927 = vpop.f32.mrf.mxu0
      %v3928 = vadd.f32 %v3767, %v3927
      %v3929 = vpop.f32.mrf.mxu0
      %3930 = vmatprep.mubr.bf16.mxu0 0
      %3931 = vmatmul.mubr.bf16.gmra.mxu0 %v3412
      %v3932 = vpop.f32.mrf.mxu0
      %v3933 = vadd.f32 %v3772, %v3932
      %v3934 = vpop.f32.mrf.mxu0
      %v3935 = vpop.f32.mrf.mxu0
      %v3936 = vadd.f32 %v3775, %v3935
      %v3937 = vpop.f32.mrf.mxu0
      %3938 = vmatprep.mubr.bf16.mxu0 0
      %3939 = vmatmul.mubr.bf16.gmra.mxu0 %v3415
      %v3940 = vpop.f32.mrf.mxu0
      %v3941 = vadd.f32 %v3780, %v3940
      %v3942 = vpop.f32.mrf.mxu0
      %v3943 = vpop.f32.mrf.mxu0
      %v3944 = vadd.f32 %v3783, %v3943
      %v3945 = vpop.f32.mrf.mxu0
      %3946 = vdwg.mxu0
      %v3947 = vadd.f32 %v2777, %v3821
      %v3948 = vadd.f32 %v2780, %v3824
      %v3949 = vadd.f32 %v2785, %v3829
      %v3950 = vadd.f32 %v2788, %v3832
      %v3951 = vadd.f32 %v2793, %v3837
      %v3952 = vadd.f32 %v2796, %v3840
      %v3953 = vadd.f32 %v2801, %v3845
      %v3954 = vadd.f32 %v2804, %v3848
      %v3955 = vadd.f32 %v2809, %v3853
      %v3956 = vadd.f32 %v2812, %v3856
      %v3957 = vadd.f32 %v2817, %v3861
      %v3958 = vadd.f32 %v2820, %v3864
      %v3959 = vadd.f32 %v2825, %v3869
      %v3960 = vadd.f32 %v2828, %v3872
      %v3961 = vadd.f32 %v2833, %v3877
      %v3962 = vadd.f32 %v2836, %v3880
      %v3963 = vadd.f32 %v2841, %v3885
      %v3964 = vadd.f32 %v2844, %v3888
      %v3965 = vadd.f32 %v2849, %v3893
      %v3966 = vadd.f32 %v2852, %v3896
      %v3967 = vadd.f32 %v2857, %v3901
      %v3968 = vadd.f32 %v2860, %v3904
      %v3969 = vadd.f32 %v2865, %v3909
      %v3970 = vadd.f32 %v2868, %v3912
      %v3971 = vadd.f32 %v2873, %v3917
      %v3972 = vadd.f32 %v2876, %v3920
      %v3973 = vadd.f32 %v2881, %v3925
      %v3974 = vadd.f32 %v2884, %v3928
      %v3975 = vadd.f32 %v2889, %v3933
      %v3976 = vadd.f32 %v2892, %v3936
      %v3977 = vadd.f32 %v2897, %v3941
      %v3978 = vadd.f32 %v2900, %v3944
      %v3979 = vpack.c.bf16 %v3948, %v3947
      %v3980 = vpack.c.bf16 %v3950, %v3949
      %v3981 = vpack.c.bf16 %v3952, %v3951
      %v3982 = vpack.c.bf16 %v3954, %v3953
      %v3983 = vpack.c.bf16 %v3956, %v3955
      %v3984 = vpack.c.bf16 %v3958, %v3957
      %v3985 = vpack.c.bf16 %v3960, %v3959
      %v3986 = vpack.c.bf16 %v3962, %v3961
      %v3987 = vpack.c.bf16 %v3964, %v3963
      %v3988 = vpack.c.bf16 %v3966, %v3965
      %v3989 = vpack.c.bf16 %v3968, %v3967
      %v3990 = vpack.c.bf16 %v3970, %v3969
      %v3991 = vpack.c.bf16 %v3972, %v3971
      %v3992 = vpack.c.bf16 %v3974, %v3973
      %v3993 = vpack.c.bf16 %v3976, %v3975
      %v3994 = vpack.c.bf16 %v3978, %v3977
      %v4011 = vunpack.c.l.b16 %v3979
      %v4012 = vunpack.c.h.b16 %v3979
      %v4013 = vunpack.c.l.b16 %v3980
      %v4014 = vunpack.c.h.b16 %v3980
      %v4015 = vunpack.c.l.b16 %v3981
      %v4016 = vunpack.c.h.b16 %v3981
      %v4017 = vunpack.c.l.b16 %v3982
      %v4018 = vunpack.c.h.b16 %v3982
      %v4019 = vunpack.c.l.b16 %v3983
      %v4020 = vunpack.c.h.b16 %v3983
      %v4021 = vunpack.c.l.b16 %v3984
      %v4022 = vunpack.c.h.b16 %v3984
      %v4023 = vunpack.c.l.b16 %v3985
      %v4024 = vunpack.c.h.b16 %v3985
      %v4025 = vunpack.c.l.b16 %v3986
      %v4026 = vunpack.c.h.b16 %v3986
      %v4027 = vunpack.c.l.b16 %v3987
      %v4028 = vunpack.c.h.b16 %v3987
      %v4029 = vunpack.c.l.b16 %v3988
      %v4030 = vunpack.c.h.b16 %v3988
      %v4031 = vunpack.c.l.b16 %v3989
      %v4032 = vunpack.c.h.b16 %v3989
      %v4033 = vunpack.c.l.b16 %v3990
      %v4034 = vunpack.c.h.b16 %v3990
      %v4035 = vunpack.c.l.b16 %v3991
      %v4036 = vunpack.c.h.b16 %v3991
      %v4037 = vunpack.c.l.b16 %v3992
      %v4038 = vunpack.c.h.b16 %v3992
      %v4039 = vunpack.c.l.b16 %v3993
      %v4040 = vunpack.c.h.b16 %v3993
      %v4041 = vunpack.c.l.b16 %v3994
      %v4042 = vunpack.c.h.b16 %v3994
      %v4043 = vpack.c.b16 %v4011, %v4011
      %v4044 = vpack.c.b16 %v4012, %v4012
      %v4045 = vpack.c.b16 %v4013, %v4013
      %v4046 = vpack.c.b16 %v4014, %v4014
      %v4047 = vpack.c.b16 %v4015, %v4015
      %v4048 = vpack.c.b16 %v4016, %v4016
      %v4049 = vpack.c.b16 %v4017, %v4017
      %v4050 = vpack.c.b16 %v4018, %v4018
      %v4051 = vpack.c.b16 %v4019, %v4019
      %v4052 = vpack.c.b16 %v4020, %v4020
      %v4053 = vpack.c.b16 %v4021, %v4021
      %v4054 = vpack.c.b16 %v4022, %v4022
      %v4055 = vpack.c.b16 %v4023, %v4023
      %v4056 = vpack.c.b16 %v4024, %v4024
      %v4057 = vpack.c.b16 %v4025, %v4025
      %v4058 = vpack.c.b16 %v4026, %v4026
      %v4059 = vpack.c.b16 %v4027, %v4027
      %v4060 = vpack.c.b16 %v4028, %v4028
      %v4061 = vpack.c.b16 %v4029, %v4029
      %v4062 = vpack.c.b16 %v4030, %v4030
      %v4063 = vpack.c.b16 %v4031, %v4031
      %v4064 = vpack.c.b16 %v4032, %v4032
      %v4065 = vpack.c.b16 %v4033, %v4033
      %v4066 = vpack.c.b16 %v4034, %v4034
      %v4067 = vpack.c.b16 %v4035, %v4035
      %v4068 = vpack.c.b16 %v4036, %v4036
      %v4069 = vpack.c.b16 %v4037, %v4037
      %v4070 = vpack.c.b16 %v4038, %v4038
      %v4071 = vpack.c.b16 %v4039, %v4039
      %v4072 = vpack.c.b16 %v4040, %v4040
      %v4073 = vpack.c.b16 %v4041, %v4041
      %v4074 = vpack.c.b16 %v4042, %v4042
      %4107 = vst [vmem:[%s231] sm:$0xf] %v4043
      %4108 = vst [vmem:[%s231 + $0x4] sm:$0xf] %v4044
      %4109 = vst [vmem:[%s231 + $0x8] sm:$0xf] %v4045
      %4110 = vst [vmem:[%s231 + $0xc] sm:$0xf] %v4046
      %4111 = vst [vmem:[%s231 + $0x10] sm:$0xf] %v4047
      %4112 = vst [vmem:[%s231 + $0x14] sm:$0xf] %v4048
      %4113 = vst [vmem:[%s231 + $0x18] sm:$0xf] %v4049
      %4114 = vst [vmem:[%s231 + $0x1c] sm:$0xf] %v4050
      %4115 = vst [vmem:[%s231 + $0x20] sm:$0xf] %v4051
      %4116 = vst [vmem:[%s231 + $0x24] sm:$0xf] %v4052
      %4117 = vst [vmem:[%s231 + $0x28] sm:$0xf] %v4053
      %4118 = vst [vmem:[%s231 + $0x2c] sm:$0xf] %v4054
      %4119 = vst [vmem:[%s231 + $0x30] sm:$0xf] %v4055
      %4120 = vst [vmem:[%s231 + $0x34] sm:$0xf] %v4056
      %4121 = vst [vmem:[%s231 + $0x38] sm:$0xf] %v4057
      %4122 = vst [vmem:[%s231 + $0x3c] sm:$0xf] %v4058
      %4123 = vst [vmem:[%s231 + $0x40] sm:$0xf] %v4059
      %4124 = vst [vmem:[%s231 + $0x44] sm:$0xf] %v4060
      %4125 = vst [vmem:[%s231 + $0x48] sm:$0xf] %v4061
      %4126 = vst [vmem:[%s231 + $0x4c] sm:$0xf] %v4062
      %4127 = vst [vmem:[%s231 + $0x50] sm:$0xf] %v4063
      %4128 = vst [vmem:[%s231 + $0x54] sm:$0xf] %v4064
      %4129 = vst [vmem:[%s231 + $0x58] sm:$0xf] %v4065
      %4130 = vst [vmem:[%s231 + $0x5c] sm:$0xf] %v4066
      %4131 = vst [vmem:[%s231 + $0x60] sm:$0xf] %v4067
      %4132 = vst [vmem:[%s231 + $0x64] sm:$0xf] %v4068
      %4133 = vst [vmem:[%s231 + $0x68] sm:$0xf] %v4069
      %4134 = vst [vmem:[%s231 + $0x6c] sm:$0xf] %v4070
      %4135 = vst [vmem:[%s231 + $0x70] sm:$0xf] %v4071
      %4136 = vst [vmem:[%s231 + $0x74] sm:$0xf] %v4072
      %4137 = vst [vmem:[%s231 + $0x78] sm:$0xf] %v4073
      %4138 = vst [vmem:[%s231 + $0x7c] sm:$0xf] %v4074
      %v4139 = vadd.f32 %v3947, %v3948
      %v4140 = vadd.f32 %v4139, %v3949
      %v4141 = vadd.f32 %v4140, %v3950
      %v4142 = vadd.f32 %v4141, %v3951
      %v4143 = vadd.f32 %v4142, %v3952
      %v4144 = vadd.f32 %v4143, %v3953
      %v4145 = vadd.f32 %v4144, %v3954
      %v4146 = vadd.f32 %v4145, %v3955
      %v4147 = vadd.f32 %v4146, %v3956
      %v4148 = vadd.f32 %v4147, %v3957
      %v4149 = vadd.f32 %v4148, %v3958
      %v4150 = vadd.f32 %v4149, %v3959
      %v4151 = vadd.f32 %v4150, %v3960
      %v4152 = vadd.f32 %v4151, %v3961
      %v4153 = vadd.f32 %v4152, %v3962
      %v4154 = vadd.f32 %v4153, %v3963
      %v4155 = vadd.f32 %v4154, %v3964
      %v4156 = vadd.f32 %v4155, %v3965
      %v4157 = vadd.f32 %v4156, %v3966
      %v4158 = vadd.f32 %v4157, %v3967
      %v4159 = vadd.f32 %v4158, %v3968
      %v4160 = vadd.f32 %v4159, %v3969
      %v4161 = vadd.f32 %v4160, %v3970
      %v4162 = vadd.f32 %v4161, %v3971
      %v4163 = vadd.f32 %v4162, %v3972
      %v4164 = vadd.f32 %v4163, %v3973
      %v4165 = vadd.f32 %v4164, %v3974
      %v4166 = vadd.f32 %v4165, %v3975
      %v4167 = vadd.f32 %v4166, %v3976
      %v4168 = vadd.f32 %v4167, %v3977
      %v4169 = vadd.f32 %v4168, %v3978
      %v4170 = vrot.slane %v4169, 4
      %v4171 = vadd.f32 %v4169, %v4170
      %v4172 = vrot.slane %v4171, 2
      %v4173 = vadd.f32 %v4171, %v4172
      %v4174 = vrot.slane %v4173, 1
      %v4175 = vadd.f32 %v4173, %v4174
      %v4176 = vadd.f32 %v4175, 0.0
      %v4177 = vmul.f32 %v3947, %v3947
      %v4178 = vmul.f32 %v3948, %v3948
      %v4179 = vmul.f32 %v3949, %v3949
      %v4180 = vmul.f32 %v3950, %v3950
      %v4181 = vmul.f32 %v3951, %v3951
      %v4182 = vmul.f32 %v3952, %v3952
      %v4183 = vmul.f32 %v3953, %v3953
      %v4184 = vmul.f32 %v3954, %v3954
      %v4185 = vmul.f32 %v3955, %v3955
      %v4186 = vmul.f32 %v3956, %v3956
      %v4187 = vmul.f32 %v3957, %v3957
      %v4188 = vmul.f32 %v3958, %v3958
      %v4189 = vmul.f32 %v3959, %v3959
      %v4190 = vmul.f32 %v3960, %v3960
      %v4191 = vmul.f32 %v3961, %v3961
      %v4192 = vmul.f32 %v3962, %v3962
      %v4193 = vmul.f32 %v3963, %v3963
      %v4194 = vmul.f32 %v3964, %v3964
      %v4195 = vmul.f32 %v3965, %v3965
      %v4196 = vmul.f32 %v3966, %v3966
      %v4197 = vmul.f32 %v3967, %v3967
      %v4198 = vmul.f32 %v3968, %v3968
      %v4199 = vmul.f32 %v3969, %v3969
      %v4200 = vmul.f32 %v3970, %v3970
      %v4201 = vmul.f32 %v3971, %v3971
      %v4202 = vmul.f32 %v3972, %v3972
      %v4203 = vmul.f32 %v3973, %v3973
      %v4204 = vmul.f32 %v3974, %v3974
      %v4205 = vmul.f32 %v3975, %v3975
      %v4206 = vmul.f32 %v3976, %v3976
      %v4207 = vmul.f32 %v3977, %v3977
      %v4208 = vmul.f32 %v3978, %v3978
      %v4209 = vadd.f32 %v4177, %v4178
      %v4210 = vadd.f32 %v4209, %v4179
      %v4211 = vadd.f32 %v4210, %v4180
      %v4212 = vadd.f32 %v4211, %v4181
      %v4213 = vadd.f32 %v4212, %v4182
      %v4214 = vadd.f32 %v4213, %v4183
      %v4215 = vadd.f32 %v4214, %v4184
      %v4216 = vadd.f32 %v4215, %v4185
      %v4217 = vadd.f32 %v4216, %v4186
      %v4218 = vadd.f32 %v4217, %v4187
      %v4219 = vadd.f32 %v4218, %v4188
      %v4220 = vadd.f32 %v4219, %v4189
      %v4221 = vadd.f32 %v4220, %v4190
      %v4222 = vadd.f32 %v4221, %v4191
      %v4223 = vadd.f32 %v4222, %v4192
      %v4224 = vadd.f32 %v4223, %v4193
      %v4225 = vadd.f32 %v4224, %v4194
      %v4226 = vadd.f32 %v4225, %v4195
      %v4227 = vadd.f32 %v4226, %v4196
      %v4228 = vadd.f32 %v4227, %v4197
      %v4229 = vadd.f32 %v4228, %v4198
      %v4230 = vadd.f32 %v4229, %v4199
      %v4231 = vadd.f32 %v4230, %v4200
      %v4232 = vadd.f32 %v4231, %v4201
      %v4233 = vadd.f32 %v4232, %v4202
      %v4234 = vadd.f32 %v4233, %v4203
      %v4235 = vadd.f32 %v4234, %v4204
      %v4236 = vadd.f32 %v4235, %v4205
      %v4237 = vadd.f32 %v4236, %v4206
      %v4238 = vadd.f32 %v4237, %v4207
      %v4239 = vadd.f32 %v4238, %v4208
      %v4240 = vrot.slane %v4239, 4
      %v4241 = vadd.f32 %v4239, %v4240
      %v4242 = vrot.slane %v4241, 2
      %v4243 = vadd.f32 %v4241, %v4242
      %v4244 = vrot.slane %v4243, 1
      %v4245 = vadd.f32 %v4243, %v4244
      %v4246 = vadd.f32 %v4245, 0.0
      %vm4247 = vcmask 1040384
      %v4248 = vsel %vm4247, %v4176, %v4246
      %4249 = vst [vmem:[%s235] sm:$0x3] %v4248
      %p4250 = scmp.lt.s32.totalorder %s17, 1
      %s4251 = scalar_select %p4250, %s17, 1
      %s4252 = smul.addr %s4251, 32
      %s4253 = smul.addr %s4252, 4
      %s4254 = scalar_lea.vmem %s4, %s4253
      %p4255 = scmp.lt.s32.totalorder %s17, 1
      %s4256 = scalar_select %p4255, %s17, 1
      %s4257 = smul.addr %s4256, 2
      %s4258 = scalar_lea.vmem %s5, %s4257
      // Predicated region
      $region37: #{basic_block_forward.4} parent=35 // pred_check
        %p4259 = pneg %p124
      $region38: #{basic_block_forward.4} parent=35 // pred_check_branch
        %4261 = sbr.rel (%p4259) target = $region40
      $region39: #{basic_block_forward.4} parent=35 // pred_region
        _
      $region40: #{basic_block_forward.4} parent=35 // pred_fallthru
        _
      // Predicated region
      $region41: #{basic_block_forward.4} parent=35 // pred_check
        %p4262 = pneg %p150
      $region42: #{basic_block_forward.4} parent=35 // pred_check_branch
        %4264 = sbr.rel (%p4262) target = $region44
      $region43: #{basic_block_forward.4} parent=35 // pred_region
        _
      $region44: #{basic_block_forward.4} parent=35 // pred_fallthru
        _
    $region36: #{basic_block_forward.4} parent=5 // pred_fallthru
      _
    %p4265 = scmp.le.s32.totalorder 2, %s12
    // Predicated region
    $region45: #{basic_block_forward.4} parent=5 // pred_check
      %p4266 = pneg %p4265
    $region46: #{basic_block_forward.4} parent=5 // pred_check_branch
      %4268 = sbr.rel (%p4266) target = $region48
    $region47: #{basic_block_forward.4} parent=5 // pred_region
      %s4269 = ssub.s32 %s12, 2
      // Predicated region
      $region49: #{basic_block_forward.4} parent=47 // pred_check
        %p4270 = pneg %p130
      $region50: #{basic_block_forward.4} parent=47 // pred_check_branch
        %4272 = sbr.rel (%p4270) target = $region52
      $region51: #{basic_block_forward.4} parent=47 // pred_region
        %p4273 = scmp.lt.s32.totalorder %s18, 1
        %s4274 = scalar_select %p4273, %s18, 1
        %s4275 = smul.addr %s4274, 32
        %s4276 = smul.addr %s4275, 4
        %s4277 = scalar_lea.vmem %s4, %s4276
      $region52: #{basic_block_forward.4} parent=47 // pred_fallthru
        _
      // Predicated region
      $region53: #{basic_block_forward.4} parent=47 // pred_check
        %p4278 = pneg %p156
      $region54: #{basic_block_forward.4} parent=47 // pred_check_branch
        %4280 = sbr.rel (%p4278) target = $region56
      $region55: #{basic_block_forward.4} parent=47 // pred_region
        %p4281 = scmp.lt.s32.totalorder %s18, 1
        %s4282 = scalar_select %p4281, %s18, 1
        %s4283 = smul.addr %s4282, 2
        %s4284 = scalar_lea.vmem %s5, %s4283
      $region56: #{basic_block_forward.4} parent=47 // pred_fallthru
        _
    $region48: #{basic_block_forward.4} parent=5 // pred_fallthru
      _
  $region6: #{basic_block_forward.4} parent=0 // loop_footer
    %s16 = sadd.s32 1, %s12
  $region7: #{basic_block_forward.4} parent=0 // loop_footer_branch
    %11 = sbr.rel target = $region3
  $region8: #{basic_block_forward.4} parent=0 // loop_exit
    _

</llo_original>
